<compile_context>
chip_gen: v5e
topology: v5e:2x2
jax: 0.10.0
libtpu: 0.0.40
codegen_flags: <defaults>
</compile_context>

<pallas_src>
import functools

import jax
import jax.numpy as jnp
from jax.experimental import pallas as pl
from jax.experimental.pallas import tpu as pltpu


LANE = 128            # TPU vreg lane width; Cout is padded to this (lane-dense stores).
NEG_SLOPE = 0.2       # LeakyReLU slope
BN_EPS = 1e-5
VMEM_LIMIT = 48 * 1024 * 1024   # explicit scoped-VMEM budget: < v7x 64 MiB physical,
                                # above the 32/16 MiB v6e/v5e defaults.


def _round_up(x, m):
    return ((x + m - 1) // m) * m


def _pick_tile_k(k_dim):
    # v6e/v7x MXUs are 2x256x256 -> prefer 256-multiples; 128 still matches v5e.
    for t in (512, 256, 128):
        if k_dim % t == 0:
            return t
    return k_dim   # small K (e.g. conv1's 48): single full-extent step.


# ---------------------------------------------------------------------------
# Kernel 1: fused (patches @ W) -> activation   (no BatchNorm), M-tiled
# ---------------------------------------------------------------------------
def matmul_act_kernel(p_ref, w_ref, o_ref, *, act):
    # p_ref: [TM, K] bf16   w_ref: [K, C] bf16   o_ref: [TM, C] bf16 (C % 128 == 0)
    y = jnp.dot(p_ref[...], w_ref[...], preferred_element_type=jnp.float32)
    if act == "leaky":
        y = jnp.where(y > 0, y, NEG_SLOPE * y)
    elif act == "sigmoid":
        # exp + approx reciprocal both run on the EUP slot.
        y = pl.reciprocal(1.0 + jnp.exp(-y), approx=True)
        y = jnp.minimum(jnp.maximum(y, 0.0), 1.0)   # guard approx-rcp overshoot
    o_ref[...] = y.astype(o_ref.dtype)


def conv_act(patches, w, *, act, tile_m=4096):
    """patches: [M, K] bf16, w: [K, C] bf16 -> [M, C] bf16.  C % 128 == 0."""
    M, K = patches.shape
    C = w.shape[1]
    tm = min(tile_m, M)                 # tm == M (full extent) or a multiple of 8
    grid = (pl.cdiv(M, tm),)            # ragged tail (if any) handled by Pallas masking

    kern = functools.partial(matmul_act_kernel, act=act)
    cost = pl.CostEstimate(
        flops=2 * M * K * C,
        transcendentals=(M * C if act == "sigmoid" else 0),
        bytes_accessed=patches.size * 2 + w.size * 2 + M * C * 2,
    )
    return pl.pallas_call(
        kern,
        out_shape=jax.ShapeDtypeStruct((M, C), jnp.bfloat16),
        grid=grid,
        in_specs=[
            pl.BlockSpec((tm, K), lambda i: (i, 0)),
            pl.BlockSpec((K, C), lambda i: (0, 0)),
        ],
        out_specs=pl.BlockSpec((tm, C), lambda i: (i, 0)),
        compiler_params=pltpu.CompilerParams(
            dimension_semantics=("parallel",),          # v7x: split M across both TCs
            vmem_limit_bytes=VMEM_LIMIT,
        ),
        cost_estimate=cost,
    )(patches, w)


# ---------------------------------------------------------------------------
# Kernel 2: K-tiled (patches @ W) -> train-mode BatchNorm -> LeakyReLU
# ---------------------------------------------------------------------------
def matmul_bn_act_kernel(p_ref, w_ref, g_ref, b_ref, o_ref, acc_ref, *, eps):
    # p_ref: [M, TK] bf16   w_ref: [TK, C] bf16   g/b_ref: [1, C] f32
    # o_ref: [M, C] bf16    acc_ref: [M, C] f32 VMEM accumulator
    @pl.when(pl.program_id(0) == 0)
    def _init():
        acc_ref[...] = jnp.zeros_like(acc_ref)

    acc_ref[...] += jnp.dot(p_ref[...], w_ref[...],
                            preferred_element_type=jnp.float32)

    @pl.when(pl.program_id(0) == pl.num_programs(0) - 1)
    def _finalize():
        y = acc_ref[...]
        m = jnp.float32(y.shape[0])
        # Train-mode BatchNorm2d: batch stats over M = N*OH*OW, biased variance.
        # Centered two-pass moments (no E[x^2]-E[x]^2 cancellation) on VMEM data.
        mean = jnp.sum(y, axis=0, keepdims=True) / m
        d = y - mean
        var = jnp.sum(d * d, axis=0, keepdims=True) / m
        yn = d * jax.lax.rsqrt(var + eps)
        yn = yn * g_ref[...] + b_ref[...]
        yn = jnp.where(yn > 0, yn, NEG_SLOPE * yn)      # BN layers always use LeakyReLU
        o_ref[...] = yn.astype(o_ref.dtype)


def conv_bn_act(patches, w, gamma, beta, *, eps=BN_EPS):
    """patches: [M, K] bf16, w: [K, C] bf16, gamma/beta: [1, C] f32 -> [M, C] bf16.

    BatchNorm needs full-batch statistics, so M stays whole; the contraction
    dim K is tiled ('arbitrary' reduction axis) with an f32 VMEM accumulator."""
    M, K = patches.shape
    C = w.shape[1]
    tk = _pick_tile_k(K)
    grid = (K // tk,)

    kern = functools.partial(matmul_bn_act_kernel, eps=eps)
    cost = pl.CostEstimate(
        flops=2 * M * K * C,
        transcendentals=0,
        bytes_accessed=(patches.size * 2 + w.size * 2
                        + gamma.size * 4 + beta.size * 4 + M * C * 2),
    )
    return pl.pallas_call(
        kern,
        out_shape=jax.ShapeDtypeStruct((M, C), jnp.bfloat16),
        grid=grid,
        in_specs=[
            pl.BlockSpec((M, tk), lambda k: (0, k)),
            pl.BlockSpec((tk, C), lambda k: (k, 0)),
            pl.BlockSpec((1, C), lambda k: (0, 0)),
            pl.BlockSpec((1, C), lambda k: (0, 0)),
        ],
        out_specs=pl.BlockSpec((M, C), lambda k: (0, 0)),
        scratch_shapes=[pltpu.VMEM((M, C), jnp.float32)],
        compiler_params=pltpu.CompilerParams(
            dimension_semantics=("arbitrary",),
            vmem_limit_bytes=VMEM_LIMIT,
        ),
        cost_estimate=cost,
    )(patches, w, gamma, beta)


# ---------------------------------------------------------------------------
# Plain-JAX glue: im2col via static strided slices (bf16 throughout, no gather)
# ---------------------------------------------------------------------------
def im2col(x, k, stride, pad):
    """x: [N, H, W, C] bf16 -> patches [N*OH*OW, k*k*C] bf16; column order (kh, kw, c)."""
    N, H, W, C = x.shape
    xp = jnp.pad(x, ((0, 0), (pad, pad), (pad, pad), (0, 0)))
    OH = (H + 2 * pad - k) // stride + 1
    OW = (W + 2 * pad - k) // stride + 1
    cols = []
    for kh in range(k):
        for kw in range(k):
            sl = jax.lax.slice(
                xp,
                (0, kh, kw, 0),
                (N, kh + stride * (OH - 1) + 1, kw + stride * (OW - 1) + 1, C),
                (1, stride, stride, 1),
            )  # [N, OH, OW, C]
            cols.append(sl)
    patches = jnp.concatenate(cols, axis=-1)  # [N, OH, OW, k*k*C]
    return patches.reshape(N * OH * OW, k * k * C), (N, OH, OW)


# ---------------------------------------------------------------------------
# Discriminator parameters + forward
# ---------------------------------------------------------------------------
# (stride, pad, activation, use_bn) for the five convs:
#   conv(4,2,1)+LReLU, 3x [conv(4,2,1)+BN+LReLU], conv(4,1,0)+Sigmoid.
LAYER_CFG = (
    (2, 1, "leaky", False),
    (2, 1, "leaky", True),
    (2, 1, "leaky", True),
    (2, 1, "leaky", True),
    (1, 0, "sigmoid", False),
)


def init_discriminator_params(key, channels, ndf):
    """Conv weights stored as [KH, KW, Cin, Cout]; BN gamma/beta as [1, Cout]."""
    layer_io = [
        (channels, ndf),
        (ndf, ndf * 2),
        (ndf * 2, ndf * 4),
        (ndf * 4, ndf * 8),
        (ndf * 8, 1),
    ]
    params = []
    for (cin, cout), (_, _, _, has_bn) in zip(layer_io, LAYER_CFG):
        key, k_w, k_g, k_b = jax.random.split(key, 4)
        w = 0.02 * jax.random.normal(k_w, (4, 4, cin, cout), dtype=jnp.float32)
        if has_bn:
            gamma = 1.0 + 0.1 * jax.random.normal(k_g, (1, cout), dtype=jnp.float32)
            beta = 0.1 * jax.random.normal(k_b, (1, cout), dtype=jnp.float32)
        else:
            gamma = jnp.ones((1, cout), dtype=jnp.float32)
            beta = jnp.zeros((1, cout), dtype=jnp.float32)
        params.append({"w": w, "gamma": gamma, "beta": beta})
    return params


def discriminator_forward(x_nchw, params):
    # x_nchw: [N, C, H, W] f32 (PyTorch layout).  Cast to NHWC bf16 once; every
    # layer afterwards stays bf16 in HBM (kernels accumulate/normalize in f32).
    x = jnp.transpose(x_nchw, (0, 2, 3, 1)).astype(jnp.bfloat16)

    for p, (stride, pad, act, use_bn) in zip(params, LAYER_CFG):
        kh, kw, cin, cout = p["w"].shape
        patches, (N, OH, OW) = im2col(x, kh, stride, pad)   # [M, K] bf16

        K = kh * kw * cin                      # NOT padded (full-extent block is legal)
        Cp = _round_up(cout, LANE)             # lane-dense, unmasked output stores
        w2d = jnp.pad(p["w"].reshape(K, cout),
                      ((0, 0), (0, Cp - cout))).astype(jnp.bfloat16)

        if use_bn:
            gamma = jnp.pad(p["gamma"], ((0, 0), (0, Cp - cout)), constant_values=1.0)
            beta = jnp.pad(p["beta"], ((0, 0), (0, Cp - cout)))
            y = conv_bn_act(patches, w2d, gamma, beta)
        else:
            y = conv_act(patches, w2d, act=act)

        x = y[:, :cout].reshape(N, OH, OW, cout)            # bf16

    # back to NCHW [N, 1, 1, 1]; final result in f32 for parity with torch.
    return jnp.transpose(x, (0, 3, 1, 2)).astype(jnp.float32)


if __name__ == "__main__":
    # DCGAN-consistent small shapes: batch=2, channels=3, ndf=16, 64x64 images
    # (64x64 so the final 4x4/stride-1/pad-0 conv reduces to 1x1; ndf=16 makes
    # layer 4's contraction K=1024 exercise the 2-step K-tiled BN reduction).
    key = jax.random.PRNGKey(0)
    key_x, key_p = jax.random.split(key)

    N, C, H, W, NDF = 2, 3, 64, 64, 16
    x = jax.random.normal(key_x, (N, C, H, W), dtype=jnp.float32)
    params = init_discriminator_params(key_p, C, NDF)

    fwd = jax.jit(discriminator_forward)
    out = jax.block_until_ready(fwd(x, params))

    assert out.shape == (N, 1, 1, 1), out.shape
    assert bool(jnp.all(jnp.isfinite(out)))
    assert bool(jnp.all((out >= 0.0) & (out <= 1.0)))  # sigmoid output range
    print("KERNEL_OK")
</pallas_src>

<mosaic_0001>
module attributes {stable_mosaic.version = 11 : i64} {
  func.func @matmul_act_kernel(%arg0: i32, %arg1: memref<2048x48xbf16, #tpu.memory_space<vmem>>, %arg2: memref<48x128xbf16, #tpu.memory_space<vmem>>, %arg3: memref<2048x128xbf16, #tpu.memory_space<vmem>>) attributes {dimension_semantics = [#tpu.dimension_semantics<parallel>], iteration_bounds = array<i64: 1>, scalar_prefetch = 0 : i64, scratch_operands = 0 : i64, tpu.core_type = #tpu.core_type<tc>, window_params = [{transform_indices = @transform_0, window_bounds = array<i64: 2048, 48>}, {pipeline_mode = #tpu.pipeline_mode<synchronous>, transform_indices = @transform_1, window_bounds = array<i64: 48, 128>}, {transform_indices = @transform_2, window_bounds = array<i64: 2048, 128>}]} {
    %c0 = arith.constant 0 : index
    %c0_0 = arith.constant 0 : index
    %0 = vector.load %arg1[%c0, %c0_0] : memref<2048x48xbf16, #tpu.memory_space<vmem>>, vector<2048x48xbf16>
    %c0_1 = arith.constant 0 : index
    %c0_2 = arith.constant 0 : index
    %1 = vector.load %arg2[%c0_1, %c0_2] : memref<48x128xbf16, #tpu.memory_space<vmem>>, vector<48x128xbf16>
    %cst = arith.constant dense<0.000000e+00> : vector<2048x128xf32>
    %2 = tpu.matmul %0, %1, %cst {dimension_numbers = #tpu.dot_dimension_numbers<[1], [0], [0], [1], [0, 0, 1, 1], [], []>} : vector<2048x48xbf16>, vector<48x128xbf16>, vector<2048x128xf32> -> vector<2048x128xf32>
    %cst_3 = arith.constant 0.000000e+00 : f32
    %3 = vector.broadcast %cst_3 : f32 to vector<2048x128xf32>
    %4 = arith.cmpf ogt, %2, %3 : vector<2048x128xf32>
    %cst_4 = arith.constant 2.000000e-01 : f32
    %5 = vector.broadcast %cst_4 : f32 to vector<2048x128xf32>
    %6 = arith.mulf %5, %2 : vector<2048x128xf32>
    %7 = arith.select %4, %2, %6 : vector<2048x128xi1>, vector<2048x128xf32>
    %8 = arith.truncf %7 : vector<2048x128xf32> to vector<2048x128xbf16>
    %c0_5 = arith.constant 0 : index
    %c0_6 = arith.constant 0 : index
    %9 = vector.load %arg3[%c0_5, %c0_6] : memref<2048x128xbf16, #tpu.memory_space<vmem>>, vector<2048x128xbf16>
    tpu.vector_store %arg3[%c0_5, %c0_6], %8 {strides = array<i32>} : memref<2048x128xbf16, #tpu.memory_space<vmem>>, vector<2048x128xbf16>,
    return
  }
  func.func @transform_0(%arg0: i32) -> (i32, i32) {
    %c0_i32 = arith.constant 0 : i32
    %c0_i32_0 = arith.constant 0 : i32
    return %arg0, %c0_i32 : i32, i32
  }
  func.func @transform_1(%arg0: i32) -> (i32, i32) {
    %c0_i32 = arith.constant 0 : i32
    %c0_i32_0 = arith.constant 0 : i32
    %c0_i32_1 = arith.constant 0 : i32
    return %c0_i32, %c0_i32_0 : i32, i32
  }
  func.func @transform_2(%arg0: i32) -> (i32, i32) {
    %c0_i32 = arith.constant 0 : i32
    %c0_i32_0 = arith.constant 0 : i32
    return %arg0, %c0_i32 : i32, i32
  }
}

module attributes {stable_mosaic.version = 11 : i64} {
  func.func @matmul_bn_act_kernel(%arg0: i32, %arg1: memref<512x256xbf16, #tpu.memory_space<vmem>>, %arg2: memref<256x128xbf16, #tpu.memory_space<vmem>>, %arg3: memref<1x128xf32, #tpu.memory_space<vmem>>, %arg4: memref<1x128xf32, #tpu.memory_space<vmem>>, %arg5: memref<512x128xbf16, #tpu.memory_space<vmem>>, %arg6: memref<512x128xf32, #tpu.memory_space<vmem>>) attributes {dimension_semantics = [#tpu.dimension_semantics<arbitrary>], iteration_bounds = array<i64: 1>, scalar_prefetch = 0 : i64, scratch_operands = 1 : i64, tpu.core_type = #tpu.core_type<tc>, window_params = [{transform_indices = @transform_0, window_bounds = array<i64: 512, 256>}, {transform_indices = @transform_1, window_bounds = array<i64: 256, 128>}, {pipeline_mode = #tpu.pipeline_mode<synchronous>, transform_indices = @transform_2, window_bounds = array<i64: 1, 128>}, {pipeline_mode = #tpu.pipeline_mode<synchronous>, transform_indices = @transform_3, window_bounds = array<i64: 1, 128>}, {pipeline_mode = #tpu.pipeline_mode<synchronous>, transform_indices = @transform_4, window_bounds = array<i64: 512, 128>}]} {
    %c0_i32 = arith.constant 0 : i32
    %0 = arith.cmpi eq, %arg0, %c0_i32 : i32
    %1 = arith.extui %0 : i1 to i32
    %c0_i32_0 = arith.constant 0 : i32
    %2 = arith.cmpi ne, %1, %c0_i32_0 : i32
    scf.if %2 {
      %cst_10 = arith.constant 0.000000e+00 : f32
      %12 = vector.broadcast %cst_10 : f32 to vector<512x128xf32>
      %c0_11 = arith.constant 0 : index
      %c0_12 = arith.constant 0 : index
      %13 = vector.load %arg6[%c0_11, %c0_12] : memref<512x128xf32, #tpu.memory_space<vmem>>, vector<512x128xf32>
      tpu.vector_store %arg6[%c0_11, %c0_12], %12 {strides = array<i32>} : memref<512x128xf32, #tpu.memory_space<vmem>>, vector<512x128xf32>,
    } else {
    }
    %c0 = arith.constant 0 : index
    %c0_1 = arith.constant 0 : index
    %3 = vector.load %arg6[%c0, %c0_1] : memref<512x128xf32, #tpu.memory_space<vmem>>, vector<512x128xf32>
    %c0_2 = arith.constant 0 : index
    %c0_3 = arith.constant 0 : index
    %4 = vector.load %arg1[%c0_2, %c0_3] : memref<512x256xbf16, #tpu.memory_space<vmem>>, vector<512x256xbf16>
    %c0_4 = arith.constant 0 : index
    %c0_5 = arith.constant 0 : index
    %5 = vector.load %arg2[%c0_4, %c0_5] : memref<256x128xbf16, #tpu.memory_space<vmem>>, vector<256x128xbf16>
    %cst = arith.constant dense<0.000000e+00> : vector<512x128xf32>
    %6 = tpu.matmul %4, %5, %cst {dimension_numbers = #tpu.dot_dimension_numbers<[1], [0], [0], [1], [0, 0, 1, 1], [], []>} : vector<512x256xbf16>, vector<256x128xbf16>, vector<512x128xf32> -> vector<512x128xf32>
    %7 = arith.addf %3, %6 : vector<512x128xf32>
    %c0_6 = arith.constant 0 : index
    %c0_7 = arith.constant 0 : index
    %8 = vector.load %arg6[%c0_6, %c0_7] : memref<512x128xf32, #tpu.memory_space<vmem>>, vector<512x128xf32>
    tpu.vector_store %arg6[%c0_6, %c0_7], %7 {strides = array<i32>} : memref<512x128xf32, #tpu.memory_space<vmem>>, vector<512x128xf32>,
    %c0_i32_8 = arith.constant 0 : i32
    %9 = arith.cmpi eq, %arg0, %c0_i32_8 : i32
    %10 = arith.extui %9 : i1 to i32
    %c0_i32_9 = arith.constant 0 : i32
    %11 = arith.cmpi ne, %10, %c0_i32_9 : i32
    scf.if %11 {
      %c0_10 = arith.constant 0 : index
      %c0_11 = arith.constant 0 : index
      %12 = vector.load %arg6[%c0_10, %c0_11] : memref<512x128xf32, #tpu.memory_space<vmem>>, vector<512x128xf32>
      %cst_12 = arith.constant dense<0.000000e+00> : vector<128xf32>
      %13 = vector.multi_reduction <add>, %12, %cst_12 [0] : vector<512x128xf32> to vector<128xf32>
      %14 = vector.shape_cast %13 : vector<128xf32> to vector<1x128xf32>
      %cst_13 = arith.constant 5.120000e+02 : f32
      %15 = vector.broadcast %cst_13 : f32 to vector<1x128xf32>
      %16 = arith.divf %14, %15 : vector<1x128xf32>
      %17 = vector.broadcast %16 : vector<1x128xf32> to vector<512x128xf32>
      %18 = arith.subf %12, %17 : vector<512x128xf32>
      %19 = arith.mulf %18, %18 : vector<512x128xf32>
      %cst_14 = arith.constant dense<0.000000e+00> : vector<128xf32>
      %20 = vector.multi_reduction <add>, %19, %cst_14 [0] : vector<512x128xf32> to vector<128xf32>
      %21 = vector.shape_cast %20 : vector<128xf32> to vector<1x128xf32>
      %cst_15 = arith.constant 5.120000e+02 : f32
      %22 = vector.broadcast %cst_15 : f32 to vector<1x128xf32>
      %23 = arith.divf %21, %22 : vector<1x128xf32>
      %cst_16 = arith.constant 9.99999974E-6 : f32
      %24 = vector.broadcast %cst_16 : f32 to vector<1x128xf32>
      %25 = arith.addf %23, %24 : vector<1x128xf32>
      %26 = math.rsqrt %25 : vector<1x128xf32>
      %27 = vector.broadcast %26 : vector<1x128xf32> to vector<512x128xf32>
      %28 = arith.mulf %18, %27 : vector<512x128xf32>
      %c0_17 = arith.constant 0 : index
      %c0_18 = arith.constant 0 : index
      %29 = vector.load %arg3[%c0_17, %c0_18] : memref<1x128xf32, #tpu.memory_space<vmem>>, vector<1x128xf32>
      %30 = vector.broadcast %29 : vector<1x128xf32> to vector<512x128xf32>
      %31 = arith.mulf %28, %30 : vector<512x128xf32>
      %c0_19 = arith.constant 0 : index
      %c0_20 = arith.constant 0 : index
      %32 = vector.load %arg4[%c0_19, %c0_20] : memref<1x128xf32, #tpu.memory_space<vmem>>, vector<1x128xf32>
      %33 = vector.broadcast %32 : vector<1x128xf32> to vector<512x128xf32>
      %34 = arith.addf %31, %33 : vector<512x128xf32>
      %cst_21 = arith.constant 0.000000e+00 : f32
      %35 = vector.broadcast %cst_21 : f32 to vector<512x128xf32>
      %36 = arith.cmpf ogt, %34, %35 : vector<512x128xf32>
      %cst_22 = arith.constant 2.000000e-01 : f32
      %37 = vector.broadcast %cst_22 : f32 to vector<512x128xf32>
      %38 = arith.mulf %37, %34 : vector<512x128xf32>
      %39 = arith.select %36, %34, %38 : vector<512x128xi1>, vector<512x128xf32>
      %40 = arith.truncf %39 : vector<512x128xf32> to vector<512x128xbf16>
      %c0_23 = arith.constant 0 : index
      %c0_24 = arith.constant 0 : index
      %41 = vector.load %arg5[%c0_23, %c0_24] : memref<512x128xbf16, #tpu.memory_space<vmem>>, vector<512x128xbf16>
      tpu.vector_store %arg5[%c0_23, %c0_24], %40 {strides = array<i32>} : memref<512x128xbf16, #tpu.memory_space<vmem>>, vector<512x128xbf16>,
    } else {
    }
    return
  }
  func.func @transform_0(%arg0: i32) -> (i32, i32) {
    %c0_i32 = arith.constant 0 : i32
    %c0_i32_0 = arith.constant 0 : i32
    return %c0_i32, %arg0 : i32, i32
  }
  func.func @transform_1(%arg0: i32) -> (i32, i32) {
    %c0_i32 = arith.constant 0 : i32
    %c0_i32_0 = arith.constant 0 : i32
    return %arg0, %c0_i32 : i32, i32
  }
  func.func @transform_2(%arg0: i32) -> (i32, i32) {
    %c0_i32 = arith.constant 0 : i32
    %c0_i32_0 = arith.constant 0 : i32
    %c0_i32_1 = arith.constant 0 : i32
    return %c0_i32, %c0_i32_0 : i32, i32
  }
  func.func @transform_3(%arg0: i32) -> (i32, i32) {
    %c0_i32 = arith.constant 0 : i32
    %c0_i32_0 = arith.constant 0 : i32
    %c0_i32_1 = arith.constant 0 : i32
    return %c0_i32, %c0_i32_0 : i32, i32
  }
  func.func @transform_4(%arg0: i32) -> (i32, i32) {
    %c0_i32 = arith.constant 0 : i32
    %c0_i32_0 = arith.constant 0 : i32
    %c0_i32_1 = arith.constant 0 : i32
    return %c0_i32, %c0_i32_0 : i32, i32
  }
}

module attributes {stable_mosaic.version = 11 : i64} {
  func.func @matmul_bn_act_kernel(%arg0: i32, %arg1: memref<128x512xbf16, #tpu.memory_space<vmem>>, %arg2: memref<512x128xbf16, #tpu.memory_space<vmem>>, %arg3: memref<1x128xf32, #tpu.memory_space<vmem>>, %arg4: memref<1x128xf32, #tpu.memory_space<vmem>>, %arg5: memref<128x128xbf16, #tpu.memory_space<vmem>>, %arg6: memref<128x128xf32, #tpu.memory_space<vmem>>) attributes {dimension_semantics = [#tpu.dimension_semantics<arbitrary>], iteration_bounds = array<i64: 1>, scalar_prefetch = 0 : i64, scratch_operands = 1 : i64, tpu.core_type = #tpu.core_type<tc>, window_params = [{transform_indices = @transform_0, window_bounds = array<i64: 128, 512>}, {transform_indices = @transform_1, window_bounds = array<i64: 512, 128>}, {pipeline_mode = #tpu.pipeline_mode<synchronous>, transform_indices = @transform_2, window_bounds = array<i64: 1, 128>}, {pipeline_mode = #tpu.pipeline_mode<synchronous>, transform_indices = @transform_3, window_bounds = array<i64: 1, 128>}, {pipeline_mode = #tpu.pipeline_mode<synchronous>, transform_indices = @transform_4, window_bounds = array<i64: 128, 128>}]} {
    %c0_i32 = arith.constant 0 : i32
    %0 = arith.cmpi eq, %arg0, %c0_i32 : i32
    %1 = arith.extui %0 : i1 to i32
    %c0_i32_0 = arith.constant 0 : i32
    %2 = arith.cmpi ne, %1, %c0_i32_0 : i32
    scf.if %2 {
      %cst_10 = arith.constant 0.000000e+00 : f32
      %12 = vector.broadcast %cst_10 : f32 to vector<128x128xf32>
      %c0_11 = arith.constant 0 : index
      %c0_12 = arith.constant 0 : index
      %13 = vector.load %arg6[%c0_11, %c0_12] : memref<128x128xf32, #tpu.memory_space<vmem>>, vector<128x128xf32>
      tpu.vector_store %arg6[%c0_11, %c0_12], %12 {strides = array<i32>} : memref<128x128xf32, #tpu.memory_space<vmem>>, vector<128x128xf32>,
    } else {
    }
    %c0 = arith.constant 0 : index
    %c0_1 = arith.constant 0 : index
    %3 = vector.load %arg6[%c0, %c0_1] : memref<128x128xf32, #tpu.memory_space<vmem>>, vector<128x128xf32>
    %c0_2 = arith.constant 0 : index
    %c0_3 = arith.constant 0 : index
    %4 = vector.load %arg1[%c0_2, %c0_3] : memref<128x512xbf16, #tpu.memory_space<vmem>>, vector<128x512xbf16>
    %c0_4 = arith.constant 0 : index
    %c0_5 = arith.constant 0 : index
    %5 = vector.load %arg2[%c0_4, %c0_5] : memref<512x128xbf16, #tpu.memory_space<vmem>>, vector<512x128xbf16>
    %cst = arith.constant dense<0.000000e+00> : vector<128x128xf32>
    %6 = tpu.matmul %4, %5, %cst {dimension_numbers = #tpu.dot_dimension_numbers<[1], [0], [0], [1], [0, 0, 1, 1], [], []>} : vector<128x512xbf16>, vector<512x128xbf16>, vector<128x128xf32> -> vector<128x128xf32>
    %7 = arith.addf %3, %6 : vector<128x128xf32>
    %c0_6 = arith.constant 0 : index
    %c0_7 = arith.constant 0 : index
    %8 = vector.load %arg6[%c0_6, %c0_7] : memref<128x128xf32, #tpu.memory_space<vmem>>, vector<128x128xf32>
    tpu.vector_store %arg6[%c0_6, %c0_7], %7 {strides = array<i32>} : memref<128x128xf32, #tpu.memory_space<vmem>>, vector<128x128xf32>,
    %c0_i32_8 = arith.constant 0 : i32
    %9 = arith.cmpi eq, %arg0, %c0_i32_8 : i32
    %10 = arith.extui %9 : i1 to i32
    %c0_i32_9 = arith.constant 0 : i32
    %11 = arith.cmpi ne, %10, %c0_i32_9 : i32
    scf.if %11 {
      %c0_10 = arith.constant 0 : index
      %c0_11 = arith.constant 0 : index
      %12 = vector.load %arg6[%c0_10, %c0_11] : memref<128x128xf32, #tpu.memory_space<vmem>>, vector<128x128xf32>
      %cst_12 = arith.constant dense<0.000000e+00> : vector<128xf32>
      %13 = vector.multi_reduction <add>, %12, %cst_12 [0] : vector<128x128xf32> to vector<128xf32>
      %14 = vector.shape_cast %13 : vector<128xf32> to vector<1x128xf32>
      %cst_13 = arith.constant 1.280000e+02 : f32
      %15 = vector.broadcast %cst_13 : f32 to vector<1x128xf32>
      %16 = arith.divf %14, %15 : vector<1x128xf32>
      %17 = vector.broadcast %16 : vector<1x128xf32> to vector<128x128xf32>
      %18 = arith.subf %12, %17 : vector<128x128xf32>
      %19 = arith.mulf %18, %18 : vector<128x128xf32>
      %cst_14 = arith.constant dense<0.000000e+00> : vector<128xf32>
      %20 = vector.multi_reduction <add>, %19, %cst_14 [0] : vector<128x128xf32> to vector<128xf32>
      %21 = vector.shape_cast %20 : vector<128xf32> to vector<1x128xf32>
      %cst_15 = arith.constant 1.280000e+02 : f32
      %22 = vector.broadcast %cst_15 : f32 to vector<1x128xf32>
      %23 = arith.divf %21, %22 : vector<1x128xf32>
      %cst_16 = arith.constant 9.99999974E-6 : f32
      %24 = vector.broadcast %cst_16 : f32 to vector<1x128xf32>
      %25 = arith.addf %23, %24 : vector<1x128xf32>
      %26 = math.rsqrt %25 : vector<1x128xf32>
      %27 = vector.broadcast %26 : vector<1x128xf32> to vector<128x128xf32>
      %28 = arith.mulf %18, %27 : vector<128x128xf32>
      %c0_17 = arith.constant 0 : index
      %c0_18 = arith.constant 0 : index
      %29 = vector.load %arg3[%c0_17, %c0_18] : memref<1x128xf32, #tpu.memory_space<vmem>>, vector<1x128xf32>
      %30 = vector.broadcast %29 : vector<1x128xf32> to vector<128x128xf32>
      %31 = arith.mulf %28, %30 : vector<128x128xf32>
      %c0_19 = arith.constant 0 : index
      %c0_20 = arith.constant 0 : index
      %32 = vector.load %arg4[%c0_19, %c0_20] : memref<1x128xf32, #tpu.memory_space<vmem>>, vector<1x128xf32>
      %33 = vector.broadcast %32 : vector<1x128xf32> to vector<128x128xf32>
      %34 = arith.addf %31, %33 : vector<128x128xf32>
      %cst_21 = arith.constant 0.000000e+00 : f32
      %35 = vector.broadcast %cst_21 : f32 to vector<128x128xf32>
      %36 = arith.cmpf ogt, %34, %35 : vector<128x128xf32>
      %cst_22 = arith.constant 2.000000e-01 : f32
      %37 = vector.broadcast %cst_22 : f32 to vector<128x128xf32>
      %38 = arith.mulf %37, %34 : vector<128x128xf32>
      %39 = arith.select %36, %34, %38 : vector<128x128xi1>, vector<128x128xf32>
      %40 = arith.truncf %39 : vector<128x128xf32> to vector<128x128xbf16>
      %c0_23 = arith.constant 0 : index
      %c0_24 = arith.constant 0 : index
      %41 = vector.load %arg5[%c0_23, %c0_24] : memref<128x128xbf16, #tpu.memory_space<vmem>>, vector<128x128xbf16>
      tpu.vector_store %arg5[%c0_23, %c0_24], %40 {strides = array<i32>} : memref<128x128xbf16, #tpu.memory_space<vmem>>, vector<128x128xbf16>,
    } else {
    }
    return
  }
  func.func @transform_0(%arg0: i32) -> (i32, i32) {
    %c0_i32 = arith.constant 0 : i32
    %c0_i32_0 = arith.constant 0 : i32
    return %c0_i32, %arg0 : i32, i32
  }
  func.func @transform_1(%arg0: i32) -> (i32, i32) {
    %c0_i32 = arith.constant 0 : i32
    %c0_i32_0 = arith.constant 0 : i32
    return %arg0, %c0_i32 : i32, i32
  }
  func.func @transform_2(%arg0: i32) -> (i32, i32) {
    %c0_i32 = arith.constant 0 : i32
    %c0_i32_0 = arith.constant 0 : i32
    %c0_i32_1 = arith.constant 0 : i32
    return %c0_i32, %c0_i32_0 : i32, i32
  }
  func.func @transform_3(%arg0: i32) -> (i32, i32) {
    %c0_i32 = arith.constant 0 : i32
    %c0_i32_0 = arith.constant 0 : i32
    %c0_i32_1 = arith.constant 0 : i32
    return %c0_i32, %c0_i32_0 : i32, i32
  }
  func.func @transform_4(%arg0: i32) -> (i32, i32) {
    %c0_i32 = arith.constant 0 : i32
    %c0_i32_0 = arith.constant 0 : i32
    %c0_i32_1 = arith.constant 0 : i32
    return %c0_i32, %c0_i32_0 : i32, i32
  }
}

module attributes {stable_mosaic.version = 11 : i64} {
  func.func @matmul_bn_act_kernel(%arg0: i32, %arg1: memref<32x512xbf16, #tpu.memory_space<vmem>>, %arg2: memref<512x128xbf16, #tpu.memory_space<vmem>>, %arg3: memref<1x128xf32, #tpu.memory_space<vmem>>, %arg4: memref<1x128xf32, #tpu.memory_space<vmem>>, %arg5: memref<32x128xbf16, #tpu.memory_space<vmem>>, %arg6: memref<32x128xf32, #tpu.memory_space<vmem>>) attributes {dimension_semantics = [#tpu.dimension_semantics<arbitrary>], iteration_bounds = array<i64: 2>, scalar_prefetch = 0 : i64, scratch_operands = 1 : i64, tpu.core_type = #tpu.core_type<tc>, window_params = [{transform_indices = @transform_0, window_bounds = array<i64: 32, 512>}, {transform_indices = @transform_1, window_bounds = array<i64: 512, 128>}, {pipeline_mode = #tpu.pipeline_mode<synchronous>, transform_indices = @transform_2, window_bounds = array<i64: 1, 128>}, {pipeline_mode = #tpu.pipeline_mode<synchronous>, transform_indices = @transform_3, window_bounds = array<i64: 1, 128>}, {pipeline_mode = #tpu.pipeline_mode<synchronous>, transform_indices = @transform_4, window_bounds = array<i64: 32, 128>}]} {
    %c0_i32 = arith.constant 0 : i32
    %0 = arith.cmpi eq, %arg0, %c0_i32 : i32
    %1 = arith.extui %0 : i1 to i32
    %c0_i32_0 = arith.constant 0 : i32
    %2 = arith.cmpi ne, %1, %c0_i32_0 : i32
    scf.if %2 {
      %cst_9 = arith.constant 0.000000e+00 : f32
      %12 = vector.broadcast %cst_9 : f32 to vector<32x128xf32>
      %c0_10 = arith.constant 0 : index
      %c0_11 = arith.constant 0 : index
      %13 = vector.load %arg6[%c0_10, %c0_11] : memref<32x128xf32, #tpu.memory_space<vmem>>, vector<32x128xf32>
      tpu.vector_store %arg6[%c0_10, %c0_11], %12 {strides = array<i32>} : memref<32x128xf32, #tpu.memory_space<vmem>>, vector<32x128xf32>,
    } else {
    }
    %c0 = arith.constant 0 : index
    %c0_1 = arith.constant 0 : index
    %3 = vector.load %arg6[%c0, %c0_1] : memref<32x128xf32, #tpu.memory_space<vmem>>, vector<32x128xf32>
    %c0_2 = arith.constant 0 : index
    %c0_3 = arith.constant 0 : index
    %4 = vector.load %arg1[%c0_2, %c0_3] : memref<32x512xbf16, #tpu.memory_space<vmem>>, vector<32x512xbf16>
    %c0_4 = arith.constant 0 : index
    %c0_5 = arith.constant 0 : index
    %5 = vector.load %arg2[%c0_4, %c0_5] : memref<512x128xbf16, #tpu.memory_space<vmem>>, vector<512x128xbf16>
    %cst = arith.constant dense<0.000000e+00> : vector<32x128xf32>
    %6 = tpu.matmul %4, %5, %cst {dimension_numbers = #tpu.dot_dimension_numbers<[1], [0], [0], [1], [0, 0, 1, 1], [], []>} : vector<32x512xbf16>, vector<512x128xbf16>, vector<32x128xf32> -> vector<32x128xf32>
    %7 = arith.addf %3, %6 : vector<32x128xf32>
    %c0_6 = arith.constant 0 : index
    %c0_7 = arith.constant 0 : index
    %8 = vector.load %arg6[%c0_6, %c0_7] : memref<32x128xf32, #tpu.memory_space<vmem>>, vector<32x128xf32>
    tpu.vector_store %arg6[%c0_6, %c0_7], %7 {strides = array<i32>} : memref<32x128xf32, #tpu.memory_space<vmem>>, vector<32x128xf32>,
    %c1_i32 = arith.constant 1 : i32
    %9 = arith.cmpi eq, %arg0, %c1_i32 : i32
    %10 = arith.extui %9 : i1 to i32
    %c0_i32_8 = arith.constant 0 : i32
    %11 = arith.cmpi ne, %10, %c0_i32_8 : i32
    scf.if %11 {
      %c0_9 = arith.constant 0 : index
      %c0_10 = arith.constant 0 : index
      %12 = vector.load %arg6[%c0_9, %c0_10] : memref<32x128xf32, #tpu.memory_space<vmem>>, vector<32x128xf32>
      %cst_11 = arith.constant dense<0.000000e+00> : vector<128xf32>
      %13 = vector.multi_reduction <add>, %12, %cst_11 [0] : vector<32x128xf32> to vector<128xf32>
      %14 = vector.shape_cast %13 : vector<128xf32> to vector<1x128xf32>
      %cst_12 = arith.constant 3.200000e+01 : f32
      %15 = vector.broadcast %cst_12 : f32 to vector<1x128xf32>
      %16 = arith.divf %14, %15 : vector<1x128xf32>
      %17 = vector.broadcast %16 : vector<1x128xf32> to vector<32x128xf32>
      %18 = arith.subf %12, %17 : vector<32x128xf32>
      %19 = arith.mulf %18, %18 : vector<32x128xf32>
      %cst_13 = arith.constant dense<0.000000e+00> : vector<128xf32>
      %20 = vector.multi_reduction <add>, %19, %cst_13 [0] : vector<32x128xf32> to vector<128xf32>
      %21 = vector.shape_cast %20 : vector<128xf32> to vector<1x128xf32>
      %cst_14 = arith.constant 3.200000e+01 : f32
      %22 = vector.broadcast %cst_14 : f32 to vector<1x128xf32>
      %23 = arith.divf %21, %22 : vector<1x128xf32>
      %cst_15 = arith.constant 9.99999974E-6 : f32
      %24 = vector.broadcast %cst_15 : f32 to vector<1x128xf32>
      %25 = arith.addf %23, %24 : vector<1x128xf32>
      %26 = math.rsqrt %25 : vector<1x128xf32>
      %27 = vector.broadcast %26 : vector<1x128xf32> to vector<32x128xf32>
      %28 = arith.mulf %18, %27 : vector<32x128xf32>
      %c0_16 = arith.constant 0 : index
      %c0_17 = arith.constant 0 : index
      %29 = vector.load %arg3[%c0_16, %c0_17] : memref<1x128xf32, #tpu.memory_space<vmem>>, vector<1x128xf32>
      %30 = vector.broadcast %29 : vector<1x128xf32> to vector<32x128xf32>
      %31 = arith.mulf %28, %30 : vector<32x128xf32>
      %c0_18 = arith.constant 0 : index
      %c0_19 = arith.constant 0 : index
      %32 = vector.load %arg4[%c0_18, %c0_19] : memref<1x128xf32, #tpu.memory_space<vmem>>, vector<1x128xf32>
      %33 = vector.broadcast %32 : vector<1x128xf32> to vector<32x128xf32>
      %34 = arith.addf %31, %33 : vector<32x128xf32>
      %cst_20 = arith.constant 0.000000e+00 : f32
      %35 = vector.broadcast %cst_20 : f32 to vector<32x128xf32>
      %36 = arith.cmpf ogt, %34, %35 : vector<32x128xf32>
      %cst_21 = arith.constant 2.000000e-01 : f32
      %37 = vector.broadcast %cst_21 : f32 to vector<32x128xf32>
      %38 = arith.mulf %37, %34 : vector<32x128xf32>
      %39 = arith.select %36, %34, %38 : vector<32x128xi1>, vector<32x128xf32>
      %40 = arith.truncf %39 : vector<32x128xf32> to vector<32x128xbf16>
      %c0_22 = arith.constant 0 : index
      %c0_23 = arith.constant 0 : index
      %41 = vector.load %arg5[%c0_22, %c0_23] : memref<32x128xbf16, #tpu.memory_space<vmem>>, vector<32x128xbf16>
      tpu.vector_store %arg5[%c0_22, %c0_23], %40 {strides = array<i32>} : memref<32x128xbf16, #tpu.memory_space<vmem>>, vector<32x128xbf16>,
    } else {
    }
    return
  }
  func.func @transform_0(%arg0: i32) -> (i32, i32) {
    %c0_i32 = arith.constant 0 : i32
    %c0_i32_0 = arith.constant 0 : i32
    return %c0_i32, %arg0 : i32, i32
  }
  func.func @transform_1(%arg0: i32) -> (i32, i32) {
    %c0_i32 = arith.constant 0 : i32
    %c0_i32_0 = arith.constant 0 : i32
    return %arg0, %c0_i32 : i32, i32
  }
  func.func @transform_2(%arg0: i32) -> (i32, i32) {
    %c0_i32 = arith.constant 0 : i32
    %c0_i32_0 = arith.constant 0 : i32
    %c0_i32_1 = arith.constant 0 : i32
    return %c0_i32, %c0_i32_0 : i32, i32
  }
  func.func @transform_3(%arg0: i32) -> (i32, i32) {
    %c0_i32 = arith.constant 0 : i32
    %c0_i32_0 = arith.constant 0 : i32
    %c0_i32_1 = arith.constant 0 : i32
    return %c0_i32, %c0_i32_0 : i32, i32
  }
  func.func @transform_4(%arg0: i32) -> (i32, i32) {
    %c0_i32 = arith.constant 0 : i32
    %c0_i32_0 = arith.constant 0 : i32
    %c0_i32_1 = arith.constant 0 : i32
    return %c0_i32, %c0_i32_0 : i32, i32
  }
}

module attributes {stable_mosaic.version = 11 : i64} {
  func.func @matmul_act_kernel(%arg0: i32, %arg1: memref<2x2048xbf16, #tpu.memory_space<vmem>>, %arg2: memref<2048x128xbf16, #tpu.memory_space<vmem>>, %arg3: memref<2x128xbf16, #tpu.memory_space<vmem>>) attributes {dimension_semantics = [#tpu.dimension_semantics<parallel>], iteration_bounds = array<i64: 1>, scalar_prefetch = 0 : i64, scratch_operands = 0 : i64, tpu.core_type = #tpu.core_type<tc>, window_params = [{transform_indices = @transform_0, window_bounds = array<i64: 2, 2048>}, {pipeline_mode = #tpu.pipeline_mode<synchronous>, transform_indices = @transform_1, window_bounds = array<i64: 2048, 128>}, {transform_indices = @transform_2, window_bounds = array<i64: 2, 128>}]} {
    %c0 = arith.constant 0 : index
    %c0_0 = arith.constant 0 : index
    %0 = vector.load %arg1[%c0, %c0_0] : memref<2x2048xbf16, #tpu.memory_space<vmem>>, vector<2x2048xbf16>
    %c0_1 = arith.constant 0 : index
    %c0_2 = arith.constant 0 : index
    %1 = vector.load %arg2[%c0_1, %c0_2] : memref<2048x128xbf16, #tpu.memory_space<vmem>>, vector<2048x128xbf16>
    %cst = arith.constant dense<0.000000e+00> : vector<2x128xf32>
    %2 = tpu.matmul %0, %1, %cst {dimension_numbers = #tpu.dot_dimension_numbers<[1], [0], [0], [1], [0, 0, 1, 1], [], []>} : vector<2x2048xbf16>, vector<2048x128xbf16>, vector<2x128xf32> -> vector<2x128xf32>
    %cst_3 = arith.constant 0.000000e+00 : f32
    %3 = vector.broadcast %cst_3 : f32 to vector<2x128xf32>
    %4 = arith.subf %3, %2 : vector<2x128xf32>
    %5 = math.exp %4 : vector<2x128xf32>
    %cst_4 = arith.constant 1.000000e+00 : f32
    %6 = vector.broadcast %cst_4 : f32 to vector<2x128xf32>
    %7 = arith.addf %6, %5 : vector<2x128xf32>
    %8 = tpu.reciprocal %7 {approx = true} : vector<2x128xf32> -> vector<2x128xf32>
    %cst_5 = arith.constant 0.000000e+00 : f32
    %9 = vector.broadcast %cst_5 : f32 to vector<2x128xf32>
    %10 = arith.maximumf %8, %9 : vector<2x128xf32>
    %cst_6 = arith.constant 1.000000e+00 : f32
    %11 = vector.broadcast %cst_6 : f32 to vector<2x128xf32>
    %12 = arith.minimumf %10, %11 : vector<2x128xf32>
    %13 = arith.truncf %12 : vector<2x128xf32> to vector<2x128xbf16>
    %c0_7 = arith.constant 0 : index
    %c0_8 = arith.constant 0 : index
    %14 = vector.load %arg3[%c0_7, %c0_8] : memref<2x128xbf16, #tpu.memory_space<vmem>>, vector<2x128xbf16>
    tpu.vector_store %arg3[%c0_7, %c0_8], %13 {strides = array<i32>} : memref<2x128xbf16, #tpu.memory_space<vmem>>, vector<2x128xbf16>,
    return
  }
  func.func @transform_0(%arg0: i32) -> (i32, i32) {
    %c0_i32 = arith.constant 0 : i32
    %c0_i32_0 = arith.constant 0 : i32
    return %arg0, %c0_i32 : i32, i32
  }
  func.func @transform_1(%arg0: i32) -> (i32, i32) {
    %c0_i32 = arith.constant 0 : i32
    %c0_i32_0 = arith.constant 0 : i32
    %c0_i32_1 = arith.constant 0 : i32
    return %c0_i32, %c0_i32_0 : i32, i32
  }
  func.func @transform_2(%arg0: i32) -> (i32, i32) {
    %c0_i32 = arith.constant 0 : i32
    %c0_i32_0 = arith.constant 0 : i32
    return %arg0, %c0_i32 : i32, i32
  }
}

</mosaic_0001>

<llo_original>
// kernel: discriminator_forward.5
$region0: #{discriminator_forward.5}
  #allocation0 [shape = 'u32[]', space=smem, size = 0x4, offset = 0x4, fixed_abs, tag = 'smem constant byte address 0x4 - core index']
  #allocation1 [shape = 'u32[72,128]{1,0:T(1,128)}', space=vmem, size = 0x9000, scoped, tag = 'internal scratch']
  %s0 = inlined_call_operand.vmem [shape: bf16[2048,48], index: 0, kind: input, shape index: {}]
  %s1 = inlined_call_operand.vmem [shape: bf16[48,128], index: 1, kind: input, shape index: {}]
  %s2 = inlined_call_operand.vmem [shape: bf16[2048,128], index: 2, kind: output, shape index: {}]
  %s3 = sld [smem:[#allocation0]]
  $region18: #{discriminator_forward.5} parent=0
    _
  %s5 = ssub.s32 1, %s3
  %s6 = scalar_select 0, %s5, %s3
  // Predicated region
  $region2: #{discriminator_forward.5} parent=0 // pred_check
    _
  $region3: #{discriminator_forward.5} parent=0 // pred_check_branch
    %8 = sbr.rel (0) target = $region5
  $region4: #{discriminator_forward.5} parent=0 // pred_region
    _
  $region5: #{discriminator_forward.5} parent=0 // pred_fallthru
    _
  // Predicated region
  $region6: #{discriminator_forward.5} parent=0 // pred_check
    _
  $region7: #{discriminator_forward.5} parent=0 // pred_check_branch
    %10 = sbr.rel (0) target = $region9
  $region8: #{discriminator_forward.5} parent=0 // pred_region
    _
  $region9: #{discriminator_forward.5} parent=0 // pred_fallthru
    _
  %v12 = vld [vmem:[%s0] sm:$0xf]
  %v13 = vld [vmem:[%s0 + $0x4] sm:$0xf]
  %v14 = vld [vmem:[%s0 + $0x8] sm:$0xf]
  %v15 = vld [vmem:[%s0 + $0xc] sm:$0xf]
  %v16 = vld [vmem:[%s0 + $0x10] sm:$0xf]
  %v17 = vld [vmem:[%s0 + $0x14] sm:$0xf]
  %v18 = vld [vmem:[%s0 + $0x18] sm:$0xf]
  %v19 = vld [vmem:[%s0 + $0x1c] sm:$0xf]
  %v20 = vld [vmem:[%s0 + $0x20] sm:$0xf]
  %v21 = vld [vmem:[%s0 + $0x24] sm:$0xf]
  %v22 = vld [vmem:[%s0 + $0x28] sm:$0xf]
  %v23 = vld [vmem:[%s0 + $0x2c] sm:$0xf]
  %v24 = vld [vmem:[%s0 + $0x30] sm:$0xf]
  %v25 = vld [vmem:[%s0 + $0x34] sm:$0xf]
  %v26 = vld [vmem:[%s0 + $0x38] sm:$0xf]
  %v27 = vld [vmem:[%s0 + $0x3c] sm:$0xf]
  %v28 = vld [vmem:[%s0 + $0x40] sm:$0xf]
  %v29 = vld [vmem:[%s0 + $0x44] sm:$0xf]
  %v30 = vld [vmem:[%s0 + $0x48] sm:$0xf]
  %v31 = vld [vmem:[%s0 + $0x4c] sm:$0xf]
  %v32 = vld [vmem:[%s0 + $0x50] sm:$0xf]
  %v33 = vld [vmem:[%s0 + $0x54] sm:$0xf]
  %v34 = vld [vmem:[%s0 + $0x58] sm:$0xf]
  %v35 = vld [vmem:[%s0 + $0x5c] sm:$0xf]
  %v36 = vld [vmem:[%s0 + $0x60] sm:$0xf]
  %v37 = vld [vmem:[%s0 + $0x64] sm:$0xf]
  %v38 = vld [vmem:[%s0 + $0x68] sm:$0xf]
  %v39 = vld [vmem:[%s0 + $0x6c] sm:$0xf]
  %v40 = vld [vmem:[%s0 + $0x70] sm:$0xf]
  %v41 = vld [vmem:[%s0 + $0x74] sm:$0xf]
  %v42 = vld [vmem:[%s0 + $0x78] sm:$0xf]
  %v43 = vld [vmem:[%s0 + $0x7c] sm:$0xf]
  %v44 = vld [vmem:[%s0 + $0x80] sm:$0xf]
  %v45 = vld [vmem:[%s0 + $0x84] sm:$0xf]
  %v46 = vld [vmem:[%s0 + $0x88] sm:$0xf]
  %v47 = vld [vmem:[%s0 + $0x8c] sm:$0xf]
  %v48 = vld [vmem:[%s0 + $0x90] sm:$0xf]
  %v49 = vld [vmem:[%s0 + $0x94] sm:$0xf]
  %v50 = vld [vmem:[%s0 + $0x98] sm:$0xf]
  %v51 = vld [vmem:[%s0 + $0x9c] sm:$0xf]
  %v52 = vld [vmem:[%s0 + $0xa0] sm:$0xf]
  %v53 = vld [vmem:[%s0 + $0xa4] sm:$0xf]
  %v54 = vld [vmem:[%s0 + $0xa8] sm:$0xf]
  %v55 = vld [vmem:[%s0 + $0xac] sm:$0xf]
  %v56 = vld [vmem:[%s0 + $0xb0] sm:$0xf]
  %v57 = vld [vmem:[%s0 + $0xb4] sm:$0xf]
  %v58 = vld [vmem:[%s0 + $0xb8] sm:$0xf]
  %v59 = vld [vmem:[%s0 + $0xbc] sm:$0xf]
  %v60 = vld [vmem:[%s0 + $0xc0] sm:$0xf]
  %v61 = vld [vmem:[%s0 + $0xc4] sm:$0xf]
  %v62 = vld [vmem:[%s0 + $0xc8] sm:$0xf]
  %v63 = vld [vmem:[%s0 + $0xcc] sm:$0xf]
  %v64 = vld [vmem:[%s0 + $0xd0] sm:$0xf]
  %v65 = vld [vmem:[%s0 + $0xd4] sm:$0xf]
  %v66 = vld [vmem:[%s0 + $0xd8] sm:$0xf]
  %v67 = vld [vmem:[%s0 + $0xdc] sm:$0xf]
  %v68 = vld [vmem:[%s0 + $0xe0] sm:$0xf]
  %v69 = vld [vmem:[%s0 + $0xe4] sm:$0xf]
  %v70 = vld [vmem:[%s0 + $0xe8] sm:$0xf]
  %v71 = vld [vmem:[%s0 + $0xec] sm:$0xf]
  %v72 = vld [vmem:[%s0 + $0xf0] sm:$0xf]
  %v73 = vld [vmem:[%s0 + $0xf4] sm:$0xf]
  %v74 = vld [vmem:[%s0 + $0xf8] sm:$0xf]
  %v75 = vld [vmem:[%s0 + $0xfc] sm:$0xf]
  %v76 = vld [vmem:[%s0 + $0x100] sm:$0xf]
  %v77 = vld [vmem:[%s0 + $0x104] sm:$0xf]
  %v78 = vld [vmem:[%s0 + $0x108] sm:$0xf]
  %v79 = vld [vmem:[%s0 + $0x10c] sm:$0xf]
  %v80 = vld [vmem:[%s0 + $0x110] sm:$0xf]
  %v81 = vld [vmem:[%s0 + $0x114] sm:$0xf]
  %v82 = vld [vmem:[%s0 + $0x118] sm:$0xf]
  %v83 = vld [vmem:[%s0 + $0x11c] sm:$0xf]
  %v84 = vld [vmem:[%s0 + $0x120] sm:$0xf]
  %v85 = vld [vmem:[%s0 + $0x124] sm:$0xf]
  %v86 = vld [vmem:[%s0 + $0x128] sm:$0xf]
  %v87 = vld [vmem:[%s0 + $0x12c] sm:$0xf]
  %v88 = vld [vmem:[%s0 + $0x130] sm:$0xf]
  %v89 = vld [vmem:[%s0 + $0x134] sm:$0xf]
  %v90 = vld [vmem:[%s0 + $0x138] sm:$0xf]
  %v91 = vld [vmem:[%s0 + $0x13c] sm:$0xf]
  %v92 = vld [vmem:[%s0 + $0x140] sm:$0xf]
  %v93 = vld [vmem:[%s0 + $0x144] sm:$0xf]
  %v94 = vld [vmem:[%s0 + $0x148] sm:$0xf]
  %v95 = vld [vmem:[%s0 + $0x14c] sm:$0xf]
  %v96 = vld [vmem:[%s0 + $0x150] sm:$0xf]
  %v97 = vld [vmem:[%s0 + $0x154] sm:$0xf]
  %v98 = vld [vmem:[%s0 + $0x158] sm:$0xf]
  %v99 = vld [vmem:[%s0 + $0x15c] sm:$0xf]
  %v100 = vld [vmem:[%s0 + $0x160] sm:$0xf]
  %v101 = vld [vmem:[%s0 + $0x164] sm:$0xf]
  %v102 = vld [vmem:[%s0 + $0x168] sm:$0xf]
  %v103 = vld [vmem:[%s0 + $0x16c] sm:$0xf]
  %v104 = vld [vmem:[%s0 + $0x170] sm:$0xf]
  %v105 = vld [vmem:[%s0 + $0x174] sm:$0xf]
  %v106 = vld [vmem:[%s0 + $0x178] sm:$0xf]
  %v107 = vld [vmem:[%s0 + $0x17c] sm:$0xf]
  %v108 = vld [vmem:[%s0 + $0x180] sm:$0xf]
  %v109 = vld [vmem:[%s0 + $0x184] sm:$0xf]
  %v110 = vld [vmem:[%s0 + $0x188] sm:$0xf]
  %v111 = vld [vmem:[%s0 + $0x18c] sm:$0xf]
  %v112 = vld [vmem:[%s0 + $0x190] sm:$0xf]
  %v113 = vld [vmem:[%s0 + $0x194] sm:$0xf]
  %v114 = vld [vmem:[%s0 + $0x198] sm:$0xf]
  %v115 = vld [vmem:[%s0 + $0x19c] sm:$0xf]
  %v116 = vld [vmem:[%s0 + $0x1a0] sm:$0xf]
  %v117 = vld [vmem:[%s0 + $0x1a4] sm:$0xf]
  %v118 = vld [vmem:[%s0 + $0x1a8] sm:$0xf]
  %v119 = vld [vmem:[%s0 + $0x1ac] sm:$0xf]
  %v120 = vld [vmem:[%s0 + $0x1b0] sm:$0xf]
  %v121 = vld [vmem:[%s0 + $0x1b4] sm:$0xf]
  %v122 = vld [vmem:[%s0 + $0x1b8] sm:$0xf]
  %v123 = vld [vmem:[%s0 + $0x1bc] sm:$0xf]
  %v124 = vld [vmem:[%s0 + $0x1c0] sm:$0xf]
  %v125 = vld [vmem:[%s0 + $0x1c4] sm:$0xf]
  %v126 = vld [vmem:[%s0 + $0x1c8] sm:$0xf]
  %v127 = vld [vmem:[%s0 + $0x1cc] sm:$0xf]
  %v128 = vld [vmem:[%s0 + $0x1d0] sm:$0xf]
  %v129 = vld [vmem:[%s0 + $0x1d4] sm:$0xf]
  %v130 = vld [vmem:[%s0 + $0x1d8] sm:$0xf]
  %v131 = vld [vmem:[%s0 + $0x1dc] sm:$0xf]
  %v132 = vld [vmem:[%s0 + $0x1e0] sm:$0xf]
  %v133 = vld [vmem:[%s0 + $0x1e4] sm:$0xf]
  %v134 = vld [vmem:[%s0 + $0x1e8] sm:$0xf]
  %v135 = vld [vmem:[%s0 + $0x1ec] sm:$0xf]
  %v136 = vld [vmem:[%s0 + $0x1f0] sm:$0xf]
  %v137 = vld [vmem:[%s0 + $0x1f4] sm:$0xf]
  %v138 = vld [vmem:[%s0 + $0x1f8] sm:$0xf]
  %v139 = vld [vmem:[%s0 + $0x1fc] sm:$0xf]
  %v140 = vld [vmem:[%s0 + $0x200] sm:$0xf]
  %v141 = vld [vmem:[%s0 + $0x204] sm:$0xf]
  %v142 = vld [vmem:[%s0 + $0x208] sm:$0xf]
  %v143 = vld [vmem:[%s0 + $0x20c] sm:$0xf]
  %v144 = vld [vmem:[%s0 + $0x210] sm:$0xf]
  %v145 = vld [vmem:[%s0 + $0x214] sm:$0xf]
  %v146 = vld [vmem:[%s0 + $0x218] sm:$0xf]
  %v147 = vld [vmem:[%s0 + $0x21c] sm:$0xf]
  %v148 = vld [vmem:[%s0 + $0x220] sm:$0xf]
  %v149 = vld [vmem:[%s0 + $0x224] sm:$0xf]
  %v150 = vld [vmem:[%s0 + $0x228] sm:$0xf]
  %v151 = vld [vmem:[%s0 + $0x22c] sm:$0xf]
  %v152 = vld [vmem:[%s0 + $0x230] sm:$0xf]
  %v153 = vld [vmem:[%s0 + $0x234] sm:$0xf]
  %v154 = vld [vmem:[%s0 + $0x238] sm:$0xf]
  %v155 = vld [vmem:[%s0 + $0x23c] sm:$0xf]
  %v156 = vld [vmem:[%s0 + $0x240] sm:$0xf]
  %v157 = vld [vmem:[%s0 + $0x244] sm:$0xf]
  %v158 = vld [vmem:[%s0 + $0x248] sm:$0xf]
  %v159 = vld [vmem:[%s0 + $0x24c] sm:$0xf]
  %v160 = vld [vmem:[%s0 + $0x250] sm:$0xf]
  %v161 = vld [vmem:[%s0 + $0x254] sm:$0xf]
  %v162 = vld [vmem:[%s0 + $0x258] sm:$0xf]
  %v163 = vld [vmem:[%s0 + $0x25c] sm:$0xf]
  %v164 = vld [vmem:[%s0 + $0x260] sm:$0xf]
  %v165 = vld [vmem:[%s0 + $0x264] sm:$0xf]
  %v166 = vld [vmem:[%s0 + $0x268] sm:$0xf]
  %v167 = vld [vmem:[%s0 + $0x26c] sm:$0xf]
  %v168 = vld [vmem:[%s0 + $0x270] sm:$0xf]
  %v169 = vld [vmem:[%s0 + $0x274] sm:$0xf]
  %v170 = vld [vmem:[%s0 + $0x278] sm:$0xf]
  %v171 = vld [vmem:[%s0 + $0x27c] sm:$0xf]
  %v172 = vld [vmem:[%s0 + $0x280] sm:$0xf]
  %v173 = vld [vmem:[%s0 + $0x284] sm:$0xf]
  %v174 = vld [vmem:[%s0 + $0x288] sm:$0xf]
  %v175 = vld [vmem:[%s0 + $0x28c] sm:$0xf]
  %v176 = vld [vmem:[%s0 + $0x290] sm:$0xf]
  %v177 = vld [vmem:[%s0 + $0x294] sm:$0xf]
  %v178 = vld [vmem:[%s0 + $0x298] sm:$0xf]
  %v179 = vld [vmem:[%s0 + $0x29c] sm:$0xf]
  %v180 = vld [vmem:[%s0 + $0x2a0] sm:$0xf]
  %v181 = vld [vmem:[%s0 + $0x2a4] sm:$0xf]
  %v182 = vld [vmem:[%s0 + $0x2a8] sm:$0xf]
  %v183 = vld [vmem:[%s0 + $0x2ac] sm:$0xf]
  %v184 = vld [vmem:[%s0 + $0x2b0] sm:$0xf]
  %v185 = vld [vmem:[%s0 + $0x2b4] sm:$0xf]
  %v186 = vld [vmem:[%s0 + $0x2b8] sm:$0xf]
  %v187 = vld [vmem:[%s0 + $0x2bc] sm:$0xf]
  %v188 = vld [vmem:[%s0 + $0x2c0] sm:$0xf]
  %v189 = vld [vmem:[%s0 + $0x2c4] sm:$0xf]
  %v190 = vld [vmem:[%s0 + $0x2c8] sm:$0xf]
  %v191 = vld [vmem:[%s0 + $0x2cc] sm:$0xf]
  %v192 = vld [vmem:[%s0 + $0x2d0] sm:$0xf]
  %v193 = vld [vmem:[%s0 + $0x2d4] sm:$0xf]
  %v194 = vld [vmem:[%s0 + $0x2d8] sm:$0xf]
  %v195 = vld [vmem:[%s0 + $0x2dc] sm:$0xf]
  %v196 = vld [vmem:[%s0 + $0x2e0] sm:$0xf]
  %v197 = vld [vmem:[%s0 + $0x2e4] sm:$0xf]
  %v198 = vld [vmem:[%s0 + $0x2e8] sm:$0xf]
  %v199 = vld [vmem:[%s0 + $0x2ec] sm:$0xf]
  %v200 = vld [vmem:[%s0 + $0x2f0] sm:$0xf]
  %v201 = vld [vmem:[%s0 + $0x2f4] sm:$0xf]
  %v202 = vld [vmem:[%s0 + $0x2f8] sm:$0xf]
  %v203 = vld [vmem:[%s0 + $0x2fc] sm:$0xf]
  %v204 = vld [vmem:[%s0 + $0x300] sm:$0xf]
  %v205 = vld [vmem:[%s0 + $0x304] sm:$0xf]
  %v206 = vld [vmem:[%s0 + $0x308] sm:$0xf]
  %v207 = vld [vmem:[%s0 + $0x30c] sm:$0xf]
  %v208 = vld [vmem:[%s0 + $0x310] sm:$0xf]
  %v209 = vld [vmem:[%s0 + $0x314] sm:$0xf]
  %v210 = vld [vmem:[%s0 + $0x318] sm:$0xf]
  %v211 = vld [vmem:[%s0 + $0x31c] sm:$0xf]
  %v212 = vld [vmem:[%s0 + $0x320] sm:$0xf]
  %v213 = vld [vmem:[%s0 + $0x324] sm:$0xf]
  %v214 = vld [vmem:[%s0 + $0x328] sm:$0xf]
  %v215 = vld [vmem:[%s0 + $0x32c] sm:$0xf]
  %v216 = vld [vmem:[%s0 + $0x330] sm:$0xf]
  %v217 = vld [vmem:[%s0 + $0x334] sm:$0xf]
  %v218 = vld [vmem:[%s0 + $0x338] sm:$0xf]
  %v219 = vld [vmem:[%s0 + $0x33c] sm:$0xf]
  %v220 = vld [vmem:[%s0 + $0x340] sm:$0xf]
  %v221 = vld [vmem:[%s0 + $0x344] sm:$0xf]
  %v222 = vld [vmem:[%s0 + $0x348] sm:$0xf]
  %v223 = vld [vmem:[%s0 + $0x34c] sm:$0xf]
  %v224 = vld [vmem:[%s0 + $0x350] sm:$0xf]
  %v225 = vld [vmem:[%s0 + $0x354] sm:$0xf]
  %v226 = vld [vmem:[%s0 + $0x358] sm:$0xf]
  %v227 = vld [vmem:[%s0 + $0x35c] sm:$0xf]
  %v228 = vld [vmem:[%s0 + $0x360] sm:$0xf]
  %v229 = vld [vmem:[%s0 + $0x364] sm:$0xf]
  %v230 = vld [vmem:[%s0 + $0x368] sm:$0xf]
  %v231 = vld [vmem:[%s0 + $0x36c] sm:$0xf]
  %v232 = vld [vmem:[%s0 + $0x370] sm:$0xf]
  %v233 = vld [vmem:[%s0 + $0x374] sm:$0xf]
  %v234 = vld [vmem:[%s0 + $0x378] sm:$0xf]
  %v235 = vld [vmem:[%s0 + $0x37c] sm:$0xf]
  %v236 = vld [vmem:[%s0 + $0x380] sm:$0xf]
  %v237 = vld [vmem:[%s0 + $0x384] sm:$0xf]
  %v238 = vld [vmem:[%s0 + $0x388] sm:$0xf]
  %v239 = vld [vmem:[%s0 + $0x38c] sm:$0xf]
  %v240 = vld [vmem:[%s0 + $0x390] sm:$0xf]
  %v241 = vld [vmem:[%s0 + $0x394] sm:$0xf]
  %v242 = vld [vmem:[%s0 + $0x398] sm:$0xf]
  %v243 = vld [vmem:[%s0 + $0x39c] sm:$0xf]
  %v244 = vld [vmem:[%s0 + $0x3a0] sm:$0xf]
  %v245 = vld [vmem:[%s0 + $0x3a4] sm:$0xf]
  %v246 = vld [vmem:[%s0 + $0x3a8] sm:$0xf]
  %v247 = vld [vmem:[%s0 + $0x3ac] sm:$0xf]
  %v248 = vld [vmem:[%s0 + $0x3b0] sm:$0xf]
  %v249 = vld [vmem:[%s0 + $0x3b4] sm:$0xf]
  %v250 = vld [vmem:[%s0 + $0x3b8] sm:$0xf]
  %v251 = vld [vmem:[%s0 + $0x3bc] sm:$0xf]
  %v252 = vld [vmem:[%s0 + $0x3c0] sm:$0xf]
  %v253 = vld [vmem:[%s0 + $0x3c4] sm:$0xf]
  %v254 = vld [vmem:[%s0 + $0x3c8] sm:$0xf]
  %v255 = vld [vmem:[%s0 + $0x3cc] sm:$0xf]
  %v256 = vld [vmem:[%s0 + $0x3d0] sm:$0xf]
  %v257 = vld [vmem:[%s0 + $0x3d4] sm:$0xf]
  %v258 = vld [vmem:[%s0 + $0x3d8] sm:$0xf]
  %v259 = vld [vmem:[%s0 + $0x3dc] sm:$0xf]
  %v260 = vld [vmem:[%s0 + $0x3e0] sm:$0xf]
  %v261 = vld [vmem:[%s0 + $0x3e4] sm:$0xf]
  %v262 = vld [vmem:[%s0 + $0x3e8] sm:$0xf]
  %v263 = vld [vmem:[%s0 + $0x3ec] sm:$0xf]
  %v264 = vld [vmem:[%s0 + $0x3f0] sm:$0xf]
  %v265 = vld [vmem:[%s0 + $0x3f4] sm:$0xf]
  %v266 = vld [vmem:[%s0 + $0x3f8] sm:$0xf]
  %v267 = vld [vmem:[%s0 + $0x3fc] sm:$0xf]
  %v268 = vld [vmem:[%s1] sm:$0xf]
  %v269 = vld [vmem:[%s1 + $0x4] sm:$0xf]
  %v270 = vld [vmem:[%s1 + $0x8] sm:$0xf]
  %v271 = vld [vmem:[%s1 + $0xc] sm:$0xf]
  %v272 = vld [vmem:[%s1 + $0x10] sm:$0xf]
  %v273 = vld [vmem:[%s1 + $0x14] sm:$0xf]
  %v530 = vunpack.c.l.b16 %v12
  %v531 = vunpack.c.l.b16 %v13
  %v532 = vunpack.c.l.b16 %v14
  %v533 = vunpack.c.l.b16 %v15
  %v534 = vunpack.c.l.b16 %v16
  %v535 = vunpack.c.l.b16 %v17
  %v536 = vunpack.c.l.b16 %v18
  %v537 = vunpack.c.l.b16 %v19
  %v538 = vunpack.c.l.b16 %v20
  %v539 = vunpack.c.l.b16 %v21
  %v540 = vunpack.c.l.b16 %v22
  %v541 = vunpack.c.l.b16 %v23
  %v542 = vunpack.c.l.b16 %v24
  %v543 = vunpack.c.l.b16 %v25
  %v544 = vunpack.c.l.b16 %v26
  %v545 = vunpack.c.l.b16 %v27
  %v546 = vunpack.c.l.b16 %v28
  %v547 = vunpack.c.l.b16 %v29
  %v548 = vunpack.c.l.b16 %v30
  %v549 = vunpack.c.l.b16 %v31
  %v550 = vunpack.c.l.b16 %v32
  %v551 = vunpack.c.l.b16 %v33
  %v552 = vunpack.c.l.b16 %v34
  %v553 = vunpack.c.l.b16 %v35
  %v554 = vunpack.c.l.b16 %v36
  %v555 = vunpack.c.l.b16 %v37
  %v556 = vunpack.c.l.b16 %v38
  %v557 = vunpack.c.l.b16 %v39
  %v558 = vunpack.c.l.b16 %v40
  %v559 = vunpack.c.l.b16 %v41
  %v560 = vunpack.c.l.b16 %v42
  %v561 = vunpack.c.l.b16 %v43
  %v562 = vunpack.c.l.b16 %v44
  %v563 = vunpack.c.l.b16 %v45
  %v564 = vunpack.c.l.b16 %v46
  %v565 = vunpack.c.l.b16 %v47
  %v566 = vunpack.c.l.b16 %v48
  %v567 = vunpack.c.l.b16 %v49
  %v568 = vunpack.c.l.b16 %v50
  %v569 = vunpack.c.l.b16 %v51
  %v570 = vunpack.c.l.b16 %v52
  %v571 = vunpack.c.l.b16 %v53
  %v572 = vunpack.c.l.b16 %v54
  %v573 = vunpack.c.l.b16 %v55
  %v574 = vunpack.c.l.b16 %v56
  %v575 = vunpack.c.l.b16 %v57
  %v576 = vunpack.c.l.b16 %v58
  %v577 = vunpack.c.l.b16 %v59
  %v578 = vunpack.c.l.b16 %v60
  %v579 = vunpack.c.l.b16 %v61
  %v580 = vunpack.c.l.b16 %v62
  %v581 = vunpack.c.l.b16 %v63
  %v582 = vunpack.c.l.b16 %v64
  %v583 = vunpack.c.l.b16 %v65
  %v584 = vunpack.c.l.b16 %v66
  %v585 = vunpack.c.l.b16 %v67
  %v586 = vunpack.c.l.b16 %v68
  %v587 = vunpack.c.l.b16 %v69
  %v588 = vunpack.c.l.b16 %v70
  %v589 = vunpack.c.l.b16 %v71
  %v590 = vunpack.c.l.b16 %v72
  %v591 = vunpack.c.l.b16 %v73
  %v592 = vunpack.c.l.b16 %v74
  %v593 = vunpack.c.l.b16 %v75
  %v594 = vunpack.c.l.b16 %v76
  %v595 = vunpack.c.l.b16 %v77
  %v596 = vunpack.c.l.b16 %v78
  %v597 = vunpack.c.l.b16 %v79
  %v598 = vunpack.c.l.b16 %v80
  %v599 = vunpack.c.l.b16 %v81
  %v600 = vunpack.c.l.b16 %v82
  %v601 = vunpack.c.l.b16 %v83
  %v602 = vunpack.c.l.b16 %v84
  %v603 = vunpack.c.l.b16 %v85
  %v604 = vunpack.c.l.b16 %v86
  %v605 = vunpack.c.l.b16 %v87
  %v606 = vunpack.c.l.b16 %v88
  %v607 = vunpack.c.l.b16 %v89
  %v608 = vunpack.c.l.b16 %v90
  %v609 = vunpack.c.l.b16 %v91
  %v610 = vunpack.c.l.b16 %v92
  %v611 = vunpack.c.l.b16 %v93
  %v612 = vunpack.c.l.b16 %v94
  %v613 = vunpack.c.l.b16 %v95
  %v614 = vunpack.c.l.b16 %v96
  %v615 = vunpack.c.l.b16 %v97
  %v616 = vunpack.c.l.b16 %v98
  %v617 = vunpack.c.l.b16 %v99
  %v618 = vunpack.c.l.b16 %v100
  %v619 = vunpack.c.l.b16 %v101
  %v620 = vunpack.c.l.b16 %v102
  %v621 = vunpack.c.l.b16 %v103
  %v622 = vunpack.c.l.b16 %v104
  %v623 = vunpack.c.l.b16 %v105
  %v624 = vunpack.c.l.b16 %v106
  %v625 = vunpack.c.l.b16 %v107
  %v626 = vunpack.c.l.b16 %v108
  %v627 = vunpack.c.l.b16 %v109
  %v628 = vunpack.c.l.b16 %v110
  %v629 = vunpack.c.l.b16 %v111
  %v630 = vunpack.c.l.b16 %v112
  %v631 = vunpack.c.l.b16 %v113
  %v632 = vunpack.c.l.b16 %v114
  %v633 = vunpack.c.l.b16 %v115
  %v634 = vunpack.c.l.b16 %v116
  %v635 = vunpack.c.l.b16 %v117
  %v636 = vunpack.c.l.b16 %v118
  %v637 = vunpack.c.l.b16 %v119
  %v638 = vunpack.c.l.b16 %v120
  %v639 = vunpack.c.l.b16 %v121
  %v640 = vunpack.c.l.b16 %v122
  %v641 = vunpack.c.l.b16 %v123
  %v642 = vunpack.c.l.b16 %v124
  %v643 = vunpack.c.l.b16 %v125
  %v644 = vunpack.c.l.b16 %v126
  %v645 = vunpack.c.l.b16 %v127
  %v646 = vunpack.c.l.b16 %v128
  %v647 = vunpack.c.l.b16 %v129
  %v648 = vunpack.c.l.b16 %v130
  %v649 = vunpack.c.l.b16 %v131
  %v650 = vunpack.c.l.b16 %v132
  %v651 = vunpack.c.l.b16 %v133
  %v652 = vunpack.c.l.b16 %v134
  %v653 = vunpack.c.l.b16 %v135
  %v654 = vunpack.c.l.b16 %v136
  %v655 = vunpack.c.l.b16 %v137
  %v656 = vunpack.c.l.b16 %v138
  %v657 = vunpack.c.l.b16 %v139
  %v658 = vunpack.c.l.b16 %v140
  %v659 = vunpack.c.l.b16 %v141
  %v660 = vunpack.c.l.b16 %v142
  %v661 = vunpack.c.l.b16 %v143
  %v662 = vunpack.c.l.b16 %v144
  %v663 = vunpack.c.l.b16 %v145
  %v664 = vunpack.c.l.b16 %v146
  %v665 = vunpack.c.l.b16 %v147
  %v666 = vunpack.c.l.b16 %v148
  %v667 = vunpack.c.l.b16 %v149
  %v668 = vunpack.c.l.b16 %v150
  %v669 = vunpack.c.l.b16 %v151
  %v670 = vunpack.c.l.b16 %v152
  %v671 = vunpack.c.l.b16 %v153
  %v672 = vunpack.c.l.b16 %v154
  %v673 = vunpack.c.l.b16 %v155
  %v674 = vunpack.c.l.b16 %v156
  %v675 = vunpack.c.l.b16 %v157
  %v676 = vunpack.c.l.b16 %v158
  %v677 = vunpack.c.l.b16 %v159
  %v678 = vunpack.c.l.b16 %v160
  %v679 = vunpack.c.l.b16 %v161
  %v680 = vunpack.c.l.b16 %v162
  %v681 = vunpack.c.l.b16 %v163
  %v682 = vunpack.c.l.b16 %v164
  %v683 = vunpack.c.l.b16 %v165
  %v684 = vunpack.c.l.b16 %v166
  %v685 = vunpack.c.l.b16 %v167
  %v686 = vunpack.c.l.b16 %v168
  %v687 = vunpack.c.l.b16 %v169
  %v688 = vunpack.c.l.b16 %v170
  %v689 = vunpack.c.l.b16 %v171
  %v690 = vunpack.c.l.b16 %v172
  %v691 = vunpack.c.l.b16 %v173
  %v692 = vunpack.c.l.b16 %v174
  %v693 = vunpack.c.l.b16 %v175
  %v694 = vunpack.c.l.b16 %v176
  %v695 = vunpack.c.l.b16 %v177
  %v696 = vunpack.c.l.b16 %v178
  %v697 = vunpack.c.l.b16 %v179
  %v698 = vunpack.c.l.b16 %v180
  %v699 = vunpack.c.l.b16 %v181
  %v700 = vunpack.c.l.b16 %v182
  %v701 = vunpack.c.l.b16 %v183
  %v702 = vunpack.c.l.b16 %v184
  %v703 = vunpack.c.l.b16 %v185
  %v704 = vunpack.c.l.b16 %v186
  %v705 = vunpack.c.l.b16 %v187
  %v706 = vunpack.c.l.b16 %v188
  %v707 = vunpack.c.l.b16 %v189
  %v708 = vunpack.c.l.b16 %v190
  %v709 = vunpack.c.l.b16 %v191
  %v710 = vunpack.c.l.b16 %v192
  %v711 = vunpack.c.l.b16 %v193
  %v712 = vunpack.c.l.b16 %v194
  %v713 = vunpack.c.l.b16 %v195
  %v714 = vunpack.c.l.b16 %v196
  %v715 = vunpack.c.l.b16 %v197
  %v716 = vunpack.c.l.b16 %v198
  %v717 = vunpack.c.l.b16 %v199
  %v718 = vunpack.c.l.b16 %v200
  %v719 = vunpack.c.l.b16 %v201
  %v720 = vunpack.c.l.b16 %v202
  %v721 = vunpack.c.l.b16 %v203
  %v722 = vunpack.c.l.b16 %v204
  %v723 = vunpack.c.l.b16 %v205
  %v724 = vunpack.c.l.b16 %v206
  %v725 = vunpack.c.l.b16 %v207
  %v726 = vunpack.c.l.b16 %v208
  %v727 = vunpack.c.l.b16 %v209
  %v728 = vunpack.c.l.b16 %v210
  %v729 = vunpack.c.l.b16 %v211
  %v730 = vunpack.c.l.b16 %v212
  %v731 = vunpack.c.l.b16 %v213
  %v732 = vunpack.c.l.b16 %v214
  %v733 = vunpack.c.l.b16 %v215
  %v734 = vunpack.c.l.b16 %v216
  %v735 = vunpack.c.l.b16 %v217
  %v736 = vunpack.c.l.b16 %v218
  %v737 = vunpack.c.l.b16 %v219
  %v738 = vunpack.c.l.b16 %v220
  %v739 = vunpack.c.l.b16 %v221
  %v740 = vunpack.c.l.b16 %v222
  %v741 = vunpack.c.l.b16 %v223
  %v742 = vunpack.c.l.b16 %v224
  %v743 = vunpack.c.l.b16 %v225
  %v744 = vunpack.c.l.b16 %v226
  %v745 = vunpack.c.l.b16 %v227
  %v746 = vunpack.c.l.b16 %v228
  %v747 = vunpack.c.l.b16 %v229
  %v748 = vunpack.c.l.b16 %v230
  %v749 = vunpack.c.l.b16 %v231
  %v750 = vunpack.c.l.b16 %v232
  %v751 = vunpack.c.l.b16 %v233
  %v752 = vunpack.c.l.b16 %v234
  %v753 = vunpack.c.l.b16 %v235
  %v754 = vunpack.c.l.b16 %v236
  %v755 = vunpack.c.l.b16 %v237
  %v756 = vunpack.c.l.b16 %v238
  %v757 = vunpack.c.l.b16 %v239
  %v758 = vunpack.c.l.b16 %v240
  %v759 = vunpack.c.l.b16 %v241
  %v760 = vunpack.c.l.b16 %v242
  %v761 = vunpack.c.l.b16 %v243
  %v762 = vunpack.c.l.b16 %v244
  %v763 = vunpack.c.l.b16 %v245
  %v764 = vunpack.c.l.b16 %v246
  %v765 = vunpack.c.l.b16 %v247
  %v766 = vunpack.c.l.b16 %v248
  %v767 = vunpack.c.l.b16 %v249
  %v768 = vunpack.c.l.b16 %v250
  %v769 = vunpack.c.l.b16 %v251
  %v770 = vunpack.c.l.b16 %v252
  %v771 = vunpack.c.l.b16 %v253
  %v772 = vunpack.c.l.b16 %v254
  %v773 = vunpack.c.l.b16 %v255
  %v774 = vunpack.c.l.b16 %v256
  %v775 = vunpack.c.l.b16 %v257
  %v776 = vunpack.c.l.b16 %v258
  %v777 = vunpack.c.l.b16 %v259
  %v778 = vunpack.c.l.b16 %v260
  %v779 = vunpack.c.l.b16 %v261
  %v780 = vunpack.c.l.b16 %v262
  %v781 = vunpack.c.l.b16 %v263
  %v782 = vunpack.c.l.b16 %v264
  %v783 = vunpack.c.l.b16 %v265
  %v784 = vunpack.c.l.b16 %v266
  %v785 = vunpack.c.l.b16 %v267
  %v786 = vpack.c.b16 %v531, %v530
  %v787 = vpack.c.b16 %v533, %v532
  %v788 = vpack.c.b16 %v535, %v534
  %v789 = vpack.c.b16 %v537, %v536
  %v790 = vpack.c.b16 %v539, %v538
  %v791 = vpack.c.b16 %v541, %v540
  %v792 = vpack.c.b16 %v543, %v542
  %v793 = vpack.c.b16 %v545, %v544
  %v794 = vpack.c.b16 %v547, %v546
  %v795 = vpack.c.b16 %v549, %v548
  %v796 = vpack.c.b16 %v551, %v550
  %v797 = vpack.c.b16 %v553, %v552
  %v798 = vpack.c.b16 %v555, %v554
  %v799 = vpack.c.b16 %v557, %v556
  %v800 = vpack.c.b16 %v559, %v558
  %v801 = vpack.c.b16 %v561, %v560
  %v802 = vpack.c.b16 %v563, %v562
  %v803 = vpack.c.b16 %v565, %v564
  %v804 = vpack.c.b16 %v567, %v566
  %v805 = vpack.c.b16 %v569, %v568
  %v806 = vpack.c.b16 %v571, %v570
  %v807 = vpack.c.b16 %v573, %v572
  %v808 = vpack.c.b16 %v575, %v574
  %v809 = vpack.c.b16 %v577, %v576
  %v810 = vpack.c.b16 %v579, %v578
  %v811 = vpack.c.b16 %v581, %v580
  %v812 = vpack.c.b16 %v583, %v582
  %v813 = vpack.c.b16 %v585, %v584
  %v814 = vpack.c.b16 %v587, %v586
  %v815 = vpack.c.b16 %v589, %v588
  %v816 = vpack.c.b16 %v591, %v590
  %v817 = vpack.c.b16 %v593, %v592
  %v818 = vpack.c.b16 %v595, %v594
  %v819 = vpack.c.b16 %v597, %v596
  %v820 = vpack.c.b16 %v599, %v598
  %v821 = vpack.c.b16 %v601, %v600
  %v822 = vpack.c.b16 %v603, %v602
  %v823 = vpack.c.b16 %v605, %v604
  %v824 = vpack.c.b16 %v607, %v606
  %v825 = vpack.c.b16 %v609, %v608
  %v826 = vpack.c.b16 %v611, %v610
  %v827 = vpack.c.b16 %v613, %v612
  %v828 = vpack.c.b16 %v615, %v614
  %v829 = vpack.c.b16 %v617, %v616
  %v830 = vpack.c.b16 %v619, %v618
  %v831 = vpack.c.b16 %v621, %v620
  %v832 = vpack.c.b16 %v623, %v622
  %v833 = vpack.c.b16 %v625, %v624
  %v834 = vpack.c.b16 %v627, %v626
  %v835 = vpack.c.b16 %v629, %v628
  %v836 = vpack.c.b16 %v631, %v630
  %v837 = vpack.c.b16 %v633, %v632
  %v838 = vpack.c.b16 %v635, %v634
  %v839 = vpack.c.b16 %v637, %v636
  %v840 = vpack.c.b16 %v639, %v638
  %v841 = vpack.c.b16 %v641, %v640
  %v842 = vpack.c.b16 %v643, %v642
  %v843 = vpack.c.b16 %v645, %v644
  %v844 = vpack.c.b16 %v647, %v646
  %v845 = vpack.c.b16 %v649, %v648
  %v846 = vpack.c.b16 %v651, %v650
  %v847 = vpack.c.b16 %v653, %v652
  %v848 = vpack.c.b16 %v655, %v654
  %v849 = vpack.c.b16 %v657, %v656
  %v850 = vpack.c.b16 %v659, %v658
  %v851 = vpack.c.b16 %v661, %v660
  %v852 = vpack.c.b16 %v663, %v662
  %v853 = vpack.c.b16 %v665, %v664
  %v854 = vpack.c.b16 %v667, %v666
  %v855 = vpack.c.b16 %v669, %v668
  %v856 = vpack.c.b16 %v671, %v670
  %v857 = vpack.c.b16 %v673, %v672
  %v858 = vpack.c.b16 %v675, %v674
  %v859 = vpack.c.b16 %v677, %v676
  %v860 = vpack.c.b16 %v679, %v678
  %v861 = vpack.c.b16 %v681, %v680
  %v862 = vpack.c.b16 %v683, %v682
  %v863 = vpack.c.b16 %v685, %v684
  %v864 = vpack.c.b16 %v687, %v686
  %v865 = vpack.c.b16 %v689, %v688
  %v866 = vpack.c.b16 %v691, %v690
  %v867 = vpack.c.b16 %v693, %v692
  %v868 = vpack.c.b16 %v695, %v694
  %v869 = vpack.c.b16 %v697, %v696
  %v870 = vpack.c.b16 %v699, %v698
  %v871 = vpack.c.b16 %v701, %v700
  %v872 = vpack.c.b16 %v703, %v702
  %v873 = vpack.c.b16 %v705, %v704
  %v874 = vpack.c.b16 %v707, %v706
  %v875 = vpack.c.b16 %v709, %v708
  %v876 = vpack.c.b16 %v711, %v710
  %v877 = vpack.c.b16 %v713, %v712
  %v878 = vpack.c.b16 %v715, %v714
  %v879 = vpack.c.b16 %v717, %v716
  %v880 = vpack.c.b16 %v719, %v718
  %v881 = vpack.c.b16 %v721, %v720
  %v882 = vpack.c.b16 %v723, %v722
  %v883 = vpack.c.b16 %v725, %v724
  %v884 = vpack.c.b16 %v727, %v726
  %v885 = vpack.c.b16 %v729, %v728
  %v886 = vpack.c.b16 %v731, %v730
  %v887 = vpack.c.b16 %v733, %v732
  %v888 = vpack.c.b16 %v735, %v734
  %v889 = vpack.c.b16 %v737, %v736
  %v890 = vpack.c.b16 %v739, %v738
  %v891 = vpack.c.b16 %v741, %v740
  %v892 = vpack.c.b16 %v743, %v742
  %v893 = vpack.c.b16 %v745, %v744
  %v894 = vpack.c.b16 %v747, %v746
  %v895 = vpack.c.b16 %v749, %v748
  %v896 = vpack.c.b16 %v751, %v750
  %v897 = vpack.c.b16 %v753, %v752
  %v898 = vpack.c.b16 %v755, %v754
  %v899 = vpack.c.b16 %v757, %v756
  %v900 = vpack.c.b16 %v759, %v758
  %v901 = vpack.c.b16 %v761, %v760
  %v902 = vpack.c.b16 %v763, %v762
  %v903 = vpack.c.b16 %v765, %v764
  %v904 = vpack.c.b16 %v767, %v766
  %v905 = vpack.c.b16 %v769, %v768
  %v906 = vpack.c.b16 %v771, %v770
  %v907 = vpack.c.b16 %v773, %v772
  %v908 = vpack.c.b16 %v775, %v774
  %v909 = vpack.c.b16 %v777, %v776
  %v910 = vpack.c.b16 %v779, %v778
  %v911 = vpack.c.b16 %v781, %v780
  %v912 = vpack.c.b16 %v783, %v782
  %v913 = vpack.c.b16 %v785, %v784
  %v920 = vunpack.c.l.b16 %v268
  %v921 = vunpack.c.l.b16 %v269
  %v922 = vunpack.c.l.b16 %v270
  %v923 = vunpack.c.l.b16 %v271
  %v924 = vunpack.c.l.b16 %v272
  %v925 = vunpack.c.l.b16 %v273
  %v926 = vpack.c.b16 %v921, %v920
  %v927 = vpack.c.b16 %v923, %v922
  %v928 = vpack.c.b16 %v925, %v924
  %vm932 = vcmask 392192
  %v934 = vsel %vm932, %v786, 0
  %v937 = vsel %vm932, %v787, 0
  %v940 = vsel %vm932, %v788, 0
  %v943 = vsel %vm932, %v789, 0
  %v946 = vsel %vm932, %v790, 0
  %v949 = vsel %vm932, %v791, 0
  %v952 = vsel %vm932, %v792, 0
  %v955 = vsel %vm932, %v793, 0
  %v958 = vsel %vm932, %v794, 0
  %v961 = vsel %vm932, %v795, 0
  %v964 = vsel %vm932, %v796, 0
  %v967 = vsel %vm932, %v797, 0
  %v970 = vsel %vm932, %v798, 0
  %v973 = vsel %vm932, %v799, 0
  %v976 = vsel %vm932, %v800, 0
  %v979 = vsel %vm932, %v801, 0
  %v982 = vsel %vm932, %v802, 0
  %v985 = vsel %vm932, %v803, 0
  %v988 = vsel %vm932, %v804, 0
  %v991 = vsel %vm932, %v805, 0
  %v994 = vsel %vm932, %v806, 0
  %v997 = vsel %vm932, %v807, 0
  %v1000 = vsel %vm932, %v808, 0
  %v1003 = vsel %vm932, %v809, 0
  %v1006 = vsel %vm932, %v810, 0
  %v1009 = vsel %vm932, %v811, 0
  %v1012 = vsel %vm932, %v812, 0
  %v1015 = vsel %vm932, %v813, 0
  %v1018 = vsel %vm932, %v814, 0
  %v1021 = vsel %vm932, %v815, 0
  %v1024 = vsel %vm932, %v816, 0
  %v1027 = vsel %vm932, %v817, 0
  %v1030 = vsel %vm932, %v818, 0
  %v1033 = vsel %vm932, %v819, 0
  %v1036 = vsel %vm932, %v820, 0
  %v1039 = vsel %vm932, %v821, 0
  %v1042 = vsel %vm932, %v822, 0
  %v1045 = vsel %vm932, %v823, 0
  %v1048 = vsel %vm932, %v824, 0
  %v1051 = vsel %vm932, %v825, 0
  %v1054 = vsel %vm932, %v826, 0
  %v1057 = vsel %vm932, %v827, 0
  %v1060 = vsel %vm932, %v828, 0
  %v1063 = vsel %vm932, %v829, 0
  %v1066 = vsel %vm932, %v830, 0
  %v1069 = vsel %vm932, %v831, 0
  %v1072 = vsel %vm932, %v832, 0
  %v1075 = vsel %vm932, %v833, 0
  %v1078 = vsel %vm932, %v834, 0
  %v1081 = vsel %vm932, %v835, 0
  %v1084 = vsel %vm932, %v836, 0
  %v1087 = vsel %vm932, %v837, 0
  %v1090 = vsel %vm932, %v838, 0
  %v1093 = vsel %vm932, %v839, 0
  %v1096 = vsel %vm932, %v840, 0
  %v1099 = vsel %vm932, %v841, 0
  %v1102 = vsel %vm932, %v842, 0
  %v1105 = vsel %vm932, %v843, 0
  %v1108 = vsel %vm932, %v844, 0
  %v1111 = vsel %vm932, %v845, 0
  %v1114 = vsel %vm932, %v846, 0
  %v1117 = vsel %vm932, %v847, 0
  %v1120 = vsel %vm932, %v848, 0
  %v1123 = vsel %vm932, %v849, 0
  %v1126 = vsel %vm932, %v850, 0
  %v1129 = vsel %vm932, %v851, 0
  %v1132 = vsel %vm932, %v852, 0
  %v1135 = vsel %vm932, %v853, 0
  %v1138 = vsel %vm932, %v854, 0
  %v1141 = vsel %vm932, %v855, 0
  %v1144 = vsel %vm932, %v856, 0
  %v1147 = vsel %vm932, %v857, 0
  %v1150 = vsel %vm932, %v858, 0
  %v1153 = vsel %vm932, %v859, 0
  %v1156 = vsel %vm932, %v860, 0
  %v1159 = vsel %vm932, %v861, 0
  %v1162 = vsel %vm932, %v862, 0
  %v1165 = vsel %vm932, %v863, 0
  %v1168 = vsel %vm932, %v864, 0
  %v1171 = vsel %vm932, %v865, 0
  %v1174 = vsel %vm932, %v866, 0
  %v1177 = vsel %vm932, %v867, 0
  %v1180 = vsel %vm932, %v868, 0
  %v1183 = vsel %vm932, %v869, 0
  %v1186 = vsel %vm932, %v870, 0
  %v1189 = vsel %vm932, %v871, 0
  %v1192 = vsel %vm932, %v872, 0
  %v1195 = vsel %vm932, %v873, 0
  %v1198 = vsel %vm932, %v874, 0
  %v1201 = vsel %vm932, %v875, 0
  %v1204 = vsel %vm932, %v876, 0
  %v1207 = vsel %vm932, %v877, 0
  %v1210 = vsel %vm932, %v878, 0
  %v1213 = vsel %vm932, %v879, 0
  %v1216 = vsel %vm932, %v880, 0
  %v1219 = vsel %vm932, %v881, 0
  %v1222 = vsel %vm932, %v882, 0
  %v1225 = vsel %vm932, %v883, 0
  %v1228 = vsel %vm932, %v884, 0
  %v1231 = vsel %vm932, %v885, 0
  %v1234 = vsel %vm932, %v886, 0
  %v1237 = vsel %vm932, %v887, 0
  %v1240 = vsel %vm932, %v888, 0
  %v1243 = vsel %vm932, %v889, 0
  %v1246 = vsel %vm932, %v890, 0
  %v1249 = vsel %vm932, %v891, 0
  %v1252 = vsel %vm932, %v892, 0
  %v1255 = vsel %vm932, %v893, 0
  %v1258 = vsel %vm932, %v894, 0
  %v1261 = vsel %vm932, %v895, 0
  %v1264 = vsel %vm932, %v896, 0
  %v1267 = vsel %vm932, %v897, 0
  %v1270 = vsel %vm932, %v898, 0
  %v1273 = vsel %vm932, %v899, 0
  %v1276 = vsel %vm932, %v900, 0
  %v1279 = vsel %vm932, %v901, 0
  %v1282 = vsel %vm932, %v902, 0
  %v1285 = vsel %vm932, %v903, 0
  %v1288 = vsel %vm932, %v904, 0
  %v1291 = vsel %vm932, %v905, 0
  %v1294 = vsel %vm932, %v906, 0
  %v1297 = vsel %vm932, %v907, 0
  %v1300 = vsel %vm932, %v908, 0
  %v1303 = vsel %vm932, %v909, 0
  %v1306 = vsel %vm932, %v910, 0
  %v1309 = vsel %vm932, %v911, 0
  %v1312 = vsel %vm932, %v912, 0
  %v1315 = vsel %vm932, %v913, 0
  %1317 = vmatpush.bf16.msra.mxu0 0
  %1318 = vmatpush.bf16.msra.mxu0 0
  %1319 = vmatpush.bf16.msra.mxu0 0
  %1320 = vmatpush.bf16.msra.mxu0 0
  %1321 = vmatpush.bf16.msra.mxu0 0
  %1322 = vmatpush.bf16.msra.mxu0 %v928
  %1323 = vmatpush.bf16.msra.mxu0 %v927
  %1324 = vmatpush.bf16.msra.mxu0 %v926
  %1325 = vmatmul.bf16.gmra.mxu0 %v934
  %v1326 = vpop.f32.mrf.mxu0
  %v1327 = vadd.f32 0.0, %v1326
  %v1328 = vpop.f32.mrf.mxu0
  %v1329 = vadd.f32 0.0, %v1328
  %1330 = vmatmul.bf16.gmra.mxu0 %v937
  %v1331 = vpop.f32.mrf.mxu0
  %v1332 = vadd.f32 0.0, %v1331
  %v1333 = vpop.f32.mrf.mxu0
  %v1334 = vadd.f32 0.0, %v1333
  %1335 = vmatmul.bf16.gmra.mxu0 %v940
  %v1336 = vpop.f32.mrf.mxu0
  %v1337 = vadd.f32 0.0, %v1336
  %v1338 = vpop.f32.mrf.mxu0
  %v1339 = vadd.f32 0.0, %v1338
  %1340 = vmatmul.bf16.gmra.mxu0 %v943
  %v1341 = vpop.f32.mrf.mxu0
  %v1342 = vadd.f32 0.0, %v1341
  %v1343 = vpop.f32.mrf.mxu0
  %v1344 = vadd.f32 0.0, %v1343
  %1345 = vmatmul.bf16.gmra.mxu0 %v946
  %v1346 = vpop.f32.mrf.mxu0
  %v1347 = vadd.f32 0.0, %v1346
  %v1348 = vpop.f32.mrf.mxu0
  %v1349 = vadd.f32 0.0, %v1348
  %1350 = vmatmul.bf16.gmra.mxu0 %v949
  %v1351 = vpop.f32.mrf.mxu0
  %v1352 = vadd.f32 0.0, %v1351
  %v1353 = vpop.f32.mrf.mxu0
  %v1354 = vadd.f32 0.0, %v1353
  %1355 = vmatmul.bf16.gmra.mxu0 %v952
  %v1356 = vpop.f32.mrf.mxu0
  %v1357 = vadd.f32 0.0, %v1356
  %v1358 = vpop.f32.mrf.mxu0
  %v1359 = vadd.f32 0.0, %v1358
  %1360 = vmatmul.bf16.gmra.mxu0 %v955
  %v1361 = vpop.f32.mrf.mxu0
  %v1362 = vadd.f32 0.0, %v1361
  %v1363 = vpop.f32.mrf.mxu0
  %v1364 = vadd.f32 0.0, %v1363
  %1365 = vmatmul.bf16.gmra.mxu0 %v958
  %v1366 = vpop.f32.mrf.mxu0
  %v1367 = vadd.f32 0.0, %v1366
  %v1368 = vpop.f32.mrf.mxu0
  %v1369 = vadd.f32 0.0, %v1368
  %1370 = vmatmul.bf16.gmra.mxu0 %v961
  %v1371 = vpop.f32.mrf.mxu0
  %v1372 = vadd.f32 0.0, %v1371
  %v1373 = vpop.f32.mrf.mxu0
  %v1374 = vadd.f32 0.0, %v1373
  %1375 = vmatmul.bf16.gmra.mxu0 %v964
  %v1376 = vpop.f32.mrf.mxu0
  %v1377 = vadd.f32 0.0, %v1376
  %v1378 = vpop.f32.mrf.mxu0
  %v1379 = vadd.f32 0.0, %v1378
  %1380 = vmatmul.bf16.gmra.mxu0 %v967
  %v1381 = vpop.f32.mrf.mxu0
  %v1382 = vadd.f32 0.0, %v1381
  %v1383 = vpop.f32.mrf.mxu0
  %v1384 = vadd.f32 0.0, %v1383
  %1385 = vmatmul.bf16.gmra.mxu0 %v970
  %v1386 = vpop.f32.mrf.mxu0
  %v1387 = vadd.f32 0.0, %v1386
  %v1388 = vpop.f32.mrf.mxu0
  %v1389 = vadd.f32 0.0, %v1388
  %1390 = vmatmul.bf16.gmra.mxu0 %v973
  %v1391 = vpop.f32.mrf.mxu0
  %v1392 = vadd.f32 0.0, %v1391
  %v1393 = vpop.f32.mrf.mxu0
  %v1394 = vadd.f32 0.0, %v1393
  %1395 = vmatmul.bf16.gmra.mxu0 %v976
  %v1396 = vpop.f32.mrf.mxu0
  %v1397 = vadd.f32 0.0, %v1396
  %v1398 = vpop.f32.mrf.mxu0
  %v1399 = vadd.f32 0.0, %v1398
  %1400 = vmatmul.bf16.gmra.mxu0 %v979
  %v1401 = vpop.f32.mrf.mxu0
  %v1402 = vadd.f32 0.0, %v1401
  %v1403 = vpop.f32.mrf.mxu0
  %v1404 = vadd.f32 0.0, %v1403
  %1405 = vmatmul.bf16.gmra.mxu0 %v982
  %v1406 = vpop.f32.mrf.mxu0
  %v1407 = vadd.f32 0.0, %v1406
  %v1408 = vpop.f32.mrf.mxu0
  %v1409 = vadd.f32 0.0, %v1408
  %1410 = vmatmul.bf16.gmra.mxu0 %v985
  %v1411 = vpop.f32.mrf.mxu0
  %v1412 = vadd.f32 0.0, %v1411
  %v1413 = vpop.f32.mrf.mxu0
  %v1414 = vadd.f32 0.0, %v1413
  %1415 = vmatmul.bf16.gmra.mxu0 %v988
  %v1416 = vpop.f32.mrf.mxu0
  %v1417 = vadd.f32 0.0, %v1416
  %v1418 = vpop.f32.mrf.mxu0
  %v1419 = vadd.f32 0.0, %v1418
  %1420 = vmatmul.bf16.gmra.mxu0 %v991
  %v1421 = vpop.f32.mrf.mxu0
  %v1422 = vadd.f32 0.0, %v1421
  %v1423 = vpop.f32.mrf.mxu0
  %v1424 = vadd.f32 0.0, %v1423
  %1425 = vmatmul.bf16.gmra.mxu0 %v994
  %v1426 = vpop.f32.mrf.mxu0
  %v1427 = vadd.f32 0.0, %v1426
  %v1428 = vpop.f32.mrf.mxu0
  %v1429 = vadd.f32 0.0, %v1428
  %1430 = vmatmul.bf16.gmra.mxu0 %v997
  %v1431 = vpop.f32.mrf.mxu0
  %v1432 = vadd.f32 0.0, %v1431
  %v1433 = vpop.f32.mrf.mxu0
  %v1434 = vadd.f32 0.0, %v1433
  %1435 = vmatmul.bf16.gmra.mxu0 %v1000
  %v1436 = vpop.f32.mrf.mxu0
  %v1437 = vadd.f32 0.0, %v1436
  %v1438 = vpop.f32.mrf.mxu0
  %v1439 = vadd.f32 0.0, %v1438
  %1440 = vmatmul.bf16.gmra.mxu0 %v1003
  %v1441 = vpop.f32.mrf.mxu0
  %v1442 = vadd.f32 0.0, %v1441
  %v1443 = vpop.f32.mrf.mxu0
  %v1444 = vadd.f32 0.0, %v1443
  %1445 = vmatmul.bf16.gmra.mxu0 %v1006
  %v1446 = vpop.f32.mrf.mxu0
  %v1447 = vadd.f32 0.0, %v1446
  %v1448 = vpop.f32.mrf.mxu0
  %v1449 = vadd.f32 0.0, %v1448
  %1450 = vmatmul.bf16.gmra.mxu0 %v1009
  %v1451 = vpop.f32.mrf.mxu0
  %v1452 = vadd.f32 0.0, %v1451
  %v1453 = vpop.f32.mrf.mxu0
  %v1454 = vadd.f32 0.0, %v1453
  %1455 = vmatmul.bf16.gmra.mxu0 %v1012
  %v1456 = vpop.f32.mrf.mxu0
  %v1457 = vadd.f32 0.0, %v1456
  %v1458 = vpop.f32.mrf.mxu0
  %v1459 = vadd.f32 0.0, %v1458
  %1460 = vmatmul.bf16.gmra.mxu0 %v1015
  %v1461 = vpop.f32.mrf.mxu0
  %v1462 = vadd.f32 0.0, %v1461
  %v1463 = vpop.f32.mrf.mxu0
  %v1464 = vadd.f32 0.0, %v1463
  %1465 = vmatmul.bf16.gmra.mxu0 %v1018
  %v1466 = vpop.f32.mrf.mxu0
  %v1467 = vadd.f32 0.0, %v1466
  %v1468 = vpop.f32.mrf.mxu0
  %v1469 = vadd.f32 0.0, %v1468
  %1470 = vmatmul.bf16.gmra.mxu0 %v1021
  %v1471 = vpop.f32.mrf.mxu0
  %v1472 = vadd.f32 0.0, %v1471
  %v1473 = vpop.f32.mrf.mxu0
  %v1474 = vadd.f32 0.0, %v1473
  %1475 = vmatmul.bf16.gmra.mxu0 %v1024
  %v1476 = vpop.f32.mrf.mxu0
  %v1477 = vadd.f32 0.0, %v1476
  %v1478 = vpop.f32.mrf.mxu0
  %v1479 = vadd.f32 0.0, %v1478
  %1480 = vmatmul.bf16.gmra.mxu0 %v1027
  %v1481 = vpop.f32.mrf.mxu0
  %v1482 = vadd.f32 0.0, %v1481
  %v1483 = vpop.f32.mrf.mxu0
  %v1484 = vadd.f32 0.0, %v1483
  %1485 = vmatmul.bf16.gmra.mxu0 %v1030
  %v1486 = vpop.f32.mrf.mxu0
  %v1487 = vadd.f32 0.0, %v1486
  %v1488 = vpop.f32.mrf.mxu0
  %v1489 = vadd.f32 0.0, %v1488
  %1490 = vmatmul.bf16.gmra.mxu0 %v1033
  %v1491 = vpop.f32.mrf.mxu0
  %v1492 = vadd.f32 0.0, %v1491
  %v1493 = vpop.f32.mrf.mxu0
  %v1494 = vadd.f32 0.0, %v1493
  %1495 = vmatmul.bf16.gmra.mxu0 %v1036
  %v1496 = vpop.f32.mrf.mxu0
  %v1497 = vadd.f32 0.0, %v1496
  %v1498 = vpop.f32.mrf.mxu0
  %v1499 = vadd.f32 0.0, %v1498
  %1500 = vmatmul.bf16.gmra.mxu0 %v1039
  %v1501 = vpop.f32.mrf.mxu0
  %v1502 = vadd.f32 0.0, %v1501
  %v1503 = vpop.f32.mrf.mxu0
  %v1504 = vadd.f32 0.0, %v1503
  %1505 = vmatmul.bf16.gmra.mxu0 %v1042
  %v1506 = vpop.f32.mrf.mxu0
  %v1507 = vadd.f32 0.0, %v1506
  %v1508 = vpop.f32.mrf.mxu0
  %v1509 = vadd.f32 0.0, %v1508
  %1510 = vmatmul.bf16.gmra.mxu0 %v1045
  %v1511 = vpop.f32.mrf.mxu0
  %v1512 = vadd.f32 0.0, %v1511
  %v1513 = vpop.f32.mrf.mxu0
  %v1514 = vadd.f32 0.0, %v1513
  %1515 = vmatmul.bf16.gmra.mxu0 %v1048
  %v1516 = vpop.f32.mrf.mxu0
  %v1517 = vadd.f32 0.0, %v1516
  %v1518 = vpop.f32.mrf.mxu0
  %v1519 = vadd.f32 0.0, %v1518
  %1520 = vmatmul.bf16.gmra.mxu0 %v1051
  %v1521 = vpop.f32.mrf.mxu0
  %v1522 = vadd.f32 0.0, %v1521
  %v1523 = vpop.f32.mrf.mxu0
  %v1524 = vadd.f32 0.0, %v1523
  %1525 = vmatmul.bf16.gmra.mxu0 %v1054
  %v1526 = vpop.f32.mrf.mxu0
  %v1527 = vadd.f32 0.0, %v1526
  %v1528 = vpop.f32.mrf.mxu0
  %v1529 = vadd.f32 0.0, %v1528
  %1530 = vmatmul.bf16.gmra.mxu0 %v1057
  %v1531 = vpop.f32.mrf.mxu0
  %v1532 = vadd.f32 0.0, %v1531
  %v1533 = vpop.f32.mrf.mxu0
  %v1534 = vadd.f32 0.0, %v1533
  %1535 = vmatmul.bf16.gmra.mxu0 %v1060
  %v1536 = vpop.f32.mrf.mxu0
  %v1537 = vadd.f32 0.0, %v1536
  %v1538 = vpop.f32.mrf.mxu0
  %v1539 = vadd.f32 0.0, %v1538
  %1540 = vmatmul.bf16.gmra.mxu0 %v1063
  %v1541 = vpop.f32.mrf.mxu0
  %v1542 = vadd.f32 0.0, %v1541
  %v1543 = vpop.f32.mrf.mxu0
  %v1544 = vadd.f32 0.0, %v1543
  %1545 = vmatmul.bf16.gmra.mxu0 %v1066
  %v1546 = vpop.f32.mrf.mxu0
  %v1547 = vadd.f32 0.0, %v1546
  %v1548 = vpop.f32.mrf.mxu0
  %v1549 = vadd.f32 0.0, %v1548
  %1550 = vmatmul.bf16.gmra.mxu0 %v1069
  %v1551 = vpop.f32.mrf.mxu0
  %v1552 = vadd.f32 0.0, %v1551
  %v1553 = vpop.f32.mrf.mxu0
  %v1554 = vadd.f32 0.0, %v1553
  %1555 = vmatmul.bf16.gmra.mxu0 %v1072
  %v1556 = vpop.f32.mrf.mxu0
  %v1557 = vadd.f32 0.0, %v1556
  %v1558 = vpop.f32.mrf.mxu0
  %v1559 = vadd.f32 0.0, %v1558
  %1560 = vmatmul.bf16.gmra.mxu0 %v1075
  %v1561 = vpop.f32.mrf.mxu0
  %v1562 = vadd.f32 0.0, %v1561
  %v1563 = vpop.f32.mrf.mxu0
  %v1564 = vadd.f32 0.0, %v1563
  %1565 = vmatmul.bf16.gmra.mxu0 %v1078
  %v1566 = vpop.f32.mrf.mxu0
  %v1567 = vadd.f32 0.0, %v1566
  %v1568 = vpop.f32.mrf.mxu0
  %v1569 = vadd.f32 0.0, %v1568
  %1570 = vmatmul.bf16.gmra.mxu0 %v1081
  %v1571 = vpop.f32.mrf.mxu0
  %v1572 = vadd.f32 0.0, %v1571
  %v1573 = vpop.f32.mrf.mxu0
  %v1574 = vadd.f32 0.0, %v1573
  %1575 = vmatmul.bf16.gmra.mxu0 %v1084
  %v1576 = vpop.f32.mrf.mxu0
  %v1577 = vadd.f32 0.0, %v1576
  %v1578 = vpop.f32.mrf.mxu0
  %v1579 = vadd.f32 0.0, %v1578
  %1580 = vmatmul.bf16.gmra.mxu0 %v1087
  %v1581 = vpop.f32.mrf.mxu0
  %v1582 = vadd.f32 0.0, %v1581
  %v1583 = vpop.f32.mrf.mxu0
  %v1584 = vadd.f32 0.0, %v1583
  %1585 = vmatmul.bf16.gmra.mxu0 %v1090
  %v1586 = vpop.f32.mrf.mxu0
  %v1587 = vadd.f32 0.0, %v1586
  %v1588 = vpop.f32.mrf.mxu0
  %v1589 = vadd.f32 0.0, %v1588
  %1590 = vmatmul.bf16.gmra.mxu0 %v1093
  %v1591 = vpop.f32.mrf.mxu0
  %v1592 = vadd.f32 0.0, %v1591
  %v1593 = vpop.f32.mrf.mxu0
  %v1594 = vadd.f32 0.0, %v1593
  %1595 = vmatmul.bf16.gmra.mxu0 %v1096
  %v1596 = vpop.f32.mrf.mxu0
  %v1597 = vadd.f32 0.0, %v1596
  %v1598 = vpop.f32.mrf.mxu0
  %v1599 = vadd.f32 0.0, %v1598
  %1600 = vmatmul.bf16.gmra.mxu0 %v1099
  %v1601 = vpop.f32.mrf.mxu0
  %v1602 = vadd.f32 0.0, %v1601
  %v1603 = vpop.f32.mrf.mxu0
  %v1604 = vadd.f32 0.0, %v1603
  %1605 = vmatmul.bf16.gmra.mxu0 %v1102
  %v1606 = vpop.f32.mrf.mxu0
  %v1607 = vadd.f32 0.0, %v1606
  %v1608 = vpop.f32.mrf.mxu0
  %v1609 = vadd.f32 0.0, %v1608
  %1610 = vmatmul.bf16.gmra.mxu0 %v1105
  %v1611 = vpop.f32.mrf.mxu0
  %v1612 = vadd.f32 0.0, %v1611
  %v1613 = vpop.f32.mrf.mxu0
  %v1614 = vadd.f32 0.0, %v1613
  %1615 = vmatmul.bf16.gmra.mxu0 %v1108
  %v1616 = vpop.f32.mrf.mxu0
  %v1617 = vadd.f32 0.0, %v1616
  %v1618 = vpop.f32.mrf.mxu0
  %v1619 = vadd.f32 0.0, %v1618
  %1620 = vmatmul.bf16.gmra.mxu0 %v1111
  %v1621 = vpop.f32.mrf.mxu0
  %v1622 = vadd.f32 0.0, %v1621
  %v1623 = vpop.f32.mrf.mxu0
  %v1624 = vadd.f32 0.0, %v1623
  %1625 = vmatmul.bf16.gmra.mxu0 %v1114
  %v1626 = vpop.f32.mrf.mxu0
  %v1627 = vadd.f32 0.0, %v1626
  %v1628 = vpop.f32.mrf.mxu0
  %v1629 = vadd.f32 0.0, %v1628
  %1630 = vmatmul.bf16.gmra.mxu0 %v1117
  %v1631 = vpop.f32.mrf.mxu0
  %v1632 = vadd.f32 0.0, %v1631
  %v1633 = vpop.f32.mrf.mxu0
  %v1634 = vadd.f32 0.0, %v1633
  %1635 = vmatmul.bf16.gmra.mxu0 %v1120
  %v1636 = vpop.f32.mrf.mxu0
  %v1637 = vadd.f32 0.0, %v1636
  %v1638 = vpop.f32.mrf.mxu0
  %v1639 = vadd.f32 0.0, %v1638
  %1640 = vmatmul.bf16.gmra.mxu0 %v1123
  %v1641 = vpop.f32.mrf.mxu0
  %v1642 = vadd.f32 0.0, %v1641
  %v1643 = vpop.f32.mrf.mxu0
  %v1644 = vadd.f32 0.0, %v1643
  %1645 = vmatmul.bf16.gmra.mxu0 %v1126
  %v1646 = vpop.f32.mrf.mxu0
  %v1647 = vadd.f32 0.0, %v1646
  %v1648 = vpop.f32.mrf.mxu0
  %v1649 = vadd.f32 0.0, %v1648
  %1650 = vmatmul.bf16.gmra.mxu0 %v1129
  %v1651 = vpop.f32.mrf.mxu0
  %v1652 = vadd.f32 0.0, %v1651
  %v1653 = vpop.f32.mrf.mxu0
  %v1654 = vadd.f32 0.0, %v1653
  %1655 = vmatmul.bf16.gmra.mxu0 %v1132
  %v1656 = vpop.f32.mrf.mxu0
  %v1657 = vadd.f32 0.0, %v1656
  %v1658 = vpop.f32.mrf.mxu0
  %v1659 = vadd.f32 0.0, %v1658
  %1660 = vmatmul.bf16.gmra.mxu0 %v1135
  %v1661 = vpop.f32.mrf.mxu0
  %v1662 = vadd.f32 0.0, %v1661
  %v1663 = vpop.f32.mrf.mxu0
  %v1664 = vadd.f32 0.0, %v1663
  %1665 = vmatmul.bf16.gmra.mxu0 %v1138
  %v1666 = vpop.f32.mrf.mxu0
  %v1667 = vadd.f32 0.0, %v1666
  %v1668 = vpop.f32.mrf.mxu0
  %v1669 = vadd.f32 0.0, %v1668
  %1670 = vmatmul.bf16.gmra.mxu0 %v1141
  %v1671 = vpop.f32.mrf.mxu0
  %v1672 = vadd.f32 0.0, %v1671
  %v1673 = vpop.f32.mrf.mxu0
  %v1674 = vadd.f32 0.0, %v1673
  %1675 = vmatmul.bf16.gmra.mxu0 %v1144
  %v1676 = vpop.f32.mrf.mxu0
  %v1677 = vadd.f32 0.0, %v1676
  %v1678 = vpop.f32.mrf.mxu0
  %v1679 = vadd.f32 0.0, %v1678
  %1680 = vmatmul.bf16.gmra.mxu0 %v1147
  %v1681 = vpop.f32.mrf.mxu0
  %v1682 = vadd.f32 0.0, %v1681
  %v1683 = vpop.f32.mrf.mxu0
  %v1684 = vadd.f32 0.0, %v1683
  %1685 = vmatmul.bf16.gmra.mxu0 %v1150
  %v1686 = vpop.f32.mrf.mxu0
  %v1687 = vadd.f32 0.0, %v1686
  %v1688 = vpop.f32.mrf.mxu0
  %v1689 = vadd.f32 0.0, %v1688
  %1690 = vmatmul.bf16.gmra.mxu0 %v1153
  %v1691 = vpop.f32.mrf.mxu0
  %v1692 = vadd.f32 0.0, %v1691
  %v1693 = vpop.f32.mrf.mxu0
  %v1694 = vadd.f32 0.0, %v1693
  %1695 = vmatmul.bf16.gmra.mxu0 %v1156
  %v1696 = vpop.f32.mrf.mxu0
  %v1697 = vadd.f32 0.0, %v1696
  %v1698 = vpop.f32.mrf.mxu0
  %v1699 = vadd.f32 0.0, %v1698
  %1700 = vmatmul.bf16.gmra.mxu0 %v1159
  %v1701 = vpop.f32.mrf.mxu0
  %v1702 = vadd.f32 0.0, %v1701
  %v1703 = vpop.f32.mrf.mxu0
  %v1704 = vadd.f32 0.0, %v1703
  %1705 = vmatmul.bf16.gmra.mxu0 %v1162
  %v1706 = vpop.f32.mrf.mxu0
  %v1707 = vadd.f32 0.0, %v1706
  %v1708 = vpop.f32.mrf.mxu0
  %v1709 = vadd.f32 0.0, %v1708
  %1710 = vmatmul.bf16.gmra.mxu0 %v1165
  %v1711 = vpop.f32.mrf.mxu0
  %v1712 = vadd.f32 0.0, %v1711
  %v1713 = vpop.f32.mrf.mxu0
  %v1714 = vadd.f32 0.0, %v1713
  %1715 = vmatmul.bf16.gmra.mxu0 %v1168
  %v1716 = vpop.f32.mrf.mxu0
  %v1717 = vadd.f32 0.0, %v1716
  %v1718 = vpop.f32.mrf.mxu0
  %v1719 = vadd.f32 0.0, %v1718
  %1720 = vmatmul.bf16.gmra.mxu0 %v1171
  %v1721 = vpop.f32.mrf.mxu0
  %v1722 = vadd.f32 0.0, %v1721
  %v1723 = vpop.f32.mrf.mxu0
  %v1724 = vadd.f32 0.0, %v1723
  %1725 = vmatmul.bf16.gmra.mxu0 %v1174
  %v1726 = vpop.f32.mrf.mxu0
  %v1727 = vadd.f32 0.0, %v1726
  %v1728 = vpop.f32.mrf.mxu0
  %v1729 = vadd.f32 0.0, %v1728
  %1730 = vmatmul.bf16.gmra.mxu0 %v1177
  %v1731 = vpop.f32.mrf.mxu0
  %v1732 = vadd.f32 0.0, %v1731
  %v1733 = vpop.f32.mrf.mxu0
  %v1734 = vadd.f32 0.0, %v1733
  %1735 = vmatmul.bf16.gmra.mxu0 %v1180
  %v1736 = vpop.f32.mrf.mxu0
  %v1737 = vadd.f32 0.0, %v1736
  %v1738 = vpop.f32.mrf.mxu0
  %v1739 = vadd.f32 0.0, %v1738
  %1740 = vmatmul.bf16.gmra.mxu0 %v1183
  %v1741 = vpop.f32.mrf.mxu0
  %v1742 = vadd.f32 0.0, %v1741
  %v1743 = vpop.f32.mrf.mxu0
  %v1744 = vadd.f32 0.0, %v1743
  %1745 = vmatmul.bf16.gmra.mxu0 %v1186
  %v1746 = vpop.f32.mrf.mxu0
  %v1747 = vadd.f32 0.0, %v1746
  %v1748 = vpop.f32.mrf.mxu0
  %v1749 = vadd.f32 0.0, %v1748
  %1750 = vmatmul.bf16.gmra.mxu0 %v1189
  %v1751 = vpop.f32.mrf.mxu0
  %v1752 = vadd.f32 0.0, %v1751
  %v1753 = vpop.f32.mrf.mxu0
  %v1754 = vadd.f32 0.0, %v1753
  %1755 = vmatmul.bf16.gmra.mxu0 %v1192
  %v1756 = vpop.f32.mrf.mxu0
  %v1757 = vadd.f32 0.0, %v1756
  %v1758 = vpop.f32.mrf.mxu0
  %v1759 = vadd.f32 0.0, %v1758
  %1760 = vmatmul.bf16.gmra.mxu0 %v1195
  %v1761 = vpop.f32.mrf.mxu0
  %v1762 = vadd.f32 0.0, %v1761
  %v1763 = vpop.f32.mrf.mxu0
  %v1764 = vadd.f32 0.0, %v1763
  %1765 = vmatmul.bf16.gmra.mxu0 %v1198
  %v1766 = vpop.f32.mrf.mxu0
  %v1767 = vadd.f32 0.0, %v1766
  %v1768 = vpop.f32.mrf.mxu0
  %v1769 = vadd.f32 0.0, %v1768
  %1770 = vmatmul.bf16.gmra.mxu0 %v1201
  %v1771 = vpop.f32.mrf.mxu0
  %v1772 = vadd.f32 0.0, %v1771
  %v1773 = vpop.f32.mrf.mxu0
  %v1774 = vadd.f32 0.0, %v1773
  %1775 = vmatmul.bf16.gmra.mxu0 %v1204
  %v1776 = vpop.f32.mrf.mxu0
  %v1777 = vadd.f32 0.0, %v1776
  %v1778 = vpop.f32.mrf.mxu0
  %v1779 = vadd.f32 0.0, %v1778
  %1780 = vmatmul.bf16.gmra.mxu0 %v1207
  %v1781 = vpop.f32.mrf.mxu0
  %v1782 = vadd.f32 0.0, %v1781
  %v1783 = vpop.f32.mrf.mxu0
  %v1784 = vadd.f32 0.0, %v1783
  %1785 = vmatmul.bf16.gmra.mxu0 %v1210
  %v1786 = vpop.f32.mrf.mxu0
  %v1787 = vadd.f32 0.0, %v1786
  %v1788 = vpop.f32.mrf.mxu0
  %v1789 = vadd.f32 0.0, %v1788
  %1790 = vmatmul.bf16.gmra.mxu0 %v1213
  %v1791 = vpop.f32.mrf.mxu0
  %v1792 = vadd.f32 0.0, %v1791
  %v1793 = vpop.f32.mrf.mxu0
  %v1794 = vadd.f32 0.0, %v1793
  %1795 = vmatmul.bf16.gmra.mxu0 %v1216
  %v1796 = vpop.f32.mrf.mxu0
  %v1797 = vadd.f32 0.0, %v1796
  %v1798 = vpop.f32.mrf.mxu0
  %v1799 = vadd.f32 0.0, %v1798
  %1800 = vmatmul.bf16.gmra.mxu0 %v1219
  %v1801 = vpop.f32.mrf.mxu0
  %v1802 = vadd.f32 0.0, %v1801
  %v1803 = vpop.f32.mrf.mxu0
  %v1804 = vadd.f32 0.0, %v1803
  %1805 = vmatmul.bf16.gmra.mxu0 %v1222
  %v1806 = vpop.f32.mrf.mxu0
  %v1807 = vadd.f32 0.0, %v1806
  %v1808 = vpop.f32.mrf.mxu0
  %v1809 = vadd.f32 0.0, %v1808
  %1810 = vmatmul.bf16.gmra.mxu0 %v1225
  %v1811 = vpop.f32.mrf.mxu0
  %v1812 = vadd.f32 0.0, %v1811
  %v1813 = vpop.f32.mrf.mxu0
  %v1814 = vadd.f32 0.0, %v1813
  %1815 = vmatmul.bf16.gmra.mxu0 %v1228
  %v1816 = vpop.f32.mrf.mxu0
  %v1817 = vadd.f32 0.0, %v1816
  %v1818 = vpop.f32.mrf.mxu0
  %v1819 = vadd.f32 0.0, %v1818
  %1820 = vmatmul.bf16.gmra.mxu0 %v1231
  %v1821 = vpop.f32.mrf.mxu0
  %v1822 = vadd.f32 0.0, %v1821
  %v1823 = vpop.f32.mrf.mxu0
  %v1824 = vadd.f32 0.0, %v1823
  %1825 = vmatmul.bf16.gmra.mxu0 %v1234
  %v1826 = vpop.f32.mrf.mxu0
  %v1827 = vadd.f32 0.0, %v1826
  %v1828 = vpop.f32.mrf.mxu0
  %v1829 = vadd.f32 0.0, %v1828
  %1830 = vmatmul.bf16.gmra.mxu0 %v1237
  %v1831 = vpop.f32.mrf.mxu0
  %v1832 = vadd.f32 0.0, %v1831
  %v1833 = vpop.f32.mrf.mxu0
  %v1834 = vadd.f32 0.0, %v1833
  %1835 = vmatmul.bf16.gmra.mxu0 %v1240
  %v1836 = vpop.f32.mrf.mxu0
  %v1837 = vadd.f32 0.0, %v1836
  %v1838 = vpop.f32.mrf.mxu0
  %v1839 = vadd.f32 0.0, %v1838
  %1840 = vmatmul.bf16.gmra.mxu0 %v1243
  %v1841 = vpop.f32.mrf.mxu0
  %v1842 = vadd.f32 0.0, %v1841
  %v1843 = vpop.f32.mrf.mxu0
  %v1844 = vadd.f32 0.0, %v1843
  %1845 = vmatmul.bf16.gmra.mxu0 %v1246
  %v1846 = vpop.f32.mrf.mxu0
  %v1847 = vadd.f32 0.0, %v1846
  %v1848 = vpop.f32.mrf.mxu0
  %v1849 = vadd.f32 0.0, %v1848
  %1850 = vmatmul.bf16.gmra.mxu0 %v1249
  %v1851 = vpop.f32.mrf.mxu0
  %v1852 = vadd.f32 0.0, %v1851
  %v1853 = vpop.f32.mrf.mxu0
  %v1854 = vadd.f32 0.0, %v1853
  %1855 = vmatmul.bf16.gmra.mxu0 %v1252
  %v1856 = vpop.f32.mrf.mxu0
  %v1857 = vadd.f32 0.0, %v1856
  %v1858 = vpop.f32.mrf.mxu0
  %v1859 = vadd.f32 0.0, %v1858
  %1860 = vmatmul.bf16.gmra.mxu0 %v1255
  %v1861 = vpop.f32.mrf.mxu0
  %v1862 = vadd.f32 0.0, %v1861
  %v1863 = vpop.f32.mrf.mxu0
  %v1864 = vadd.f32 0.0, %v1863
  %1865 = vmatmul.bf16.gmra.mxu0 %v1258
  %v1866 = vpop.f32.mrf.mxu0
  %v1867 = vadd.f32 0.0, %v1866
  %v1868 = vpop.f32.mrf.mxu0
  %v1869 = vadd.f32 0.0, %v1868
  %1870 = vmatmul.bf16.gmra.mxu0 %v1261
  %v1871 = vpop.f32.mrf.mxu0
  %v1872 = vadd.f32 0.0, %v1871
  %v1873 = vpop.f32.mrf.mxu0
  %v1874 = vadd.f32 0.0, %v1873
  %1875 = vmatmul.bf16.gmra.mxu0 %v1264
  %v1876 = vpop.f32.mrf.mxu0
  %v1877 = vadd.f32 0.0, %v1876
  %v1878 = vpop.f32.mrf.mxu0
  %v1879 = vadd.f32 0.0, %v1878
  %1880 = vmatmul.bf16.gmra.mxu0 %v1267
  %v1881 = vpop.f32.mrf.mxu0
  %v1882 = vadd.f32 0.0, %v1881
  %v1883 = vpop.f32.mrf.mxu0
  %v1884 = vadd.f32 0.0, %v1883
  %1885 = vmatmul.bf16.gmra.mxu0 %v1270
  %v1886 = vpop.f32.mrf.mxu0
  %v1887 = vadd.f32 0.0, %v1886
  %v1888 = vpop.f32.mrf.mxu0
  %v1889 = vadd.f32 0.0, %v1888
  %1890 = vmatmul.bf16.gmra.mxu0 %v1273
  %v1891 = vpop.f32.mrf.mxu0
  %v1892 = vadd.f32 0.0, %v1891
  %v1893 = vpop.f32.mrf.mxu0
  %v1894 = vadd.f32 0.0, %v1893
  %1895 = vmatmul.bf16.gmra.mxu0 %v1276
  %v1896 = vpop.f32.mrf.mxu0
  %v1897 = vadd.f32 0.0, %v1896
  %v1898 = vpop.f32.mrf.mxu0
  %v1899 = vadd.f32 0.0, %v1898
  %1900 = vmatmul.bf16.gmra.mxu0 %v1279
  %v1901 = vpop.f32.mrf.mxu0
  %v1902 = vadd.f32 0.0, %v1901
  %v1903 = vpop.f32.mrf.mxu0
  %v1904 = vadd.f32 0.0, %v1903
  %1905 = vmatmul.bf16.gmra.mxu0 %v1282
  %v1906 = vpop.f32.mrf.mxu0
  %v1907 = vadd.f32 0.0, %v1906
  %v1908 = vpop.f32.mrf.mxu0
  %v1909 = vadd.f32 0.0, %v1908
  %1910 = vmatmul.bf16.gmra.mxu0 %v1285
  %v1911 = vpop.f32.mrf.mxu0
  %v1912 = vadd.f32 0.0, %v1911
  %v1913 = vpop.f32.mrf.mxu0
  %v1914 = vadd.f32 0.0, %v1913
  %1915 = vmatmul.bf16.gmra.mxu0 %v1288
  %v1916 = vpop.f32.mrf.mxu0
  %v1917 = vadd.f32 0.0, %v1916
  %v1918 = vpop.f32.mrf.mxu0
  %v1919 = vadd.f32 0.0, %v1918
  %1920 = vmatmul.bf16.gmra.mxu0 %v1291
  %v1921 = vpop.f32.mrf.mxu0
  %v1922 = vadd.f32 0.0, %v1921
  %v1923 = vpop.f32.mrf.mxu0
  %v1924 = vadd.f32 0.0, %v1923
  %1925 = vmatmul.bf16.gmra.mxu0 %v1294
  %v1926 = vpop.f32.mrf.mxu0
  %v1927 = vadd.f32 0.0, %v1926
  %v1928 = vpop.f32.mrf.mxu0
  %v1929 = vadd.f32 0.0, %v1928
  %1930 = vmatmul.bf16.gmra.mxu0 %v1297
  %v1931 = vpop.f32.mrf.mxu0
  %v1932 = vadd.f32 0.0, %v1931
  %v1933 = vpop.f32.mrf.mxu0
  %v1934 = vadd.f32 0.0, %v1933
  %1935 = vmatmul.bf16.gmra.mxu0 %v1300
  %v1936 = vpop.f32.mrf.mxu0
  %v1937 = vadd.f32 0.0, %v1936
  %v1938 = vpop.f32.mrf.mxu0
  %v1939 = vadd.f32 0.0, %v1938
  %1940 = vmatmul.bf16.gmra.mxu0 %v1303
  %v1941 = vpop.f32.mrf.mxu0
  %v1942 = vadd.f32 0.0, %v1941
  %v1943 = vpop.f32.mrf.mxu0
  %v1944 = vadd.f32 0.0, %v1943
  %1945 = vmatmul.bf16.gmra.mxu0 %v1306
  %v1946 = vpop.f32.mrf.mxu0
  %v1947 = vadd.f32 0.0, %v1946
  %v1948 = vpop.f32.mrf.mxu0
  %v1949 = vadd.f32 0.0, %v1948
  %1950 = vmatmul.bf16.gmra.mxu0 %v1309
  %v1951 = vpop.f32.mrf.mxu0
  %v1952 = vadd.f32 0.0, %v1951
  %v1953 = vpop.f32.mrf.mxu0
  %v1954 = vadd.f32 0.0, %v1953
  %1955 = vmatmul.bf16.gmra.mxu0 %v1312
  %v1956 = vpop.f32.mrf.mxu0
  %v1957 = vadd.f32 0.0, %v1956
  %v1958 = vpop.f32.mrf.mxu0
  %v1959 = vadd.f32 0.0, %v1958
  %1960 = vmatmul.bf16.gmra.mxu0 %v1315
  %v1961 = vpop.f32.mrf.mxu0
  %v1962 = vadd.f32 0.0, %v1961
  %v1963 = vpop.f32.mrf.mxu0
  %v1964 = vadd.f32 0.0, %v1963
  %1965 = vdwg.mxu0
  %vm1966 = vcmp.gt.f32.partialorder %v1327, 0.0
  %vm1967 = vcmp.gt.f32.partialorder %v1329, 0.0
  %vm1968 = vcmp.gt.f32.partialorder %v1332, 0.0
  %vm1969 = vcmp.gt.f32.partialorder %v1334, 0.0
  %vm1970 = vcmp.gt.f32.partialorder %v1337, 0.0
  %vm1971 = vcmp.gt.f32.partialorder %v1339, 0.0
  %vm1972 = vcmp.gt.f32.partialorder %v1342, 0.0
  %vm1973 = vcmp.gt.f32.partialorder %v1344, 0.0
  %vm1974 = vcmp.gt.f32.partialorder %v1347, 0.0
  %vm1975 = vcmp.gt.f32.partialorder %v1349, 0.0
  %vm1976 = vcmp.gt.f32.partialorder %v1352, 0.0
  %vm1977 = vcmp.gt.f32.partialorder %v1354, 0.0
  %vm1978 = vcmp.gt.f32.partialorder %v1357, 0.0
  %vm1979 = vcmp.gt.f32.partialorder %v1359, 0.0
  %vm1980 = vcmp.gt.f32.partialorder %v1362, 0.0
  %vm1981 = vcmp.gt.f32.partialorder %v1364, 0.0
  %vm1982 = vcmp.gt.f32.partialorder %v1367, 0.0
  %vm1983 = vcmp.gt.f32.partialorder %v1369, 0.0
  %vm1984 = vcmp.gt.f32.partialorder %v1372, 0.0
  %vm1985 = vcmp.gt.f32.partialorder %v1374, 0.0
  %vm1986 = vcmp.gt.f32.partialorder %v1377, 0.0
  %vm1987 = vcmp.gt.f32.partialorder %v1379, 0.0
  %vm1988 = vcmp.gt.f32.partialorder %v1382, 0.0
  %vm1989 = vcmp.gt.f32.partialorder %v1384, 0.0
  %vm1990 = vcmp.gt.f32.partialorder %v1387, 0.0
  %vm1991 = vcmp.gt.f32.partialorder %v1389, 0.0
  %vm1992 = vcmp.gt.f32.partialorder %v1392, 0.0
  %vm1993 = vcmp.gt.f32.partialorder %v1394, 0.0
  %vm1994 = vcmp.gt.f32.partialorder %v1397, 0.0
  %vm1995 = vcmp.gt.f32.partialorder %v1399, 0.0
  %vm1996 = vcmp.gt.f32.partialorder %v1402, 0.0
  %vm1997 = vcmp.gt.f32.partialorder %v1404, 0.0
  %vm1998 = vcmp.gt.f32.partialorder %v1407, 0.0
  %vm1999 = vcmp.gt.f32.partialorder %v1409, 0.0
  %vm2000 = vcmp.gt.f32.partialorder %v1412, 0.0
  %vm2001 = vcmp.gt.f32.partialorder %v1414, 0.0
  %vm2002 = vcmp.gt.f32.partialorder %v1417, 0.0
  %vm2003 = vcmp.gt.f32.partialorder %v1419, 0.0
  %vm2004 = vcmp.gt.f32.partialorder %v1422, 0.0
  %vm2005 = vcmp.gt.f32.partialorder %v1424, 0.0
  %vm2006 = vcmp.gt.f32.partialorder %v1427, 0.0
  %vm2007 = vcmp.gt.f32.partialorder %v1429, 0.0
  %vm2008 = vcmp.gt.f32.partialorder %v1432, 0.0
  %vm2009 = vcmp.gt.f32.partialorder %v1434, 0.0
  %vm2010 = vcmp.gt.f32.partialorder %v1437, 0.0
  %vm2011 = vcmp.gt.f32.partialorder %v1439, 0.0
  %vm2012 = vcmp.gt.f32.partialorder %v1442, 0.0
  %vm2013 = vcmp.gt.f32.partialorder %v1444, 0.0
  %vm2014 = vcmp.gt.f32.partialorder %v1447, 0.0
  %vm2015 = vcmp.gt.f32.partialorder %v1449, 0.0
  %vm2016 = vcmp.gt.f32.partialorder %v1452, 0.0
  %vm2017 = vcmp.gt.f32.partialorder %v1454, 0.0
  %vm2018 = vcmp.gt.f32.partialorder %v1457, 0.0
  %vm2019 = vcmp.gt.f32.partialorder %v1459, 0.0
  %vm2020 = vcmp.gt.f32.partialorder %v1462, 0.0
  %vm2021 = vcmp.gt.f32.partialorder %v1464, 0.0
  %vm2022 = vcmp.gt.f32.partialorder %v1467, 0.0
  %vm2023 = vcmp.gt.f32.partialorder %v1469, 0.0
  %vm2024 = vcmp.gt.f32.partialorder %v1472, 0.0
  %vm2025 = vcmp.gt.f32.partialorder %v1474, 0.0
  %vm2026 = vcmp.gt.f32.partialorder %v1477, 0.0
  %vm2027 = vcmp.gt.f32.partialorder %v1479, 0.0
  %vm2028 = vcmp.gt.f32.partialorder %v1482, 0.0
  %vm2029 = vcmp.gt.f32.partialorder %v1484, 0.0
  %vm2030 = vcmp.gt.f32.partialorder %v1487, 0.0
  %vm2031 = vcmp.gt.f32.partialorder %v1489, 0.0
  %vm2032 = vcmp.gt.f32.partialorder %v1492, 0.0
  %vm2033 = vcmp.gt.f32.partialorder %v1494, 0.0
  %vm2034 = vcmp.gt.f32.partialorder %v1497, 0.0
  %vm2035 = vcmp.gt.f32.partialorder %v1499, 0.0
  %vm2036 = vcmp.gt.f32.partialorder %v1502, 0.0
  %vm2037 = vcmp.gt.f32.partialorder %v1504, 0.0
  %vm2038 = vcmp.gt.f32.partialorder %v1507, 0.0
  %vm2039 = vcmp.gt.f32.partialorder %v1509, 0.0
  %vm2040 = vcmp.gt.f32.partialorder %v1512, 0.0
  %vm2041 = vcmp.gt.f32.partialorder %v1514, 0.0
  %vm2042 = vcmp.gt.f32.partialorder %v1517, 0.0
  %vm2043 = vcmp.gt.f32.partialorder %v1519, 0.0
  %vm2044 = vcmp.gt.f32.partialorder %v1522, 0.0
  %vm2045 = vcmp.gt.f32.partialorder %v1524, 0.0
  %vm2046 = vcmp.gt.f32.partialorder %v1527, 0.0
  %vm2047 = vcmp.gt.f32.partialorder %v1529, 0.0
  %vm2048 = vcmp.gt.f32.partialorder %v1532, 0.0
  %vm2049 = vcmp.gt.f32.partialorder %v1534, 0.0
  %vm2050 = vcmp.gt.f32.partialorder %v1537, 0.0
  %vm2051 = vcmp.gt.f32.partialorder %v1539, 0.0
  %vm2052 = vcmp.gt.f32.partialorder %v1542, 0.0
  %vm2053 = vcmp.gt.f32.partialorder %v1544, 0.0
  %vm2054 = vcmp.gt.f32.partialorder %v1547, 0.0
  %vm2055 = vcmp.gt.f32.partialorder %v1549, 0.0
  %vm2056 = vcmp.gt.f32.partialorder %v1552, 0.0
  %vm2057 = vcmp.gt.f32.partialorder %v1554, 0.0
  %vm2058 = vcmp.gt.f32.partialorder %v1557, 0.0
  %vm2059 = vcmp.gt.f32.partialorder %v1559, 0.0
  %vm2060 = vcmp.gt.f32.partialorder %v1562, 0.0
  %vm2061 = vcmp.gt.f32.partialorder %v1564, 0.0
  %vm2062 = vcmp.gt.f32.partialorder %v1567, 0.0
  %vm2063 = vcmp.gt.f32.partialorder %v1569, 0.0
  %vm2064 = vcmp.gt.f32.partialorder %v1572, 0.0
  %vm2065 = vcmp.gt.f32.partialorder %v1574, 0.0
  %vm2066 = vcmp.gt.f32.partialorder %v1577, 0.0
  %vm2067 = vcmp.gt.f32.partialorder %v1579, 0.0
  %vm2068 = vcmp.gt.f32.partialorder %v1582, 0.0
  %vm2069 = vcmp.gt.f32.partialorder %v1584, 0.0
  %vm2070 = vcmp.gt.f32.partialorder %v1587, 0.0
  %vm2071 = vcmp.gt.f32.partialorder %v1589, 0.0
  %vm2072 = vcmp.gt.f32.partialorder %v1592, 0.0
  %vm2073 = vcmp.gt.f32.partialorder %v1594, 0.0
  %vm2074 = vcmp.gt.f32.partialorder %v1597, 0.0
  %vm2075 = vcmp.gt.f32.partialorder %v1599, 0.0
  %vm2076 = vcmp.gt.f32.partialorder %v1602, 0.0
  %vm2077 = vcmp.gt.f32.partialorder %v1604, 0.0
  %vm2078 = vcmp.gt.f32.partialorder %v1607, 0.0
  %vm2079 = vcmp.gt.f32.partialorder %v1609, 0.0
  %vm2080 = vcmp.gt.f32.partialorder %v1612, 0.0
  %vm2081 = vcmp.gt.f32.partialorder %v1614, 0.0
  %vm2082 = vcmp.gt.f32.partialorder %v1617, 0.0
  %vm2083 = vcmp.gt.f32.partialorder %v1619, 0.0
  %vm2084 = vcmp.gt.f32.partialorder %v1622, 0.0
  %vm2085 = vcmp.gt.f32.partialorder %v1624, 0.0
  %vm2086 = vcmp.gt.f32.partialorder %v1627, 0.0
  %vm2087 = vcmp.gt.f32.partialorder %v1629, 0.0
  %vm2088 = vcmp.gt.f32.partialorder %v1632, 0.0
  %vm2089 = vcmp.gt.f32.partialorder %v1634, 0.0
  %vm2090 = vcmp.gt.f32.partialorder %v1637, 0.0
  %vm2091 = vcmp.gt.f32.partialorder %v1639, 0.0
  %vm2092 = vcmp.gt.f32.partialorder %v1642, 0.0
  %vm2093 = vcmp.gt.f32.partialorder %v1644, 0.0
  %vm2094 = vcmp.gt.f32.partialorder %v1647, 0.0
  %vm2095 = vcmp.gt.f32.partialorder %v1649, 0.0
  %vm2096 = vcmp.gt.f32.partialorder %v1652, 0.0
  %vm2097 = vcmp.gt.f32.partialorder %v1654, 0.0
  %vm2098 = vcmp.gt.f32.partialorder %v1657, 0.0
  %vm2099 = vcmp.gt.f32.partialorder %v1659, 0.0
  %vm2100 = vcmp.gt.f32.partialorder %v1662, 0.0
  %vm2101 = vcmp.gt.f32.partialorder %v1664, 0.0
  %vm2102 = vcmp.gt.f32.partialorder %v1667, 0.0
  %vm2103 = vcmp.gt.f32.partialorder %v1669, 0.0
  %vm2104 = vcmp.gt.f32.partialorder %v1672, 0.0
  %vm2105 = vcmp.gt.f32.partialorder %v1674, 0.0
  %vm2106 = vcmp.gt.f32.partialorder %v1677, 0.0
  %vm2107 = vcmp.gt.f32.partialorder %v1679, 0.0
  %vm2108 = vcmp.gt.f32.partialorder %v1682, 0.0
  %vm2109 = vcmp.gt.f32.partialorder %v1684, 0.0
  %vm2110 = vcmp.gt.f32.partialorder %v1687, 0.0
  %vm2111 = vcmp.gt.f32.partialorder %v1689, 0.0
  %vm2112 = vcmp.gt.f32.partialorder %v1692, 0.0
  %vm2113 = vcmp.gt.f32.partialorder %v1694, 0.0
  %vm2114 = vcmp.gt.f32.partialorder %v1697, 0.0
  %vm2115 = vcmp.gt.f32.partialorder %v1699, 0.0
  %vm2116 = vcmp.gt.f32.partialorder %v1702, 0.0
  %vm2117 = vcmp.gt.f32.partialorder %v1704, 0.0
  %vm2118 = vcmp.gt.f32.partialorder %v1707, 0.0
  %vm2119 = vcmp.gt.f32.partialorder %v1709, 0.0
  %vm2120 = vcmp.gt.f32.partialorder %v1712, 0.0
  %vm2121 = vcmp.gt.f32.partialorder %v1714, 0.0
  %vm2122 = vcmp.gt.f32.partialorder %v1717, 0.0
  %vm2123 = vcmp.gt.f32.partialorder %v1719, 0.0
  %vm2124 = vcmp.gt.f32.partialorder %v1722, 0.0
  %vm2125 = vcmp.gt.f32.partialorder %v1724, 0.0
  %vm2126 = vcmp.gt.f32.partialorder %v1727, 0.0
  %vm2127 = vcmp.gt.f32.partialorder %v1729, 0.0
  %vm2128 = vcmp.gt.f32.partialorder %v1732, 0.0
  %vm2129 = vcmp.gt.f32.partialorder %v1734, 0.0
  %vm2130 = vcmp.gt.f32.partialorder %v1737, 0.0
  %vm2131 = vcmp.gt.f32.partialorder %v1739, 0.0
  %vm2132 = vcmp.gt.f32.partialorder %v1742, 0.0
  %vm2133 = vcmp.gt.f32.partialorder %v1744, 0.0
  %vm2134 = vcmp.gt.f32.partialorder %v1747, 0.0
  %vm2135 = vcmp.gt.f32.partialorder %v1749, 0.0
  %vm2136 = vcmp.gt.f32.partialorder %v1752, 0.0
  %vm2137 = vcmp.gt.f32.partialorder %v1754, 0.0
  %vm2138 = vcmp.gt.f32.partialorder %v1757, 0.0
  %vm2139 = vcmp.gt.f32.partialorder %v1759, 0.0
  %vm2140 = vcmp.gt.f32.partialorder %v1762, 0.0
  %vm2141 = vcmp.gt.f32.partialorder %v1764, 0.0
  %vm2142 = vcmp.gt.f32.partialorder %v1767, 0.0
  %vm2143 = vcmp.gt.f32.partialorder %v1769, 0.0
  %vm2144 = vcmp.gt.f32.partialorder %v1772, 0.0
  %vm2145 = vcmp.gt.f32.partialorder %v1774, 0.0
  %vm2146 = vcmp.gt.f32.partialorder %v1777, 0.0
  %vm2147 = vcmp.gt.f32.partialorder %v1779, 0.0
  %vm2148 = vcmp.gt.f32.partialorder %v1782, 0.0
  %vm2149 = vcmp.gt.f32.partialorder %v1784, 0.0
  %vm2150 = vcmp.gt.f32.partialorder %v1787, 0.0
  %vm2151 = vcmp.gt.f32.partialorder %v1789, 0.0
  %vm2152 = vcmp.gt.f32.partialorder %v1792, 0.0
  %vm2153 = vcmp.gt.f32.partialorder %v1794, 0.0
  %vm2154 = vcmp.gt.f32.partialorder %v1797, 0.0
  %vm2155 = vcmp.gt.f32.partialorder %v1799, 0.0
  %vm2156 = vcmp.gt.f32.partialorder %v1802, 0.0
  %vm2157 = vcmp.gt.f32.partialorder %v1804, 0.0
  %vm2158 = vcmp.gt.f32.partialorder %v1807, 0.0
  %vm2159 = vcmp.gt.f32.partialorder %v1809, 0.0
  %vm2160 = vcmp.gt.f32.partialorder %v1812, 0.0
  %vm2161 = vcmp.gt.f32.partialorder %v1814, 0.0
  %vm2162 = vcmp.gt.f32.partialorder %v1817, 0.0
  %vm2163 = vcmp.gt.f32.partialorder %v1819, 0.0
  %vm2164 = vcmp.gt.f32.partialorder %v1822, 0.0
  %vm2165 = vcmp.gt.f32.partialorder %v1824, 0.0
  %vm2166 = vcmp.gt.f32.partialorder %v1827, 0.0
  %vm2167 = vcmp.gt.f32.partialorder %v1829, 0.0
  %vm2168 = vcmp.gt.f32.partialorder %v1832, 0.0
  %vm2169 = vcmp.gt.f32.partialorder %v1834, 0.0
  %vm2170 = vcmp.gt.f32.partialorder %v1837, 0.0
  %vm2171 = vcmp.gt.f32.partialorder %v1839, 0.0
  %vm2172 = vcmp.gt.f32.partialorder %v1842, 0.0
  %vm2173 = vcmp.gt.f32.partialorder %v1844, 0.0
  %vm2174 = vcmp.gt.f32.partialorder %v1847, 0.0
  %vm2175 = vcmp.gt.f32.partialorder %v1849, 0.0
  %vm2176 = vcmp.gt.f32.partialorder %v1852, 0.0
  %vm2177 = vcmp.gt.f32.partialorder %v1854, 0.0
  %vm2178 = vcmp.gt.f32.partialorder %v1857, 0.0
  %vm2179 = vcmp.gt.f32.partialorder %v1859, 0.0
  %vm2180 = vcmp.gt.f32.partialorder %v1862, 0.0
  %vm2181 = vcmp.gt.f32.partialorder %v1864, 0.0
  %vm2182 = vcmp.gt.f32.partialorder %v1867, 0.0
  %vm2183 = vcmp.gt.f32.partialorder %v1869, 0.0
  %vm2184 = vcmp.gt.f32.partialorder %v1872, 0.0
  %vm2185 = vcmp.gt.f32.partialorder %v1874, 0.0
  %vm2186 = vcmp.gt.f32.partialorder %v1877, 0.0
  %vm2187 = vcmp.gt.f32.partialorder %v1879, 0.0
  %vm2188 = vcmp.gt.f32.partialorder %v1882, 0.0
  %vm2189 = vcmp.gt.f32.partialorder %v1884, 0.0
  %vm2190 = vcmp.gt.f32.partialorder %v1887, 0.0
  %vm2191 = vcmp.gt.f32.partialorder %v1889, 0.0
  %vm2192 = vcmp.gt.f32.partialorder %v1892, 0.0
  %vm2193 = vcmp.gt.f32.partialorder %v1894, 0.0
  %vm2194 = vcmp.gt.f32.partialorder %v1897, 0.0
  %vm2195 = vcmp.gt.f32.partialorder %v1899, 0.0
  %vm2196 = vcmp.gt.f32.partialorder %v1902, 0.0
  %vm2197 = vcmp.gt.f32.partialorder %v1904, 0.0
  %vm2198 = vcmp.gt.f32.partialorder %v1907, 0.0
  %vm2199 = vcmp.gt.f32.partialorder %v1909, 0.0
  %vm2200 = vcmp.gt.f32.partialorder %v1912, 0.0
  %vm2201 = vcmp.gt.f32.partialorder %v1914, 0.0
  %vm2202 = vcmp.gt.f32.partialorder %v1917, 0.0
  %vm2203 = vcmp.gt.f32.partialorder %v1919, 0.0
  %vm2204 = vcmp.gt.f32.partialorder %v1922, 0.0
  %vm2205 = vcmp.gt.f32.partialorder %v1924, 0.0
  %vm2206 = vcmp.gt.f32.partialorder %v1927, 0.0
  %vm2207 = vcmp.gt.f32.partialorder %v1929, 0.0
  %vm2208 = vcmp.gt.f32.partialorder %v1932, 0.0
  %vm2209 = vcmp.gt.f32.partialorder %v1934, 0.0
  %vm2210 = vcmp.gt.f32.partialorder %v1937, 0.0
  %vm2211 = vcmp.gt.f32.partialorder %v1939, 0.0
  %vm2212 = vcmp.gt.f32.partialorder %v1942, 0.0
  %vm2213 = vcmp.gt.f32.partialorder %v1944, 0.0
  %vm2214 = vcmp.gt.f32.partialorder %v1947, 0.0
  %vm2215 = vcmp.gt.f32.partialorder %v1949, 0.0
  %vm2216 = vcmp.gt.f32.partialorder %v1952, 0.0
  %vm2217 = vcmp.gt.f32.partialorder %v1954, 0.0
  %vm2218 = vcmp.gt.f32.partialorder %v1957, 0.0
  %vm2219 = vcmp.gt.f32.partialorder %v1959, 0.0
  %vm2220 = vcmp.gt.f32.partialorder %v1962, 0.0
  %vm2221 = vcmp.gt.f32.partialorder %v1964, 0.0
  %v2222 = vmul.f32 %v1327, 0.2
  %v2223 = vmul.f32 %v1329, 0.2
  %v2224 = vmul.f32 %v1332, 0.2
  %v2225 = vmul.f32 %v1334, 0.2
  %v2226 = vmul.f32 %v1337, 0.2
  %v2227 = vmul.f32 %v1339, 0.2
  %v2228 = vmul.f32 %v1342, 0.2
  %v2229 = vmul.f32 %v1344, 0.2
  %v2230 = vmul.f32 %v1347, 0.2
  %v2231 = vmul.f32 %v1349, 0.2
  %v2232 = vmul.f32 %v1352, 0.2
  %v2233 = vmul.f32 %v1354, 0.2
  %v2234 = vmul.f32 %v1357, 0.2
  %v2235 = vmul.f32 %v1359, 0.2
  %v2236 = vmul.f32 %v1362, 0.2
  %v2237 = vmul.f32 %v1364, 0.2
  %v2238 = vmul.f32 %v1367, 0.2
  %v2239 = vmul.f32 %v1369, 0.2
  %v2240 = vmul.f32 %v1372, 0.2
  %v2241 = vmul.f32 %v1374, 0.2
  %v2242 = vmul.f32 %v1377, 0.2
  %v2243 = vmul.f32 %v1379, 0.2
  %v2244 = vmul.f32 %v1382, 0.2
  %v2245 = vmul.f32 %v1384, 0.2
  %v2246 = vmul.f32 %v1387, 0.2
  %v2247 = vmul.f32 %v1389, 0.2
  %v2248 = vmul.f32 %v1392, 0.2
  %v2249 = vmul.f32 %v1394, 0.2
  %v2250 = vmul.f32 %v1397, 0.2
  %v2251 = vmul.f32 %v1399, 0.2
  %v2252 = vmul.f32 %v1402, 0.2
  %v2253 = vmul.f32 %v1404, 0.2
  %v2254 = vmul.f32 %v1407, 0.2
  %v2255 = vmul.f32 %v1409, 0.2
  %v2256 = vmul.f32 %v1412, 0.2
  %v2257 = vmul.f32 %v1414, 0.2
  %v2258 = vmul.f32 %v1417, 0.2
  %v2259 = vmul.f32 %v1419, 0.2
  %v2260 = vmul.f32 %v1422, 0.2
  %v2261 = vmul.f32 %v1424, 0.2
  %v2262 = vmul.f32 %v1427, 0.2
  %v2263 = vmul.f32 %v1429, 0.2
  %v2264 = vmul.f32 %v1432, 0.2
  %v2265 = vmul.f32 %v1434, 0.2
  %v2266 = vmul.f32 %v1437, 0.2
  %v2267 = vmul.f32 %v1439, 0.2
  %v2268 = vmul.f32 %v1442, 0.2
  %v2269 = vmul.f32 %v1444, 0.2
  %v2270 = vmul.f32 %v1447, 0.2
  %v2271 = vmul.f32 %v1449, 0.2
  %v2272 = vmul.f32 %v1452, 0.2
  %v2273 = vmul.f32 %v1454, 0.2
  %v2274 = vmul.f32 %v1457, 0.2
  %v2275 = vmul.f32 %v1459, 0.2
  %v2276 = vmul.f32 %v1462, 0.2
  %v2277 = vmul.f32 %v1464, 0.2
  %v2278 = vmul.f32 %v1467, 0.2
  %v2279 = vmul.f32 %v1469, 0.2
  %v2280 = vmul.f32 %v1472, 0.2
  %v2281 = vmul.f32 %v1474, 0.2
  %v2282 = vmul.f32 %v1477, 0.2
  %v2283 = vmul.f32 %v1479, 0.2
  %v2284 = vmul.f32 %v1482, 0.2
  %v2285 = vmul.f32 %v1484, 0.2
  %v2286 = vmul.f32 %v1487, 0.2
  %v2287 = vmul.f32 %v1489, 0.2
  %v2288 = vmul.f32 %v1492, 0.2
  %v2289 = vmul.f32 %v1494, 0.2
  %v2290 = vmul.f32 %v1497, 0.2
  %v2291 = vmul.f32 %v1499, 0.2
  %v2292 = vmul.f32 %v1502, 0.2
  %v2293 = vmul.f32 %v1504, 0.2
  %v2294 = vmul.f32 %v1507, 0.2
  %v2295 = vmul.f32 %v1509, 0.2
  %v2296 = vmul.f32 %v1512, 0.2
  %v2297 = vmul.f32 %v1514, 0.2
  %v2298 = vmul.f32 %v1517, 0.2
  %v2299 = vmul.f32 %v1519, 0.2
  %v2300 = vmul.f32 %v1522, 0.2
  %v2301 = vmul.f32 %v1524, 0.2
  %v2302 = vmul.f32 %v1527, 0.2
  %v2303 = vmul.f32 %v1529, 0.2
  %v2304 = vmul.f32 %v1532, 0.2
  %v2305 = vmul.f32 %v1534, 0.2
  %v2306 = vmul.f32 %v1537, 0.2
  %v2307 = vmul.f32 %v1539, 0.2
  %v2308 = vmul.f32 %v1542, 0.2
  %v2309 = vmul.f32 %v1544, 0.2
  %v2310 = vmul.f32 %v1547, 0.2
  %v2311 = vmul.f32 %v1549, 0.2
  %v2312 = vmul.f32 %v1552, 0.2
  %v2313 = vmul.f32 %v1554, 0.2
  %v2314 = vmul.f32 %v1557, 0.2
  %v2315 = vmul.f32 %v1559, 0.2
  %v2316 = vmul.f32 %v1562, 0.2
  %v2317 = vmul.f32 %v1564, 0.2
  %v2318 = vmul.f32 %v1567, 0.2
  %v2319 = vmul.f32 %v1569, 0.2
  %v2320 = vmul.f32 %v1572, 0.2
  %v2321 = vmul.f32 %v1574, 0.2
  %v2322 = vmul.f32 %v1577, 0.2
  %v2323 = vmul.f32 %v1579, 0.2
  %v2324 = vmul.f32 %v1582, 0.2
  %v2325 = vmul.f32 %v1584, 0.2
  %v2326 = vmul.f32 %v1587, 0.2
  %v2327 = vmul.f32 %v1589, 0.2
  %v2328 = vmul.f32 %v1592, 0.2
  %v2329 = vmul.f32 %v1594, 0.2
  %v2330 = vmul.f32 %v1597, 0.2
  %v2331 = vmul.f32 %v1599, 0.2
  %v2332 = vmul.f32 %v1602, 0.2
  %v2333 = vmul.f32 %v1604, 0.2
  %v2334 = vmul.f32 %v1607, 0.2
  %v2335 = vmul.f32 %v1609, 0.2
  %v2336 = vmul.f32 %v1612, 0.2
  %v2337 = vmul.f32 %v1614, 0.2
  %v2338 = vmul.f32 %v1617, 0.2
  %v2339 = vmul.f32 %v1619, 0.2
  %v2340 = vmul.f32 %v1622, 0.2
  %v2341 = vmul.f32 %v1624, 0.2
  %v2342 = vmul.f32 %v1627, 0.2
  %v2343 = vmul.f32 %v1629, 0.2
  %v2344 = vmul.f32 %v1632, 0.2
  %v2345 = vmul.f32 %v1634, 0.2
  %v2346 = vmul.f32 %v1637, 0.2
  %v2347 = vmul.f32 %v1639, 0.2
  %v2348 = vmul.f32 %v1642, 0.2
  %v2349 = vmul.f32 %v1644, 0.2
  %v2350 = vmul.f32 %v1647, 0.2
  %v2351 = vmul.f32 %v1649, 0.2
  %v2352 = vmul.f32 %v1652, 0.2
  %v2353 = vmul.f32 %v1654, 0.2
  %v2354 = vmul.f32 %v1657, 0.2
  %v2355 = vmul.f32 %v1659, 0.2
  %v2356 = vmul.f32 %v1662, 0.2
  %v2357 = vmul.f32 %v1664, 0.2
  %v2358 = vmul.f32 %v1667, 0.2
  %v2359 = vmul.f32 %v1669, 0.2
  %v2360 = vmul.f32 %v1672, 0.2
  %v2361 = vmul.f32 %v1674, 0.2
  %v2362 = vmul.f32 %v1677, 0.2
  %v2363 = vmul.f32 %v1679, 0.2
  %v2364 = vmul.f32 %v1682, 0.2
  %v2365 = vmul.f32 %v1684, 0.2
  %v2366 = vmul.f32 %v1687, 0.2
  %v2367 = vmul.f32 %v1689, 0.2
  %v2368 = vmul.f32 %v1692, 0.2
  %v2369 = vmul.f32 %v1694, 0.2
  %v2370 = vmul.f32 %v1697, 0.2
  %v2371 = vmul.f32 %v1699, 0.2
  %v2372 = vmul.f32 %v1702, 0.2
  %v2373 = vmul.f32 %v1704, 0.2
  %v2374 = vmul.f32 %v1707, 0.2
  %v2375 = vmul.f32 %v1709, 0.2
  %v2376 = vmul.f32 %v1712, 0.2
  %v2377 = vmul.f32 %v1714, 0.2
  %v2378 = vmul.f32 %v1717, 0.2
  %v2379 = vmul.f32 %v1719, 0.2
  %v2380 = vmul.f32 %v1722, 0.2
  %v2381 = vmul.f32 %v1724, 0.2
  %v2382 = vmul.f32 %v1727, 0.2
  %v2383 = vmul.f32 %v1729, 0.2
  %v2384 = vmul.f32 %v1732, 0.2
  %v2385 = vmul.f32 %v1734, 0.2
  %v2386 = vmul.f32 %v1737, 0.2
  %v2387 = vmul.f32 %v1739, 0.2
  %v2388 = vmul.f32 %v1742, 0.2
  %v2389 = vmul.f32 %v1744, 0.2
  %v2390 = vmul.f32 %v1747, 0.2
  %v2391 = vmul.f32 %v1749, 0.2
  %v2392 = vmul.f32 %v1752, 0.2
  %v2393 = vmul.f32 %v1754, 0.2
  %v2394 = vmul.f32 %v1757, 0.2
  %v2395 = vmul.f32 %v1759, 0.2
  %v2396 = vmul.f32 %v1762, 0.2
  %v2397 = vmul.f32 %v1764, 0.2
  %v2398 = vmul.f32 %v1767, 0.2
  %v2399 = vmul.f32 %v1769, 0.2
  %v2400 = vmul.f32 %v1772, 0.2
  %v2401 = vmul.f32 %v1774, 0.2
  %v2402 = vmul.f32 %v1777, 0.2
  %v2403 = vmul.f32 %v1779, 0.2
  %v2404 = vmul.f32 %v1782, 0.2
  %v2405 = vmul.f32 %v1784, 0.2
  %v2406 = vmul.f32 %v1787, 0.2
  %v2407 = vmul.f32 %v1789, 0.2
  %v2408 = vmul.f32 %v1792, 0.2
  %v2409 = vmul.f32 %v1794, 0.2
  %v2410 = vmul.f32 %v1797, 0.2
  %v2411 = vmul.f32 %v1799, 0.2
  %v2412 = vmul.f32 %v1802, 0.2
  %v2413 = vmul.f32 %v1804, 0.2
  %v2414 = vmul.f32 %v1807, 0.2
  %v2415 = vmul.f32 %v1809, 0.2
  %v2416 = vmul.f32 %v1812, 0.2
  %v2417 = vmul.f32 %v1814, 0.2
  %v2418 = vmul.f32 %v1817, 0.2
  %v2419 = vmul.f32 %v1819, 0.2
  %v2420 = vmul.f32 %v1822, 0.2
  %v2421 = vmul.f32 %v1824, 0.2
  %v2422 = vmul.f32 %v1827, 0.2
  %v2423 = vmul.f32 %v1829, 0.2
  %v2424 = vmul.f32 %v1832, 0.2
  %v2425 = vmul.f32 %v1834, 0.2
  %v2426 = vmul.f32 %v1837, 0.2
  %v2427 = vmul.f32 %v1839, 0.2
  %v2428 = vmul.f32 %v1842, 0.2
  %v2429 = vmul.f32 %v1844, 0.2
  %v2430 = vmul.f32 %v1847, 0.2
  %v2431 = vmul.f32 %v1849, 0.2
  %v2432 = vmul.f32 %v1852, 0.2
  %v2433 = vmul.f32 %v1854, 0.2
  %v2434 = vmul.f32 %v1857, 0.2
  %v2435 = vmul.f32 %v1859, 0.2
  %v2436 = vmul.f32 %v1862, 0.2
  %v2437 = vmul.f32 %v1864, 0.2
  %v2438 = vmul.f32 %v1867, 0.2
  %v2439 = vmul.f32 %v1869, 0.2
  %v2440 = vmul.f32 %v1872, 0.2
  %v2441 = vmul.f32 %v1874, 0.2
  %v2442 = vmul.f32 %v1877, 0.2
  %v2443 = vmul.f32 %v1879, 0.2
  %v2444 = vmul.f32 %v1882, 0.2
  %v2445 = vmul.f32 %v1884, 0.2
  %v2446 = vmul.f32 %v1887, 0.2
  %v2447 = vmul.f32 %v1889, 0.2
  %v2448 = vmul.f32 %v1892, 0.2
  %v2449 = vmul.f32 %v1894, 0.2
  %v2450 = vmul.f32 %v1897, 0.2
  %v2451 = vmul.f32 %v1899, 0.2
  %v2452 = vmul.f32 %v1902, 0.2
  %v2453 = vmul.f32 %v1904, 0.2
  %v2454 = vmul.f32 %v1907, 0.2
  %v2455 = vmul.f32 %v1909, 0.2
  %v2456 = vmul.f32 %v1912, 0.2
  %v2457 = vmul.f32 %v1914, 0.2
  %v2458 = vmul.f32 %v1917, 0.2
  %v2459 = vmul.f32 %v1919, 0.2
  %v2460 = vmul.f32 %v1922, 0.2
  %v2461 = vmul.f32 %v1924, 0.2
  %v2462 = vmul.f32 %v1927, 0.2
  %v2463 = vmul.f32 %v1929, 0.2
  %v2464 = vmul.f32 %v1932, 0.2
  %v2465 = vmul.f32 %v1934, 0.2
  %v2466 = vmul.f32 %v1937, 0.2
  %v2467 = vmul.f32 %v1939, 0.2
  %v2468 = vmul.f32 %v1942, 0.2
  %v2469 = vmul.f32 %v1944, 0.2
  %v2470 = vmul.f32 %v1947, 0.2
  %v2471 = vmul.f32 %v1949, 0.2
  %v2472 = vmul.f32 %v1952, 0.2
  %v2473 = vmul.f32 %v1954, 0.2
  %v2474 = vmul.f32 %v1957, 0.2
  %v2475 = vmul.f32 %v1959, 0.2
  %v2476 = vmul.f32 %v1962, 0.2
  %v2477 = vmul.f32 %v1964, 0.2
  %v2478 = vsel %vm1966, %v1327, %v2222
  %v2479 = vsel %vm1967, %v1329, %v2223
  %v2480 = vsel %vm1968, %v1332, %v2224
  %v2481 = vsel %vm1969, %v1334, %v2225
  %v2482 = vsel %vm1970, %v1337, %v2226
  %v2483 = vsel %vm1971, %v1339, %v2227
  %v2484 = vsel %vm1972, %v1342, %v2228
  %v2485 = vsel %vm1973, %v1344, %v2229
  %v2486 = vsel %vm1974, %v1347, %v2230
  %v2487 = vsel %vm1975, %v1349, %v2231
  %v2488 = vsel %vm1976, %v1352, %v2232
  %v2489 = vsel %vm1977, %v1354, %v2233
  %v2490 = vsel %vm1978, %v1357, %v2234
  %v2491 = vsel %vm1979, %v1359, %v2235
  %v2492 = vsel %vm1980, %v1362, %v2236
  %v2493 = vsel %vm1981, %v1364, %v2237
  %v2494 = vsel %vm1982, %v1367, %v2238
  %v2495 = vsel %vm1983, %v1369, %v2239
  %v2496 = vsel %vm1984, %v1372, %v2240
  %v2497 = vsel %vm1985, %v1374, %v2241
  %v2498 = vsel %vm1986, %v1377, %v2242
  %v2499 = vsel %vm1987, %v1379, %v2243
  %v2500 = vsel %vm1988, %v1382, %v2244
  %v2501 = vsel %vm1989, %v1384, %v2245
  %v2502 = vsel %vm1990, %v1387, %v2246
  %v2503 = vsel %vm1991, %v1389, %v2247
  %v2504 = vsel %vm1992, %v1392, %v2248
  %v2505 = vsel %vm1993, %v1394, %v2249
  %v2506 = vsel %vm1994, %v1397, %v2250
  %v2507 = vsel %vm1995, %v1399, %v2251
  %v2508 = vsel %vm1996, %v1402, %v2252
  %v2509 = vsel %vm1997, %v1404, %v2253
  %v2510 = vsel %vm1998, %v1407, %v2254
  %v2511 = vsel %vm1999, %v1409, %v2255
  %v2512 = vsel %vm2000, %v1412, %v2256
  %v2513 = vsel %vm2001, %v1414, %v2257
  %v2514 = vsel %vm2002, %v1417, %v2258
  %v2515 = vsel %vm2003, %v1419, %v2259
  %v2516 = vsel %vm2004, %v1422, %v2260
  %v2517 = vsel %vm2005, %v1424, %v2261
  %v2518 = vsel %vm2006, %v1427, %v2262
  %v2519 = vsel %vm2007, %v1429, %v2263
  %v2520 = vsel %vm2008, %v1432, %v2264
  %v2521 = vsel %vm2009, %v1434, %v2265
  %v2522 = vsel %vm2010, %v1437, %v2266
  %v2523 = vsel %vm2011, %v1439, %v2267
  %v2524 = vsel %vm2012, %v1442, %v2268
  %v2525 = vsel %vm2013, %v1444, %v2269
  %v2526 = vsel %vm2014, %v1447, %v2270
  %v2527 = vsel %vm2015, %v1449, %v2271
  %v2528 = vsel %vm2016, %v1452, %v2272
  %v2529 = vsel %vm2017, %v1454, %v2273
  %v2530 = vsel %vm2018, %v1457, %v2274
  %v2531 = vsel %vm2019, %v1459, %v2275
  %v2532 = vsel %vm2020, %v1462, %v2276
  %v2533 = vsel %vm2021, %v1464, %v2277
  %v2534 = vsel %vm2022, %v1467, %v2278
  %v2535 = vsel %vm2023, %v1469, %v2279
  %v2536 = vsel %vm2024, %v1472, %v2280
  %v2537 = vsel %vm2025, %v1474, %v2281
  %v2538 = vsel %vm2026, %v1477, %v2282
  %v2539 = vsel %vm2027, %v1479, %v2283
  %v2540 = vsel %vm2028, %v1482, %v2284
  %v2541 = vsel %vm2029, %v1484, %v2285
  %v2542 = vsel %vm2030, %v1487, %v2286
  %v2543 = vsel %vm2031, %v1489, %v2287
  %v2544 = vsel %vm2032, %v1492, %v2288
  %v2545 = vsel %vm2033, %v1494, %v2289
  %v2546 = vsel %vm2034, %v1497, %v2290
  %v2547 = vsel %vm2035, %v1499, %v2291
  %v2548 = vsel %vm2036, %v1502, %v2292
  %v2549 = vsel %vm2037, %v1504, %v2293
  %v2550 = vsel %vm2038, %v1507, %v2294
  %v2551 = vsel %vm2039, %v1509, %v2295
  %v2552 = vsel %vm2040, %v1512, %v2296
  %v2553 = vsel %vm2041, %v1514, %v2297
  %v2554 = vsel %vm2042, %v1517, %v2298
  %v2555 = vsel %vm2043, %v1519, %v2299
  %v2556 = vsel %vm2044, %v1522, %v2300
  %v2557 = vsel %vm2045, %v1524, %v2301
  %v2558 = vsel %vm2046, %v1527, %v2302
  %v2559 = vsel %vm2047, %v1529, %v2303
  %v2560 = vsel %vm2048, %v1532, %v2304
  %v2561 = vsel %vm2049, %v1534, %v2305
  %v2562 = vsel %vm2050, %v1537, %v2306
  %v2563 = vsel %vm2051, %v1539, %v2307
  %v2564 = vsel %vm2052, %v1542, %v2308
  %v2565 = vsel %vm2053, %v1544, %v2309
  %v2566 = vsel %vm2054, %v1547, %v2310
  %v2567 = vsel %vm2055, %v1549, %v2311
  %v2568 = vsel %vm2056, %v1552, %v2312
  %v2569 = vsel %vm2057, %v1554, %v2313
  %v2570 = vsel %vm2058, %v1557, %v2314
  %v2571 = vsel %vm2059, %v1559, %v2315
  %v2572 = vsel %vm2060, %v1562, %v2316
  %v2573 = vsel %vm2061, %v1564, %v2317
  %v2574 = vsel %vm2062, %v1567, %v2318
  %v2575 = vsel %vm2063, %v1569, %v2319
  %v2576 = vsel %vm2064, %v1572, %v2320
  %v2577 = vsel %vm2065, %v1574, %v2321
  %v2578 = vsel %vm2066, %v1577, %v2322
  %v2579 = vsel %vm2067, %v1579, %v2323
  %v2580 = vsel %vm2068, %v1582, %v2324
  %v2581 = vsel %vm2069, %v1584, %v2325
  %v2582 = vsel %vm2070, %v1587, %v2326
  %v2583 = vsel %vm2071, %v1589, %v2327
  %v2584 = vsel %vm2072, %v1592, %v2328
  %v2585 = vsel %vm2073, %v1594, %v2329
  %v2586 = vsel %vm2074, %v1597, %v2330
  %v2587 = vsel %vm2075, %v1599, %v2331
  %v2588 = vsel %vm2076, %v1602, %v2332
  %v2589 = vsel %vm2077, %v1604, %v2333
  %v2590 = vsel %vm2078, %v1607, %v2334
  %v2591 = vsel %vm2079, %v1609, %v2335
  %v2592 = vsel %vm2080, %v1612, %v2336
  %v2593 = vsel %vm2081, %v1614, %v2337
  %v2594 = vsel %vm2082, %v1617, %v2338
  %v2595 = vsel %vm2083, %v1619, %v2339
  %v2596 = vsel %vm2084, %v1622, %v2340
  %v2597 = vsel %vm2085, %v1624, %v2341
  %v2598 = vsel %vm2086, %v1627, %v2342
  %v2599 = vsel %vm2087, %v1629, %v2343
  %v2600 = vsel %vm2088, %v1632, %v2344
  %v2601 = vsel %vm2089, %v1634, %v2345
  %v2602 = vsel %vm2090, %v1637, %v2346
  %v2603 = vsel %vm2091, %v1639, %v2347
  %v2604 = vsel %vm2092, %v1642, %v2348
  %v2605 = vsel %vm2093, %v1644, %v2349
  %v2606 = vsel %vm2094, %v1647, %v2350
  %v2607 = vsel %vm2095, %v1649, %v2351
  %v2608 = vsel %vm2096, %v1652, %v2352
  %v2609 = vsel %vm2097, %v1654, %v2353
  %v2610 = vsel %vm2098, %v1657, %v2354
  %v2611 = vsel %vm2099, %v1659, %v2355
  %v2612 = vsel %vm2100, %v1662, %v2356
  %v2613 = vsel %vm2101, %v1664, %v2357
  %v2614 = vsel %vm2102, %v1667, %v2358
  %v2615 = vsel %vm2103, %v1669, %v2359
  %v2616 = vsel %vm2104, %v1672, %v2360
  %v2617 = vsel %vm2105, %v1674, %v2361
  %v2618 = vsel %vm2106, %v1677, %v2362
  %v2619 = vsel %vm2107, %v1679, %v2363
  %v2620 = vsel %vm2108, %v1682, %v2364
  %v2621 = vsel %vm2109, %v1684, %v2365
  %v2622 = vsel %vm2110, %v1687, %v2366
  %v2623 = vsel %vm2111, %v1689, %v2367
  %v2624 = vsel %vm2112, %v1692, %v2368
  %v2625 = vsel %vm2113, %v1694, %v2369
  %v2626 = vsel %vm2114, %v1697, %v2370
  %v2627 = vsel %vm2115, %v1699, %v2371
  %v2628 = vsel %vm2116, %v1702, %v2372
  %v2629 = vsel %vm2117, %v1704, %v2373
  %v2630 = vsel %vm2118, %v1707, %v2374
  %v2631 = vsel %vm2119, %v1709, %v2375
  %v2632 = vsel %vm2120, %v1712, %v2376
  %v2633 = vsel %vm2121, %v1714, %v2377
  %v2634 = vsel %vm2122, %v1717, %v2378
  %v2635 = vsel %vm2123, %v1719, %v2379
  %v2636 = vsel %vm2124, %v1722, %v2380
  %v2637 = vsel %vm2125, %v1724, %v2381
  %v2638 = vsel %vm2126, %v1727, %v2382
  %v2639 = vsel %vm2127, %v1729, %v2383
  %v2640 = vsel %vm2128, %v1732, %v2384
  %v2641 = vsel %vm2129, %v1734, %v2385
  %v2642 = vsel %vm2130, %v1737, %v2386
  %v2643 = vsel %vm2131, %v1739, %v2387
  %v2644 = vsel %vm2132, %v1742, %v2388
  %v2645 = vsel %vm2133, %v1744, %v2389
  %v2646 = vsel %vm2134, %v1747, %v2390
  %v2647 = vsel %vm2135, %v1749, %v2391
  %v2648 = vsel %vm2136, %v1752, %v2392
  %v2649 = vsel %vm2137, %v1754, %v2393
  %v2650 = vsel %vm2138, %v1757, %v2394
  %v2651 = vsel %vm2139, %v1759, %v2395
  %v2652 = vsel %vm2140, %v1762, %v2396
  %v2653 = vsel %vm2141, %v1764, %v2397
  %v2654 = vsel %vm2142, %v1767, %v2398
  %v2655 = vsel %vm2143, %v1769, %v2399
  %v2656 = vsel %vm2144, %v1772, %v2400
  %v2657 = vsel %vm2145, %v1774, %v2401
  %v2658 = vsel %vm2146, %v1777, %v2402
  %v2659 = vsel %vm2147, %v1779, %v2403
  %v2660 = vsel %vm2148, %v1782, %v2404
  %v2661 = vsel %vm2149, %v1784, %v2405
  %v2662 = vsel %vm2150, %v1787, %v2406
  %v2663 = vsel %vm2151, %v1789, %v2407
  %v2664 = vsel %vm2152, %v1792, %v2408
  %v2665 = vsel %vm2153, %v1794, %v2409
  %v2666 = vsel %vm2154, %v1797, %v2410
  %v2667 = vsel %vm2155, %v1799, %v2411
  %v2668 = vsel %vm2156, %v1802, %v2412
  %v2669 = vsel %vm2157, %v1804, %v2413
  %v2670 = vsel %vm2158, %v1807, %v2414
  %v2671 = vsel %vm2159, %v1809, %v2415
  %v2672 = vsel %vm2160, %v1812, %v2416
  %v2673 = vsel %vm2161, %v1814, %v2417
  %v2674 = vsel %vm2162, %v1817, %v2418
  %v2675 = vsel %vm2163, %v1819, %v2419
  %v2676 = vsel %vm2164, %v1822, %v2420
  %v2677 = vsel %vm2165, %v1824, %v2421
  %v2678 = vsel %vm2166, %v1827, %v2422
  %v2679 = vsel %vm2167, %v1829, %v2423
  %v2680 = vsel %vm2168, %v1832, %v2424
  %v2681 = vsel %vm2169, %v1834, %v2425
  %v2682 = vsel %vm2170, %v1837, %v2426
  %v2683 = vsel %vm2171, %v1839, %v2427
  %v2684 = vsel %vm2172, %v1842, %v2428
  %v2685 = vsel %vm2173, %v1844, %v2429
  %v2686 = vsel %vm2174, %v1847, %v2430
  %v2687 = vsel %vm2175, %v1849, %v2431
  %v2688 = vsel %vm2176, %v1852, %v2432
  %v2689 = vsel %vm2177, %v1854, %v2433
  %v2690 = vsel %vm2178, %v1857, %v2434
  %v2691 = vsel %vm2179, %v1859, %v2435
  %v2692 = vsel %vm2180, %v1862, %v2436
  %v2693 = vsel %vm2181, %v1864, %v2437
  %v2694 = vsel %vm2182, %v1867, %v2438
  %v2695 = vsel %vm2183, %v1869, %v2439
  %v2696 = vsel %vm2184, %v1872, %v2440
  %v2697 = vsel %vm2185, %v1874, %v2441
  %v2698 = vsel %vm2186, %v1877, %v2442
  %v2699 = vsel %vm2187, %v1879, %v2443
  %v2700 = vsel %vm2188, %v1882, %v2444
  %v2701 = vsel %vm2189, %v1884, %v2445
  %v2702 = vsel %vm2190, %v1887, %v2446
  %v2703 = vsel %vm2191, %v1889, %v2447
  %v2704 = vsel %vm2192, %v1892, %v2448
  %v2705 = vsel %vm2193, %v1894, %v2449
  %v2706 = vsel %vm2194, %v1897, %v2450
  %v2707 = vsel %vm2195, %v1899, %v2451
  %v2708 = vsel %vm2196, %v1902, %v2452
  %v2709 = vsel %vm2197, %v1904, %v2453
  %v2710 = vsel %vm2198, %v1907, %v2454
  %v2711 = vsel %vm2199, %v1909, %v2455
  %v2712 = vsel %vm2200, %v1912, %v2456
  %v2713 = vsel %vm2201, %v1914, %v2457
  %v2714 = vsel %vm2202, %v1917, %v2458
  %v2715 = vsel %vm2203, %v1919, %v2459
  %v2716 = vsel %vm2204, %v1922, %v2460
  %v2717 = vsel %vm2205, %v1924, %v2461
  %v2718 = vsel %vm2206, %v1927, %v2462
  %v2719 = vsel %vm2207, %v1929, %v2463
  %v2720 = vsel %vm2208, %v1932, %v2464
  %v2721 = vsel %vm2209, %v1934, %v2465
  %v2722 = vsel %vm2210, %v1937, %v2466
  %v2723 = vsel %vm2211, %v1939, %v2467
  %v2724 = vsel %vm2212, %v1942, %v2468
  %v2725 = vsel %vm2213, %v1944, %v2469
  %v2726 = vsel %vm2214, %v1947, %v2470
  %v2727 = vsel %vm2215, %v1949, %v2471
  %v2728 = vsel %vm2216, %v1952, %v2472
  %v2729 = vsel %vm2217, %v1954, %v2473
  %v2730 = vsel %vm2218, %v1957, %v2474
  %v2731 = vsel %vm2219, %v1959, %v2475
  %v2732 = vsel %vm2220, %v1962, %v2476
  %v2733 = vsel %vm2221, %v1964, %v2477
  %v2734 = vpack.c.bf16 %v2478, %v2478
  %v2735 = vpack.c.bf16 %v2479, %v2479
  %v2736 = vpack.c.bf16 %v2480, %v2480
  %v2737 = vpack.c.bf16 %v2481, %v2481
  %v2738 = vpack.c.bf16 %v2482, %v2482
  %v2739 = vpack.c.bf16 %v2483, %v2483
  %v2740 = vpack.c.bf16 %v2484, %v2484
  %v2741 = vpack.c.bf16 %v2485, %v2485
  %v2742 = vpack.c.bf16 %v2486, %v2486
  %v2743 = vpack.c.bf16 %v2487, %v2487
  %v2744 = vpack.c.bf16 %v2488, %v2488
  %v2745 = vpack.c.bf16 %v2489, %v2489
  %v2746 = vpack.c.bf16 %v2490, %v2490
  %v2747 = vpack.c.bf16 %v2491, %v2491
  %v2748 = vpack.c.bf16 %v2492, %v2492
  %v2749 = vpack.c.bf16 %v2493, %v2493
  %v2750 = vpack.c.bf16 %v2494, %v2494
  %v2751 = vpack.c.bf16 %v2495, %v2495
  %v2752 = vpack.c.bf16 %v2496, %v2496
  %v2753 = vpack.c.bf16 %v2497, %v2497
  %v2754 = vpack.c.bf16 %v2498, %v2498
  %v2755 = vpack.c.bf16 %v2499, %v2499
  %v2756 = vpack.c.bf16 %v2500, %v2500
  %v2757 = vpack.c.bf16 %v2501, %v2501
  %v2758 = vpack.c.bf16 %v2502, %v2502
  %v2759 = vpack.c.bf16 %v2503, %v2503
  %v2760 = vpack.c.bf16 %v2504, %v2504
  %v2761 = vpack.c.bf16 %v2505, %v2505
  %v2762 = vpack.c.bf16 %v2506, %v2506
  %v2763 = vpack.c.bf16 %v2507, %v2507
  %v2764 = vpack.c.bf16 %v2508, %v2508
  %v2765 = vpack.c.bf16 %v2509, %v2509
  %v2766 = vpack.c.bf16 %v2510, %v2510
  %v2767 = vpack.c.bf16 %v2511, %v2511
  %v2768 = vpack.c.bf16 %v2512, %v2512
  %v2769 = vpack.c.bf16 %v2513, %v2513
  %v2770 = vpack.c.bf16 %v2514, %v2514
  %v2771 = vpack.c.bf16 %v2515, %v2515
  %v2772 = vpack.c.bf16 %v2516, %v2516
  %v2773 = vpack.c.bf16 %v2517, %v2517
  %v2774 = vpack.c.bf16 %v2518, %v2518
  %v2775 = vpack.c.bf16 %v2519, %v2519
  %v2776 = vpack.c.bf16 %v2520, %v2520
  %v2777 = vpack.c.bf16 %v2521, %v2521
  %v2778 = vpack.c.bf16 %v2522, %v2522
  %v2779 = vpack.c.bf16 %v2523, %v2523
  %v2780 = vpack.c.bf16 %v2524, %v2524
  %v2781 = vpack.c.bf16 %v2525, %v2525
  %v2782 = vpack.c.bf16 %v2526, %v2526
  %v2783 = vpack.c.bf16 %v2527, %v2527
  %v2784 = vpack.c.bf16 %v2528, %v2528
  %v2785 = vpack.c.bf16 %v2529, %v2529
  %v2786 = vpack.c.bf16 %v2530, %v2530
  %v2787 = vpack.c.bf16 %v2531, %v2531
  %v2788 = vpack.c.bf16 %v2532, %v2532
  %v2789 = vpack.c.bf16 %v2533, %v2533
  %v2790 = vpack.c.bf16 %v2534, %v2534
  %v2791 = vpack.c.bf16 %v2535, %v2535
  %v2792 = vpack.c.bf16 %v2536, %v2536
  %v2793 = vpack.c.bf16 %v2537, %v2537
  %v2794 = vpack.c.bf16 %v2538, %v2538
  %v2795 = vpack.c.bf16 %v2539, %v2539
  %v2796 = vpack.c.bf16 %v2540, %v2540
  %v2797 = vpack.c.bf16 %v2541, %v2541
  %v2798 = vpack.c.bf16 %v2542, %v2542
  %v2799 = vpack.c.bf16 %v2543, %v2543
  %v2800 = vpack.c.bf16 %v2544, %v2544
  %v2801 = vpack.c.bf16 %v2545, %v2545
  %v2802 = vpack.c.bf16 %v2546, %v2546
  %v2803 = vpack.c.bf16 %v2547, %v2547
  %v2804 = vpack.c.bf16 %v2548, %v2548
  %v2805 = vpack.c.bf16 %v2549, %v2549
  %v2806 = vpack.c.bf16 %v2550, %v2550
  %v2807 = vpack.c.bf16 %v2551, %v2551
  %v2808 = vpack.c.bf16 %v2552, %v2552
  %v2809 = vpack.c.bf16 %v2553, %v2553
  %v2810 = vpack.c.bf16 %v2554, %v2554
  %v2811 = vpack.c.bf16 %v2555, %v2555
  %v2812 = vpack.c.bf16 %v2556, %v2556
  %v2813 = vpack.c.bf16 %v2557, %v2557
  %v2814 = vpack.c.bf16 %v2558, %v2558
  %v2815 = vpack.c.bf16 %v2559, %v2559
  %v2816 = vpack.c.bf16 %v2560, %v2560
  %v2817 = vpack.c.bf16 %v2561, %v2561
  %v2818 = vpack.c.bf16 %v2562, %v2562
  %v2819 = vpack.c.bf16 %v2563, %v2563
  %v2820 = vpack.c.bf16 %v2564, %v2564
  %v2821 = vpack.c.bf16 %v2565, %v2565
  %v2822 = vpack.c.bf16 %v2566, %v2566
  %v2823 = vpack.c.bf16 %v2567, %v2567
  %v2824 = vpack.c.bf16 %v2568, %v2568
  %v2825 = vpack.c.bf16 %v2569, %v2569
  %v2826 = vpack.c.bf16 %v2570, %v2570
  %v2827 = vpack.c.bf16 %v2571, %v2571
  %v2828 = vpack.c.bf16 %v2572, %v2572
  %v2829 = vpack.c.bf16 %v2573, %v2573
  %v2830 = vpack.c.bf16 %v2574, %v2574
  %v2831 = vpack.c.bf16 %v2575, %v2575
  %v2832 = vpack.c.bf16 %v2576, %v2576
  %v2833 = vpack.c.bf16 %v2577, %v2577
  %v2834 = vpack.c.bf16 %v2578, %v2578
  %v2835 = vpack.c.bf16 %v2579, %v2579
  %v2836 = vpack.c.bf16 %v2580, %v2580
  %v2837 = vpack.c.bf16 %v2581, %v2581
  %v2838 = vpack.c.bf16 %v2582, %v2582
  %v2839 = vpack.c.bf16 %v2583, %v2583
  %v2840 = vpack.c.bf16 %v2584, %v2584
  %v2841 = vpack.c.bf16 %v2585, %v2585
  %v2842 = vpack.c.bf16 %v2586, %v2586
  %v2843 = vpack.c.bf16 %v2587, %v2587
  %v2844 = vpack.c.bf16 %v2588, %v2588
  %v2845 = vpack.c.bf16 %v2589, %v2589
  %v2846 = vpack.c.bf16 %v2590, %v2590
  %v2847 = vpack.c.bf16 %v2591, %v2591
  %v2848 = vpack.c.bf16 %v2592, %v2592
  %v2849 = vpack.c.bf16 %v2593, %v2593
  %v2850 = vpack.c.bf16 %v2594, %v2594
  %v2851 = vpack.c.bf16 %v2595, %v2595
  %v2852 = vpack.c.bf16 %v2596, %v2596
  %v2853 = vpack.c.bf16 %v2597, %v2597
  %v2854 = vpack.c.bf16 %v2598, %v2598
  %v2855 = vpack.c.bf16 %v2599, %v2599
  %v2856 = vpack.c.bf16 %v2600, %v2600
  %v2857 = vpack.c.bf16 %v2601, %v2601
  %v2858 = vpack.c.bf16 %v2602, %v2602
  %v2859 = vpack.c.bf16 %v2603, %v2603
  %v2860 = vpack.c.bf16 %v2604, %v2604
  %v2861 = vpack.c.bf16 %v2605, %v2605
  %v2862 = vpack.c.bf16 %v2606, %v2606
  %v2863 = vpack.c.bf16 %v2607, %v2607
  %v2864 = vpack.c.bf16 %v2608, %v2608
  %v2865 = vpack.c.bf16 %v2609, %v2609
  %v2866 = vpack.c.bf16 %v2610, %v2610
  %v2867 = vpack.c.bf16 %v2611, %v2611
  %v2868 = vpack.c.bf16 %v2612, %v2612
  %v2869 = vpack.c.bf16 %v2613, %v2613
  %v2870 = vpack.c.bf16 %v2614, %v2614
  %v2871 = vpack.c.bf16 %v2615, %v2615
  %v2872 = vpack.c.bf16 %v2616, %v2616
  %v2873 = vpack.c.bf16 %v2617, %v2617
  %v2874 = vpack.c.bf16 %v2618, %v2618
  %v2875 = vpack.c.bf16 %v2619, %v2619
  %v2876 = vpack.c.bf16 %v2620, %v2620
  %v2877 = vpack.c.bf16 %v2621, %v2621
  %v2878 = vpack.c.bf16 %v2622, %v2622
  %v2879 = vpack.c.bf16 %v2623, %v2623
  %v2880 = vpack.c.bf16 %v2624, %v2624
  %v2881 = vpack.c.bf16 %v2625, %v2625
  %v2882 = vpack.c.bf16 %v2626, %v2626
  %v2883 = vpack.c.bf16 %v2627, %v2627
  %v2884 = vpack.c.bf16 %v2628, %v2628
  %v2885 = vpack.c.bf16 %v2629, %v2629
  %v2886 = vpack.c.bf16 %v2630, %v2630
  %v2887 = vpack.c.bf16 %v2631, %v2631
  %v2888 = vpack.c.bf16 %v2632, %v2632
  %v2889 = vpack.c.bf16 %v2633, %v2633
  %v2890 = vpack.c.bf16 %v2634, %v2634
  %v2891 = vpack.c.bf16 %v2635, %v2635
  %v2892 = vpack.c.bf16 %v2636, %v2636
  %v2893 = vpack.c.bf16 %v2637, %v2637
  %v2894 = vpack.c.bf16 %v2638, %v2638
  %v2895 = vpack.c.bf16 %v2639, %v2639
  %v2896 = vpack.c.bf16 %v2640, %v2640
  %v2897 = vpack.c.bf16 %v2641, %v2641
  %v2898 = vpack.c.bf16 %v2642, %v2642
  %v2899 = vpack.c.bf16 %v2643, %v2643
  %v2900 = vpack.c.bf16 %v2644, %v2644
  %v2901 = vpack.c.bf16 %v2645, %v2645
  %v2902 = vpack.c.bf16 %v2646, %v2646
  %v2903 = vpack.c.bf16 %v2647, %v2647
  %v2904 = vpack.c.bf16 %v2648, %v2648
  %v2905 = vpack.c.bf16 %v2649, %v2649
  %v2906 = vpack.c.bf16 %v2650, %v2650
  %v2907 = vpack.c.bf16 %v2651, %v2651
  %v2908 = vpack.c.bf16 %v2652, %v2652
  %v2909 = vpack.c.bf16 %v2653, %v2653
  %v2910 = vpack.c.bf16 %v2654, %v2654
  %v2911 = vpack.c.bf16 %v2655, %v2655
  %v2912 = vpack.c.bf16 %v2656, %v2656
  %v2913 = vpack.c.bf16 %v2657, %v2657
  %v2914 = vpack.c.bf16 %v2658, %v2658
  %v2915 = vpack.c.bf16 %v2659, %v2659
  %v2916 = vpack.c.bf16 %v2660, %v2660
  %v2917 = vpack.c.bf16 %v2661, %v2661
  %v2918 = vpack.c.bf16 %v2662, %v2662
  %v2919 = vpack.c.bf16 %v2663, %v2663
  %v2920 = vpack.c.bf16 %v2664, %v2664
  %v2921 = vpack.c.bf16 %v2665, %v2665
  %v2922 = vpack.c.bf16 %v2666, %v2666
  %v2923 = vpack.c.bf16 %v2667, %v2667
  %v2924 = vpack.c.bf16 %v2668, %v2668
  %v2925 = vpack.c.bf16 %v2669, %v2669
  %v2926 = vpack.c.bf16 %v2670, %v2670
  %v2927 = vpack.c.bf16 %v2671, %v2671
  %v2928 = vpack.c.bf16 %v2672, %v2672
  %v2929 = vpack.c.bf16 %v2673, %v2673
  %v2930 = vpack.c.bf16 %v2674, %v2674
  %v2931 = vpack.c.bf16 %v2675, %v2675
  %v2932 = vpack.c.bf16 %v2676, %v2676
  %v2933 = vpack.c.bf16 %v2677, %v2677
  %v2934 = vpack.c.bf16 %v2678, %v2678
  %v2935 = vpack.c.bf16 %v2679, %v2679
  %v2936 = vpack.c.bf16 %v2680, %v2680
  %v2937 = vpack.c.bf16 %v2681, %v2681
  %v2938 = vpack.c.bf16 %v2682, %v2682
  %v2939 = vpack.c.bf16 %v2683, %v2683
  %v2940 = vpack.c.bf16 %v2684, %v2684
  %v2941 = vpack.c.bf16 %v2685, %v2685
  %v2942 = vpack.c.bf16 %v2686, %v2686
  %v2943 = vpack.c.bf16 %v2687, %v2687
  %v2944 = vpack.c.bf16 %v2688, %v2688
  %v2945 = vpack.c.bf16 %v2689, %v2689
  %v2946 = vpack.c.bf16 %v2690, %v2690
  %v2947 = vpack.c.bf16 %v2691, %v2691
  %v2948 = vpack.c.bf16 %v2692, %v2692
  %v2949 = vpack.c.bf16 %v2693, %v2693
  %v2950 = vpack.c.bf16 %v2694, %v2694
  %v2951 = vpack.c.bf16 %v2695, %v2695
  %v2952 = vpack.c.bf16 %v2696, %v2696
  %v2953 = vpack.c.bf16 %v2697, %v2697
  %v2954 = vpack.c.bf16 %v2698, %v2698
  %v2955 = vpack.c.bf16 %v2699, %v2699
  %v2956 = vpack.c.bf16 %v2700, %v2700
  %v2957 = vpack.c.bf16 %v2701, %v2701
  %v2958 = vpack.c.bf16 %v2702, %v2702
  %v2959 = vpack.c.bf16 %v2703, %v2703
  %v2960 = vpack.c.bf16 %v2704, %v2704
  %v2961 = vpack.c.bf16 %v2705, %v2705
  %v2962 = vpack.c.bf16 %v2706, %v2706
  %v2963 = vpack.c.bf16 %v2707, %v2707
  %v2964 = vpack.c.bf16 %v2708, %v2708
  %v2965 = vpack.c.bf16 %v2709, %v2709
  %v2966 = vpack.c.bf16 %v2710, %v2710
  %v2967 = vpack.c.bf16 %v2711, %v2711
  %v2968 = vpack.c.bf16 %v2712, %v2712
  %v2969 = vpack.c.bf16 %v2713, %v2713
  %v2970 = vpack.c.bf16 %v2714, %v2714
  %v2971 = vpack.c.bf16 %v2715, %v2715
  %v2972 = vpack.c.bf16 %v2716, %v2716
  %v2973 = vpack.c.bf16 %v2717, %v2717
  %v2974 = vpack.c.bf16 %v2718, %v2718
  %v2975 = vpack.c.bf16 %v2719, %v2719
  %v2976 = vpack.c.bf16 %v2720, %v2720
  %v2977 = vpack.c.bf16 %v2721, %v2721
  %v2978 = vpack.c.bf16 %v2722, %v2722
  %v2979 = vpack.c.bf16 %v2723, %v2723
  %v2980 = vpack.c.bf16 %v2724, %v2724
  %v2981 = vpack.c.bf16 %v2725, %v2725
  %v2982 = vpack.c.bf16 %v2726, %v2726
  %v2983 = vpack.c.bf16 %v2727, %v2727
  %v2984 = vpack.c.bf16 %v2728, %v2728
  %v2985 = vpack.c.bf16 %v2729, %v2729
  %v2986 = vpack.c.bf16 %v2730, %v2730
  %v2987 = vpack.c.bf16 %v2731, %v2731
  %v2988 = vpack.c.bf16 %v2732, %v2732
  %v2989 = vpack.c.bf16 %v2733, %v2733
  %2990 = vst [vmem:[%s2] sm:$0xf] %v2734
  %2991 = vst [vmem:[%s2 + $0x4] sm:$0xf] %v2735
  %2992 = vst [vmem:[%s2 + $0x8] sm:$0xf] %v2736
  %2993 = vst [vmem:[%s2 + $0xc] sm:$0xf] %v2737
  %2994 = vst [vmem:[%s2 + $0x10] sm:$0xf] %v2738
  %2995 = vst [vmem:[%s2 + $0x14] sm:$0xf] %v2739
  %2996 = vst [vmem:[%s2 + $0x18] sm:$0xf] %v2740
  %2997 = vst [vmem:[%s2 + $0x1c] sm:$0xf] %v2741
  %2998 = vst [vmem:[%s2 + $0x20] sm:$0xf] %v2742
  %2999 = vst [vmem:[%s2 + $0x24] sm:$0xf] %v2743
  %3000 = vst [vmem:[%s2 + $0x28] sm:$0xf] %v2744
  %3001 = vst [vmem:[%s2 + $0x2c] sm:$0xf] %v2745
  %3002 = vst [vmem:[%s2 + $0x30] sm:$0xf] %v2746
  %3003 = vst [vmem:[%s2 + $0x34] sm:$0xf] %v2747
  %3004 = vst [vmem:[%s2 + $0x38] sm:$0xf] %v2748
  %3005 = vst [vmem:[%s2 + $0x3c] sm:$0xf] %v2749
  %3006 = vst [vmem:[%s2 + $0x40] sm:$0xf] %v2750
  %3007 = vst [vmem:[%s2 + $0x44] sm:$0xf] %v2751
  %3008 = vst [vmem:[%s2 + $0x48] sm:$0xf] %v2752
  %3009 = vst [vmem:[%s2 + $0x4c] sm:$0xf] %v2753
  %3010 = vst [vmem:[%s2 + $0x50] sm:$0xf] %v2754
  %3011 = vst [vmem:[%s2 + $0x54] sm:$0xf] %v2755
  %3012 = vst [vmem:[%s2 + $0x58] sm:$0xf] %v2756
  %3013 = vst [vmem:[%s2 + $0x5c] sm:$0xf] %v2757
  %3014 = vst [vmem:[%s2 + $0x60] sm:$0xf] %v2758
  %3015 = vst [vmem:[%s2 + $0x64] sm:$0xf] %v2759
  %3016 = vst [vmem:[%s2 + $0x68] sm:$0xf] %v2760
  %3017 = vst [vmem:[%s2 + $0x6c] sm:$0xf] %v2761
  %3018 = vst [vmem:[%s2 + $0x70] sm:$0xf] %v2762
  %3019 = vst [vmem:[%s2 + $0x74] sm:$0xf] %v2763
  %3020 = vst [vmem:[%s2 + $0x78] sm:$0xf] %v2764
  %3021 = vst [vmem:[%s2 + $0x7c] sm:$0xf] %v2765
  %3022 = vst [vmem:[%s2 + $0x80] sm:$0xf] %v2766
  %3023 = vst [vmem:[%s2 + $0x84] sm:$0xf] %v2767
  %3024 = vst [vmem:[%s2 + $0x88] sm:$0xf] %v2768
  %3025 = vst [vmem:[%s2 + $0x8c] sm:$0xf] %v2769
  %3026 = vst [vmem:[%s2 + $0x90] sm:$0xf] %v2770
  %3027 = vst [vmem:[%s2 + $0x94] sm:$0xf] %v2771
  %3028 = vst [vmem:[%s2 + $0x98] sm:$0xf] %v2772
  %3029 = vst [vmem:[%s2 + $0x9c] sm:$0xf] %v2773
  %3030 = vst [vmem:[%s2 + $0xa0] sm:$0xf] %v2774
  %3031 = vst [vmem:[%s2 + $0xa4] sm:$0xf] %v2775
  %3032 = vst [vmem:[%s2 + $0xa8] sm:$0xf] %v2776
  %3033 = vst [vmem:[%s2 + $0xac] sm:$0xf] %v2777
  %3034 = vst [vmem:[%s2 + $0xb0] sm:$0xf] %v2778
  %3035 = vst [vmem:[%s2 + $0xb4] sm:$0xf] %v2779
  %3036 = vst [vmem:[%s2 + $0xb8] sm:$0xf] %v2780
  %3037 = vst [vmem:[%s2 + $0xbc] sm:$0xf] %v2781
  %3038 = vst [vmem:[%s2 + $0xc0] sm:$0xf] %v2782
  %3039 = vst [vmem:[%s2 + $0xc4] sm:$0xf] %v2783
  %3040 = vst [vmem:[%s2 + $0xc8] sm:$0xf] %v2784
  %3041 = vst [vmem:[%s2 + $0xcc] sm:$0xf] %v2785
  %3042 = vst [vmem:[%s2 + $0xd0] sm:$0xf] %v2786
  %3043 = vst [vmem:[%s2 + $0xd4] sm:$0xf] %v2787
  %3044 = vst [vmem:[%s2 + $0xd8] sm:$0xf] %v2788
  %3045 = vst [vmem:[%s2 + $0xdc] sm:$0xf] %v2789
  %3046 = vst [vmem:[%s2 + $0xe0] sm:$0xf] %v2790
  %3047 = vst [vmem:[%s2 + $0xe4] sm:$0xf] %v2791
  %3048 = vst [vmem:[%s2 + $0xe8] sm:$0xf] %v2792
  %3049 = vst [vmem:[%s2 + $0xec] sm:$0xf] %v2793
  %3050 = vst [vmem:[%s2 + $0xf0] sm:$0xf] %v2794
  %3051 = vst [vmem:[%s2 + $0xf4] sm:$0xf] %v2795
  %3052 = vst [vmem:[%s2 + $0xf8] sm:$0xf] %v2796
  %3053 = vst [vmem:[%s2 + $0xfc] sm:$0xf] %v2797
  %3054 = vst [vmem:[%s2 + $0x100] sm:$0xf] %v2798
  %3055 = vst [vmem:[%s2 + $0x104] sm:$0xf] %v2799
  %3056 = vst [vmem:[%s2 + $0x108] sm:$0xf] %v2800
  %3057 = vst [vmem:[%s2 + $0x10c] sm:$0xf] %v2801
  %3058 = vst [vmem:[%s2 + $0x110] sm:$0xf] %v2802
  %3059 = vst [vmem:[%s2 + $0x114] sm:$0xf] %v2803
  %3060 = vst [vmem:[%s2 + $0x118] sm:$0xf] %v2804
  %3061 = vst [vmem:[%s2 + $0x11c] sm:$0xf] %v2805
  %3062 = vst [vmem:[%s2 + $0x120] sm:$0xf] %v2806
  %3063 = vst [vmem:[%s2 + $0x124] sm:$0xf] %v2807
  %3064 = vst [vmem:[%s2 + $0x128] sm:$0xf] %v2808
  %3065 = vst [vmem:[%s2 + $0x12c] sm:$0xf] %v2809
  %3066 = vst [vmem:[%s2 + $0x130] sm:$0xf] %v2810
  %3067 = vst [vmem:[%s2 + $0x134] sm:$0xf] %v2811
  %3068 = vst [vmem:[%s2 + $0x138] sm:$0xf] %v2812
  %3069 = vst [vmem:[%s2 + $0x13c] sm:$0xf] %v2813
  %3070 = vst [vmem:[%s2 + $0x140] sm:$0xf] %v2814
  %3071 = vst [vmem:[%s2 + $0x144] sm:$0xf] %v2815
  %3072 = vst [vmem:[%s2 + $0x148] sm:$0xf] %v2816
  %3073 = vst [vmem:[%s2 + $0x14c] sm:$0xf] %v2817
  %3074 = vst [vmem:[%s2 + $0x150] sm:$0xf] %v2818
  %3075 = vst [vmem:[%s2 + $0x154] sm:$0xf] %v2819
  %3076 = vst [vmem:[%s2 + $0x158] sm:$0xf] %v2820
  %3077 = vst [vmem:[%s2 + $0x15c] sm:$0xf] %v2821
  %3078 = vst [vmem:[%s2 + $0x160] sm:$0xf] %v2822
  %3079 = vst [vmem:[%s2 + $0x164] sm:$0xf] %v2823
  %3080 = vst [vmem:[%s2 + $0x168] sm:$0xf] %v2824
  %3081 = vst [vmem:[%s2 + $0x16c] sm:$0xf] %v2825
  %3082 = vst [vmem:[%s2 + $0x170] sm:$0xf] %v2826
  %3083 = vst [vmem:[%s2 + $0x174] sm:$0xf] %v2827
  %3084 = vst [vmem:[%s2 + $0x178] sm:$0xf] %v2828
  %3085 = vst [vmem:[%s2 + $0x17c] sm:$0xf] %v2829
  %3086 = vst [vmem:[%s2 + $0x180] sm:$0xf] %v2830
  %3087 = vst [vmem:[%s2 + $0x184] sm:$0xf] %v2831
  %3088 = vst [vmem:[%s2 + $0x188] sm:$0xf] %v2832
  %3089 = vst [vmem:[%s2 + $0x18c] sm:$0xf] %v2833
  %3090 = vst [vmem:[%s2 + $0x190] sm:$0xf] %v2834
  %3091 = vst [vmem:[%s2 + $0x194] sm:$0xf] %v2835
  %3092 = vst [vmem:[%s2 + $0x198] sm:$0xf] %v2836
  %3093 = vst [vmem:[%s2 + $0x19c] sm:$0xf] %v2837
  %3094 = vst [vmem:[%s2 + $0x1a0] sm:$0xf] %v2838
  %3095 = vst [vmem:[%s2 + $0x1a4] sm:$0xf] %v2839
  %3096 = vst [vmem:[%s2 + $0x1a8] sm:$0xf] %v2840
  %3097 = vst [vmem:[%s2 + $0x1ac] sm:$0xf] %v2841
  %3098 = vst [vmem:[%s2 + $0x1b0] sm:$0xf] %v2842
  %3099 = vst [vmem:[%s2 + $0x1b4] sm:$0xf] %v2843
  %3100 = vst [vmem:[%s2 + $0x1b8] sm:$0xf] %v2844
  %3101 = vst [vmem:[%s2 + $0x1bc] sm:$0xf] %v2845
  %3102 = vst [vmem:[%s2 + $0x1c0] sm:$0xf] %v2846
  %3103 = vst [vmem:[%s2 + $0x1c4] sm:$0xf] %v2847
  %3104 = vst [vmem:[%s2 + $0x1c8] sm:$0xf] %v2848
  %3105 = vst [vmem:[%s2 + $0x1cc] sm:$0xf] %v2849
  %3106 = vst [vmem:[%s2 + $0x1d0] sm:$0xf] %v2850
  %3107 = vst [vmem:[%s2 + $0x1d4] sm:$0xf] %v2851
  %3108 = vst [vmem:[%s2 + $0x1d8] sm:$0xf] %v2852
  %3109 = vst [vmem:[%s2 + $0x1dc] sm:$0xf] %v2853
  %3110 = vst [vmem:[%s2 + $0x1e0] sm:$0xf] %v2854
  %3111 = vst [vmem:[%s2 + $0x1e4] sm:$0xf] %v2855
  %3112 = vst [vmem:[%s2 + $0x1e8] sm:$0xf] %v2856
  %3113 = vst [vmem:[%s2 + $0x1ec] sm:$0xf] %v2857
  %3114 = vst [vmem:[%s2 + $0x1f0] sm:$0xf] %v2858
  %3115 = vst [vmem:[%s2 + $0x1f4] sm:$0xf] %v2859
  %3116 = vst [vmem:[%s2 + $0x1f8] sm:$0xf] %v2860
  %3117 = vst [vmem:[%s2 + $0x1fc] sm:$0xf] %v2861
  %3118 = vst [vmem:[%s2 + $0x200] sm:$0xf] %v2862
  %3119 = vst [vmem:[%s2 + $0x204] sm:$0xf] %v2863
  %3120 = vst [vmem:[%s2 + $0x208] sm:$0xf] %v2864
  %3121 = vst [vmem:[%s2 + $0x20c] sm:$0xf] %v2865
  %3122 = vst [vmem:[%s2 + $0x210] sm:$0xf] %v2866
  %3123 = vst [vmem:[%s2 + $0x214] sm:$0xf] %v2867
  %3124 = vst [vmem:[%s2 + $0x218] sm:$0xf] %v2868
  %3125 = vst [vmem:[%s2 + $0x21c] sm:$0xf] %v2869
  %3126 = vst [vmem:[%s2 + $0x220] sm:$0xf] %v2870
  %3127 = vst [vmem:[%s2 + $0x224] sm:$0xf] %v2871
  %3128 = vst [vmem:[%s2 + $0x228] sm:$0xf] %v2872
  %3129 = vst [vmem:[%s2 + $0x22c] sm:$0xf] %v2873
  %3130 = vst [vmem:[%s2 + $0x230] sm:$0xf] %v2874
  %3131 = vst [vmem:[%s2 + $0x234] sm:$0xf] %v2875
  %3132 = vst [vmem:[%s2 + $0x238] sm:$0xf] %v2876
  %3133 = vst [vmem:[%s2 + $0x23c] sm:$0xf] %v2877
  %3134 = vst [vmem:[%s2 + $0x240] sm:$0xf] %v2878
  %3135 = vst [vmem:[%s2 + $0x244] sm:$0xf] %v2879
  %3136 = vst [vmem:[%s2 + $0x248] sm:$0xf] %v2880
  %3137 = vst [vmem:[%s2 + $0x24c] sm:$0xf] %v2881
  %3138 = vst [vmem:[%s2 + $0x250] sm:$0xf] %v2882
  %3139 = vst [vmem:[%s2 + $0x254] sm:$0xf] %v2883
  %3140 = vst [vmem:[%s2 + $0x258] sm:$0xf] %v2884
  %3141 = vst [vmem:[%s2 + $0x25c] sm:$0xf] %v2885
  %3142 = vst [vmem:[%s2 + $0x260] sm:$0xf] %v2886
  %3143 = vst [vmem:[%s2 + $0x264] sm:$0xf] %v2887
  %3144 = vst [vmem:[%s2 + $0x268] sm:$0xf] %v2888
  %3145 = vst [vmem:[%s2 + $0x26c] sm:$0xf] %v2889
  %3146 = vst [vmem:[%s2 + $0x270] sm:$0xf] %v2890
  %3147 = vst [vmem:[%s2 + $0x274] sm:$0xf] %v2891
  %3148 = vst [vmem:[%s2 + $0x278] sm:$0xf] %v2892
  %3149 = vst [vmem:[%s2 + $0x27c] sm:$0xf] %v2893
  %3150 = vst [vmem:[%s2 + $0x280] sm:$0xf] %v2894
  %3151 = vst [vmem:[%s2 + $0x284] sm:$0xf] %v2895
  %3152 = vst [vmem:[%s2 + $0x288] sm:$0xf] %v2896
  %3153 = vst [vmem:[%s2 + $0x28c] sm:$0xf] %v2897
  %3154 = vst [vmem:[%s2 + $0x290] sm:$0xf] %v2898
  %3155 = vst [vmem:[%s2 + $0x294] sm:$0xf] %v2899
  %3156 = vst [vmem:[%s2 + $0x298] sm:$0xf] %v2900
  %3157 = vst [vmem:[%s2 + $0x29c] sm:$0xf] %v2901
  %3158 = vst [vmem:[%s2 + $0x2a0] sm:$0xf] %v2902
  %3159 = vst [vmem:[%s2 + $0x2a4] sm:$0xf] %v2903
  %3160 = vst [vmem:[%s2 + $0x2a8] sm:$0xf] %v2904
  %3161 = vst [vmem:[%s2 + $0x2ac] sm:$0xf] %v2905
  %3162 = vst [vmem:[%s2 + $0x2b0] sm:$0xf] %v2906
  %3163 = vst [vmem:[%s2 + $0x2b4] sm:$0xf] %v2907
  %3164 = vst [vmem:[%s2 + $0x2b8] sm:$0xf] %v2908
  %3165 = vst [vmem:[%s2 + $0x2bc] sm:$0xf] %v2909
  %3166 = vst [vmem:[%s2 + $0x2c0] sm:$0xf] %v2910
  %3167 = vst [vmem:[%s2 + $0x2c4] sm:$0xf] %v2911
  %3168 = vst [vmem:[%s2 + $0x2c8] sm:$0xf] %v2912
  %3169 = vst [vmem:[%s2 + $0x2cc] sm:$0xf] %v2913
  %3170 = vst [vmem:[%s2 + $0x2d0] sm:$0xf] %v2914
  %3171 = vst [vmem:[%s2 + $0x2d4] sm:$0xf] %v2915
  %3172 = vst [vmem:[%s2 + $0x2d8] sm:$0xf] %v2916
  %3173 = vst [vmem:[%s2 + $0x2dc] sm:$0xf] %v2917
  %3174 = vst [vmem:[%s2 + $0x2e0] sm:$0xf] %v2918
  %3175 = vst [vmem:[%s2 + $0x2e4] sm:$0xf] %v2919
  %3176 = vst [vmem:[%s2 + $0x2e8] sm:$0xf] %v2920
  %3177 = vst [vmem:[%s2 + $0x2ec] sm:$0xf] %v2921
  %3178 = vst [vmem:[%s2 + $0x2f0] sm:$0xf] %v2922
  %3179 = vst [vmem:[%s2 + $0x2f4] sm:$0xf] %v2923
  %3180 = vst [vmem:[%s2 + $0x2f8] sm:$0xf] %v2924
  %3181 = vst [vmem:[%s2 + $0x2fc] sm:$0xf] %v2925
  %3182 = vst [vmem:[%s2 + $0x300] sm:$0xf] %v2926
  %3183 = vst [vmem:[%s2 + $0x304] sm:$0xf] %v2927
  %3184 = vst [vmem:[%s2 + $0x308] sm:$0xf] %v2928
  %3185 = vst [vmem:[%s2 + $0x30c] sm:$0xf] %v2929
  %3186 = vst [vmem:[%s2 + $0x310] sm:$0xf] %v2930
  %3187 = vst [vmem:[%s2 + $0x314] sm:$0xf] %v2931
  %3188 = vst [vmem:[%s2 + $0x318] sm:$0xf] %v2932
  %3189 = vst [vmem:[%s2 + $0x31c] sm:$0xf] %v2933
  %3190 = vst [vmem:[%s2 + $0x320] sm:$0xf] %v2934
  %3191 = vst [vmem:[%s2 + $0x324] sm:$0xf] %v2935
  %3192 = vst [vmem:[%s2 + $0x328] sm:$0xf] %v2936
  %3193 = vst [vmem:[%s2 + $0x32c] sm:$0xf] %v2937
  %3194 = vst [vmem:[%s2 + $0x330] sm:$0xf] %v2938
  %3195 = vst [vmem:[%s2 + $0x334] sm:$0xf] %v2939
  %3196 = vst [vmem:[%s2 + $0x338] sm:$0xf] %v2940
  %3197 = vst [vmem:[%s2 + $0x33c] sm:$0xf] %v2941
  %3198 = vst [vmem:[%s2 + $0x340] sm:$0xf] %v2942
  %3199 = vst [vmem:[%s2 + $0x344] sm:$0xf] %v2943
  %3200 = vst [vmem:[%s2 + $0x348] sm:$0xf] %v2944
  %3201 = vst [vmem:[%s2 + $0x34c] sm:$0xf] %v2945
  %3202 = vst [vmem:[%s2 + $0x350] sm:$0xf] %v2946
  %3203 = vst [vmem:[%s2 + $0x354] sm:$0xf] %v2947
  %3204 = vst [vmem:[%s2 + $0x358] sm:$0xf] %v2948
  %3205 = vst [vmem:[%s2 + $0x35c] sm:$0xf] %v2949
  %3206 = vst [vmem:[%s2 + $0x360] sm:$0xf] %v2950
  %3207 = vst [vmem:[%s2 + $0x364] sm:$0xf] %v2951
  %3208 = vst [vmem:[%s2 + $0x368] sm:$0xf] %v2952
  %3209 = vst [vmem:[%s2 + $0x36c] sm:$0xf] %v2953
  %3210 = vst [vmem:[%s2 + $0x370] sm:$0xf] %v2954
  %3211 = vst [vmem:[%s2 + $0x374] sm:$0xf] %v2955
  %3212 = vst [vmem:[%s2 + $0x378] sm:$0xf] %v2956
  %3213 = vst [vmem:[%s2 + $0x37c] sm:$0xf] %v2957
  %3214 = vst [vmem:[%s2 + $0x380] sm:$0xf] %v2958
  %3215 = vst [vmem:[%s2 + $0x384] sm:$0xf] %v2959
  %3216 = vst [vmem:[%s2 + $0x388] sm:$0xf] %v2960
  %3217 = vst [vmem:[%s2 + $0x38c] sm:$0xf] %v2961
  %3218 = vst [vmem:[%s2 + $0x390] sm:$0xf] %v2962
  %3219 = vst [vmem:[%s2 + $0x394] sm:$0xf] %v2963
  %3220 = vst [vmem:[%s2 + $0x398] sm:$0xf] %v2964
  %3221 = vst [vmem:[%s2 + $0x39c] sm:$0xf] %v2965
  %3222 = vst [vmem:[%s2 + $0x3a0] sm:$0xf] %v2966
  %3223 = vst [vmem:[%s2 + $0x3a4] sm:$0xf] %v2967
  %3224 = vst [vmem:[%s2 + $0x3a8] sm:$0xf] %v2968
  %3225 = vst [vmem:[%s2 + $0x3ac] sm:$0xf] %v2969
  %3226 = vst [vmem:[%s2 + $0x3b0] sm:$0xf] %v2970
  %3227 = vst [vmem:[%s2 + $0x3b4] sm:$0xf] %v2971
  %3228 = vst [vmem:[%s2 + $0x3b8] sm:$0xf] %v2972
  %3229 = vst [vmem:[%s2 + $0x3bc] sm:$0xf] %v2973
  %3230 = vst [vmem:[%s2 + $0x3c0] sm:$0xf] %v2974
  %3231 = vst [vmem:[%s2 + $0x3c4] sm:$0xf] %v2975
  %3232 = vst [vmem:[%s2 + $0x3c8] sm:$0xf] %v2976
  %3233 = vst [vmem:[%s2 + $0x3cc] sm:$0xf] %v2977
  %3234 = vst [vmem:[%s2 + $0x3d0] sm:$0xf] %v2978
  %3235 = vst [vmem:[%s2 + $0x3d4] sm:$0xf] %v2979
  %3236 = vst [vmem:[%s2 + $0x3d8] sm:$0xf] %v2980
  %3237 = vst [vmem:[%s2 + $0x3dc] sm:$0xf] %v2981
  %3238 = vst [vmem:[%s2 + $0x3e0] sm:$0xf] %v2982
  %3239 = vst [vmem:[%s2 + $0x3e4] sm:$0xf] %v2983
  %3240 = vst [vmem:[%s2 + $0x3e8] sm:$0xf] %v2984
  %3241 = vst [vmem:[%s2 + $0x3ec] sm:$0xf] %v2985
  %3242 = vst [vmem:[%s2 + $0x3f0] sm:$0xf] %v2986
  %3243 = vst [vmem:[%s2 + $0x3f4] sm:$0xf] %v2987
  %3244 = vst [vmem:[%s2 + $0x3f8] sm:$0xf] %v2988
  %3245 = vst [vmem:[%s2 + $0x3fc] sm:$0xf] %v2989
  // Predicated region
  $region10: #{discriminator_forward.5} parent=0 // pred_check
    _
  $region11: #{discriminator_forward.5} parent=0 // pred_check_branch
    %3247 = sbr.rel (0) target = $region13
  $region12: #{discriminator_forward.5} parent=0 // pred_region
    _
  $region13: #{discriminator_forward.5} parent=0 // pred_fallthru
    _
  // Predicated region
  $region14: #{discriminator_forward.5} parent=0 // pred_check
    _
  $region15: #{discriminator_forward.5} parent=0 // pred_check_branch
    %3249 = sbr.rel (0) target = $region17
  $region16: #{discriminator_forward.5} parent=0 // pred_region
    _
  $region17: #{discriminator_forward.5} parent=0 // pred_fallthru
    _

// kernel: discriminator_forward.6
$region0: #{discriminator_forward.6}
  #allocation0 [shape = 'u32[]', space=smem, size = 0x4, offset = 0x4, fixed_abs, tag = 'smem constant byte address 0x4 - core index']
  #allocation1 [shape = 'u32[72,128]{1,0:T(1,128)}', space=vmem, size = 0x9000, scoped, tag = 'internal scratch']
  #allocation2 [shape = 'f32[512,128]{1,0:T(8,128)}', space=vmem, size = 0x40000, scoped, tag = 'scratch operand']
  %s0 = inlined_call_operand.vmem [shape: bf16[512,256], index: 0, kind: input, shape index: {}]
  %s1 = inlined_call_operand.vmem [shape: bf16[256,128], index: 1, kind: input, shape index: {}]
  %s2 = inlined_call_operand.vmem [shape: f32[1,128], index: 2, kind: input, shape index: {}]
  %s3 = inlined_call_operand.vmem [shape: f32[1,128], index: 3, kind: input, shape index: {}]
  %s4 = inlined_call_operand.vmem [shape: bf16[512,128], index: 4, kind: output, shape index: {}]
  %s5 = sld [smem:[#allocation0]]
  $region34: #{discriminator_forward.6} parent=0
    _
  %s7 = ssub.s32 1, %s5
  %s8 = scalar_select 0, %s7, %s5
  // Predicated region
  $region2: #{discriminator_forward.6} parent=0 // pred_check
    _
  $region3: #{discriminator_forward.6} parent=0 // pred_check_branch
    %10 = sbr.rel (0) target = $region5
  $region4: #{discriminator_forward.6} parent=0 // pred_region
    _
  $region5: #{discriminator_forward.6} parent=0 // pred_fallthru
    _
  // Predicated region
  $region6: #{discriminator_forward.6} parent=0 // pred_check
    _
  $region7: #{discriminator_forward.6} parent=0 // pred_check_branch
    %12 = sbr.rel (0) target = $region9
  $region8: #{discriminator_forward.6} parent=0 // pred_region
    _
  $region9: #{discriminator_forward.6} parent=0 // pred_fallthru
    _
  // Predicated region
  $region10: #{discriminator_forward.6} parent=0 // pred_check
    _
  $region11: #{discriminator_forward.6} parent=0 // pred_check_branch
    %14 = sbr.rel (0) target = $region13
  $region12: #{discriminator_forward.6} parent=0 // pred_region
    _
  $region13: #{discriminator_forward.6} parent=0 // pred_fallthru
    _
  // Predicated region
  $region14: #{discriminator_forward.6} parent=0 // pred_check
    _
  $region15: #{discriminator_forward.6} parent=0 // pred_check_branch
    %16 = sbr.rel (0) target = $region17
  $region16: #{discriminator_forward.6} parent=0 // pred_region
    _
  $region17: #{discriminator_forward.6} parent=0 // pred_fallthru
    _
  %p17 = scmp.eq.s32.totalorder 0, 0
  // Predicated region
  $region18: #{discriminator_forward.6} parent=0 // pred_check
    %p18 = pneg %p17
  $region19: #{discriminator_forward.6} parent=0 // pred_check_branch
    %20 = sbr.rel (%p18) target = $region21
  $region20: #{discriminator_forward.6} parent=0 // pred_region
    %21 = vst [vmem:[#allocation2] sm:$0xff] 0.0
    %22 = vst [vmem:[#allocation2 + $0x8] sm:$0xff] 0.0
    %23 = vst [vmem:[#allocation2 + $0x10] sm:$0xff] 0.0
    %24 = vst [vmem:[#allocation2 + $0x18] sm:$0xff] 0.0
    %25 = vst [vmem:[#allocation2 + $0x20] sm:$0xff] 0.0
    %26 = vst [vmem:[#allocation2 + $0x28] sm:$0xff] 0.0
    %27 = vst [vmem:[#allocation2 + $0x30] sm:$0xff] 0.0
    %28 = vst [vmem:[#allocation2 + $0x38] sm:$0xff] 0.0
    %29 = vst [vmem:[#allocation2 + $0x40] sm:$0xff] 0.0
    %30 = vst [vmem:[#allocation2 + $0x48] sm:$0xff] 0.0
    %31 = vst [vmem:[#allocation2 + $0x50] sm:$0xff] 0.0
    %32 = vst [vmem:[#allocation2 + $0x58] sm:$0xff] 0.0
    %33 = vst [vmem:[#allocation2 + $0x60] sm:$0xff] 0.0
    %34 = vst [vmem:[#allocation2 + $0x68] sm:$0xff] 0.0
    %35 = vst [vmem:[#allocation2 + $0x70] sm:$0xff] 0.0
    %36 = vst [vmem:[#allocation2 + $0x78] sm:$0xff] 0.0
    %37 = vst [vmem:[#allocation2 + $0x80] sm:$0xff] 0.0
    %38 = vst [vmem:[#allocation2 + $0x88] sm:$0xff] 0.0
    %39 = vst [vmem:[#allocation2 + $0x90] sm:$0xff] 0.0
    %40 = vst [vmem:[#allocation2 + $0x98] sm:$0xff] 0.0
    %41 = vst [vmem:[#allocation2 + $0xa0] sm:$0xff] 0.0
    %42 = vst [vmem:[#allocation2 + $0xa8] sm:$0xff] 0.0
    %43 = vst [vmem:[#allocation2 + $0xb0] sm:$0xff] 0.0
    %44 = vst [vmem:[#allocation2 + $0xb8] sm:$0xff] 0.0
    %45 = vst [vmem:[#allocation2 + $0xc0] sm:$0xff] 0.0
    %46 = vst [vmem:[#allocation2 + $0xc8] sm:$0xff] 0.0
    %47 = vst [vmem:[#allocation2 + $0xd0] sm:$0xff] 0.0
    %48 = vst [vmem:[#allocation2 + $0xd8] sm:$0xff] 0.0
    %49 = vst [vmem:[#allocation2 + $0xe0] sm:$0xff] 0.0
    %50 = vst [vmem:[#allocation2 + $0xe8] sm:$0xff] 0.0
    %51 = vst [vmem:[#allocation2 + $0xf0] sm:$0xff] 0.0
    %52 = vst [vmem:[#allocation2 + $0xf8] sm:$0xff] 0.0
    %53 = vst [vmem:[#allocation2 + $0x100] sm:$0xff] 0.0
    %54 = vst [vmem:[#allocation2 + $0x108] sm:$0xff] 0.0
    %55 = vst [vmem:[#allocation2 + $0x110] sm:$0xff] 0.0
    %56 = vst [vmem:[#allocation2 + $0x118] sm:$0xff] 0.0
    %57 = vst [vmem:[#allocation2 + $0x120] sm:$0xff] 0.0
    %58 = vst [vmem:[#allocation2 + $0x128] sm:$0xff] 0.0
    %59 = vst [vmem:[#allocation2 + $0x130] sm:$0xff] 0.0
    %60 = vst [vmem:[#allocation2 + $0x138] sm:$0xff] 0.0
    %61 = vst [vmem:[#allocation2 + $0x140] sm:$0xff] 0.0
    %62 = vst [vmem:[#allocation2 + $0x148] sm:$0xff] 0.0
    %63 = vst [vmem:[#allocation2 + $0x150] sm:$0xff] 0.0
    %64 = vst [vmem:[#allocation2 + $0x158] sm:$0xff] 0.0
    %65 = vst [vmem:[#allocation2 + $0x160] sm:$0xff] 0.0
    %66 = vst [vmem:[#allocation2 + $0x168] sm:$0xff] 0.0
    %67 = vst [vmem:[#allocation2 + $0x170] sm:$0xff] 0.0
    %68 = vst [vmem:[#allocation2 + $0x178] sm:$0xff] 0.0
    %69 = vst [vmem:[#allocation2 + $0x180] sm:$0xff] 0.0
    %70 = vst [vmem:[#allocation2 + $0x188] sm:$0xff] 0.0
    %71 = vst [vmem:[#allocation2 + $0x190] sm:$0xff] 0.0
    %72 = vst [vmem:[#allocation2 + $0x198] sm:$0xff] 0.0
    %73 = vst [vmem:[#allocation2 + $0x1a0] sm:$0xff] 0.0
    %74 = vst [vmem:[#allocation2 + $0x1a8] sm:$0xff] 0.0
    %75 = vst [vmem:[#allocation2 + $0x1b0] sm:$0xff] 0.0
    %76 = vst [vmem:[#allocation2 + $0x1b8] sm:$0xff] 0.0
    %77 = vst [vmem:[#allocation2 + $0x1c0] sm:$0xff] 0.0
    %78 = vst [vmem:[#allocation2 + $0x1c8] sm:$0xff] 0.0
    %79 = vst [vmem:[#allocation2 + $0x1d0] sm:$0xff] 0.0
    %80 = vst [vmem:[#allocation2 + $0x1d8] sm:$0xff] 0.0
    %81 = vst [vmem:[#allocation2 + $0x1e0] sm:$0xff] 0.0
    %82 = vst [vmem:[#allocation2 + $0x1e8] sm:$0xff] 0.0
    %83 = vst [vmem:[#allocation2 + $0x1f0] sm:$0xff] 0.0
    %84 = vst [vmem:[#allocation2 + $0x1f8] sm:$0xff] 0.0
  $region21: #{discriminator_forward.6} parent=0 // pred_fallthru
    _
  %v85 = vld [vmem:[#allocation2] sm:$0xff]
  %v86 = vld [vmem:[#allocation2 + $0x8] sm:$0xff]
  %v87 = vld [vmem:[#allocation2 + $0x10] sm:$0xff]
  %v88 = vld [vmem:[#allocation2 + $0x18] sm:$0xff]
  %v89 = vld [vmem:[#allocation2 + $0x20] sm:$0xff]
  %v90 = vld [vmem:[#allocation2 + $0x28] sm:$0xff]
  %v91 = vld [vmem:[#allocation2 + $0x30] sm:$0xff]
  %v92 = vld [vmem:[#allocation2 + $0x38] sm:$0xff]
  %v93 = vld [vmem:[#allocation2 + $0x40] sm:$0xff]
  %v94 = vld [vmem:[#allocation2 + $0x48] sm:$0xff]
  %v95 = vld [vmem:[#allocation2 + $0x50] sm:$0xff]
  %v96 = vld [vmem:[#allocation2 + $0x58] sm:$0xff]
  %v97 = vld [vmem:[#allocation2 + $0x60] sm:$0xff]
  %v98 = vld [vmem:[#allocation2 + $0x68] sm:$0xff]
  %v99 = vld [vmem:[#allocation2 + $0x70] sm:$0xff]
  %v100 = vld [vmem:[#allocation2 + $0x78] sm:$0xff]
  %v101 = vld [vmem:[#allocation2 + $0x80] sm:$0xff]
  %v102 = vld [vmem:[#allocation2 + $0x88] sm:$0xff]
  %v103 = vld [vmem:[#allocation2 + $0x90] sm:$0xff]
  %v104 = vld [vmem:[#allocation2 + $0x98] sm:$0xff]
  %v105 = vld [vmem:[#allocation2 + $0xa0] sm:$0xff]
  %v106 = vld [vmem:[#allocation2 + $0xa8] sm:$0xff]
  %v107 = vld [vmem:[#allocation2 + $0xb0] sm:$0xff]
  %v108 = vld [vmem:[#allocation2 + $0xb8] sm:$0xff]
  %v109 = vld [vmem:[#allocation2 + $0xc0] sm:$0xff]
  %v110 = vld [vmem:[#allocation2 + $0xc8] sm:$0xff]
  %v111 = vld [vmem:[#allocation2 + $0xd0] sm:$0xff]
  %v112 = vld [vmem:[#allocation2 + $0xd8] sm:$0xff]
  %v113 = vld [vmem:[#allocation2 + $0xe0] sm:$0xff]
  %v114 = vld [vmem:[#allocation2 + $0xe8] sm:$0xff]
  %v115 = vld [vmem:[#allocation2 + $0xf0] sm:$0xff]
  %v116 = vld [vmem:[#allocation2 + $0xf8] sm:$0xff]
  %v117 = vld [vmem:[#allocation2 + $0x100] sm:$0xff]
  %v118 = vld [vmem:[#allocation2 + $0x108] sm:$0xff]
  %v119 = vld [vmem:[#allocation2 + $0x110] sm:$0xff]
  %v120 = vld [vmem:[#allocation2 + $0x118] sm:$0xff]
  %v121 = vld [vmem:[#allocation2 + $0x120] sm:$0xff]
  %v122 = vld [vmem:[#allocation2 + $0x128] sm:$0xff]
  %v123 = vld [vmem:[#allocation2 + $0x130] sm:$0xff]
  %v124 = vld [vmem:[#allocation2 + $0x138] sm:$0xff]
  %v125 = vld [vmem:[#allocation2 + $0x140] sm:$0xff]
  %v126 = vld [vmem:[#allocation2 + $0x148] sm:$0xff]
  %v127 = vld [vmem:[#allocation2 + $0x150] sm:$0xff]
  %v128 = vld [vmem:[#allocation2 + $0x158] sm:$0xff]
  %v129 = vld [vmem:[#allocation2 + $0x160] sm:$0xff]
  %v130 = vld [vmem:[#allocation2 + $0x168] sm:$0xff]
  %v131 = vld [vmem:[#allocation2 + $0x170] sm:$0xff]
  %v132 = vld [vmem:[#allocation2 + $0x178] sm:$0xff]
  %v133 = vld [vmem:[#allocation2 + $0x180] sm:$0xff]
  %v134 = vld [vmem:[#allocation2 + $0x188] sm:$0xff]
  %v135 = vld [vmem:[#allocation2 + $0x190] sm:$0xff]
  %v136 = vld [vmem:[#allocation2 + $0x198] sm:$0xff]
  %v137 = vld [vmem:[#allocation2 + $0x1a0] sm:$0xff]
  %v138 = vld [vmem:[#allocation2 + $0x1a8] sm:$0xff]
  %v139 = vld [vmem:[#allocation2 + $0x1b0] sm:$0xff]
  %v140 = vld [vmem:[#allocation2 + $0x1b8] sm:$0xff]
  %v141 = vld [vmem:[#allocation2 + $0x1c0] sm:$0xff]
  %v142 = vld [vmem:[#allocation2 + $0x1c8] sm:$0xff]
  %v143 = vld [vmem:[#allocation2 + $0x1d0] sm:$0xff]
  %v144 = vld [vmem:[#allocation2 + $0x1d8] sm:$0xff]
  %v145 = vld [vmem:[#allocation2 + $0x1e0] sm:$0xff]
  %v146 = vld [vmem:[#allocation2 + $0x1e8] sm:$0xff]
  %v147 = vld [vmem:[#allocation2 + $0x1f0] sm:$0xff]
  %v148 = vld [vmem:[#allocation2 + $0x1f8] sm:$0xff]
  %v149 = vld [vmem:[%s0] sm:$0xff]
  %v150 = vld [vmem:[%s0 + $0x8] sm:$0xff]
  %v151 = vld [vmem:[%s0 + $0x10] sm:$0xff]
  %v152 = vld [vmem:[%s0 + $0x18] sm:$0xff]
  %v153 = vld [vmem:[%s0 + $0x20] sm:$0xff]
  %v154 = vld [vmem:[%s0 + $0x28] sm:$0xff]
  %v155 = vld [vmem:[%s0 + $0x30] sm:$0xff]
  %v156 = vld [vmem:[%s0 + $0x38] sm:$0xff]
  %v157 = vld [vmem:[%s0 + $0x40] sm:$0xff]
  %v158 = vld [vmem:[%s0 + $0x48] sm:$0xff]
  %v159 = vld [vmem:[%s0 + $0x50] sm:$0xff]
  %v160 = vld [vmem:[%s0 + $0x58] sm:$0xff]
  %v161 = vld [vmem:[%s0 + $0x60] sm:$0xff]
  %v162 = vld [vmem:[%s0 + $0x68] sm:$0xff]
  %v163 = vld [vmem:[%s0 + $0x70] sm:$0xff]
  %v164 = vld [vmem:[%s0 + $0x78] sm:$0xff]
  %v165 = vld [vmem:[%s0 + $0x80] sm:$0xff]
  %v166 = vld [vmem:[%s0 + $0x88] sm:$0xff]
  %v167 = vld [vmem:[%s0 + $0x90] sm:$0xff]
  %v168 = vld [vmem:[%s0 + $0x98] sm:$0xff]
  %v169 = vld [vmem:[%s0 + $0xa0] sm:$0xff]
  %v170 = vld [vmem:[%s0 + $0xa8] sm:$0xff]
  %v171 = vld [vmem:[%s0 + $0xb0] sm:$0xff]
  %v172 = vld [vmem:[%s0 + $0xb8] sm:$0xff]
  %v173 = vld [vmem:[%s0 + $0xc0] sm:$0xff]
  %v174 = vld [vmem:[%s0 + $0xc8] sm:$0xff]
  %v175 = vld [vmem:[%s0 + $0xd0] sm:$0xff]
  %v176 = vld [vmem:[%s0 + $0xd8] sm:$0xff]
  %v177 = vld [vmem:[%s0 + $0xe0] sm:$0xff]
  %v178 = vld [vmem:[%s0 + $0xe8] sm:$0xff]
  %v179 = vld [vmem:[%s0 + $0xf0] sm:$0xff]
  %v180 = vld [vmem:[%s0 + $0xf8] sm:$0xff]
  %v181 = vld [vmem:[%s0 + $0x100] sm:$0xff]
  %v182 = vld [vmem:[%s0 + $0x108] sm:$0xff]
  %v183 = vld [vmem:[%s0 + $0x110] sm:$0xff]
  %v184 = vld [vmem:[%s0 + $0x118] sm:$0xff]
  %v185 = vld [vmem:[%s0 + $0x120] sm:$0xff]
  %v186 = vld [vmem:[%s0 + $0x128] sm:$0xff]
  %v187 = vld [vmem:[%s0 + $0x130] sm:$0xff]
  %v188 = vld [vmem:[%s0 + $0x138] sm:$0xff]
  %v189 = vld [vmem:[%s0 + $0x140] sm:$0xff]
  %v190 = vld [vmem:[%s0 + $0x148] sm:$0xff]
  %v191 = vld [vmem:[%s0 + $0x150] sm:$0xff]
  %v192 = vld [vmem:[%s0 + $0x158] sm:$0xff]
  %v193 = vld [vmem:[%s0 + $0x160] sm:$0xff]
  %v194 = vld [vmem:[%s0 + $0x168] sm:$0xff]
  %v195 = vld [vmem:[%s0 + $0x170] sm:$0xff]
  %v196 = vld [vmem:[%s0 + $0x178] sm:$0xff]
  %v197 = vld [vmem:[%s0 + $0x180] sm:$0xff]
  %v198 = vld [vmem:[%s0 + $0x188] sm:$0xff]
  %v199 = vld [vmem:[%s0 + $0x190] sm:$0xff]
  %v200 = vld [vmem:[%s0 + $0x198] sm:$0xff]
  %v201 = vld [vmem:[%s0 + $0x1a0] sm:$0xff]
  %v202 = vld [vmem:[%s0 + $0x1a8] sm:$0xff]
  %v203 = vld [vmem:[%s0 + $0x1b0] sm:$0xff]
  %v204 = vld [vmem:[%s0 + $0x1b8] sm:$0xff]
  %v205 = vld [vmem:[%s0 + $0x1c0] sm:$0xff]
  %v206 = vld [vmem:[%s0 + $0x1c8] sm:$0xff]
  %v207 = vld [vmem:[%s0 + $0x1d0] sm:$0xff]
  %v208 = vld [vmem:[%s0 + $0x1d8] sm:$0xff]
  %v209 = vld [vmem:[%s0 + $0x1e0] sm:$0xff]
  %v210 = vld [vmem:[%s0 + $0x1e8] sm:$0xff]
  %v211 = vld [vmem:[%s0 + $0x1f0] sm:$0xff]
  %v212 = vld [vmem:[%s0 + $0x1f8] sm:$0xff]
  %v213 = vld [vmem:[%s1] sm:$0xf]
  %v214 = vld [vmem:[%s1 + $0x4] sm:$0xf]
  %v215 = vld [vmem:[%s1 + $0x8] sm:$0xf]
  %v216 = vld [vmem:[%s1 + $0xc] sm:$0xf]
  %v217 = vld [vmem:[%s1 + $0x10] sm:$0xf]
  %v218 = vld [vmem:[%s1 + $0x14] sm:$0xf]
  %v219 = vld [vmem:[%s1 + $0x18] sm:$0xf]
  %v220 = vld [vmem:[%s1 + $0x1c] sm:$0xf]
  %v221 = vld [vmem:[%s1 + $0x20] sm:$0xf]
  %v222 = vld [vmem:[%s1 + $0x24] sm:$0xf]
  %v223 = vld [vmem:[%s1 + $0x28] sm:$0xf]
  %v224 = vld [vmem:[%s1 + $0x2c] sm:$0xf]
  %v225 = vld [vmem:[%s1 + $0x30] sm:$0xf]
  %v226 = vld [vmem:[%s1 + $0x34] sm:$0xf]
  %v227 = vld [vmem:[%s1 + $0x38] sm:$0xf]
  %v228 = vld [vmem:[%s1 + $0x3c] sm:$0xf]
  %v229 = vld [vmem:[%s1 + $0x40] sm:$0xf]
  %v230 = vld [vmem:[%s1 + $0x44] sm:$0xf]
  %v231 = vld [vmem:[%s1 + $0x48] sm:$0xf]
  %v232 = vld [vmem:[%s1 + $0x4c] sm:$0xf]
  %v233 = vld [vmem:[%s1 + $0x50] sm:$0xf]
  %v234 = vld [vmem:[%s1 + $0x54] sm:$0xf]
  %v235 = vld [vmem:[%s1 + $0x58] sm:$0xf]
  %v236 = vld [vmem:[%s1 + $0x5c] sm:$0xf]
  %v237 = vld [vmem:[%s1 + $0x60] sm:$0xf]
  %v238 = vld [vmem:[%s1 + $0x64] sm:$0xf]
  %v239 = vld [vmem:[%s1 + $0x68] sm:$0xf]
  %v240 = vld [vmem:[%s1 + $0x6c] sm:$0xf]
  %v241 = vld [vmem:[%s1 + $0x70] sm:$0xf]
  %v242 = vld [vmem:[%s1 + $0x74] sm:$0xf]
  %v243 = vld [vmem:[%s1 + $0x78] sm:$0xf]
  %v244 = vld [vmem:[%s1 + $0x7c] sm:$0xf]
  %v309 = vunpack.c.l.b16 %v149
  %v310 = vunpack.c.h.b16 %v149
  %v311 = vunpack.c.l.b16 %v150
  %v312 = vunpack.c.h.b16 %v150
  %v313 = vunpack.c.l.b16 %v151
  %v314 = vunpack.c.h.b16 %v151
  %v315 = vunpack.c.l.b16 %v152
  %v316 = vunpack.c.h.b16 %v152
  %v317 = vunpack.c.l.b16 %v153
  %v318 = vunpack.c.h.b16 %v153
  %v319 = vunpack.c.l.b16 %v154
  %v320 = vunpack.c.h.b16 %v154
  %v321 = vunpack.c.l.b16 %v155
  %v322 = vunpack.c.h.b16 %v155
  %v323 = vunpack.c.l.b16 %v156
  %v324 = vunpack.c.h.b16 %v156
  %v325 = vunpack.c.l.b16 %v157
  %v326 = vunpack.c.h.b16 %v157
  %v327 = vunpack.c.l.b16 %v158
  %v328 = vunpack.c.h.b16 %v158
  %v329 = vunpack.c.l.b16 %v159
  %v330 = vunpack.c.h.b16 %v159
  %v331 = vunpack.c.l.b16 %v160
  %v332 = vunpack.c.h.b16 %v160
  %v333 = vunpack.c.l.b16 %v161
  %v334 = vunpack.c.h.b16 %v161
  %v335 = vunpack.c.l.b16 %v162
  %v336 = vunpack.c.h.b16 %v162
  %v337 = vunpack.c.l.b16 %v163
  %v338 = vunpack.c.h.b16 %v163
  %v339 = vunpack.c.l.b16 %v164
  %v340 = vunpack.c.h.b16 %v164
  %v341 = vunpack.c.l.b16 %v165
  %v342 = vunpack.c.h.b16 %v165
  %v343 = vunpack.c.l.b16 %v166
  %v344 = vunpack.c.h.b16 %v166
  %v345 = vunpack.c.l.b16 %v167
  %v346 = vunpack.c.h.b16 %v167
  %v347 = vunpack.c.l.b16 %v168
  %v348 = vunpack.c.h.b16 %v168
  %v349 = vunpack.c.l.b16 %v169
  %v350 = vunpack.c.h.b16 %v169
  %v351 = vunpack.c.l.b16 %v170
  %v352 = vunpack.c.h.b16 %v170
  %v353 = vunpack.c.l.b16 %v171
  %v354 = vunpack.c.h.b16 %v171
  %v355 = vunpack.c.l.b16 %v172
  %v356 = vunpack.c.h.b16 %v172
  %v357 = vunpack.c.l.b16 %v173
  %v358 = vunpack.c.h.b16 %v173
  %v359 = vunpack.c.l.b16 %v174
  %v360 = vunpack.c.h.b16 %v174
  %v361 = vunpack.c.l.b16 %v175
  %v362 = vunpack.c.h.b16 %v175
  %v363 = vunpack.c.l.b16 %v176
  %v364 = vunpack.c.h.b16 %v176
  %v365 = vunpack.c.l.b16 %v177
  %v366 = vunpack.c.h.b16 %v177
  %v367 = vunpack.c.l.b16 %v178
  %v368 = vunpack.c.h.b16 %v178
  %v369 = vunpack.c.l.b16 %v179
  %v370 = vunpack.c.h.b16 %v179
  %v371 = vunpack.c.l.b16 %v180
  %v372 = vunpack.c.h.b16 %v180
  %v373 = vunpack.c.l.b16 %v181
  %v374 = vunpack.c.h.b16 %v181
  %v375 = vunpack.c.l.b16 %v182
  %v376 = vunpack.c.h.b16 %v182
  %v377 = vunpack.c.l.b16 %v183
  %v378 = vunpack.c.h.b16 %v183
  %v379 = vunpack.c.l.b16 %v184
  %v380 = vunpack.c.h.b16 %v184
  %v381 = vunpack.c.l.b16 %v185
  %v382 = vunpack.c.h.b16 %v185
  %v383 = vunpack.c.l.b16 %v186
  %v384 = vunpack.c.h.b16 %v186
  %v385 = vunpack.c.l.b16 %v187
  %v386 = vunpack.c.h.b16 %v187
  %v387 = vunpack.c.l.b16 %v188
  %v388 = vunpack.c.h.b16 %v188
  %v389 = vunpack.c.l.b16 %v189
  %v390 = vunpack.c.h.b16 %v189
  %v391 = vunpack.c.l.b16 %v190
  %v392 = vunpack.c.h.b16 %v190
  %v393 = vunpack.c.l.b16 %v191
  %v394 = vunpack.c.h.b16 %v191
  %v395 = vunpack.c.l.b16 %v192
  %v396 = vunpack.c.h.b16 %v192
  %v397 = vunpack.c.l.b16 %v193
  %v398 = vunpack.c.h.b16 %v193
  %v399 = vunpack.c.l.b16 %v194
  %v400 = vunpack.c.h.b16 %v194
  %v401 = vunpack.c.l.b16 %v195
  %v402 = vunpack.c.h.b16 %v195
  %v403 = vunpack.c.l.b16 %v196
  %v404 = vunpack.c.h.b16 %v196
  %v405 = vunpack.c.l.b16 %v197
  %v406 = vunpack.c.h.b16 %v197
  %v407 = vunpack.c.l.b16 %v198
  %v408 = vunpack.c.h.b16 %v198
  %v409 = vunpack.c.l.b16 %v199
  %v410 = vunpack.c.h.b16 %v199
  %v411 = vunpack.c.l.b16 %v200
  %v412 = vunpack.c.h.b16 %v200
  %v413 = vunpack.c.l.b16 %v201
  %v414 = vunpack.c.h.b16 %v201
  %v415 = vunpack.c.l.b16 %v202
  %v416 = vunpack.c.h.b16 %v202
  %v417 = vunpack.c.l.b16 %v203
  %v418 = vunpack.c.h.b16 %v203
  %v419 = vunpack.c.l.b16 %v204
  %v420 = vunpack.c.h.b16 %v204
  %v421 = vunpack.c.l.b16 %v205
  %v422 = vunpack.c.h.b16 %v205
  %v423 = vunpack.c.l.b16 %v206
  %v424 = vunpack.c.h.b16 %v206
  %v425 = vunpack.c.l.b16 %v207
  %v426 = vunpack.c.h.b16 %v207
  %v427 = vunpack.c.l.b16 %v208
  %v428 = vunpack.c.h.b16 %v208
  %v429 = vunpack.c.l.b16 %v209
  %v430 = vunpack.c.h.b16 %v209
  %v431 = vunpack.c.l.b16 %v210
  %v432 = vunpack.c.h.b16 %v210
  %v433 = vunpack.c.l.b16 %v211
  %v434 = vunpack.c.h.b16 %v211
  %v435 = vunpack.c.l.b16 %v212
  %v436 = vunpack.c.h.b16 %v212
  %v437 = vpack.c.b16 %v311, %v309
  %v438 = vpack.c.b16 %v312, %v310
  %v439 = vpack.c.b16 %v315, %v313
  %v440 = vpack.c.b16 %v316, %v314
  %v441 = vpack.c.b16 %v319, %v317
  %v442 = vpack.c.b16 %v320, %v318
  %v443 = vpack.c.b16 %v323, %v321
  %v444 = vpack.c.b16 %v324, %v322
  %v445 = vpack.c.b16 %v327, %v325
  %v446 = vpack.c.b16 %v328, %v326
  %v447 = vpack.c.b16 %v331, %v329
  %v448 = vpack.c.b16 %v332, %v330
  %v449 = vpack.c.b16 %v335, %v333
  %v450 = vpack.c.b16 %v336, %v334
  %v451 = vpack.c.b16 %v339, %v337
  %v452 = vpack.c.b16 %v340, %v338
  %v453 = vpack.c.b16 %v343, %v341
  %v454 = vpack.c.b16 %v344, %v342
  %v455 = vpack.c.b16 %v347, %v345
  %v456 = vpack.c.b16 %v348, %v346
  %v457 = vpack.c.b16 %v351, %v349
  %v458 = vpack.c.b16 %v352, %v350
  %v459 = vpack.c.b16 %v355, %v353
  %v460 = vpack.c.b16 %v356, %v354
  %v461 = vpack.c.b16 %v359, %v357
  %v462 = vpack.c.b16 %v360, %v358
  %v463 = vpack.c.b16 %v363, %v361
  %v464 = vpack.c.b16 %v364, %v362
  %v465 = vpack.c.b16 %v367, %v365
  %v466 = vpack.c.b16 %v368, %v366
  %v467 = vpack.c.b16 %v371, %v369
  %v468 = vpack.c.b16 %v372, %v370
  %v469 = vpack.c.b16 %v375, %v373
  %v470 = vpack.c.b16 %v376, %v374
  %v471 = vpack.c.b16 %v379, %v377
  %v472 = vpack.c.b16 %v380, %v378
  %v473 = vpack.c.b16 %v383, %v381
  %v474 = vpack.c.b16 %v384, %v382
  %v475 = vpack.c.b16 %v387, %v385
  %v476 = vpack.c.b16 %v388, %v386
  %v477 = vpack.c.b16 %v391, %v389
  %v478 = vpack.c.b16 %v392, %v390
  %v479 = vpack.c.b16 %v395, %v393
  %v480 = vpack.c.b16 %v396, %v394
  %v481 = vpack.c.b16 %v399, %v397
  %v482 = vpack.c.b16 %v400, %v398
  %v483 = vpack.c.b16 %v403, %v401
  %v484 = vpack.c.b16 %v404, %v402
  %v485 = vpack.c.b16 %v407, %v405
  %v486 = vpack.c.b16 %v408, %v406
  %v487 = vpack.c.b16 %v411, %v409
  %v488 = vpack.c.b16 %v412, %v410
  %v489 = vpack.c.b16 %v415, %v413
  %v490 = vpack.c.b16 %v416, %v414
  %v491 = vpack.c.b16 %v419, %v417
  %v492 = vpack.c.b16 %v420, %v418
  %v493 = vpack.c.b16 %v423, %v421
  %v494 = vpack.c.b16 %v424, %v422
  %v495 = vpack.c.b16 %v427, %v425
  %v496 = vpack.c.b16 %v428, %v426
  %v497 = vpack.c.b16 %v431, %v429
  %v498 = vpack.c.b16 %v432, %v430
  %v499 = vpack.c.b16 %v435, %v433
  %v500 = vpack.c.b16 %v436, %v434
  %v597 = vunpack.c.l.b16 %v213
  %v598 = vunpack.c.l.b16 %v214
  %v599 = vunpack.c.l.b16 %v215
  %v600 = vunpack.c.l.b16 %v216
  %v601 = vunpack.c.l.b16 %v217
  %v602 = vunpack.c.l.b16 %v218
  %v603 = vunpack.c.l.b16 %v219
  %v604 = vunpack.c.l.b16 %v220
  %v605 = vunpack.c.l.b16 %v221
  %v606 = vunpack.c.l.b16 %v222
  %v607 = vunpack.c.l.b16 %v223
  %v608 = vunpack.c.l.b16 %v224
  %v609 = vunpack.c.l.b16 %v225
  %v610 = vunpack.c.l.b16 %v226
  %v611 = vunpack.c.l.b16 %v227
  %v612 = vunpack.c.l.b16 %v228
  %v613 = vunpack.c.l.b16 %v229
  %v614 = vunpack.c.l.b16 %v230
  %v615 = vunpack.c.l.b16 %v231
  %v616 = vunpack.c.l.b16 %v232
  %v617 = vunpack.c.l.b16 %v233
  %v618 = vunpack.c.l.b16 %v234
  %v619 = vunpack.c.l.b16 %v235
  %v620 = vunpack.c.l.b16 %v236
  %v621 = vunpack.c.l.b16 %v237
  %v622 = vunpack.c.l.b16 %v238
  %v623 = vunpack.c.l.b16 %v239
  %v624 = vunpack.c.l.b16 %v240
  %v625 = vunpack.c.l.b16 %v241
  %v626 = vunpack.c.l.b16 %v242
  %v627 = vunpack.c.l.b16 %v243
  %v628 = vunpack.c.l.b16 %v244
  %v629 = vpack.c.b16 %v598, %v597
  %v630 = vpack.c.b16 %v600, %v599
  %v631 = vpack.c.b16 %v602, %v601
  %v632 = vpack.c.b16 %v604, %v603
  %v633 = vpack.c.b16 %v606, %v605
  %v634 = vpack.c.b16 %v608, %v607
  %v635 = vpack.c.b16 %v610, %v609
  %v636 = vpack.c.b16 %v612, %v611
  %v637 = vpack.c.b16 %v614, %v613
  %v638 = vpack.c.b16 %v616, %v615
  %v639 = vpack.c.b16 %v618, %v617
  %v640 = vpack.c.b16 %v620, %v619
  %v641 = vpack.c.b16 %v622, %v621
  %v642 = vpack.c.b16 %v624, %v623
  %v643 = vpack.c.b16 %v626, %v625
  %v644 = vpack.c.b16 %v628, %v627
  %661 = vmatpush.bf16.msra.mxu0 %v636
  %662 = vmatpush.bf16.msra.mxu0 %v635
  %663 = vmatpush.bf16.msra.mxu0 %v634
  %664 = vmatpush.bf16.msra.mxu0 %v633
  %665 = vmatpush.bf16.msra.mxu0 %v632
  %666 = vmatpush.bf16.msra.mxu0 %v631
  %667 = vmatpush.bf16.msra.mxu0 %v630
  %668 = vmatpush.bf16.msra.mxu0 %v629
  %669 = vmatmul.bf16.gmra.mxu0 %v437
  %v670 = vpop.f32.mrf.mxu0
  %v671 = vadd.f32 0.0, %v670
  %v672 = vpop.f32.mrf.mxu0
  %v673 = vadd.f32 0.0, %v672
  %674 = vmatmul.bf16.gmra.mxu0 %v439
  %v675 = vpop.f32.mrf.mxu0
  %v676 = vadd.f32 0.0, %v675
  %v677 = vpop.f32.mrf.mxu0
  %v678 = vadd.f32 0.0, %v677
  %679 = vmatmul.bf16.gmra.mxu0 %v441
  %v680 = vpop.f32.mrf.mxu0
  %v681 = vadd.f32 0.0, %v680
  %v682 = vpop.f32.mrf.mxu0
  %v683 = vadd.f32 0.0, %v682
  %684 = vmatmul.bf16.gmra.mxu0 %v443
  %v685 = vpop.f32.mrf.mxu0
  %v686 = vadd.f32 0.0, %v685
  %v687 = vpop.f32.mrf.mxu0
  %v688 = vadd.f32 0.0, %v687
  %689 = vmatmul.bf16.gmra.mxu0 %v445
  %v690 = vpop.f32.mrf.mxu0
  %v691 = vadd.f32 0.0, %v690
  %v692 = vpop.f32.mrf.mxu0
  %v693 = vadd.f32 0.0, %v692
  %694 = vmatmul.bf16.gmra.mxu0 %v447
  %v695 = vpop.f32.mrf.mxu0
  %v696 = vadd.f32 0.0, %v695
  %v697 = vpop.f32.mrf.mxu0
  %v698 = vadd.f32 0.0, %v697
  %699 = vmatmul.bf16.gmra.mxu0 %v449
  %v700 = vpop.f32.mrf.mxu0
  %v701 = vadd.f32 0.0, %v700
  %v702 = vpop.f32.mrf.mxu0
  %v703 = vadd.f32 0.0, %v702
  %704 = vmatmul.bf16.gmra.mxu0 %v451
  %v705 = vpop.f32.mrf.mxu0
  %v706 = vadd.f32 0.0, %v705
  %v707 = vpop.f32.mrf.mxu0
  %v708 = vadd.f32 0.0, %v707
  %709 = vmatmul.bf16.gmra.mxu0 %v453
  %v710 = vpop.f32.mrf.mxu0
  %v711 = vadd.f32 0.0, %v710
  %v712 = vpop.f32.mrf.mxu0
  %v713 = vadd.f32 0.0, %v712
  %714 = vmatmul.bf16.gmra.mxu0 %v455
  %v715 = vpop.f32.mrf.mxu0
  %v716 = vadd.f32 0.0, %v715
  %v717 = vpop.f32.mrf.mxu0
  %v718 = vadd.f32 0.0, %v717
  %719 = vmatmul.bf16.gmra.mxu0 %v457
  %v720 = vpop.f32.mrf.mxu0
  %v721 = vadd.f32 0.0, %v720
  %v722 = vpop.f32.mrf.mxu0
  %v723 = vadd.f32 0.0, %v722
  %724 = vmatmul.bf16.gmra.mxu0 %v459
  %v725 = vpop.f32.mrf.mxu0
  %v726 = vadd.f32 0.0, %v725
  %v727 = vpop.f32.mrf.mxu0
  %v728 = vadd.f32 0.0, %v727
  %729 = vmatmul.bf16.gmra.mxu0 %v461
  %v730 = vpop.f32.mrf.mxu0
  %v731 = vadd.f32 0.0, %v730
  %v732 = vpop.f32.mrf.mxu0
  %v733 = vadd.f32 0.0, %v732
  %734 = vmatmul.bf16.gmra.mxu0 %v463
  %v735 = vpop.f32.mrf.mxu0
  %v736 = vadd.f32 0.0, %v735
  %v737 = vpop.f32.mrf.mxu0
  %v738 = vadd.f32 0.0, %v737
  %739 = vmatmul.bf16.gmra.mxu0 %v465
  %v740 = vpop.f32.mrf.mxu0
  %v741 = vadd.f32 0.0, %v740
  %v742 = vpop.f32.mrf.mxu0
  %v743 = vadd.f32 0.0, %v742
  %744 = vmatmul.bf16.gmra.mxu0 %v467
  %v745 = vpop.f32.mrf.mxu0
  %v746 = vadd.f32 0.0, %v745
  %v747 = vpop.f32.mrf.mxu0
  %v748 = vadd.f32 0.0, %v747
  %749 = vmatmul.bf16.gmra.mxu0 %v469
  %v750 = vpop.f32.mrf.mxu0
  %v751 = vadd.f32 0.0, %v750
  %v752 = vpop.f32.mrf.mxu0
  %v753 = vadd.f32 0.0, %v752
  %754 = vmatmul.bf16.gmra.mxu0 %v471
  %v755 = vpop.f32.mrf.mxu0
  %v756 = vadd.f32 0.0, %v755
  %v757 = vpop.f32.mrf.mxu0
  %v758 = vadd.f32 0.0, %v757
  %759 = vmatmul.bf16.gmra.mxu0 %v473
  %v760 = vpop.f32.mrf.mxu0
  %v761 = vadd.f32 0.0, %v760
  %v762 = vpop.f32.mrf.mxu0
  %v763 = vadd.f32 0.0, %v762
  %764 = vmatmul.bf16.gmra.mxu0 %v475
  %v765 = vpop.f32.mrf.mxu0
  %v766 = vadd.f32 0.0, %v765
  %v767 = vpop.f32.mrf.mxu0
  %v768 = vadd.f32 0.0, %v767
  %769 = vmatmul.bf16.gmra.mxu0 %v477
  %v770 = vpop.f32.mrf.mxu0
  %v771 = vadd.f32 0.0, %v770
  %v772 = vpop.f32.mrf.mxu0
  %v773 = vadd.f32 0.0, %v772
  %774 = vmatmul.bf16.gmra.mxu0 %v479
  %v775 = vpop.f32.mrf.mxu0
  %v776 = vadd.f32 0.0, %v775
  %v777 = vpop.f32.mrf.mxu0
  %v778 = vadd.f32 0.0, %v777
  %779 = vmatmul.bf16.gmra.mxu0 %v481
  %v780 = vpop.f32.mrf.mxu0
  %v781 = vadd.f32 0.0, %v780
  %v782 = vpop.f32.mrf.mxu0
  %v783 = vadd.f32 0.0, %v782
  %784 = vmatmul.bf16.gmra.mxu0 %v483
  %v785 = vpop.f32.mrf.mxu0
  %v786 = vadd.f32 0.0, %v785
  %v787 = vpop.f32.mrf.mxu0
  %v788 = vadd.f32 0.0, %v787
  %789 = vmatmul.bf16.gmra.mxu0 %v485
  %v790 = vpop.f32.mrf.mxu0
  %v791 = vadd.f32 0.0, %v790
  %v792 = vpop.f32.mrf.mxu0
  %v793 = vadd.f32 0.0, %v792
  %794 = vmatmul.bf16.gmra.mxu0 %v487
  %v795 = vpop.f32.mrf.mxu0
  %v796 = vadd.f32 0.0, %v795
  %v797 = vpop.f32.mrf.mxu0
  %v798 = vadd.f32 0.0, %v797
  %799 = vmatmul.bf16.gmra.mxu0 %v489
  %v800 = vpop.f32.mrf.mxu0
  %v801 = vadd.f32 0.0, %v800
  %v802 = vpop.f32.mrf.mxu0
  %v803 = vadd.f32 0.0, %v802
  %804 = vmatmul.bf16.gmra.mxu0 %v491
  %v805 = vpop.f32.mrf.mxu0
  %v806 = vadd.f32 0.0, %v805
  %v807 = vpop.f32.mrf.mxu0
  %v808 = vadd.f32 0.0, %v807
  %809 = vmatmul.bf16.gmra.mxu0 %v493
  %v810 = vpop.f32.mrf.mxu0
  %v811 = vadd.f32 0.0, %v810
  %v812 = vpop.f32.mrf.mxu0
  %v813 = vadd.f32 0.0, %v812
  %814 = vmatmul.bf16.gmra.mxu0 %v495
  %v815 = vpop.f32.mrf.mxu0
  %v816 = vadd.f32 0.0, %v815
  %v817 = vpop.f32.mrf.mxu0
  %v818 = vadd.f32 0.0, %v817
  %819 = vmatmul.bf16.gmra.mxu0 %v497
  %v820 = vpop.f32.mrf.mxu0
  %v821 = vadd.f32 0.0, %v820
  %v822 = vpop.f32.mrf.mxu0
  %v823 = vadd.f32 0.0, %v822
  %824 = vmatmul.bf16.gmra.mxu0 %v499
  %v825 = vpop.f32.mrf.mxu0
  %v826 = vadd.f32 0.0, %v825
  %v827 = vpop.f32.mrf.mxu0
  %v828 = vadd.f32 0.0, %v827
  %829 = vdwg.mxu0
  %830 = vmatpush.bf16.msra.mxu0 %v644
  %831 = vmatpush.bf16.msra.mxu0 %v643
  %832 = vmatpush.bf16.msra.mxu0 %v642
  %833 = vmatpush.bf16.msra.mxu0 %v641
  %834 = vmatpush.bf16.msra.mxu0 %v640
  %835 = vmatpush.bf16.msra.mxu0 %v639
  %836 = vmatpush.bf16.msra.mxu0 %v638
  %837 = vmatpush.bf16.msra.mxu0 %v637
  %838 = vmatmul.bf16.gmra.mxu0 %v438
  %v839 = vpop.f32.mrf.mxu0
  %v840 = vadd.f32 %v671, %v839
  %v841 = vpop.f32.mrf.mxu0
  %v842 = vadd.f32 %v673, %v841
  %843 = vmatmul.bf16.gmra.mxu0 %v440
  %v844 = vpop.f32.mrf.mxu0
  %v845 = vadd.f32 %v676, %v844
  %v846 = vpop.f32.mrf.mxu0
  %v847 = vadd.f32 %v678, %v846
  %848 = vmatmul.bf16.gmra.mxu0 %v442
  %v849 = vpop.f32.mrf.mxu0
  %v850 = vadd.f32 %v681, %v849
  %v851 = vpop.f32.mrf.mxu0
  %v852 = vadd.f32 %v683, %v851
  %853 = vmatmul.bf16.gmra.mxu0 %v444
  %v854 = vpop.f32.mrf.mxu0
  %v855 = vadd.f32 %v686, %v854
  %v856 = vpop.f32.mrf.mxu0
  %v857 = vadd.f32 %v688, %v856
  %858 = vmatmul.bf16.gmra.mxu0 %v446
  %v859 = vpop.f32.mrf.mxu0
  %v860 = vadd.f32 %v691, %v859
  %v861 = vpop.f32.mrf.mxu0
  %v862 = vadd.f32 %v693, %v861
  %863 = vmatmul.bf16.gmra.mxu0 %v448
  %v864 = vpop.f32.mrf.mxu0
  %v865 = vadd.f32 %v696, %v864
  %v866 = vpop.f32.mrf.mxu0
  %v867 = vadd.f32 %v698, %v866
  %868 = vmatmul.bf16.gmra.mxu0 %v450
  %v869 = vpop.f32.mrf.mxu0
  %v870 = vadd.f32 %v701, %v869
  %v871 = vpop.f32.mrf.mxu0
  %v872 = vadd.f32 %v703, %v871
  %873 = vmatmul.bf16.gmra.mxu0 %v452
  %v874 = vpop.f32.mrf.mxu0
  %v875 = vadd.f32 %v706, %v874
  %v876 = vpop.f32.mrf.mxu0
  %v877 = vadd.f32 %v708, %v876
  %878 = vmatmul.bf16.gmra.mxu0 %v454
  %v879 = vpop.f32.mrf.mxu0
  %v880 = vadd.f32 %v711, %v879
  %v881 = vpop.f32.mrf.mxu0
  %v882 = vadd.f32 %v713, %v881
  %883 = vmatmul.bf16.gmra.mxu0 %v456
  %v884 = vpop.f32.mrf.mxu0
  %v885 = vadd.f32 %v716, %v884
  %v886 = vpop.f32.mrf.mxu0
  %v887 = vadd.f32 %v718, %v886
  %888 = vmatmul.bf16.gmra.mxu0 %v458
  %v889 = vpop.f32.mrf.mxu0
  %v890 = vadd.f32 %v721, %v889
  %v891 = vpop.f32.mrf.mxu0
  %v892 = vadd.f32 %v723, %v891
  %893 = vmatmul.bf16.gmra.mxu0 %v460
  %v894 = vpop.f32.mrf.mxu0
  %v895 = vadd.f32 %v726, %v894
  %v896 = vpop.f32.mrf.mxu0
  %v897 = vadd.f32 %v728, %v896
  %898 = vmatmul.bf16.gmra.mxu0 %v462
  %v899 = vpop.f32.mrf.mxu0
  %v900 = vadd.f32 %v731, %v899
  %v901 = vpop.f32.mrf.mxu0
  %v902 = vadd.f32 %v733, %v901
  %903 = vmatmul.bf16.gmra.mxu0 %v464
  %v904 = vpop.f32.mrf.mxu0
  %v905 = vadd.f32 %v736, %v904
  %v906 = vpop.f32.mrf.mxu0
  %v907 = vadd.f32 %v738, %v906
  %908 = vmatmul.bf16.gmra.mxu0 %v466
  %v909 = vpop.f32.mrf.mxu0
  %v910 = vadd.f32 %v741, %v909
  %v911 = vpop.f32.mrf.mxu0
  %v912 = vadd.f32 %v743, %v911
  %913 = vmatmul.bf16.gmra.mxu0 %v468
  %v914 = vpop.f32.mrf.mxu0
  %v915 = vadd.f32 %v746, %v914
  %v916 = vpop.f32.mrf.mxu0
  %v917 = vadd.f32 %v748, %v916
  %918 = vmatmul.bf16.gmra.mxu0 %v470
  %v919 = vpop.f32.mrf.mxu0
  %v920 = vadd.f32 %v751, %v919
  %v921 = vpop.f32.mrf.mxu0
  %v922 = vadd.f32 %v753, %v921
  %923 = vmatmul.bf16.gmra.mxu0 %v472
  %v924 = vpop.f32.mrf.mxu0
  %v925 = vadd.f32 %v756, %v924
  %v926 = vpop.f32.mrf.mxu0
  %v927 = vadd.f32 %v758, %v926
  %928 = vmatmul.bf16.gmra.mxu0 %v474
  %v929 = vpop.f32.mrf.mxu0
  %v930 = vadd.f32 %v761, %v929
  %v931 = vpop.f32.mrf.mxu0
  %v932 = vadd.f32 %v763, %v931
  %933 = vmatmul.bf16.gmra.mxu0 %v476
  %v934 = vpop.f32.mrf.mxu0
  %v935 = vadd.f32 %v766, %v934
  %v936 = vpop.f32.mrf.mxu0
  %v937 = vadd.f32 %v768, %v936
  %938 = vmatmul.bf16.gmra.mxu0 %v478
  %v939 = vpop.f32.mrf.mxu0
  %v940 = vadd.f32 %v771, %v939
  %v941 = vpop.f32.mrf.mxu0
  %v942 = vadd.f32 %v773, %v941
  %943 = vmatmul.bf16.gmra.mxu0 %v480
  %v944 = vpop.f32.mrf.mxu0
  %v945 = vadd.f32 %v776, %v944
  %v946 = vpop.f32.mrf.mxu0
  %v947 = vadd.f32 %v778, %v946
  %948 = vmatmul.bf16.gmra.mxu0 %v482
  %v949 = vpop.f32.mrf.mxu0
  %v950 = vadd.f32 %v781, %v949
  %v951 = vpop.f32.mrf.mxu0
  %v952 = vadd.f32 %v783, %v951
  %953 = vmatmul.bf16.gmra.mxu0 %v484
  %v954 = vpop.f32.mrf.mxu0
  %v955 = vadd.f32 %v786, %v954
  %v956 = vpop.f32.mrf.mxu0
  %v957 = vadd.f32 %v788, %v956
  %958 = vmatmul.bf16.gmra.mxu0 %v486
  %v959 = vpop.f32.mrf.mxu0
  %v960 = vadd.f32 %v791, %v959
  %v961 = vpop.f32.mrf.mxu0
  %v962 = vadd.f32 %v793, %v961
  %963 = vmatmul.bf16.gmra.mxu0 %v488
  %v964 = vpop.f32.mrf.mxu0
  %v965 = vadd.f32 %v796, %v964
  %v966 = vpop.f32.mrf.mxu0
  %v967 = vadd.f32 %v798, %v966
  %968 = vmatmul.bf16.gmra.mxu0 %v490
  %v969 = vpop.f32.mrf.mxu0
  %v970 = vadd.f32 %v801, %v969
  %v971 = vpop.f32.mrf.mxu0
  %v972 = vadd.f32 %v803, %v971
  %973 = vmatmul.bf16.gmra.mxu0 %v492
  %v974 = vpop.f32.mrf.mxu0
  %v975 = vadd.f32 %v806, %v974
  %v976 = vpop.f32.mrf.mxu0
  %v977 = vadd.f32 %v808, %v976
  %978 = vmatmul.bf16.gmra.mxu0 %v494
  %v979 = vpop.f32.mrf.mxu0
  %v980 = vadd.f32 %v811, %v979
  %v981 = vpop.f32.mrf.mxu0
  %v982 = vadd.f32 %v813, %v981
  %983 = vmatmul.bf16.gmra.mxu0 %v496
  %v984 = vpop.f32.mrf.mxu0
  %v985 = vadd.f32 %v816, %v984
  %v986 = vpop.f32.mrf.mxu0
  %v987 = vadd.f32 %v818, %v986
  %988 = vmatmul.bf16.gmra.mxu0 %v498
  %v989 = vpop.f32.mrf.mxu0
  %v990 = vadd.f32 %v821, %v989
  %v991 = vpop.f32.mrf.mxu0
  %v992 = vadd.f32 %v823, %v991
  %993 = vmatmul.bf16.gmra.mxu0 %v500
  %v994 = vpop.f32.mrf.mxu0
  %v995 = vadd.f32 %v826, %v994
  %v996 = vpop.f32.mrf.mxu0
  %v997 = vadd.f32 %v828, %v996
  %998 = vdwg.mxu0
  %v999 = vadd.f32 %v85, %v840
  %v1000 = vadd.f32 %v86, %v842
  %v1001 = vadd.f32 %v87, %v845
  %v1002 = vadd.f32 %v88, %v847
  %v1003 = vadd.f32 %v89, %v850
  %v1004 = vadd.f32 %v90, %v852
  %v1005 = vadd.f32 %v91, %v855
  %v1006 = vadd.f32 %v92, %v857
  %v1007 = vadd.f32 %v93, %v860
  %v1008 = vadd.f32 %v94, %v862
  %v1009 = vadd.f32 %v95, %v865
  %v1010 = vadd.f32 %v96, %v867
  %v1011 = vadd.f32 %v97, %v870
  %v1012 = vadd.f32 %v98, %v872
  %v1013 = vadd.f32 %v99, %v875
  %v1014 = vadd.f32 %v100, %v877
  %v1015 = vadd.f32 %v101, %v880
  %v1016 = vadd.f32 %v102, %v882
  %v1017 = vadd.f32 %v103, %v885
  %v1018 = vadd.f32 %v104, %v887
  %v1019 = vadd.f32 %v105, %v890
  %v1020 = vadd.f32 %v106, %v892
  %v1021 = vadd.f32 %v107, %v895
  %v1022 = vadd.f32 %v108, %v897
  %v1023 = vadd.f32 %v109, %v900
  %v1024 = vadd.f32 %v110, %v902
  %v1025 = vadd.f32 %v111, %v905
  %v1026 = vadd.f32 %v112, %v907
  %v1027 = vadd.f32 %v113, %v910
  %v1028 = vadd.f32 %v114, %v912
  %v1029 = vadd.f32 %v115, %v915
  %v1030 = vadd.f32 %v116, %v917
  %v1031 = vadd.f32 %v117, %v920
  %v1032 = vadd.f32 %v118, %v922
  %v1033 = vadd.f32 %v119, %v925
  %v1034 = vadd.f32 %v120, %v927
  %v1035 = vadd.f32 %v121, %v930
  %v1036 = vadd.f32 %v122, %v932
  %v1037 = vadd.f32 %v123, %v935
  %v1038 = vadd.f32 %v124, %v937
  %v1039 = vadd.f32 %v125, %v940
  %v1040 = vadd.f32 %v126, %v942
  %v1041 = vadd.f32 %v127, %v945
  %v1042 = vadd.f32 %v128, %v947
  %v1043 = vadd.f32 %v129, %v950
  %v1044 = vadd.f32 %v130, %v952
  %v1045 = vadd.f32 %v131, %v955
  %v1046 = vadd.f32 %v132, %v957
  %v1047 = vadd.f32 %v133, %v960
  %v1048 = vadd.f32 %v134, %v962
  %v1049 = vadd.f32 %v135, %v965
  %v1050 = vadd.f32 %v136, %v967
  %v1051 = vadd.f32 %v137, %v970
  %v1052 = vadd.f32 %v138, %v972
  %v1053 = vadd.f32 %v139, %v975
  %v1054 = vadd.f32 %v140, %v977
  %v1055 = vadd.f32 %v141, %v980
  %v1056 = vadd.f32 %v142, %v982
  %v1057 = vadd.f32 %v143, %v985
  %v1058 = vadd.f32 %v144, %v987
  %v1059 = vadd.f32 %v145, %v990
  %v1060 = vadd.f32 %v146, %v992
  %v1061 = vadd.f32 %v147, %v995
  %v1062 = vadd.f32 %v148, %v997
  %1063 = vst [vmem:[#allocation2] sm:$0xff] %v999
  %1064 = vst [vmem:[#allocation2 + $0x8] sm:$0xff] %v1000
  %1065 = vst [vmem:[#allocation2 + $0x10] sm:$0xff] %v1001
  %1066 = vst [vmem:[#allocation2 + $0x18] sm:$0xff] %v1002
  %1067 = vst [vmem:[#allocation2 + $0x20] sm:$0xff] %v1003
  %1068 = vst [vmem:[#allocation2 + $0x28] sm:$0xff] %v1004
  %1069 = vst [vmem:[#allocation2 + $0x30] sm:$0xff] %v1005
  %1070 = vst [vmem:[#allocation2 + $0x38] sm:$0xff] %v1006
  %1071 = vst [vmem:[#allocation2 + $0x40] sm:$0xff] %v1007
  %1072 = vst [vmem:[#allocation2 + $0x48] sm:$0xff] %v1008
  %1073 = vst [vmem:[#allocation2 + $0x50] sm:$0xff] %v1009
  %1074 = vst [vmem:[#allocation2 + $0x58] sm:$0xff] %v1010
  %1075 = vst [vmem:[#allocation2 + $0x60] sm:$0xff] %v1011
  %1076 = vst [vmem:[#allocation2 + $0x68] sm:$0xff] %v1012
  %1077 = vst [vmem:[#allocation2 + $0x70] sm:$0xff] %v1013
  %1078 = vst [vmem:[#allocation2 + $0x78] sm:$0xff] %v1014
  %1079 = vst [vmem:[#allocation2 + $0x80] sm:$0xff] %v1015
  %1080 = vst [vmem:[#allocation2 + $0x88] sm:$0xff] %v1016
  %1081 = vst [vmem:[#allocation2 + $0x90] sm:$0xff] %v1017
  %1082 = vst [vmem:[#allocation2 + $0x98] sm:$0xff] %v1018
  %1083 = vst [vmem:[#allocation2 + $0xa0] sm:$0xff] %v1019
  %1084 = vst [vmem:[#allocation2 + $0xa8] sm:$0xff] %v1020
  %1085 = vst [vmem:[#allocation2 + $0xb0] sm:$0xff] %v1021
  %1086 = vst [vmem:[#allocation2 + $0xb8] sm:$0xff] %v1022
  %1087 = vst [vmem:[#allocation2 + $0xc0] sm:$0xff] %v1023
  %1088 = vst [vmem:[#allocation2 + $0xc8] sm:$0xff] %v1024
  %1089 = vst [vmem:[#allocation2 + $0xd0] sm:$0xff] %v1025
  %1090 = vst [vmem:[#allocation2 + $0xd8] sm:$0xff] %v1026
  %1091 = vst [vmem:[#allocation2 + $0xe0] sm:$0xff] %v1027
  %1092 = vst [vmem:[#allocation2 + $0xe8] sm:$0xff] %v1028
  %1093 = vst [vmem:[#allocation2 + $0xf0] sm:$0xff] %v1029
  %1094 = vst [vmem:[#allocation2 + $0xf8] sm:$0xff] %v1030
  %1095 = vst [vmem:[#allocation2 + $0x100] sm:$0xff] %v1031
  %1096 = vst [vmem:[#allocation2 + $0x108] sm:$0xff] %v1032
  %1097 = vst [vmem:[#allocation2 + $0x110] sm:$0xff] %v1033
  %1098 = vst [vmem:[#allocation2 + $0x118] sm:$0xff] %v1034
  %1099 = vst [vmem:[#allocation2 + $0x120] sm:$0xff] %v1035
  %1100 = vst [vmem:[#allocation2 + $0x128] sm:$0xff] %v1036
  %1101 = vst [vmem:[#allocation2 + $0x130] sm:$0xff] %v1037
  %1102 = vst [vmem:[#allocation2 + $0x138] sm:$0xff] %v1038
  %1103 = vst [vmem:[#allocation2 + $0x140] sm:$0xff] %v1039
  %1104 = vst [vmem:[#allocation2 + $0x148] sm:$0xff] %v1040
  %1105 = vst [vmem:[#allocation2 + $0x150] sm:$0xff] %v1041
  %1106 = vst [vmem:[#allocation2 + $0x158] sm:$0xff] %v1042
  %1107 = vst [vmem:[#allocation2 + $0x160] sm:$0xff] %v1043
  %1108 = vst [vmem:[#allocation2 + $0x168] sm:$0xff] %v1044
  %1109 = vst [vmem:[#allocation2 + $0x170] sm:$0xff] %v1045
  %1110 = vst [vmem:[#allocation2 + $0x178] sm:$0xff] %v1046
  %1111 = vst [vmem:[#allocation2 + $0x180] sm:$0xff] %v1047
  %1112 = vst [vmem:[#allocation2 + $0x188] sm:$0xff] %v1048
  %1113 = vst [vmem:[#allocation2 + $0x190] sm:$0xff] %v1049
  %1114 = vst [vmem:[#allocation2 + $0x198] sm:$0xff] %v1050
  %1115 = vst [vmem:[#allocation2 + $0x1a0] sm:$0xff] %v1051
  %1116 = vst [vmem:[#allocation2 + $0x1a8] sm:$0xff] %v1052
  %1117 = vst [vmem:[#allocation2 + $0x1b0] sm:$0xff] %v1053
  %1118 = vst [vmem:[#allocation2 + $0x1b8] sm:$0xff] %v1054
  %1119 = vst [vmem:[#allocation2 + $0x1c0] sm:$0xff] %v1055
  %1120 = vst [vmem:[#allocation2 + $0x1c8] sm:$0xff] %v1056
  %1121 = vst [vmem:[#allocation2 + $0x1d0] sm:$0xff] %v1057
  %1122 = vst [vmem:[#allocation2 + $0x1d8] sm:$0xff] %v1058
  %1123 = vst [vmem:[#allocation2 + $0x1e0] sm:$0xff] %v1059
  %1124 = vst [vmem:[#allocation2 + $0x1e8] sm:$0xff] %v1060
  %1125 = vst [vmem:[#allocation2 + $0x1f0] sm:$0xff] %v1061
  %1126 = vst [vmem:[#allocation2 + $0x1f8] sm:$0xff] %v1062
  // Predicated region
  $region22: #{discriminator_forward.6} parent=0 // pred_check
    %p1127 = pneg %p17
  $region23: #{discriminator_forward.6} parent=0 // pred_check_branch
    %1129 = sbr.rel (%p1127) target = $region25
  $region24: #{discriminator_forward.6} parent=0 // pred_region
    %v1130 = vld [vmem:[#allocation2] sm:$0xff]
    %v1131 = vld [vmem:[#allocation2 + $0x8] sm:$0xff]
    %v1132 = vld [vmem:[#allocation2 + $0x10] sm:$0xff]
    %v1133 = vld [vmem:[#allocation2 + $0x18] sm:$0xff]
    %v1134 = vld [vmem:[#allocation2 + $0x20] sm:$0xff]
    %v1135 = vld [vmem:[#allocation2 + $0x28] sm:$0xff]
    %v1136 = vld [vmem:[#allocation2 + $0x30] sm:$0xff]
    %v1137 = vld [vmem:[#allocation2 + $0x38] sm:$0xff]
    %v1138 = vld [vmem:[#allocation2 + $0x40] sm:$0xff]
    %v1139 = vld [vmem:[#allocation2 + $0x48] sm:$0xff]
    %v1140 = vld [vmem:[#allocation2 + $0x50] sm:$0xff]
    %v1141 = vld [vmem:[#allocation2 + $0x58] sm:$0xff]
    %v1142 = vld [vmem:[#allocation2 + $0x60] sm:$0xff]
    %v1143 = vld [vmem:[#allocation2 + $0x68] sm:$0xff]
    %v1144 = vld [vmem:[#allocation2 + $0x70] sm:$0xff]
    %v1145 = vld [vmem:[#allocation2 + $0x78] sm:$0xff]
    %v1146 = vld [vmem:[#allocation2 + $0x80] sm:$0xff]
    %v1147 = vld [vmem:[#allocation2 + $0x88] sm:$0xff]
    %v1148 = vld [vmem:[#allocation2 + $0x90] sm:$0xff]
    %v1149 = vld [vmem:[#allocation2 + $0x98] sm:$0xff]
    %v1150 = vld [vmem:[#allocation2 + $0xa0] sm:$0xff]
    %v1151 = vld [vmem:[#allocation2 + $0xa8] sm:$0xff]
    %v1152 = vld [vmem:[#allocation2 + $0xb0] sm:$0xff]
    %v1153 = vld [vmem:[#allocation2 + $0xb8] sm:$0xff]
    %v1154 = vld [vmem:[#allocation2 + $0xc0] sm:$0xff]
    %v1155 = vld [vmem:[#allocation2 + $0xc8] sm:$0xff]
    %v1156 = vld [vmem:[#allocation2 + $0xd0] sm:$0xff]
    %v1157 = vld [vmem:[#allocation2 + $0xd8] sm:$0xff]
    %v1158 = vld [vmem:[#allocation2 + $0xe0] sm:$0xff]
    %v1159 = vld [vmem:[#allocation2 + $0xe8] sm:$0xff]
    %v1160 = vld [vmem:[#allocation2 + $0xf0] sm:$0xff]
    %v1161 = vld [vmem:[#allocation2 + $0xf8] sm:$0xff]
    %v1162 = vld [vmem:[#allocation2 + $0x100] sm:$0xff]
    %v1163 = vld [vmem:[#allocation2 + $0x108] sm:$0xff]
    %v1164 = vld [vmem:[#allocation2 + $0x110] sm:$0xff]
    %v1165 = vld [vmem:[#allocation2 + $0x118] sm:$0xff]
    %v1166 = vld [vmem:[#allocation2 + $0x120] sm:$0xff]
    %v1167 = vld [vmem:[#allocation2 + $0x128] sm:$0xff]
    %v1168 = vld [vmem:[#allocation2 + $0x130] sm:$0xff]
    %v1169 = vld [vmem:[#allocation2 + $0x138] sm:$0xff]
    %v1170 = vld [vmem:[#allocation2 + $0x140] sm:$0xff]
    %v1171 = vld [vmem:[#allocation2 + $0x148] sm:$0xff]
    %v1172 = vld [vmem:[#allocation2 + $0x150] sm:$0xff]
    %v1173 = vld [vmem:[#allocation2 + $0x158] sm:$0xff]
    %v1174 = vld [vmem:[#allocation2 + $0x160] sm:$0xff]
    %v1175 = vld [vmem:[#allocation2 + $0x168] sm:$0xff]
    %v1176 = vld [vmem:[#allocation2 + $0x170] sm:$0xff]
    %v1177 = vld [vmem:[#allocation2 + $0x178] sm:$0xff]
    %v1178 = vld [vmem:[#allocation2 + $0x180] sm:$0xff]
    %v1179 = vld [vmem:[#allocation2 + $0x188] sm:$0xff]
    %v1180 = vld [vmem:[#allocation2 + $0x190] sm:$0xff]
    %v1181 = vld [vmem:[#allocation2 + $0x198] sm:$0xff]
    %v1182 = vld [vmem:[#allocation2 + $0x1a0] sm:$0xff]
    %v1183 = vld [vmem:[#allocation2 + $0x1a8] sm:$0xff]
    %v1184 = vld [vmem:[#allocation2 + $0x1b0] sm:$0xff]
    %v1185 = vld [vmem:[#allocation2 + $0x1b8] sm:$0xff]
    %v1186 = vld [vmem:[#allocation2 + $0x1c0] sm:$0xff]
    %v1187 = vld [vmem:[#allocation2 + $0x1c8] sm:$0xff]
    %v1188 = vld [vmem:[#allocation2 + $0x1d0] sm:$0xff]
    %v1189 = vld [vmem:[#allocation2 + $0x1d8] sm:$0xff]
    %v1190 = vld [vmem:[#allocation2 + $0x1e0] sm:$0xff]
    %v1191 = vld [vmem:[#allocation2 + $0x1e8] sm:$0xff]
    %v1192 = vld [vmem:[#allocation2 + $0x1f0] sm:$0xff]
    %v1193 = vld [vmem:[#allocation2 + $0x1f8] sm:$0xff]
    %v1194 = vadd.f32 %v1130, %v1131
    %v1195 = vadd.f32 %v1194, %v1132
    %v1196 = vadd.f32 %v1195, %v1133
    %v1197 = vadd.f32 %v1196, %v1134
    %v1198 = vadd.f32 %v1197, %v1135
    %v1199 = vadd.f32 %v1198, %v1136
    %v1200 = vadd.f32 %v1199, %v1137
    %v1201 = vadd.f32 %v1200, %v1138
    %v1202 = vadd.f32 %v1201, %v1139
    %v1203 = vadd.f32 %v1202, %v1140
    %v1204 = vadd.f32 %v1203, %v1141
    %v1205 = vadd.f32 %v1204, %v1142
    %v1206 = vadd.f32 %v1205, %v1143
    %v1207 = vadd.f32 %v1206, %v1144
    %v1208 = vadd.f32 %v1207, %v1145
    %v1209 = vadd.f32 %v1208, %v1146
    %v1210 = vadd.f32 %v1209, %v1147
    %v1211 = vadd.f32 %v1210, %v1148
    %v1212 = vadd.f32 %v1211, %v1149
    %v1213 = vadd.f32 %v1212, %v1150
    %v1214 = vadd.f32 %v1213, %v1151
    %v1215 = vadd.f32 %v1214, %v1152
    %v1216 = vadd.f32 %v1215, %v1153
    %v1217 = vadd.f32 %v1216, %v1154
    %v1218 = vadd.f32 %v1217, %v1155
    %v1219 = vadd.f32 %v1218, %v1156
    %v1220 = vadd.f32 %v1219, %v1157
    %v1221 = vadd.f32 %v1220, %v1158
    %v1222 = vadd.f32 %v1221, %v1159
    %v1223 = vadd.f32 %v1222, %v1160
    %v1224 = vadd.f32 %v1223, %v1161
    %v1225 = vadd.f32 %v1224, %v1162
    %v1226 = vadd.f32 %v1225, %v1163
    %v1227 = vadd.f32 %v1226, %v1164
    %v1228 = vadd.f32 %v1227, %v1165
    %v1229 = vadd.f32 %v1228, %v1166
    %v1230 = vadd.f32 %v1229, %v1167
    %v1231 = vadd.f32 %v1230, %v1168
    %v1232 = vadd.f32 %v1231, %v1169
    %v1233 = vadd.f32 %v1232, %v1170
    %v1234 = vadd.f32 %v1233, %v1171
    %v1235 = vadd.f32 %v1234, %v1172
    %v1236 = vadd.f32 %v1235, %v1173
    %v1237 = vadd.f32 %v1236, %v1174
    %v1238 = vadd.f32 %v1237, %v1175
    %v1239 = vadd.f32 %v1238, %v1176
    %v1240 = vadd.f32 %v1239, %v1177
    %v1241 = vadd.f32 %v1240, %v1178
    %v1242 = vadd.f32 %v1241, %v1179
    %v1243 = vadd.f32 %v1242, %v1180
    %v1244 = vadd.f32 %v1243, %v1181
    %v1245 = vadd.f32 %v1244, %v1182
    %v1246 = vadd.f32 %v1245, %v1183
    %v1247 = vadd.f32 %v1246, %v1184
    %v1248 = vadd.f32 %v1247, %v1185
    %v1249 = vadd.f32 %v1248, %v1186
    %v1250 = vadd.f32 %v1249, %v1187
    %v1251 = vadd.f32 %v1250, %v1188
    %v1252 = vadd.f32 %v1251, %v1189
    %v1253 = vadd.f32 %v1252, %v1190
    %v1254 = vadd.f32 %v1253, %v1191
    %v1255 = vadd.f32 %v1254, %v1192
    %v1256 = vadd.f32 %v1255, %v1193
    %v1257 = vrot.slane %v1256, 4
    %v1258 = vadd.f32 %v1256, %v1257
    %v1259 = vrot.slane %v1258, 2
    %v1260 = vadd.f32 %v1258, %v1259
    %v1261 = vrot.slane %v1260, 1
    %v1262 = vadd.f32 %v1260, %v1261
    %v1263 = vrcp.pop 512.0
    %v1264 = vmul.f32 512.0, %v1263
    %v1265 = vsub.f32 1.0, %v1264
    %v1266 = vmul.f32 %v1263, %v1265
    %v1267 = vadd.f32 %v1263, %v1266
    %vm1268 = vweird.f32 %v1263
    %v1269 = vsel %vm1268, %v1263, %v1267
    %v1270 = vmul.f32 %v1262, %v1269
    %v1271 = vsub.f32 %v1130, %v1270
    %v1272 = vsub.f32 %v1131, %v1270
    %v1273 = vsub.f32 %v1132, %v1270
    %v1274 = vsub.f32 %v1133, %v1270
    %v1275 = vsub.f32 %v1134, %v1270
    %v1276 = vsub.f32 %v1135, %v1270
    %v1277 = vsub.f32 %v1136, %v1270
    %v1278 = vsub.f32 %v1137, %v1270
    %v1279 = vsub.f32 %v1138, %v1270
    %v1280 = vsub.f32 %v1139, %v1270
    %v1281 = vsub.f32 %v1140, %v1270
    %v1282 = vsub.f32 %v1141, %v1270
    %v1283 = vsub.f32 %v1142, %v1270
    %v1284 = vsub.f32 %v1143, %v1270
    %v1285 = vsub.f32 %v1144, %v1270
    %v1286 = vsub.f32 %v1145, %v1270
    %v1287 = vsub.f32 %v1146, %v1270
    %v1288 = vsub.f32 %v1147, %v1270
    %v1289 = vsub.f32 %v1148, %v1270
    %v1290 = vsub.f32 %v1149, %v1270
    %v1291 = vsub.f32 %v1150, %v1270
    %v1292 = vsub.f32 %v1151, %v1270
    %v1293 = vsub.f32 %v1152, %v1270
    %v1294 = vsub.f32 %v1153, %v1270
    %v1295 = vsub.f32 %v1154, %v1270
    %v1296 = vsub.f32 %v1155, %v1270
    %v1297 = vsub.f32 %v1156, %v1270
    %v1298 = vsub.f32 %v1157, %v1270
    %v1299 = vsub.f32 %v1158, %v1270
    %v1300 = vsub.f32 %v1159, %v1270
    %v1301 = vsub.f32 %v1160, %v1270
    %v1302 = vsub.f32 %v1161, %v1270
    %v1303 = vsub.f32 %v1162, %v1270
    %v1304 = vsub.f32 %v1163, %v1270
    %v1305 = vsub.f32 %v1164, %v1270
    %v1306 = vsub.f32 %v1165, %v1270
    %v1307 = vsub.f32 %v1166, %v1270
    %v1308 = vsub.f32 %v1167, %v1270
    %v1309 = vsub.f32 %v1168, %v1270
    %v1310 = vsub.f32 %v1169, %v1270
    %v1311 = vsub.f32 %v1170, %v1270
    %v1312 = vsub.f32 %v1171, %v1270
    %v1313 = vsub.f32 %v1172, %v1270
    %v1314 = vsub.f32 %v1173, %v1270
    %v1315 = vsub.f32 %v1174, %v1270
    %v1316 = vsub.f32 %v1175, %v1270
    %v1317 = vsub.f32 %v1176, %v1270
    %v1318 = vsub.f32 %v1177, %v1270
    %v1319 = vsub.f32 %v1178, %v1270
    %v1320 = vsub.f32 %v1179, %v1270
    %v1321 = vsub.f32 %v1180, %v1270
    %v1322 = vsub.f32 %v1181, %v1270
    %v1323 = vsub.f32 %v1182, %v1270
    %v1324 = vsub.f32 %v1183, %v1270
    %v1325 = vsub.f32 %v1184, %v1270
    %v1326 = vsub.f32 %v1185, %v1270
    %v1327 = vsub.f32 %v1186, %v1270
    %v1328 = vsub.f32 %v1187, %v1270
    %v1329 = vsub.f32 %v1188, %v1270
    %v1330 = vsub.f32 %v1189, %v1270
    %v1331 = vsub.f32 %v1190, %v1270
    %v1332 = vsub.f32 %v1191, %v1270
    %v1333 = vsub.f32 %v1192, %v1270
    %v1334 = vsub.f32 %v1193, %v1270
    %v1335 = vmul.f32 %v1271, %v1271
    %v1336 = vmul.f32 %v1272, %v1272
    %v1337 = vmul.f32 %v1273, %v1273
    %v1338 = vmul.f32 %v1274, %v1274
    %v1339 = vmul.f32 %v1275, %v1275
    %v1340 = vmul.f32 %v1276, %v1276
    %v1341 = vmul.f32 %v1277, %v1277
    %v1342 = vmul.f32 %v1278, %v1278
    %v1343 = vmul.f32 %v1279, %v1279
    %v1344 = vmul.f32 %v1280, %v1280
    %v1345 = vmul.f32 %v1281, %v1281
    %v1346 = vmul.f32 %v1282, %v1282
    %v1347 = vmul.f32 %v1283, %v1283
    %v1348 = vmul.f32 %v1284, %v1284
    %v1349 = vmul.f32 %v1285, %v1285
    %v1350 = vmul.f32 %v1286, %v1286
    %v1351 = vmul.f32 %v1287, %v1287
    %v1352 = vmul.f32 %v1288, %v1288
    %v1353 = vmul.f32 %v1289, %v1289
    %v1354 = vmul.f32 %v1290, %v1290
    %v1355 = vmul.f32 %v1291, %v1291
    %v1356 = vmul.f32 %v1292, %v1292
    %v1357 = vmul.f32 %v1293, %v1293
    %v1358 = vmul.f32 %v1294, %v1294
    %v1359 = vmul.f32 %v1295, %v1295
    %v1360 = vmul.f32 %v1296, %v1296
    %v1361 = vmul.f32 %v1297, %v1297
    %v1362 = vmul.f32 %v1298, %v1298
    %v1363 = vmul.f32 %v1299, %v1299
    %v1364 = vmul.f32 %v1300, %v1300
    %v1365 = vmul.f32 %v1301, %v1301
    %v1366 = vmul.f32 %v1302, %v1302
    %v1367 = vmul.f32 %v1303, %v1303
    %v1368 = vmul.f32 %v1304, %v1304
    %v1369 = vmul.f32 %v1305, %v1305
    %v1370 = vmul.f32 %v1306, %v1306
    %v1371 = vmul.f32 %v1307, %v1307
    %v1372 = vmul.f32 %v1308, %v1308
    %v1373 = vmul.f32 %v1309, %v1309
    %v1374 = vmul.f32 %v1310, %v1310
    %v1375 = vmul.f32 %v1311, %v1311
    %v1376 = vmul.f32 %v1312, %v1312
    %v1377 = vmul.f32 %v1313, %v1313
    %v1378 = vmul.f32 %v1314, %v1314
    %v1379 = vmul.f32 %v1315, %v1315
    %v1380 = vmul.f32 %v1316, %v1316
    %v1381 = vmul.f32 %v1317, %v1317
    %v1382 = vmul.f32 %v1318, %v1318
    %v1383 = vmul.f32 %v1319, %v1319
    %v1384 = vmul.f32 %v1320, %v1320
    %v1385 = vmul.f32 %v1321, %v1321
    %v1386 = vmul.f32 %v1322, %v1322
    %v1387 = vmul.f32 %v1323, %v1323
    %v1388 = vmul.f32 %v1324, %v1324
    %v1389 = vmul.f32 %v1325, %v1325
    %v1390 = vmul.f32 %v1326, %v1326
    %v1391 = vmul.f32 %v1327, %v1327
    %v1392 = vmul.f32 %v1328, %v1328
    %v1393 = vmul.f32 %v1329, %v1329
    %v1394 = vmul.f32 %v1330, %v1330
    %v1395 = vmul.f32 %v1331, %v1331
    %v1396 = vmul.f32 %v1332, %v1332
    %v1397 = vmul.f32 %v1333, %v1333
    %v1398 = vmul.f32 %v1334, %v1334
    %v1399 = vadd.f32 %v1335, %v1336
    %v1400 = vadd.f32 %v1399, %v1337
    %v1401 = vadd.f32 %v1400, %v1338
    %v1402 = vadd.f32 %v1401, %v1339
    %v1403 = vadd.f32 %v1402, %v1340
    %v1404 = vadd.f32 %v1403, %v1341
    %v1405 = vadd.f32 %v1404, %v1342
    %v1406 = vadd.f32 %v1405, %v1343
    %v1407 = vadd.f32 %v1406, %v1344
    %v1408 = vadd.f32 %v1407, %v1345
    %v1409 = vadd.f32 %v1408, %v1346
    %v1410 = vadd.f32 %v1409, %v1347
    %v1411 = vadd.f32 %v1410, %v1348
    %v1412 = vadd.f32 %v1411, %v1349
    %v1413 = vadd.f32 %v1412, %v1350
    %v1414 = vadd.f32 %v1413, %v1351
    %v1415 = vadd.f32 %v1414, %v1352
    %v1416 = vadd.f32 %v1415, %v1353
    %v1417 = vadd.f32 %v1416, %v1354
    %v1418 = vadd.f32 %v1417, %v1355
    %v1419 = vadd.f32 %v1418, %v1356
    %v1420 = vadd.f32 %v1419, %v1357
    %v1421 = vadd.f32 %v1420, %v1358
    %v1422 = vadd.f32 %v1421, %v1359
    %v1423 = vadd.f32 %v1422, %v1360
    %v1424 = vadd.f32 %v1423, %v1361
    %v1425 = vadd.f32 %v1424, %v1362
    %v1426 = vadd.f32 %v1425, %v1363
    %v1427 = vadd.f32 %v1426, %v1364
    %v1428 = vadd.f32 %v1427, %v1365
    %v1429 = vadd.f32 %v1428, %v1366
    %v1430 = vadd.f32 %v1429, %v1367
    %v1431 = vadd.f32 %v1430, %v1368
    %v1432 = vadd.f32 %v1431, %v1369
    %v1433 = vadd.f32 %v1432, %v1370
    %v1434 = vadd.f32 %v1433, %v1371
    %v1435 = vadd.f32 %v1434, %v1372
    %v1436 = vadd.f32 %v1435, %v1373
    %v1437 = vadd.f32 %v1436, %v1374
    %v1438 = vadd.f32 %v1437, %v1375
    %v1439 = vadd.f32 %v1438, %v1376
    %v1440 = vadd.f32 %v1439, %v1377
    %v1441 = vadd.f32 %v1440, %v1378
    %v1442 = vadd.f32 %v1441, %v1379
    %v1443 = vadd.f32 %v1442, %v1380
    %v1444 = vadd.f32 %v1443, %v1381
    %v1445 = vadd.f32 %v1444, %v1382
    %v1446 = vadd.f32 %v1445, %v1383
    %v1447 = vadd.f32 %v1446, %v1384
    %v1448 = vadd.f32 %v1447, %v1385
    %v1449 = vadd.f32 %v1448, %v1386
    %v1450 = vadd.f32 %v1449, %v1387
    %v1451 = vadd.f32 %v1450, %v1388
    %v1452 = vadd.f32 %v1451, %v1389
    %v1453 = vadd.f32 %v1452, %v1390
    %v1454 = vadd.f32 %v1453, %v1391
    %v1455 = vadd.f32 %v1454, %v1392
    %v1456 = vadd.f32 %v1455, %v1393
    %v1457 = vadd.f32 %v1456, %v1394
    %v1458 = vadd.f32 %v1457, %v1395
    %v1459 = vadd.f32 %v1458, %v1396
    %v1460 = vadd.f32 %v1459, %v1397
    %v1461 = vadd.f32 %v1460, %v1398
    %v1462 = vrot.slane %v1461, 4
    %v1463 = vadd.f32 %v1461, %v1462
    %v1464 = vrot.slane %v1463, 2
    %v1465 = vadd.f32 %v1463, %v1464
    %v1466 = vrot.slane %v1465, 1
    %v1467 = vadd.f32 %v1465, %v1466
    %v1468 = vmul.f32 %v1467, %v1269
    %v1469 = vadd.f32 %v1468, 1e-05
    %v1470 = vrsqrt.pop %v1469
    %v1471 = vmul.f32 %v1470, %v1469
    %v1472 = vmul.f32 %v1471, %v1470
    %v1473 = vmul.f32 0.5, %v1472
    %v1474 = vsub.f32 1.5, %v1473
    %v1475 = vmul.f32 %v1470, %v1474
    %vm1476 = vweird.f32 %v1469
    %vm1477 = vweird.f32 %v1470
    %vm1478 = vmor %vm1476, %vm1477
    %v1479 = vsel %vm1478, %v1470, %v1475
    %v1480 = vmul.f32 %v1271, %v1479
    %v1481 = vmul.f32 %v1272, %v1479
    %v1482 = vmul.f32 %v1273, %v1479
    %v1483 = vmul.f32 %v1274, %v1479
    %v1484 = vmul.f32 %v1275, %v1479
    %v1485 = vmul.f32 %v1276, %v1479
    %v1486 = vmul.f32 %v1277, %v1479
    %v1487 = vmul.f32 %v1278, %v1479
    %v1488 = vmul.f32 %v1279, %v1479
    %v1489 = vmul.f32 %v1280, %v1479
    %v1490 = vmul.f32 %v1281, %v1479
    %v1491 = vmul.f32 %v1282, %v1479
    %v1492 = vmul.f32 %v1283, %v1479
    %v1493 = vmul.f32 %v1284, %v1479
    %v1494 = vmul.f32 %v1285, %v1479
    %v1495 = vmul.f32 %v1286, %v1479
    %v1496 = vmul.f32 %v1287, %v1479
    %v1497 = vmul.f32 %v1288, %v1479
    %v1498 = vmul.f32 %v1289, %v1479
    %v1499 = vmul.f32 %v1290, %v1479
    %v1500 = vmul.f32 %v1291, %v1479
    %v1501 = vmul.f32 %v1292, %v1479
    %v1502 = vmul.f32 %v1293, %v1479
    %v1503 = vmul.f32 %v1294, %v1479
    %v1504 = vmul.f32 %v1295, %v1479
    %v1505 = vmul.f32 %v1296, %v1479
    %v1506 = vmul.f32 %v1297, %v1479
    %v1507 = vmul.f32 %v1298, %v1479
    %v1508 = vmul.f32 %v1299, %v1479
    %v1509 = vmul.f32 %v1300, %v1479
    %v1510 = vmul.f32 %v1301, %v1479
    %v1511 = vmul.f32 %v1302, %v1479
    %v1512 = vmul.f32 %v1303, %v1479
    %v1513 = vmul.f32 %v1304, %v1479
    %v1514 = vmul.f32 %v1305, %v1479
    %v1515 = vmul.f32 %v1306, %v1479
    %v1516 = vmul.f32 %v1307, %v1479
    %v1517 = vmul.f32 %v1308, %v1479
    %v1518 = vmul.f32 %v1309, %v1479
    %v1519 = vmul.f32 %v1310, %v1479
    %v1520 = vmul.f32 %v1311, %v1479
    %v1521 = vmul.f32 %v1312, %v1479
    %v1522 = vmul.f32 %v1313, %v1479
    %v1523 = vmul.f32 %v1314, %v1479
    %v1524 = vmul.f32 %v1315, %v1479
    %v1525 = vmul.f32 %v1316, %v1479
    %v1526 = vmul.f32 %v1317, %v1479
    %v1527 = vmul.f32 %v1318, %v1479
    %v1528 = vmul.f32 %v1319, %v1479
    %v1529 = vmul.f32 %v1320, %v1479
    %v1530 = vmul.f32 %v1321, %v1479
    %v1531 = vmul.f32 %v1322, %v1479
    %v1532 = vmul.f32 %v1323, %v1479
    %v1533 = vmul.f32 %v1324, %v1479
    %v1534 = vmul.f32 %v1325, %v1479
    %v1535 = vmul.f32 %v1326, %v1479
    %v1536 = vmul.f32 %v1327, %v1479
    %v1537 = vmul.f32 %v1328, %v1479
    %v1538 = vmul.f32 %v1329, %v1479
    %v1539 = vmul.f32 %v1330, %v1479
    %v1540 = vmul.f32 %v1331, %v1479
    %v1541 = vmul.f32 %v1332, %v1479
    %v1542 = vmul.f32 %v1333, %v1479
    %v1543 = vmul.f32 %v1334, %v1479
    %v1544 = vld [vmem:[%s2] sm:$0x1]
    %v1546 = vperm.slane %v1544, 0
    %v1548 = vmul.f32 %v1480, %v1546
    %v1549 = vmul.f32 %v1481, %v1546
    %v1550 = vmul.f32 %v1482, %v1546
    %v1551 = vmul.f32 %v1483, %v1546
    %v1552 = vmul.f32 %v1484, %v1546
    %v1553 = vmul.f32 %v1485, %v1546
    %v1554 = vmul.f32 %v1486, %v1546
    %v1555 = vmul.f32 %v1487, %v1546
    %v1556 = vmul.f32 %v1488, %v1546
    %v1557 = vmul.f32 %v1489, %v1546
    %v1558 = vmul.f32 %v1490, %v1546
    %v1559 = vmul.f32 %v1491, %v1546
    %v1560 = vmul.f32 %v1492, %v1546
    %v1561 = vmul.f32 %v1493, %v1546
    %v1562 = vmul.f32 %v1494, %v1546
    %v1563 = vmul.f32 %v1495, %v1546
    %v1564 = vmul.f32 %v1496, %v1546
    %v1565 = vmul.f32 %v1497, %v1546
    %v1566 = vmul.f32 %v1498, %v1546
    %v1567 = vmul.f32 %v1499, %v1546
    %v1568 = vmul.f32 %v1500, %v1546
    %v1569 = vmul.f32 %v1501, %v1546
    %v1570 = vmul.f32 %v1502, %v1546
    %v1571 = vmul.f32 %v1503, %v1546
    %v1572 = vmul.f32 %v1504, %v1546
    %v1573 = vmul.f32 %v1505, %v1546
    %v1574 = vmul.f32 %v1506, %v1546
    %v1575 = vmul.f32 %v1507, %v1546
    %v1576 = vmul.f32 %v1508, %v1546
    %v1577 = vmul.f32 %v1509, %v1546
    %v1578 = vmul.f32 %v1510, %v1546
    %v1579 = vmul.f32 %v1511, %v1546
    %v1580 = vmul.f32 %v1512, %v1546
    %v1581 = vmul.f32 %v1513, %v1546
    %v1582 = vmul.f32 %v1514, %v1546
    %v1583 = vmul.f32 %v1515, %v1546
    %v1584 = vmul.f32 %v1516, %v1546
    %v1585 = vmul.f32 %v1517, %v1546
    %v1586 = vmul.f32 %v1518, %v1546
    %v1587 = vmul.f32 %v1519, %v1546
    %v1588 = vmul.f32 %v1520, %v1546
    %v1589 = vmul.f32 %v1521, %v1546
    %v1590 = vmul.f32 %v1522, %v1546
    %v1591 = vmul.f32 %v1523, %v1546
    %v1592 = vmul.f32 %v1524, %v1546
    %v1593 = vmul.f32 %v1525, %v1546
    %v1594 = vmul.f32 %v1526, %v1546
    %v1595 = vmul.f32 %v1527, %v1546
    %v1596 = vmul.f32 %v1528, %v1546
    %v1597 = vmul.f32 %v1529, %v1546
    %v1598 = vmul.f32 %v1530, %v1546
    %v1599 = vmul.f32 %v1531, %v1546
    %v1600 = vmul.f32 %v1532, %v1546
    %v1601 = vmul.f32 %v1533, %v1546
    %v1602 = vmul.f32 %v1534, %v1546
    %v1603 = vmul.f32 %v1535, %v1546
    %v1604 = vmul.f32 %v1536, %v1546
    %v1605 = vmul.f32 %v1537, %v1546
    %v1606 = vmul.f32 %v1538, %v1546
    %v1607 = vmul.f32 %v1539, %v1546
    %v1608 = vmul.f32 %v1540, %v1546
    %v1609 = vmul.f32 %v1541, %v1546
    %v1610 = vmul.f32 %v1542, %v1546
    %v1611 = vmul.f32 %v1543, %v1546
    %v1612 = vld [vmem:[%s3] sm:$0x1]
    %v1614 = vperm.slane %v1612, 0
    %v1616 = vadd.f32 %v1548, %v1614
    %v1617 = vadd.f32 %v1549, %v1614
    %v1618 = vadd.f32 %v1550, %v1614
    %v1619 = vadd.f32 %v1551, %v1614
    %v1620 = vadd.f32 %v1552, %v1614
    %v1621 = vadd.f32 %v1553, %v1614
    %v1622 = vadd.f32 %v1554, %v1614
    %v1623 = vadd.f32 %v1555, %v1614
    %v1624 = vadd.f32 %v1556, %v1614
    %v1625 = vadd.f32 %v1557, %v1614
    %v1626 = vadd.f32 %v1558, %v1614
    %v1627 = vadd.f32 %v1559, %v1614
    %v1628 = vadd.f32 %v1560, %v1614
    %v1629 = vadd.f32 %v1561, %v1614
    %v1630 = vadd.f32 %v1562, %v1614
    %v1631 = vadd.f32 %v1563, %v1614
    %v1632 = vadd.f32 %v1564, %v1614
    %v1633 = vadd.f32 %v1565, %v1614
    %v1634 = vadd.f32 %v1566, %v1614
    %v1635 = vadd.f32 %v1567, %v1614
    %v1636 = vadd.f32 %v1568, %v1614
    %v1637 = vadd.f32 %v1569, %v1614
    %v1638 = vadd.f32 %v1570, %v1614
    %v1639 = vadd.f32 %v1571, %v1614
    %v1640 = vadd.f32 %v1572, %v1614
    %v1641 = vadd.f32 %v1573, %v1614
    %v1642 = vadd.f32 %v1574, %v1614
    %v1643 = vadd.f32 %v1575, %v1614
    %v1644 = vadd.f32 %v1576, %v1614
    %v1645 = vadd.f32 %v1577, %v1614
    %v1646 = vadd.f32 %v1578, %v1614
    %v1647 = vadd.f32 %v1579, %v1614
    %v1648 = vadd.f32 %v1580, %v1614
    %v1649 = vadd.f32 %v1581, %v1614
    %v1650 = vadd.f32 %v1582, %v1614
    %v1651 = vadd.f32 %v1583, %v1614
    %v1652 = vadd.f32 %v1584, %v1614
    %v1653 = vadd.f32 %v1585, %v1614
    %v1654 = vadd.f32 %v1586, %v1614
    %v1655 = vadd.f32 %v1587, %v1614
    %v1656 = vadd.f32 %v1588, %v1614
    %v1657 = vadd.f32 %v1589, %v1614
    %v1658 = vadd.f32 %v1590, %v1614
    %v1659 = vadd.f32 %v1591, %v1614
    %v1660 = vadd.f32 %v1592, %v1614
    %v1661 = vadd.f32 %v1593, %v1614
    %v1662 = vadd.f32 %v1594, %v1614
    %v1663 = vadd.f32 %v1595, %v1614
    %v1664 = vadd.f32 %v1596, %v1614
    %v1665 = vadd.f32 %v1597, %v1614
    %v1666 = vadd.f32 %v1598, %v1614
    %v1667 = vadd.f32 %v1599, %v1614
    %v1668 = vadd.f32 %v1600, %v1614
    %v1669 = vadd.f32 %v1601, %v1614
    %v1670 = vadd.f32 %v1602, %v1614
    %v1671 = vadd.f32 %v1603, %v1614
    %v1672 = vadd.f32 %v1604, %v1614
    %v1673 = vadd.f32 %v1605, %v1614
    %v1674 = vadd.f32 %v1606, %v1614
    %v1675 = vadd.f32 %v1607, %v1614
    %v1676 = vadd.f32 %v1608, %v1614
    %v1677 = vadd.f32 %v1609, %v1614
    %v1678 = vadd.f32 %v1610, %v1614
    %v1679 = vadd.f32 %v1611, %v1614
    %vm1680 = vcmp.gt.f32.partialorder %v1616, 0.0
    %vm1681 = vcmp.gt.f32.partialorder %v1617, 0.0
    %vm1682 = vcmp.gt.f32.partialorder %v1618, 0.0
    %vm1683 = vcmp.gt.f32.partialorder %v1619, 0.0
    %vm1684 = vcmp.gt.f32.partialorder %v1620, 0.0
    %vm1685 = vcmp.gt.f32.partialorder %v1621, 0.0
    %vm1686 = vcmp.gt.f32.partialorder %v1622, 0.0
    %vm1687 = vcmp.gt.f32.partialorder %v1623, 0.0
    %vm1688 = vcmp.gt.f32.partialorder %v1624, 0.0
    %vm1689 = vcmp.gt.f32.partialorder %v1625, 0.0
    %vm1690 = vcmp.gt.f32.partialorder %v1626, 0.0
    %vm1691 = vcmp.gt.f32.partialorder %v1627, 0.0
    %vm1692 = vcmp.gt.f32.partialorder %v1628, 0.0
    %vm1693 = vcmp.gt.f32.partialorder %v1629, 0.0
    %vm1694 = vcmp.gt.f32.partialorder %v1630, 0.0
    %vm1695 = vcmp.gt.f32.partialorder %v1631, 0.0
    %vm1696 = vcmp.gt.f32.partialorder %v1632, 0.0
    %vm1697 = vcmp.gt.f32.partialorder %v1633, 0.0
    %vm1698 = vcmp.gt.f32.partialorder %v1634, 0.0
    %vm1699 = vcmp.gt.f32.partialorder %v1635, 0.0
    %vm1700 = vcmp.gt.f32.partialorder %v1636, 0.0
    %vm1701 = vcmp.gt.f32.partialorder %v1637, 0.0
    %vm1702 = vcmp.gt.f32.partialorder %v1638, 0.0
    %vm1703 = vcmp.gt.f32.partialorder %v1639, 0.0
    %vm1704 = vcmp.gt.f32.partialorder %v1640, 0.0
    %vm1705 = vcmp.gt.f32.partialorder %v1641, 0.0
    %vm1706 = vcmp.gt.f32.partialorder %v1642, 0.0
    %vm1707 = vcmp.gt.f32.partialorder %v1643, 0.0
    %vm1708 = vcmp.gt.f32.partialorder %v1644, 0.0
    %vm1709 = vcmp.gt.f32.partialorder %v1645, 0.0
    %vm1710 = vcmp.gt.f32.partialorder %v1646, 0.0
    %vm1711 = vcmp.gt.f32.partialorder %v1647, 0.0
    %vm1712 = vcmp.gt.f32.partialorder %v1648, 0.0
    %vm1713 = vcmp.gt.f32.partialorder %v1649, 0.0
    %vm1714 = vcmp.gt.f32.partialorder %v1650, 0.0
    %vm1715 = vcmp.gt.f32.partialorder %v1651, 0.0
    %vm1716 = vcmp.gt.f32.partialorder %v1652, 0.0
    %vm1717 = vcmp.gt.f32.partialorder %v1653, 0.0
    %vm1718 = vcmp.gt.f32.partialorder %v1654, 0.0
    %vm1719 = vcmp.gt.f32.partialorder %v1655, 0.0
    %vm1720 = vcmp.gt.f32.partialorder %v1656, 0.0
    %vm1721 = vcmp.gt.f32.partialorder %v1657, 0.0
    %vm1722 = vcmp.gt.f32.partialorder %v1658, 0.0
    %vm1723 = vcmp.gt.f32.partialorder %v1659, 0.0
    %vm1724 = vcmp.gt.f32.partialorder %v1660, 0.0
    %vm1725 = vcmp.gt.f32.partialorder %v1661, 0.0
    %vm1726 = vcmp.gt.f32.partialorder %v1662, 0.0
    %vm1727 = vcmp.gt.f32.partialorder %v1663, 0.0
    %vm1728 = vcmp.gt.f32.partialorder %v1664, 0.0
    %vm1729 = vcmp.gt.f32.partialorder %v1665, 0.0
    %vm1730 = vcmp.gt.f32.partialorder %v1666, 0.0
    %vm1731 = vcmp.gt.f32.partialorder %v1667, 0.0
    %vm1732 = vcmp.gt.f32.partialorder %v1668, 0.0
    %vm1733 = vcmp.gt.f32.partialorder %v1669, 0.0
    %vm1734 = vcmp.gt.f32.partialorder %v1670, 0.0
    %vm1735 = vcmp.gt.f32.partialorder %v1671, 0.0
    %vm1736 = vcmp.gt.f32.partialorder %v1672, 0.0
    %vm1737 = vcmp.gt.f32.partialorder %v1673, 0.0
    %vm1738 = vcmp.gt.f32.partialorder %v1674, 0.0
    %vm1739 = vcmp.gt.f32.partialorder %v1675, 0.0
    %vm1740 = vcmp.gt.f32.partialorder %v1676, 0.0
    %vm1741 = vcmp.gt.f32.partialorder %v1677, 0.0
    %vm1742 = vcmp.gt.f32.partialorder %v1678, 0.0
    %vm1743 = vcmp.gt.f32.partialorder %v1679, 0.0
    %v1744 = vmul.f32 %v1616, 0.2
    %v1745 = vmul.f32 %v1617, 0.2
    %v1746 = vmul.f32 %v1618, 0.2
    %v1747 = vmul.f32 %v1619, 0.2
    %v1748 = vmul.f32 %v1620, 0.2
    %v1749 = vmul.f32 %v1621, 0.2
    %v1750 = vmul.f32 %v1622, 0.2
    %v1751 = vmul.f32 %v1623, 0.2
    %v1752 = vmul.f32 %v1624, 0.2
    %v1753 = vmul.f32 %v1625, 0.2
    %v1754 = vmul.f32 %v1626, 0.2
    %v1755 = vmul.f32 %v1627, 0.2
    %v1756 = vmul.f32 %v1628, 0.2
    %v1757 = vmul.f32 %v1629, 0.2
    %v1758 = vmul.f32 %v1630, 0.2
    %v1759 = vmul.f32 %v1631, 0.2
    %v1760 = vmul.f32 %v1632, 0.2
    %v1761 = vmul.f32 %v1633, 0.2
    %v1762 = vmul.f32 %v1634, 0.2
    %v1763 = vmul.f32 %v1635, 0.2
    %v1764 = vmul.f32 %v1636, 0.2
    %v1765 = vmul.f32 %v1637, 0.2
    %v1766 = vmul.f32 %v1638, 0.2
    %v1767 = vmul.f32 %v1639, 0.2
    %v1768 = vmul.f32 %v1640, 0.2
    %v1769 = vmul.f32 %v1641, 0.2
    %v1770 = vmul.f32 %v1642, 0.2
    %v1771 = vmul.f32 %v1643, 0.2
    %v1772 = vmul.f32 %v1644, 0.2
    %v1773 = vmul.f32 %v1645, 0.2
    %v1774 = vmul.f32 %v1646, 0.2
    %v1775 = vmul.f32 %v1647, 0.2
    %v1776 = vmul.f32 %v1648, 0.2
    %v1777 = vmul.f32 %v1649, 0.2
    %v1778 = vmul.f32 %v1650, 0.2
    %v1779 = vmul.f32 %v1651, 0.2
    %v1780 = vmul.f32 %v1652, 0.2
    %v1781 = vmul.f32 %v1653, 0.2
    %v1782 = vmul.f32 %v1654, 0.2
    %v1783 = vmul.f32 %v1655, 0.2
    %v1784 = vmul.f32 %v1656, 0.2
    %v1785 = vmul.f32 %v1657, 0.2
    %v1786 = vmul.f32 %v1658, 0.2
    %v1787 = vmul.f32 %v1659, 0.2
    %v1788 = vmul.f32 %v1660, 0.2
    %v1789 = vmul.f32 %v1661, 0.2
    %v1790 = vmul.f32 %v1662, 0.2
    %v1791 = vmul.f32 %v1663, 0.2
    %v1792 = vmul.f32 %v1664, 0.2
    %v1793 = vmul.f32 %v1665, 0.2
    %v1794 = vmul.f32 %v1666, 0.2
    %v1795 = vmul.f32 %v1667, 0.2
    %v1796 = vmul.f32 %v1668, 0.2
    %v1797 = vmul.f32 %v1669, 0.2
    %v1798 = vmul.f32 %v1670, 0.2
    %v1799 = vmul.f32 %v1671, 0.2
    %v1800 = vmul.f32 %v1672, 0.2
    %v1801 = vmul.f32 %v1673, 0.2
    %v1802 = vmul.f32 %v1674, 0.2
    %v1803 = vmul.f32 %v1675, 0.2
    %v1804 = vmul.f32 %v1676, 0.2
    %v1805 = vmul.f32 %v1677, 0.2
    %v1806 = vmul.f32 %v1678, 0.2
    %v1807 = vmul.f32 %v1679, 0.2
    %v1808 = vsel %vm1680, %v1616, %v1744
    %v1809 = vsel %vm1681, %v1617, %v1745
    %v1810 = vsel %vm1682, %v1618, %v1746
    %v1811 = vsel %vm1683, %v1619, %v1747
    %v1812 = vsel %vm1684, %v1620, %v1748
    %v1813 = vsel %vm1685, %v1621, %v1749
    %v1814 = vsel %vm1686, %v1622, %v1750
    %v1815 = vsel %vm1687, %v1623, %v1751
    %v1816 = vsel %vm1688, %v1624, %v1752
    %v1817 = vsel %vm1689, %v1625, %v1753
    %v1818 = vsel %vm1690, %v1626, %v1754
    %v1819 = vsel %vm1691, %v1627, %v1755
    %v1820 = vsel %vm1692, %v1628, %v1756
    %v1821 = vsel %vm1693, %v1629, %v1757
    %v1822 = vsel %vm1694, %v1630, %v1758
    %v1823 = vsel %vm1695, %v1631, %v1759
    %v1824 = vsel %vm1696, %v1632, %v1760
    %v1825 = vsel %vm1697, %v1633, %v1761
    %v1826 = vsel %vm1698, %v1634, %v1762
    %v1827 = vsel %vm1699, %v1635, %v1763
    %v1828 = vsel %vm1700, %v1636, %v1764
    %v1829 = vsel %vm1701, %v1637, %v1765
    %v1830 = vsel %vm1702, %v1638, %v1766
    %v1831 = vsel %vm1703, %v1639, %v1767
    %v1832 = vsel %vm1704, %v1640, %v1768
    %v1833 = vsel %vm1705, %v1641, %v1769
    %v1834 = vsel %vm1706, %v1642, %v1770
    %v1835 = vsel %vm1707, %v1643, %v1771
    %v1836 = vsel %vm1708, %v1644, %v1772
    %v1837 = vsel %vm1709, %v1645, %v1773
    %v1838 = vsel %vm1710, %v1646, %v1774
    %v1839 = vsel %vm1711, %v1647, %v1775
    %v1840 = vsel %vm1712, %v1648, %v1776
    %v1841 = vsel %vm1713, %v1649, %v1777
    %v1842 = vsel %vm1714, %v1650, %v1778
    %v1843 = vsel %vm1715, %v1651, %v1779
    %v1844 = vsel %vm1716, %v1652, %v1780
    %v1845 = vsel %vm1717, %v1653, %v1781
    %v1846 = vsel %vm1718, %v1654, %v1782
    %v1847 = vsel %vm1719, %v1655, %v1783
    %v1848 = vsel %vm1720, %v1656, %v1784
    %v1849 = vsel %vm1721, %v1657, %v1785
    %v1850 = vsel %vm1722, %v1658, %v1786
    %v1851 = vsel %vm1723, %v1659, %v1787
    %v1852 = vsel %vm1724, %v1660, %v1788
    %v1853 = vsel %vm1725, %v1661, %v1789
    %v1854 = vsel %vm1726, %v1662, %v1790
    %v1855 = vsel %vm1727, %v1663, %v1791
    %v1856 = vsel %vm1728, %v1664, %v1792
    %v1857 = vsel %vm1729, %v1665, %v1793
    %v1858 = vsel %vm1730, %v1666, %v1794
    %v1859 = vsel %vm1731, %v1667, %v1795
    %v1860 = vsel %vm1732, %v1668, %v1796
    %v1861 = vsel %vm1733, %v1669, %v1797
    %v1862 = vsel %vm1734, %v1670, %v1798
    %v1863 = vsel %vm1735, %v1671, %v1799
    %v1864 = vsel %vm1736, %v1672, %v1800
    %v1865 = vsel %vm1737, %v1673, %v1801
    %v1866 = vsel %vm1738, %v1674, %v1802
    %v1867 = vsel %vm1739, %v1675, %v1803
    %v1868 = vsel %vm1740, %v1676, %v1804
    %v1869 = vsel %vm1741, %v1677, %v1805
    %v1870 = vsel %vm1742, %v1678, %v1806
    %v1871 = vsel %vm1743, %v1679, %v1807
    %v1872 = vpack.c.bf16 %v1808, %v1808
    %v1873 = vpack.c.bf16 %v1809, %v1809
    %v1874 = vpack.c.bf16 %v1810, %v1810
    %v1875 = vpack.c.bf16 %v1811, %v1811
    %v1876 = vpack.c.bf16 %v1812, %v1812
    %v1877 = vpack.c.bf16 %v1813, %v1813
    %v1878 = vpack.c.bf16 %v1814, %v1814
    %v1879 = vpack.c.bf16 %v1815, %v1815
    %v1880 = vpack.c.bf16 %v1816, %v1816
    %v1881 = vpack.c.bf16 %v1817, %v1817
    %v1882 = vpack.c.bf16 %v1818, %v1818
    %v1883 = vpack.c.bf16 %v1819, %v1819
    %v1884 = vpack.c.bf16 %v1820, %v1820
    %v1885 = vpack.c.bf16 %v1821, %v1821
    %v1886 = vpack.c.bf16 %v1822, %v1822
    %v1887 = vpack.c.bf16 %v1823, %v1823
    %v1888 = vpack.c.bf16 %v1824, %v1824
    %v1889 = vpack.c.bf16 %v1825, %v1825
    %v1890 = vpack.c.bf16 %v1826, %v1826
    %v1891 = vpack.c.bf16 %v1827, %v1827
    %v1892 = vpack.c.bf16 %v1828, %v1828
    %v1893 = vpack.c.bf16 %v1829, %v1829
    %v1894 = vpack.c.bf16 %v1830, %v1830
    %v1895 = vpack.c.bf16 %v1831, %v1831
    %v1896 = vpack.c.bf16 %v1832, %v1832
    %v1897 = vpack.c.bf16 %v1833, %v1833
    %v1898 = vpack.c.bf16 %v1834, %v1834
    %v1899 = vpack.c.bf16 %v1835, %v1835
    %v1900 = vpack.c.bf16 %v1836, %v1836
    %v1901 = vpack.c.bf16 %v1837, %v1837
    %v1902 = vpack.c.bf16 %v1838, %v1838
    %v1903 = vpack.c.bf16 %v1839, %v1839
    %v1904 = vpack.c.bf16 %v1840, %v1840
    %v1905 = vpack.c.bf16 %v1841, %v1841
    %v1906 = vpack.c.bf16 %v1842, %v1842
    %v1907 = vpack.c.bf16 %v1843, %v1843
    %v1908 = vpack.c.bf16 %v1844, %v1844
    %v1909 = vpack.c.bf16 %v1845, %v1845
    %v1910 = vpack.c.bf16 %v1846, %v1846
    %v1911 = vpack.c.bf16 %v1847, %v1847
    %v1912 = vpack.c.bf16 %v1848, %v1848
    %v1913 = vpack.c.bf16 %v1849, %v1849
    %v1914 = vpack.c.bf16 %v1850, %v1850
    %v1915 = vpack.c.bf16 %v1851, %v1851
    %v1916 = vpack.c.bf16 %v1852, %v1852
    %v1917 = vpack.c.bf16 %v1853, %v1853
    %v1918 = vpack.c.bf16 %v1854, %v1854
    %v1919 = vpack.c.bf16 %v1855, %v1855
    %v1920 = vpack.c.bf16 %v1856, %v1856
    %v1921 = vpack.c.bf16 %v1857, %v1857
    %v1922 = vpack.c.bf16 %v1858, %v1858
    %v1923 = vpack.c.bf16 %v1859, %v1859
    %v1924 = vpack.c.bf16 %v1860, %v1860
    %v1925 = vpack.c.bf16 %v1861, %v1861
    %v1926 = vpack.c.bf16 %v1862, %v1862
    %v1927 = vpack.c.bf16 %v1863, %v1863
    %v1928 = vpack.c.bf16 %v1864, %v1864
    %v1929 = vpack.c.bf16 %v1865, %v1865
    %v1930 = vpack.c.bf16 %v1866, %v1866
    %v1931 = vpack.c.bf16 %v1867, %v1867
    %v1932 = vpack.c.bf16 %v1868, %v1868
    %v1933 = vpack.c.bf16 %v1869, %v1869
    %v1934 = vpack.c.bf16 %v1870, %v1870
    %v1935 = vpack.c.bf16 %v1871, %v1871
    %1936 = vst [vmem:[%s4] sm:$0xf] %v1872
    %1937 = vst [vmem:[%s4 + $0x4] sm:$0xf] %v1873
    %1938 = vst [vmem:[%s4 + $0x8] sm:$0xf] %v1874
    %1939 = vst [vmem:[%s4 + $0xc] sm:$0xf] %v1875
    %1940 = vst [vmem:[%s4 + $0x10] sm:$0xf] %v1876
    %1941 = vst [vmem:[%s4 + $0x14] sm:$0xf] %v1877
    %1942 = vst [vmem:[%s4 + $0x18] sm:$0xf] %v1878
    %1943 = vst [vmem:[%s4 + $0x1c] sm:$0xf] %v1879
    %1944 = vst [vmem:[%s4 + $0x20] sm:$0xf] %v1880
    %1945 = vst [vmem:[%s4 + $0x24] sm:$0xf] %v1881
    %1946 = vst [vmem:[%s4 + $0x28] sm:$0xf] %v1882
    %1947 = vst [vmem:[%s4 + $0x2c] sm:$0xf] %v1883
    %1948 = vst [vmem:[%s4 + $0x30] sm:$0xf] %v1884
    %1949 = vst [vmem:[%s4 + $0x34] sm:$0xf] %v1885
    %1950 = vst [vmem:[%s4 + $0x38] sm:$0xf] %v1886
    %1951 = vst [vmem:[%s4 + $0x3c] sm:$0xf] %v1887
    %1952 = vst [vmem:[%s4 + $0x40] sm:$0xf] %v1888
    %1953 = vst [vmem:[%s4 + $0x44] sm:$0xf] %v1889
    %1954 = vst [vmem:[%s4 + $0x48] sm:$0xf] %v1890
    %1955 = vst [vmem:[%s4 + $0x4c] sm:$0xf] %v1891
    %1956 = vst [vmem:[%s4 + $0x50] sm:$0xf] %v1892
    %1957 = vst [vmem:[%s4 + $0x54] sm:$0xf] %v1893
    %1958 = vst [vmem:[%s4 + $0x58] sm:$0xf] %v1894
    %1959 = vst [vmem:[%s4 + $0x5c] sm:$0xf] %v1895
    %1960 = vst [vmem:[%s4 + $0x60] sm:$0xf] %v1896
    %1961 = vst [vmem:[%s4 + $0x64] sm:$0xf] %v1897
    %1962 = vst [vmem:[%s4 + $0x68] sm:$0xf] %v1898
    %1963 = vst [vmem:[%s4 + $0x6c] sm:$0xf] %v1899
    %1964 = vst [vmem:[%s4 + $0x70] sm:$0xf] %v1900
    %1965 = vst [vmem:[%s4 + $0x74] sm:$0xf] %v1901
    %1966 = vst [vmem:[%s4 + $0x78] sm:$0xf] %v1902
    %1967 = vst [vmem:[%s4 + $0x7c] sm:$0xf] %v1903
    %1968 = vst [vmem:[%s4 + $0x80] sm:$0xf] %v1904
    %1969 = vst [vmem:[%s4 + $0x84] sm:$0xf] %v1905
    %1970 = vst [vmem:[%s4 + $0x88] sm:$0xf] %v1906
    %1971 = vst [vmem:[%s4 + $0x8c] sm:$0xf] %v1907
    %1972 = vst [vmem:[%s4 + $0x90] sm:$0xf] %v1908
    %1973 = vst [vmem:[%s4 + $0x94] sm:$0xf] %v1909
    %1974 = vst [vmem:[%s4 + $0x98] sm:$0xf] %v1910
    %1975 = vst [vmem:[%s4 + $0x9c] sm:$0xf] %v1911
    %1976 = vst [vmem:[%s4 + $0xa0] sm:$0xf] %v1912
    %1977 = vst [vmem:[%s4 + $0xa4] sm:$0xf] %v1913
    %1978 = vst [vmem:[%s4 + $0xa8] sm:$0xf] %v1914
    %1979 = vst [vmem:[%s4 + $0xac] sm:$0xf] %v1915
    %1980 = vst [vmem:[%s4 + $0xb0] sm:$0xf] %v1916
    %1981 = vst [vmem:[%s4 + $0xb4] sm:$0xf] %v1917
    %1982 = vst [vmem:[%s4 + $0xb8] sm:$0xf] %v1918
    %1983 = vst [vmem:[%s4 + $0xbc] sm:$0xf] %v1919
    %1984 = vst [vmem:[%s4 + $0xc0] sm:$0xf] %v1920
    %1985 = vst [vmem:[%s4 + $0xc4] sm:$0xf] %v1921
    %1986 = vst [vmem:[%s4 + $0xc8] sm:$0xf] %v1922
    %1987 = vst [vmem:[%s4 + $0xcc] sm:$0xf] %v1923
    %1988 = vst [vmem:[%s4 + $0xd0] sm:$0xf] %v1924
    %1989 = vst [vmem:[%s4 + $0xd4] sm:$0xf] %v1925
    %1990 = vst [vmem:[%s4 + $0xd8] sm:$0xf] %v1926
    %1991 = vst [vmem:[%s4 + $0xdc] sm:$0xf] %v1927
    %1992 = vst [vmem:[%s4 + $0xe0] sm:$0xf] %v1928
    %1993 = vst [vmem:[%s4 + $0xe4] sm:$0xf] %v1929
    %1994 = vst [vmem:[%s4 + $0xe8] sm:$0xf] %v1930
    %1995 = vst [vmem:[%s4 + $0xec] sm:$0xf] %v1931
    %1996 = vst [vmem:[%s4 + $0xf0] sm:$0xf] %v1932
    %1997 = vst [vmem:[%s4 + $0xf4] sm:$0xf] %v1933
    %1998 = vst [vmem:[%s4 + $0xf8] sm:$0xf] %v1934
    %1999 = vst [vmem:[%s4 + $0xfc] sm:$0xf] %v1935
  $region25: #{discriminator_forward.6} parent=0 // pred_fallthru
    _
  // Predicated region
  $region26: #{discriminator_forward.6} parent=0 // pred_check
    _
  $region27: #{discriminator_forward.6} parent=0 // pred_check_branch
    %2001 = sbr.rel (0) target = $region29
  $region28: #{discriminator_forward.6} parent=0 // pred_region
    _
  $region29: #{discriminator_forward.6} parent=0 // pred_fallthru
    _
  // Predicated region
  $region30: #{discriminator_forward.6} parent=0 // pred_check
    _
  $region31: #{discriminator_forward.6} parent=0 // pred_check_branch
    %2003 = sbr.rel (0) target = $region33
  $region32: #{discriminator_forward.6} parent=0 // pred_region
    _
  $region33: #{discriminator_forward.6} parent=0 // pred_fallthru
    _

// kernel: discriminator_forward.7
$region0: #{discriminator_forward.7}
  #allocation0 [shape = 'u32[]', space=smem, size = 0x4, offset = 0x4, fixed_abs, tag = 'smem constant byte address 0x4 - core index']
  #allocation1 [shape = 'u32[72,128]{1,0:T(1,128)}', space=vmem, size = 0x9000, scoped, tag = 'internal scratch']
  #allocation2 [shape = 'f32[128,128]{1,0:T(8,128)}', space=vmem, size = 0x10000, scoped, tag = 'scratch operand']
  %s0 = inlined_call_operand.vmem [shape: bf16[128,512], index: 0, kind: input, shape index: {}]
  %s1 = inlined_call_operand.vmem [shape: bf16[512,128], index: 1, kind: input, shape index: {}]
  %s2 = inlined_call_operand.vmem [shape: f32[1,128], index: 2, kind: input, shape index: {}]
  %s3 = inlined_call_operand.vmem [shape: f32[1,128], index: 3, kind: input, shape index: {}]
  %s4 = inlined_call_operand.vmem [shape: bf16[128,128], index: 4, kind: output, shape index: {}]
  %s5 = sld [smem:[#allocation0]]
  $region34: #{discriminator_forward.7} parent=0
    _
  %s7 = ssub.s32 1, %s5
  %s8 = scalar_select 0, %s7, %s5
  // Predicated region
  $region2: #{discriminator_forward.7} parent=0 // pred_check
    _
  $region3: #{discriminator_forward.7} parent=0 // pred_check_branch
    %10 = sbr.rel (0) target = $region5
  $region4: #{discriminator_forward.7} parent=0 // pred_region
    _
  $region5: #{discriminator_forward.7} parent=0 // pred_fallthru
    _
  // Predicated region
  $region6: #{discriminator_forward.7} parent=0 // pred_check
    _
  $region7: #{discriminator_forward.7} parent=0 // pred_check_branch
    %12 = sbr.rel (0) target = $region9
  $region8: #{discriminator_forward.7} parent=0 // pred_region
    _
  $region9: #{discriminator_forward.7} parent=0 // pred_fallthru
    _
  // Predicated region
  $region10: #{discriminator_forward.7} parent=0 // pred_check
    _
  $region11: #{discriminator_forward.7} parent=0 // pred_check_branch
    %14 = sbr.rel (0) target = $region13
  $region12: #{discriminator_forward.7} parent=0 // pred_region
    _
  $region13: #{discriminator_forward.7} parent=0 // pred_fallthru
    _
  // Predicated region
  $region14: #{discriminator_forward.7} parent=0 // pred_check
    _
  $region15: #{discriminator_forward.7} parent=0 // pred_check_branch
    %16 = sbr.rel (0) target = $region17
  $region16: #{discriminator_forward.7} parent=0 // pred_region
    _
  $region17: #{discriminator_forward.7} parent=0 // pred_fallthru
    _
  %p17 = scmp.eq.s32.totalorder 0, 0
  // Predicated region
  $region18: #{discriminator_forward.7} parent=0 // pred_check
    %p18 = pneg %p17
  $region19: #{discriminator_forward.7} parent=0 // pred_check_branch
    %20 = sbr.rel (%p18) target = $region21
  $region20: #{discriminator_forward.7} parent=0 // pred_region
    %21 = vst [vmem:[#allocation2] sm:$0xff] 0.0
    %22 = vst [vmem:[#allocation2 + $0x8] sm:$0xff] 0.0
    %23 = vst [vmem:[#allocation2 + $0x10] sm:$0xff] 0.0
    %24 = vst [vmem:[#allocation2 + $0x18] sm:$0xff] 0.0
    %25 = vst [vmem:[#allocation2 + $0x20] sm:$0xff] 0.0
    %26 = vst [vmem:[#allocation2 + $0x28] sm:$0xff] 0.0
    %27 = vst [vmem:[#allocation2 + $0x30] sm:$0xff] 0.0
    %28 = vst [vmem:[#allocation2 + $0x38] sm:$0xff] 0.0
    %29 = vst [vmem:[#allocation2 + $0x40] sm:$0xff] 0.0
    %30 = vst [vmem:[#allocation2 + $0x48] sm:$0xff] 0.0
    %31 = vst [vmem:[#allocation2 + $0x50] sm:$0xff] 0.0
    %32 = vst [vmem:[#allocation2 + $0x58] sm:$0xff] 0.0
    %33 = vst [vmem:[#allocation2 + $0x60] sm:$0xff] 0.0
    %34 = vst [vmem:[#allocation2 + $0x68] sm:$0xff] 0.0
    %35 = vst [vmem:[#allocation2 + $0x70] sm:$0xff] 0.0
    %36 = vst [vmem:[#allocation2 + $0x78] sm:$0xff] 0.0
  $region21: #{discriminator_forward.7} parent=0 // pred_fallthru
    _
  %v37 = vld [vmem:[#allocation2] sm:$0xff]
  %v38 = vld [vmem:[#allocation2 + $0x8] sm:$0xff]
  %v39 = vld [vmem:[#allocation2 + $0x10] sm:$0xff]
  %v40 = vld [vmem:[#allocation2 + $0x18] sm:$0xff]
  %v41 = vld [vmem:[#allocation2 + $0x20] sm:$0xff]
  %v42 = vld [vmem:[#allocation2 + $0x28] sm:$0xff]
  %v43 = vld [vmem:[#allocation2 + $0x30] sm:$0xff]
  %v44 = vld [vmem:[#allocation2 + $0x38] sm:$0xff]
  %v45 = vld [vmem:[#allocation2 + $0x40] sm:$0xff]
  %v46 = vld [vmem:[#allocation2 + $0x48] sm:$0xff]
  %v47 = vld [vmem:[#allocation2 + $0x50] sm:$0xff]
  %v48 = vld [vmem:[#allocation2 + $0x58] sm:$0xff]
  %v49 = vld [vmem:[#allocation2 + $0x60] sm:$0xff]
  %v50 = vld [vmem:[#allocation2 + $0x68] sm:$0xff]
  %v51 = vld [vmem:[#allocation2 + $0x70] sm:$0xff]
  %v52 = vld [vmem:[#allocation2 + $0x78] sm:$0xff]
  %v53 = vld [vmem:[%s0] sm:$0xff]
  %v54 = vld [vmem:[%s0 + $0x8] sm:$0xff]
  %v55 = vld [vmem:[%s0 + $0x10] sm:$0xff]
  %v56 = vld [vmem:[%s0 + $0x18] sm:$0xff]
  %v57 = vld [vmem:[%s0 + $0x20] sm:$0xff]
  %v58 = vld [vmem:[%s0 + $0x28] sm:$0xff]
  %v59 = vld [vmem:[%s0 + $0x30] sm:$0xff]
  %v60 = vld [vmem:[%s0 + $0x38] sm:$0xff]
  %v61 = vld [vmem:[%s0 + $0x40] sm:$0xff]
  %v62 = vld [vmem:[%s0 + $0x48] sm:$0xff]
  %v63 = vld [vmem:[%s0 + $0x50] sm:$0xff]
  %v64 = vld [vmem:[%s0 + $0x58] sm:$0xff]
  %v65 = vld [vmem:[%s0 + $0x60] sm:$0xff]
  %v66 = vld [vmem:[%s0 + $0x68] sm:$0xff]
  %v67 = vld [vmem:[%s0 + $0x70] sm:$0xff]
  %v68 = vld [vmem:[%s0 + $0x78] sm:$0xff]
  %v69 = vld [vmem:[%s0 + $0x80] sm:$0xff]
  %v70 = vld [vmem:[%s0 + $0x88] sm:$0xff]
  %v71 = vld [vmem:[%s0 + $0x90] sm:$0xff]
  %v72 = vld [vmem:[%s0 + $0x98] sm:$0xff]
  %v73 = vld [vmem:[%s0 + $0xa0] sm:$0xff]
  %v74 = vld [vmem:[%s0 + $0xa8] sm:$0xff]
  %v75 = vld [vmem:[%s0 + $0xb0] sm:$0xff]
  %v76 = vld [vmem:[%s0 + $0xb8] sm:$0xff]
  %v77 = vld [vmem:[%s0 + $0xc0] sm:$0xff]
  %v78 = vld [vmem:[%s0 + $0xc8] sm:$0xff]
  %v79 = vld [vmem:[%s0 + $0xd0] sm:$0xff]
  %v80 = vld [vmem:[%s0 + $0xd8] sm:$0xff]
  %v81 = vld [vmem:[%s0 + $0xe0] sm:$0xff]
  %v82 = vld [vmem:[%s0 + $0xe8] sm:$0xff]
  %v83 = vld [vmem:[%s0 + $0xf0] sm:$0xff]
  %v84 = vld [vmem:[%s0 + $0xf8] sm:$0xff]
  %v85 = vld [vmem:[%s1] sm:$0xf]
  %v86 = vld [vmem:[%s1 + $0x4] sm:$0xf]
  %v87 = vld [vmem:[%s1 + $0x8] sm:$0xf]
  %v88 = vld [vmem:[%s1 + $0xc] sm:$0xf]
  %v89 = vld [vmem:[%s1 + $0x10] sm:$0xf]
  %v90 = vld [vmem:[%s1 + $0x14] sm:$0xf]
  %v91 = vld [vmem:[%s1 + $0x18] sm:$0xf]
  %v92 = vld [vmem:[%s1 + $0x1c] sm:$0xf]
  %v93 = vld [vmem:[%s1 + $0x20] sm:$0xf]
  %v94 = vld [vmem:[%s1 + $0x24] sm:$0xf]
  %v95 = vld [vmem:[%s1 + $0x28] sm:$0xf]
  %v96 = vld [vmem:[%s1 + $0x2c] sm:$0xf]
  %v97 = vld [vmem:[%s1 + $0x30] sm:$0xf]
  %v98 = vld [vmem:[%s1 + $0x34] sm:$0xf]
  %v99 = vld [vmem:[%s1 + $0x38] sm:$0xf]
  %v100 = vld [vmem:[%s1 + $0x3c] sm:$0xf]
  %v101 = vld [vmem:[%s1 + $0x40] sm:$0xf]
  %v102 = vld [vmem:[%s1 + $0x44] sm:$0xf]
  %v103 = vld [vmem:[%s1 + $0x48] sm:$0xf]
  %v104 = vld [vmem:[%s1 + $0x4c] sm:$0xf]
  %v105 = vld [vmem:[%s1 + $0x50] sm:$0xf]
  %v106 = vld [vmem:[%s1 + $0x54] sm:$0xf]
  %v107 = vld [vmem:[%s1 + $0x58] sm:$0xf]
  %v108 = vld [vmem:[%s1 + $0x5c] sm:$0xf]
  %v109 = vld [vmem:[%s1 + $0x60] sm:$0xf]
  %v110 = vld [vmem:[%s1 + $0x64] sm:$0xf]
  %v111 = vld [vmem:[%s1 + $0x68] sm:$0xf]
  %v112 = vld [vmem:[%s1 + $0x6c] sm:$0xf]
  %v113 = vld [vmem:[%s1 + $0x70] sm:$0xf]
  %v114 = vld [vmem:[%s1 + $0x74] sm:$0xf]
  %v115 = vld [vmem:[%s1 + $0x78] sm:$0xf]
  %v116 = vld [vmem:[%s1 + $0x7c] sm:$0xf]
  %v117 = vld [vmem:[%s1 + $0x80] sm:$0xf]
  %v118 = vld [vmem:[%s1 + $0x84] sm:$0xf]
  %v119 = vld [vmem:[%s1 + $0x88] sm:$0xf]
  %v120 = vld [vmem:[%s1 + $0x8c] sm:$0xf]
  %v121 = vld [vmem:[%s1 + $0x90] sm:$0xf]
  %v122 = vld [vmem:[%s1 + $0x94] sm:$0xf]
  %v123 = vld [vmem:[%s1 + $0x98] sm:$0xf]
  %v124 = vld [vmem:[%s1 + $0x9c] sm:$0xf]
  %v125 = vld [vmem:[%s1 + $0xa0] sm:$0xf]
  %v126 = vld [vmem:[%s1 + $0xa4] sm:$0xf]
  %v127 = vld [vmem:[%s1 + $0xa8] sm:$0xf]
  %v128 = vld [vmem:[%s1 + $0xac] sm:$0xf]
  %v129 = vld [vmem:[%s1 + $0xb0] sm:$0xf]
  %v130 = vld [vmem:[%s1 + $0xb4] sm:$0xf]
  %v131 = vld [vmem:[%s1 + $0xb8] sm:$0xf]
  %v132 = vld [vmem:[%s1 + $0xbc] sm:$0xf]
  %v133 = vld [vmem:[%s1 + $0xc0] sm:$0xf]
  %v134 = vld [vmem:[%s1 + $0xc4] sm:$0xf]
  %v135 = vld [vmem:[%s1 + $0xc8] sm:$0xf]
  %v136 = vld [vmem:[%s1 + $0xcc] sm:$0xf]
  %v137 = vld [vmem:[%s1 + $0xd0] sm:$0xf]
  %v138 = vld [vmem:[%s1 + $0xd4] sm:$0xf]
  %v139 = vld [vmem:[%s1 + $0xd8] sm:$0xf]
  %v140 = vld [vmem:[%s1 + $0xdc] sm:$0xf]
  %v141 = vld [vmem:[%s1 + $0xe0] sm:$0xf]
  %v142 = vld [vmem:[%s1 + $0xe4] sm:$0xf]
  %v143 = vld [vmem:[%s1 + $0xe8] sm:$0xf]
  %v144 = vld [vmem:[%s1 + $0xec] sm:$0xf]
  %v145 = vld [vmem:[%s1 + $0xf0] sm:$0xf]
  %v146 = vld [vmem:[%s1 + $0xf4] sm:$0xf]
  %v147 = vld [vmem:[%s1 + $0xf8] sm:$0xf]
  %v148 = vld [vmem:[%s1 + $0xfc] sm:$0xf]
  %v181 = vunpack.c.l.b16 %v53
  %v182 = vunpack.c.h.b16 %v53
  %v183 = vunpack.c.l.b16 %v54
  %v184 = vunpack.c.h.b16 %v54
  %v185 = vunpack.c.l.b16 %v55
  %v186 = vunpack.c.h.b16 %v55
  %v187 = vunpack.c.l.b16 %v56
  %v188 = vunpack.c.h.b16 %v56
  %v189 = vunpack.c.l.b16 %v57
  %v190 = vunpack.c.h.b16 %v57
  %v191 = vunpack.c.l.b16 %v58
  %v192 = vunpack.c.h.b16 %v58
  %v193 = vunpack.c.l.b16 %v59
  %v194 = vunpack.c.h.b16 %v59
  %v195 = vunpack.c.l.b16 %v60
  %v196 = vunpack.c.h.b16 %v60
  %v197 = vunpack.c.l.b16 %v61
  %v198 = vunpack.c.h.b16 %v61
  %v199 = vunpack.c.l.b16 %v62
  %v200 = vunpack.c.h.b16 %v62
  %v201 = vunpack.c.l.b16 %v63
  %v202 = vunpack.c.h.b16 %v63
  %v203 = vunpack.c.l.b16 %v64
  %v204 = vunpack.c.h.b16 %v64
  %v205 = vunpack.c.l.b16 %v65
  %v206 = vunpack.c.h.b16 %v65
  %v207 = vunpack.c.l.b16 %v66
  %v208 = vunpack.c.h.b16 %v66
  %v209 = vunpack.c.l.b16 %v67
  %v210 = vunpack.c.h.b16 %v67
  %v211 = vunpack.c.l.b16 %v68
  %v212 = vunpack.c.h.b16 %v68
  %v213 = vunpack.c.l.b16 %v69
  %v214 = vunpack.c.h.b16 %v69
  %v215 = vunpack.c.l.b16 %v70
  %v216 = vunpack.c.h.b16 %v70
  %v217 = vunpack.c.l.b16 %v71
  %v218 = vunpack.c.h.b16 %v71
  %v219 = vunpack.c.l.b16 %v72
  %v220 = vunpack.c.h.b16 %v72
  %v221 = vunpack.c.l.b16 %v73
  %v222 = vunpack.c.h.b16 %v73
  %v223 = vunpack.c.l.b16 %v74
  %v224 = vunpack.c.h.b16 %v74
  %v225 = vunpack.c.l.b16 %v75
  %v226 = vunpack.c.h.b16 %v75
  %v227 = vunpack.c.l.b16 %v76
  %v228 = vunpack.c.h.b16 %v76
  %v229 = vunpack.c.l.b16 %v77
  %v230 = vunpack.c.h.b16 %v77
  %v231 = vunpack.c.l.b16 %v78
  %v232 = vunpack.c.h.b16 %v78
  %v233 = vunpack.c.l.b16 %v79
  %v234 = vunpack.c.h.b16 %v79
  %v235 = vunpack.c.l.b16 %v80
  %v236 = vunpack.c.h.b16 %v80
  %v237 = vunpack.c.l.b16 %v81
  %v238 = vunpack.c.h.b16 %v81
  %v239 = vunpack.c.l.b16 %v82
  %v240 = vunpack.c.h.b16 %v82
  %v241 = vunpack.c.l.b16 %v83
  %v242 = vunpack.c.h.b16 %v83
  %v243 = vunpack.c.l.b16 %v84
  %v244 = vunpack.c.h.b16 %v84
  %v245 = vpack.c.b16 %v185, %v181
  %v246 = vpack.c.b16 %v186, %v182
  %v247 = vpack.c.b16 %v187, %v183
  %v248 = vpack.c.b16 %v188, %v184
  %v249 = vpack.c.b16 %v193, %v189
  %v250 = vpack.c.b16 %v194, %v190
  %v251 = vpack.c.b16 %v195, %v191
  %v252 = vpack.c.b16 %v196, %v192
  %v253 = vpack.c.b16 %v201, %v197
  %v254 = vpack.c.b16 %v202, %v198
  %v255 = vpack.c.b16 %v203, %v199
  %v256 = vpack.c.b16 %v204, %v200
  %v257 = vpack.c.b16 %v209, %v205
  %v258 = vpack.c.b16 %v210, %v206
  %v259 = vpack.c.b16 %v211, %v207
  %v260 = vpack.c.b16 %v212, %v208
  %v261 = vpack.c.b16 %v217, %v213
  %v262 = vpack.c.b16 %v218, %v214
  %v263 = vpack.c.b16 %v219, %v215
  %v264 = vpack.c.b16 %v220, %v216
  %v265 = vpack.c.b16 %v225, %v221
  %v266 = vpack.c.b16 %v226, %v222
  %v267 = vpack.c.b16 %v227, %v223
  %v268 = vpack.c.b16 %v228, %v224
  %v269 = vpack.c.b16 %v233, %v229
  %v270 = vpack.c.b16 %v234, %v230
  %v271 = vpack.c.b16 %v235, %v231
  %v272 = vpack.c.b16 %v236, %v232
  %v273 = vpack.c.b16 %v241, %v237
  %v274 = vpack.c.b16 %v242, %v238
  %v275 = vpack.c.b16 %v243, %v239
  %v276 = vpack.c.b16 %v244, %v240
  %v373 = vunpack.c.l.b16 %v85
  %v374 = vunpack.c.l.b16 %v86
  %v375 = vunpack.c.l.b16 %v87
  %v376 = vunpack.c.l.b16 %v88
  %v377 = vunpack.c.l.b16 %v89
  %v378 = vunpack.c.l.b16 %v90
  %v379 = vunpack.c.l.b16 %v91
  %v380 = vunpack.c.l.b16 %v92
  %v381 = vunpack.c.l.b16 %v93
  %v382 = vunpack.c.l.b16 %v94
  %v383 = vunpack.c.l.b16 %v95
  %v384 = vunpack.c.l.b16 %v96
  %v385 = vunpack.c.l.b16 %v97
  %v386 = vunpack.c.l.b16 %v98
  %v387 = vunpack.c.l.b16 %v99
  %v388 = vunpack.c.l.b16 %v100
  %v389 = vunpack.c.l.b16 %v101
  %v390 = vunpack.c.l.b16 %v102
  %v391 = vunpack.c.l.b16 %v103
  %v392 = vunpack.c.l.b16 %v104
  %v393 = vunpack.c.l.b16 %v105
  %v394 = vunpack.c.l.b16 %v106
  %v395 = vunpack.c.l.b16 %v107
  %v396 = vunpack.c.l.b16 %v108
  %v397 = vunpack.c.l.b16 %v109
  %v398 = vunpack.c.l.b16 %v110
  %v399 = vunpack.c.l.b16 %v111
  %v400 = vunpack.c.l.b16 %v112
  %v401 = vunpack.c.l.b16 %v113
  %v402 = vunpack.c.l.b16 %v114
  %v403 = vunpack.c.l.b16 %v115
  %v404 = vunpack.c.l.b16 %v116
  %v405 = vunpack.c.l.b16 %v117
  %v406 = vunpack.c.l.b16 %v118
  %v407 = vunpack.c.l.b16 %v119
  %v408 = vunpack.c.l.b16 %v120
  %v409 = vunpack.c.l.b16 %v121
  %v410 = vunpack.c.l.b16 %v122
  %v411 = vunpack.c.l.b16 %v123
  %v412 = vunpack.c.l.b16 %v124
  %v413 = vunpack.c.l.b16 %v125
  %v414 = vunpack.c.l.b16 %v126
  %v415 = vunpack.c.l.b16 %v127
  %v416 = vunpack.c.l.b16 %v128
  %v417 = vunpack.c.l.b16 %v129
  %v418 = vunpack.c.l.b16 %v130
  %v419 = vunpack.c.l.b16 %v131
  %v420 = vunpack.c.l.b16 %v132
  %v421 = vunpack.c.l.b16 %v133
  %v422 = vunpack.c.l.b16 %v134
  %v423 = vunpack.c.l.b16 %v135
  %v424 = vunpack.c.l.b16 %v136
  %v425 = vunpack.c.l.b16 %v137
  %v426 = vunpack.c.l.b16 %v138
  %v427 = vunpack.c.l.b16 %v139
  %v428 = vunpack.c.l.b16 %v140
  %v429 = vunpack.c.l.b16 %v141
  %v430 = vunpack.c.l.b16 %v142
  %v431 = vunpack.c.l.b16 %v143
  %v432 = vunpack.c.l.b16 %v144
  %v433 = vunpack.c.l.b16 %v145
  %v434 = vunpack.c.l.b16 %v146
  %v435 = vunpack.c.l.b16 %v147
  %v436 = vunpack.c.l.b16 %v148
  %v437 = vpack.c.b16 %v374, %v373
  %v438 = vpack.c.b16 %v376, %v375
  %v439 = vpack.c.b16 %v378, %v377
  %v440 = vpack.c.b16 %v380, %v379
  %v441 = vpack.c.b16 %v382, %v381
  %v442 = vpack.c.b16 %v384, %v383
  %v443 = vpack.c.b16 %v386, %v385
  %v444 = vpack.c.b16 %v388, %v387
  %v445 = vpack.c.b16 %v390, %v389
  %v446 = vpack.c.b16 %v392, %v391
  %v447 = vpack.c.b16 %v394, %v393
  %v448 = vpack.c.b16 %v396, %v395
  %v449 = vpack.c.b16 %v398, %v397
  %v450 = vpack.c.b16 %v400, %v399
  %v451 = vpack.c.b16 %v402, %v401
  %v452 = vpack.c.b16 %v404, %v403
  %v453 = vpack.c.b16 %v406, %v405
  %v454 = vpack.c.b16 %v408, %v407
  %v455 = vpack.c.b16 %v410, %v409
  %v456 = vpack.c.b16 %v412, %v411
  %v457 = vpack.c.b16 %v414, %v413
  %v458 = vpack.c.b16 %v416, %v415
  %v459 = vpack.c.b16 %v418, %v417
  %v460 = vpack.c.b16 %v420, %v419
  %v461 = vpack.c.b16 %v422, %v421
  %v462 = vpack.c.b16 %v424, %v423
  %v463 = vpack.c.b16 %v426, %v425
  %v464 = vpack.c.b16 %v428, %v427
  %v465 = vpack.c.b16 %v430, %v429
  %v466 = vpack.c.b16 %v432, %v431
  %v467 = vpack.c.b16 %v434, %v433
  %v468 = vpack.c.b16 %v436, %v435
  %501 = vmatpush.bf16.msra.mxu0 %v444
  %502 = vmatpush.bf16.msra.mxu0 %v443
  %503 = vmatpush.bf16.msra.mxu0 %v442
  %504 = vmatpush.bf16.msra.mxu0 %v441
  %505 = vmatpush.bf16.msra.mxu0 %v440
  %506 = vmatpush.bf16.msra.mxu0 %v439
  %507 = vmatpush.bf16.msra.mxu0 %v438
  %508 = vmatpush.bf16.msra.mxu0 %v437
  %509 = vmatmul.bf16.gmra.mxu0 %v245
  %v510 = vpop.f32.mrf.mxu0
  %v511 = vadd.f32 0.0, %v510
  %v512 = vpop.f32.mrf.mxu0
  %v513 = vadd.f32 0.0, %v512
  %514 = vmatmul.bf16.gmra.mxu0 %v249
  %v515 = vpop.f32.mrf.mxu0
  %v516 = vadd.f32 0.0, %v515
  %v517 = vpop.f32.mrf.mxu0
  %v518 = vadd.f32 0.0, %v517
  %519 = vmatmul.bf16.gmra.mxu0 %v253
  %v520 = vpop.f32.mrf.mxu0
  %v521 = vadd.f32 0.0, %v520
  %v522 = vpop.f32.mrf.mxu0
  %v523 = vadd.f32 0.0, %v522
  %524 = vmatmul.bf16.gmra.mxu0 %v257
  %v525 = vpop.f32.mrf.mxu0
  %v526 = vadd.f32 0.0, %v525
  %v527 = vpop.f32.mrf.mxu0
  %v528 = vadd.f32 0.0, %v527
  %529 = vmatmul.bf16.gmra.mxu0 %v261
  %v530 = vpop.f32.mrf.mxu0
  %v531 = vadd.f32 0.0, %v530
  %v532 = vpop.f32.mrf.mxu0
  %v533 = vadd.f32 0.0, %v532
  %534 = vmatmul.bf16.gmra.mxu0 %v265
  %v535 = vpop.f32.mrf.mxu0
  %v536 = vadd.f32 0.0, %v535
  %v537 = vpop.f32.mrf.mxu0
  %v538 = vadd.f32 0.0, %v537
  %539 = vmatmul.bf16.gmra.mxu0 %v269
  %v540 = vpop.f32.mrf.mxu0
  %v541 = vadd.f32 0.0, %v540
  %v542 = vpop.f32.mrf.mxu0
  %v543 = vadd.f32 0.0, %v542
  %544 = vmatmul.bf16.gmra.mxu0 %v273
  %v545 = vpop.f32.mrf.mxu0
  %v546 = vadd.f32 0.0, %v545
  %v547 = vpop.f32.mrf.mxu0
  %v548 = vadd.f32 0.0, %v547
  %549 = vdwg.mxu0
  %550 = vmatpush.bf16.msra.mxu0 %v452
  %551 = vmatpush.bf16.msra.mxu0 %v451
  %552 = vmatpush.bf16.msra.mxu0 %v450
  %553 = vmatpush.bf16.msra.mxu0 %v449
  %554 = vmatpush.bf16.msra.mxu0 %v448
  %555 = vmatpush.bf16.msra.mxu0 %v447
  %556 = vmatpush.bf16.msra.mxu0 %v446
  %557 = vmatpush.bf16.msra.mxu0 %v445
  %558 = vmatmul.bf16.gmra.mxu0 %v246
  %v559 = vpop.f32.mrf.mxu0
  %v560 = vadd.f32 %v511, %v559
  %v561 = vpop.f32.mrf.mxu0
  %v562 = vadd.f32 %v513, %v561
  %563 = vmatmul.bf16.gmra.mxu0 %v250
  %v564 = vpop.f32.mrf.mxu0
  %v565 = vadd.f32 %v516, %v564
  %v566 = vpop.f32.mrf.mxu0
  %v567 = vadd.f32 %v518, %v566
  %568 = vmatmul.bf16.gmra.mxu0 %v254
  %v569 = vpop.f32.mrf.mxu0
  %v570 = vadd.f32 %v521, %v569
  %v571 = vpop.f32.mrf.mxu0
  %v572 = vadd.f32 %v523, %v571
  %573 = vmatmul.bf16.gmra.mxu0 %v258
  %v574 = vpop.f32.mrf.mxu0
  %v575 = vadd.f32 %v526, %v574
  %v576 = vpop.f32.mrf.mxu0
  %v577 = vadd.f32 %v528, %v576
  %578 = vmatmul.bf16.gmra.mxu0 %v262
  %v579 = vpop.f32.mrf.mxu0
  %v580 = vadd.f32 %v531, %v579
  %v581 = vpop.f32.mrf.mxu0
  %v582 = vadd.f32 %v533, %v581
  %583 = vmatmul.bf16.gmra.mxu0 %v266
  %v584 = vpop.f32.mrf.mxu0
  %v585 = vadd.f32 %v536, %v584
  %v586 = vpop.f32.mrf.mxu0
  %v587 = vadd.f32 %v538, %v586
  %588 = vmatmul.bf16.gmra.mxu0 %v270
  %v589 = vpop.f32.mrf.mxu0
  %v590 = vadd.f32 %v541, %v589
  %v591 = vpop.f32.mrf.mxu0
  %v592 = vadd.f32 %v543, %v591
  %593 = vmatmul.bf16.gmra.mxu0 %v274
  %v594 = vpop.f32.mrf.mxu0
  %v595 = vadd.f32 %v546, %v594
  %v596 = vpop.f32.mrf.mxu0
  %v597 = vadd.f32 %v548, %v596
  %598 = vdwg.mxu0
  %599 = vmatpush.bf16.msra.mxu0 %v460
  %600 = vmatpush.bf16.msra.mxu0 %v459
  %601 = vmatpush.bf16.msra.mxu0 %v458
  %602 = vmatpush.bf16.msra.mxu0 %v457
  %603 = vmatpush.bf16.msra.mxu0 %v456
  %604 = vmatpush.bf16.msra.mxu0 %v455
  %605 = vmatpush.bf16.msra.mxu0 %v454
  %606 = vmatpush.bf16.msra.mxu0 %v453
  %607 = vmatmul.bf16.gmra.mxu0 %v247
  %v608 = vpop.f32.mrf.mxu0
  %v609 = vadd.f32 %v560, %v608
  %v610 = vpop.f32.mrf.mxu0
  %v611 = vadd.f32 %v562, %v610
  %612 = vmatmul.bf16.gmra.mxu0 %v251
  %v613 = vpop.f32.mrf.mxu0
  %v614 = vadd.f32 %v565, %v613
  %v615 = vpop.f32.mrf.mxu0
  %v616 = vadd.f32 %v567, %v615
  %617 = vmatmul.bf16.gmra.mxu0 %v255
  %v618 = vpop.f32.mrf.mxu0
  %v619 = vadd.f32 %v570, %v618
  %v620 = vpop.f32.mrf.mxu0
  %v621 = vadd.f32 %v572, %v620
  %622 = vmatmul.bf16.gmra.mxu0 %v259
  %v623 = vpop.f32.mrf.mxu0
  %v624 = vadd.f32 %v575, %v623
  %v625 = vpop.f32.mrf.mxu0
  %v626 = vadd.f32 %v577, %v625
  %627 = vmatmul.bf16.gmra.mxu0 %v263
  %v628 = vpop.f32.mrf.mxu0
  %v629 = vadd.f32 %v580, %v628
  %v630 = vpop.f32.mrf.mxu0
  %v631 = vadd.f32 %v582, %v630
  %632 = vmatmul.bf16.gmra.mxu0 %v267
  %v633 = vpop.f32.mrf.mxu0
  %v634 = vadd.f32 %v585, %v633
  %v635 = vpop.f32.mrf.mxu0
  %v636 = vadd.f32 %v587, %v635
  %637 = vmatmul.bf16.gmra.mxu0 %v271
  %v638 = vpop.f32.mrf.mxu0
  %v639 = vadd.f32 %v590, %v638
  %v640 = vpop.f32.mrf.mxu0
  %v641 = vadd.f32 %v592, %v640
  %642 = vmatmul.bf16.gmra.mxu0 %v275
  %v643 = vpop.f32.mrf.mxu0
  %v644 = vadd.f32 %v595, %v643
  %v645 = vpop.f32.mrf.mxu0
  %v646 = vadd.f32 %v597, %v645
  %647 = vdwg.mxu0
  %648 = vmatpush.bf16.msra.mxu0 %v468
  %649 = vmatpush.bf16.msra.mxu0 %v467
  %650 = vmatpush.bf16.msra.mxu0 %v466
  %651 = vmatpush.bf16.msra.mxu0 %v465
  %652 = vmatpush.bf16.msra.mxu0 %v464
  %653 = vmatpush.bf16.msra.mxu0 %v463
  %654 = vmatpush.bf16.msra.mxu0 %v462
  %655 = vmatpush.bf16.msra.mxu0 %v461
  %656 = vmatmul.bf16.gmra.mxu0 %v248
  %v657 = vpop.f32.mrf.mxu0
  %v658 = vadd.f32 %v609, %v657
  %v659 = vpop.f32.mrf.mxu0
  %v660 = vadd.f32 %v611, %v659
  %661 = vmatmul.bf16.gmra.mxu0 %v252
  %v662 = vpop.f32.mrf.mxu0
  %v663 = vadd.f32 %v614, %v662
  %v664 = vpop.f32.mrf.mxu0
  %v665 = vadd.f32 %v616, %v664
  %666 = vmatmul.bf16.gmra.mxu0 %v256
  %v667 = vpop.f32.mrf.mxu0
  %v668 = vadd.f32 %v619, %v667
  %v669 = vpop.f32.mrf.mxu0
  %v670 = vadd.f32 %v621, %v669
  %671 = vmatmul.bf16.gmra.mxu0 %v260
  %v672 = vpop.f32.mrf.mxu0
  %v673 = vadd.f32 %v624, %v672
  %v674 = vpop.f32.mrf.mxu0
  %v675 = vadd.f32 %v626, %v674
  %676 = vmatmul.bf16.gmra.mxu0 %v264
  %v677 = vpop.f32.mrf.mxu0
  %v678 = vadd.f32 %v629, %v677
  %v679 = vpop.f32.mrf.mxu0
  %v680 = vadd.f32 %v631, %v679
  %681 = vmatmul.bf16.gmra.mxu0 %v268
  %v682 = vpop.f32.mrf.mxu0
  %v683 = vadd.f32 %v634, %v682
  %v684 = vpop.f32.mrf.mxu0
  %v685 = vadd.f32 %v636, %v684
  %686 = vmatmul.bf16.gmra.mxu0 %v272
  %v687 = vpop.f32.mrf.mxu0
  %v688 = vadd.f32 %v639, %v687
  %v689 = vpop.f32.mrf.mxu0
  %v690 = vadd.f32 %v641, %v689
  %691 = vmatmul.bf16.gmra.mxu0 %v276
  %v692 = vpop.f32.mrf.mxu0
  %v693 = vadd.f32 %v644, %v692
  %v694 = vpop.f32.mrf.mxu0
  %v695 = vadd.f32 %v646, %v694
  %696 = vdwg.mxu0
  %v697 = vadd.f32 %v37, %v658
  %v698 = vadd.f32 %v38, %v660
  %v699 = vadd.f32 %v39, %v663
  %v700 = vadd.f32 %v40, %v665
  %v701 = vadd.f32 %v41, %v668
  %v702 = vadd.f32 %v42, %v670
  %v703 = vadd.f32 %v43, %v673
  %v704 = vadd.f32 %v44, %v675
  %v705 = vadd.f32 %v45, %v678
  %v706 = vadd.f32 %v46, %v680
  %v707 = vadd.f32 %v47, %v683
  %v708 = vadd.f32 %v48, %v685
  %v709 = vadd.f32 %v49, %v688
  %v710 = vadd.f32 %v50, %v690
  %v711 = vadd.f32 %v51, %v693
  %v712 = vadd.f32 %v52, %v695
  %713 = vst [vmem:[#allocation2] sm:$0xff] %v697
  %714 = vst [vmem:[#allocation2 + $0x8] sm:$0xff] %v698
  %715 = vst [vmem:[#allocation2 + $0x10] sm:$0xff] %v699
  %716 = vst [vmem:[#allocation2 + $0x18] sm:$0xff] %v700
  %717 = vst [vmem:[#allocation2 + $0x20] sm:$0xff] %v701
  %718 = vst [vmem:[#allocation2 + $0x28] sm:$0xff] %v702
  %719 = vst [vmem:[#allocation2 + $0x30] sm:$0xff] %v703
  %720 = vst [vmem:[#allocation2 + $0x38] sm:$0xff] %v704
  %721 = vst [vmem:[#allocation2 + $0x40] sm:$0xff] %v705
  %722 = vst [vmem:[#allocation2 + $0x48] sm:$0xff] %v706
  %723 = vst [vmem:[#allocation2 + $0x50] sm:$0xff] %v707
  %724 = vst [vmem:[#allocation2 + $0x58] sm:$0xff] %v708
  %725 = vst [vmem:[#allocation2 + $0x60] sm:$0xff] %v709
  %726 = vst [vmem:[#allocation2 + $0x68] sm:$0xff] %v710
  %727 = vst [vmem:[#allocation2 + $0x70] sm:$0xff] %v711
  %728 = vst [vmem:[#allocation2 + $0x78] sm:$0xff] %v712
  // Predicated region
  $region22: #{discriminator_forward.7} parent=0 // pred_check
    %p729 = pneg %p17
  $region23: #{discriminator_forward.7} parent=0 // pred_check_branch
    %731 = sbr.rel (%p729) target = $region25
  $region24: #{discriminator_forward.7} parent=0 // pred_region
    %v732 = vld [vmem:[#allocation2] sm:$0xff]
    %v733 = vld [vmem:[#allocation2 + $0x8] sm:$0xff]
    %v734 = vld [vmem:[#allocation2 + $0x10] sm:$0xff]
    %v735 = vld [vmem:[#allocation2 + $0x18] sm:$0xff]
    %v736 = vld [vmem:[#allocation2 + $0x20] sm:$0xff]
    %v737 = vld [vmem:[#allocation2 + $0x28] sm:$0xff]
    %v738 = vld [vmem:[#allocation2 + $0x30] sm:$0xff]
    %v739 = vld [vmem:[#allocation2 + $0x38] sm:$0xff]
    %v740 = vld [vmem:[#allocation2 + $0x40] sm:$0xff]
    %v741 = vld [vmem:[#allocation2 + $0x48] sm:$0xff]
    %v742 = vld [vmem:[#allocation2 + $0x50] sm:$0xff]
    %v743 = vld [vmem:[#allocation2 + $0x58] sm:$0xff]
    %v744 = vld [vmem:[#allocation2 + $0x60] sm:$0xff]
    %v745 = vld [vmem:[#allocation2 + $0x68] sm:$0xff]
    %v746 = vld [vmem:[#allocation2 + $0x70] sm:$0xff]
    %v747 = vld [vmem:[#allocation2 + $0x78] sm:$0xff]
    %v748 = vadd.f32 %v732, %v733
    %v749 = vadd.f32 %v748, %v734
    %v750 = vadd.f32 %v749, %v735
    %v751 = vadd.f32 %v750, %v736
    %v752 = vadd.f32 %v751, %v737
    %v753 = vadd.f32 %v752, %v738
    %v754 = vadd.f32 %v753, %v739
    %v755 = vadd.f32 %v754, %v740
    %v756 = vadd.f32 %v755, %v741
    %v757 = vadd.f32 %v756, %v742
    %v758 = vadd.f32 %v757, %v743
    %v759 = vadd.f32 %v758, %v744
    %v760 = vadd.f32 %v759, %v745
    %v761 = vadd.f32 %v760, %v746
    %v762 = vadd.f32 %v761, %v747
    %v763 = vrot.slane %v762, 4
    %v764 = vadd.f32 %v762, %v763
    %v765 = vrot.slane %v764, 2
    %v766 = vadd.f32 %v764, %v765
    %v767 = vrot.slane %v766, 1
    %v768 = vadd.f32 %v766, %v767
    %v769 = vrcp.pop 128.0
    %v770 = vmul.f32 128.0, %v769
    %v771 = vsub.f32 1.0, %v770
    %v772 = vmul.f32 %v769, %v771
    %v773 = vadd.f32 %v769, %v772
    %vm774 = vweird.f32 %v769
    %v775 = vsel %vm774, %v769, %v773
    %v776 = vmul.f32 %v768, %v775
    %v777 = vsub.f32 %v732, %v776
    %v778 = vsub.f32 %v733, %v776
    %v779 = vsub.f32 %v734, %v776
    %v780 = vsub.f32 %v735, %v776
    %v781 = vsub.f32 %v736, %v776
    %v782 = vsub.f32 %v737, %v776
    %v783 = vsub.f32 %v738, %v776
    %v784 = vsub.f32 %v739, %v776
    %v785 = vsub.f32 %v740, %v776
    %v786 = vsub.f32 %v741, %v776
    %v787 = vsub.f32 %v742, %v776
    %v788 = vsub.f32 %v743, %v776
    %v789 = vsub.f32 %v744, %v776
    %v790 = vsub.f32 %v745, %v776
    %v791 = vsub.f32 %v746, %v776
    %v792 = vsub.f32 %v747, %v776
    %v793 = vmul.f32 %v777, %v777
    %v794 = vmul.f32 %v778, %v778
    %v795 = vmul.f32 %v779, %v779
    %v796 = vmul.f32 %v780, %v780
    %v797 = vmul.f32 %v781, %v781
    %v798 = vmul.f32 %v782, %v782
    %v799 = vmul.f32 %v783, %v783
    %v800 = vmul.f32 %v784, %v784
    %v801 = vmul.f32 %v785, %v785
    %v802 = vmul.f32 %v786, %v786
    %v803 = vmul.f32 %v787, %v787
    %v804 = vmul.f32 %v788, %v788
    %v805 = vmul.f32 %v789, %v789
    %v806 = vmul.f32 %v790, %v790
    %v807 = vmul.f32 %v791, %v791
    %v808 = vmul.f32 %v792, %v792
    %v809 = vadd.f32 %v793, %v794
    %v810 = vadd.f32 %v809, %v795
    %v811 = vadd.f32 %v810, %v796
    %v812 = vadd.f32 %v811, %v797
    %v813 = vadd.f32 %v812, %v798
    %v814 = vadd.f32 %v813, %v799
    %v815 = vadd.f32 %v814, %v800
    %v816 = vadd.f32 %v815, %v801
    %v817 = vadd.f32 %v816, %v802
    %v818 = vadd.f32 %v817, %v803
    %v819 = vadd.f32 %v818, %v804
    %v820 = vadd.f32 %v819, %v805
    %v821 = vadd.f32 %v820, %v806
    %v822 = vadd.f32 %v821, %v807
    %v823 = vadd.f32 %v822, %v808
    %v824 = vrot.slane %v823, 4
    %v825 = vadd.f32 %v823, %v824
    %v826 = vrot.slane %v825, 2
    %v827 = vadd.f32 %v825, %v826
    %v828 = vrot.slane %v827, 1
    %v829 = vadd.f32 %v827, %v828
    %v830 = vmul.f32 %v829, %v775
    %v831 = vadd.f32 %v830, 1e-05
    %v832 = vrsqrt.pop %v831
    %v833 = vmul.f32 %v832, %v831
    %v834 = vmul.f32 %v833, %v832
    %v835 = vmul.f32 0.5, %v834
    %v836 = vsub.f32 1.5, %v835
    %v837 = vmul.f32 %v832, %v836
    %vm838 = vweird.f32 %v831
    %vm839 = vweird.f32 %v832
    %vm840 = vmor %vm838, %vm839
    %v841 = vsel %vm840, %v832, %v837
    %v842 = vmul.f32 %v777, %v841
    %v843 = vmul.f32 %v778, %v841
    %v844 = vmul.f32 %v779, %v841
    %v845 = vmul.f32 %v780, %v841
    %v846 = vmul.f32 %v781, %v841
    %v847 = vmul.f32 %v782, %v841
    %v848 = vmul.f32 %v783, %v841
    %v849 = vmul.f32 %v784, %v841
    %v850 = vmul.f32 %v785, %v841
    %v851 = vmul.f32 %v786, %v841
    %v852 = vmul.f32 %v787, %v841
    %v853 = vmul.f32 %v788, %v841
    %v854 = vmul.f32 %v789, %v841
    %v855 = vmul.f32 %v790, %v841
    %v856 = vmul.f32 %v791, %v841
    %v857 = vmul.f32 %v792, %v841
    %v858 = vld [vmem:[%s2] sm:$0x1]
    %v860 = vperm.slane %v858, 0
    %v862 = vmul.f32 %v842, %v860
    %v863 = vmul.f32 %v843, %v860
    %v864 = vmul.f32 %v844, %v860
    %v865 = vmul.f32 %v845, %v860
    %v866 = vmul.f32 %v846, %v860
    %v867 = vmul.f32 %v847, %v860
    %v868 = vmul.f32 %v848, %v860
    %v869 = vmul.f32 %v849, %v860
    %v870 = vmul.f32 %v850, %v860
    %v871 = vmul.f32 %v851, %v860
    %v872 = vmul.f32 %v852, %v860
    %v873 = vmul.f32 %v853, %v860
    %v874 = vmul.f32 %v854, %v860
    %v875 = vmul.f32 %v855, %v860
    %v876 = vmul.f32 %v856, %v860
    %v877 = vmul.f32 %v857, %v860
    %v878 = vld [vmem:[%s3] sm:$0x1]
    %v880 = vperm.slane %v878, 0
    %v882 = vadd.f32 %v862, %v880
    %v883 = vadd.f32 %v863, %v880
    %v884 = vadd.f32 %v864, %v880
    %v885 = vadd.f32 %v865, %v880
    %v886 = vadd.f32 %v866, %v880
    %v887 = vadd.f32 %v867, %v880
    %v888 = vadd.f32 %v868, %v880
    %v889 = vadd.f32 %v869, %v880
    %v890 = vadd.f32 %v870, %v880
    %v891 = vadd.f32 %v871, %v880
    %v892 = vadd.f32 %v872, %v880
    %v893 = vadd.f32 %v873, %v880
    %v894 = vadd.f32 %v874, %v880
    %v895 = vadd.f32 %v875, %v880
    %v896 = vadd.f32 %v876, %v880
    %v897 = vadd.f32 %v877, %v880
    %vm898 = vcmp.gt.f32.partialorder %v882, 0.0
    %vm899 = vcmp.gt.f32.partialorder %v883, 0.0
    %vm900 = vcmp.gt.f32.partialorder %v884, 0.0
    %vm901 = vcmp.gt.f32.partialorder %v885, 0.0
    %vm902 = vcmp.gt.f32.partialorder %v886, 0.0
    %vm903 = vcmp.gt.f32.partialorder %v887, 0.0
    %vm904 = vcmp.gt.f32.partialorder %v888, 0.0
    %vm905 = vcmp.gt.f32.partialorder %v889, 0.0
    %vm906 = vcmp.gt.f32.partialorder %v890, 0.0
    %vm907 = vcmp.gt.f32.partialorder %v891, 0.0
    %vm908 = vcmp.gt.f32.partialorder %v892, 0.0
    %vm909 = vcmp.gt.f32.partialorder %v893, 0.0
    %vm910 = vcmp.gt.f32.partialorder %v894, 0.0
    %vm911 = vcmp.gt.f32.partialorder %v895, 0.0
    %vm912 = vcmp.gt.f32.partialorder %v896, 0.0
    %vm913 = vcmp.gt.f32.partialorder %v897, 0.0
    %v914 = vmul.f32 %v882, 0.2
    %v915 = vmul.f32 %v883, 0.2
    %v916 = vmul.f32 %v884, 0.2
    %v917 = vmul.f32 %v885, 0.2
    %v918 = vmul.f32 %v886, 0.2
    %v919 = vmul.f32 %v887, 0.2
    %v920 = vmul.f32 %v888, 0.2
    %v921 = vmul.f32 %v889, 0.2
    %v922 = vmul.f32 %v890, 0.2
    %v923 = vmul.f32 %v891, 0.2
    %v924 = vmul.f32 %v892, 0.2
    %v925 = vmul.f32 %v893, 0.2
    %v926 = vmul.f32 %v894, 0.2
    %v927 = vmul.f32 %v895, 0.2
    %v928 = vmul.f32 %v896, 0.2
    %v929 = vmul.f32 %v897, 0.2
    %v930 = vsel %vm898, %v882, %v914
    %v931 = vsel %vm899, %v883, %v915
    %v932 = vsel %vm900, %v884, %v916
    %v933 = vsel %vm901, %v885, %v917
    %v934 = vsel %vm902, %v886, %v918
    %v935 = vsel %vm903, %v887, %v919
    %v936 = vsel %vm904, %v888, %v920
    %v937 = vsel %vm905, %v889, %v921
    %v938 = vsel %vm906, %v890, %v922
    %v939 = vsel %vm907, %v891, %v923
    %v940 = vsel %vm908, %v892, %v924
    %v941 = vsel %vm909, %v893, %v925
    %v942 = vsel %vm910, %v894, %v926
    %v943 = vsel %vm911, %v895, %v927
    %v944 = vsel %vm912, %v896, %v928
    %v945 = vsel %vm913, %v897, %v929
    %v946 = vpack.c.bf16 %v930, %v930
    %v947 = vpack.c.bf16 %v931, %v931
    %v948 = vpack.c.bf16 %v932, %v932
    %v949 = vpack.c.bf16 %v933, %v933
    %v950 = vpack.c.bf16 %v934, %v934
    %v951 = vpack.c.bf16 %v935, %v935
    %v952 = vpack.c.bf16 %v936, %v936
    %v953 = vpack.c.bf16 %v937, %v937
    %v954 = vpack.c.bf16 %v938, %v938
    %v955 = vpack.c.bf16 %v939, %v939
    %v956 = vpack.c.bf16 %v940, %v940
    %v957 = vpack.c.bf16 %v941, %v941
    %v958 = vpack.c.bf16 %v942, %v942
    %v959 = vpack.c.bf16 %v943, %v943
    %v960 = vpack.c.bf16 %v944, %v944
    %v961 = vpack.c.bf16 %v945, %v945
    %962 = vst [vmem:[%s4] sm:$0xf] %v946
    %963 = vst [vmem:[%s4 + $0x4] sm:$0xf] %v947
    %964 = vst [vmem:[%s4 + $0x8] sm:$0xf] %v948
    %965 = vst [vmem:[%s4 + $0xc] sm:$0xf] %v949
    %966 = vst [vmem:[%s4 + $0x10] sm:$0xf] %v950
    %967 = vst [vmem:[%s4 + $0x14] sm:$0xf] %v951
    %968 = vst [vmem:[%s4 + $0x18] sm:$0xf] %v952
    %969 = vst [vmem:[%s4 + $0x1c] sm:$0xf] %v953
    %970 = vst [vmem:[%s4 + $0x20] sm:$0xf] %v954
    %971 = vst [vmem:[%s4 + $0x24] sm:$0xf] %v955
    %972 = vst [vmem:[%s4 + $0x28] sm:$0xf] %v956
    %973 = vst [vmem:[%s4 + $0x2c] sm:$0xf] %v957
    %974 = vst [vmem:[%s4 + $0x30] sm:$0xf] %v958
    %975 = vst [vmem:[%s4 + $0x34] sm:$0xf] %v959
    %976 = vst [vmem:[%s4 + $0x38] sm:$0xf] %v960
    %977 = vst [vmem:[%s4 + $0x3c] sm:$0xf] %v961
  $region25: #{discriminator_forward.7} parent=0 // pred_fallthru
    _
  // Predicated region
  $region26: #{discriminator_forward.7} parent=0 // pred_check
    _
  $region27: #{discriminator_forward.7} parent=0 // pred_check_branch
    %979 = sbr.rel (0) target = $region29
  $region28: #{discriminator_forward.7} parent=0 // pred_region
    _
  $region29: #{discriminator_forward.7} parent=0 // pred_fallthru
    _
  // Predicated region
  $region30: #{discriminator_forward.7} parent=0 // pred_check
    _
  $region31: #{discriminator_forward.7} parent=0 // pred_check_branch
    %981 = sbr.rel (0) target = $region33
  $region32: #{discriminator_forward.7} parent=0 // pred_region
    _
  $region33: #{discriminator_forward.7} parent=0 // pred_fallthru
    _

// kernel: discriminator_forward.8
$region0: #{discriminator_forward.8}
  #allocation0 [shape = 'u32[]', space=smem, size = 0x4, offset = 0x4, fixed_abs, tag = 'smem constant byte address 0x4 - core index']
  #allocation1 [shape = 'u32[72,128]{1,0:T(1,128)}', space=vmem, size = 0x9000, scoped, tag = 'internal scratch']
  #allocation2 [shape = 'f32[32,128]{1,0:T(8,128)}', space=vmem, size = 0x4000, scoped, tag = 'scratch operand']
  %s0 = inlined_call_operand.vmem [shape: bf16[32,1024], index: 0, kind: input, shape index: {}]
  %s1 = inlined_call_operand.vmem [shape: bf16[1024,128], index: 1, kind: input, shape index: {}]
  %s2 = inlined_call_operand.vmem [shape: f32[1,128], index: 2, kind: input, shape index: {}]
  %s3 = inlined_call_operand.vmem [shape: f32[1,128], index: 3, kind: input, shape index: {}]
  %s4 = inlined_call_operand.vmem [shape: bf16[32,128], index: 4, kind: output, shape index: {}]
  %s5 = sld [smem:[#allocation0]]
  $region80: #{discriminator_forward.8} parent=0
    _
  %s7 = ssub.s32 1, %s5
  %s8 = scalar_select 0, %s7, %s5
  $region1: #{discriminator_forward.8} parent=0
    #allocation3 [shape = 'u8[65536]{0}', space=vmem, size = 0x10000, scoped, tag = 'input window, operand 0']
    loop: start=0, step=1, limit=4
    $region2: #{discriminator_forward.8} parent=1 // loop_pre_header
      _
    $region3: #{discriminator_forward.8} parent=1 // loop_header
      %s10 = sphi 0, %s14
      %p11 = scmp.ge.s32.totalorder %s10, 4
      %s20 = sphi 0, %s22
      %s23 = sphi 0, %s20
      %s24 = sphi 0, %s23
      %s40 = sphi 0, %s24
      %s46 = sphi 0, %s48
      %s49 = sphi 0, %s46
      %s50 = sphi 0, %s49
      %s66 = sphi 0, %s50
      %s70 = sphi 0, %s70
      %s72 = sphi 0, %s70
      %s73 = sphi 0, %s72
      %s87 = sphi 0, %s73
      %s91 = sphi 0, %s91
      %s93 = sphi 0, %s91
      %s94 = sphi 0, %s93
      %s108 = sphi 0, %s94
      %s112 = sphi 0, %s112
      %s114 = sphi 0, %s112
      %s115 = sphi 0, %s114
      %s129 = sphi 0, %s115
    $region4: #{discriminator_forward.8} parent=1 // loop_header_branch
      %13 = sbr.rel (%p11) target = $region8
    $region5: #{discriminator_forward.8} parent=1 // loop_body
      %s15 = ssub.s32 %s10, 1
      %s16 = ssub.s32 %s10, 2
      %s17 = sadd.s32 %s10, 1
      %s18 = ssub.s32 %s10, %s17
      %p19 = scmp.eq.s32.totalorder %s18, 0
      %s21 = sadd.s32 %s20, 1
      %s22 = scalar_select %p19, %s20, %s21
      %p25 = pneg %p19
      %p26 = scmp.eq.s32.totalorder %s10, 1
      %p27 = por %p25, %p26
      %p28 = scmp.ne.s32.totalorder %s20, %s23
      %p29 = scmp.eq.s32.totalorder %s10, 0
      %p30 = por %p28, %p29
      %p31 = scmp.ne.s32.totalorder %s20, %s23
      %p32 = scmp.eq.s32.totalorder %s15, 1
      %p33 = por %p31, %p32
      %p34 = scmp.ne.s32.totalorder %s23, %s24
      %p35 = scmp.eq.s32.totalorder %s15, 0
      %p36 = por %p34, %p35
      %p37 = scmp.ne.s32.totalorder %s23, %s24
      %p38 = scmp.eq.s32.totalorder %s16, 1
      %p39 = por %p37, %p38
      %p41 = scmp.ne.s32.totalorder %s24, %s40
      %p42 = scmp.eq.s32.totalorder %s16, 0
      %p43 = por %p41, %p42
      %s44 = ssub.s32 %s10, %s17
      %p45 = scmp.eq.s32.totalorder %s44, 0
      %s47 = sadd.s32 %s46, 1
      %s48 = scalar_select %p45, %s46, %s47
      %p51 = pneg %p45
      %p52 = scmp.eq.s32.totalorder %s10, 1
      %p53 = por %p51, %p52
      %p54 = scmp.ne.s32.totalorder %s46, %s49
      %p55 = scmp.eq.s32.totalorder %s10, 0
      %p56 = por %p54, %p55
      %p57 = scmp.ne.s32.totalorder %s46, %s49
      %p58 = scmp.eq.s32.totalorder %s15, 1
      %p59 = por %p57, %p58
      %p60 = scmp.ne.s32.totalorder %s49, %s50
      %p61 = scmp.eq.s32.totalorder %s15, 0
      %p62 = por %p60, %p61
      %p63 = scmp.ne.s32.totalorder %s49, %s50
      %p64 = scmp.eq.s32.totalorder %s16, 1
      %p65 = por %p63, %p64
      %p67 = scmp.ne.s32.totalorder %s50, %s66
      %p68 = scmp.eq.s32.totalorder %s16, 0
      %p69 = por %p67, %p68
      %s71 = sadd.s32 %s70, 1
      %p74 = scmp.eq.s32.totalorder %s10, 1
      %p75 = scmp.ne.s32.totalorder %s70, %s72
      %p76 = scmp.eq.s32.totalorder %s10, 0
      %p77 = por %p75, %p76
      %p78 = scmp.ne.s32.totalorder %s70, %s72
      %p79 = scmp.eq.s32.totalorder %s15, 1
      %p80 = por %p78, %p79
      %p81 = scmp.ne.s32.totalorder %s72, %s73
      %p82 = scmp.eq.s32.totalorder %s15, 0
      %p83 = por %p81, %p82
      %p84 = scmp.ne.s32.totalorder %s72, %s73
      %p85 = scmp.eq.s32.totalorder %s16, 1
      %p86 = por %p84, %p85
      %p88 = scmp.ne.s32.totalorder %s73, %s87
      %p89 = scmp.eq.s32.totalorder %s16, 0
      %p90 = por %p88, %p89
      %s92 = sadd.s32 %s91, 1
      %p95 = scmp.eq.s32.totalorder %s10, 1
      %p96 = scmp.ne.s32.totalorder %s91, %s93
      %p97 = scmp.eq.s32.totalorder %s10, 0
      %p98 = por %p96, %p97
      %p99 = scmp.ne.s32.totalorder %s91, %s93
      %p100 = scmp.eq.s32.totalorder %s15, 1
      %p101 = por %p99, %p100
      %p102 = scmp.ne.s32.totalorder %s93, %s94
      %p103 = scmp.eq.s32.totalorder %s15, 0
      %p104 = por %p102, %p103
      %p105 = scmp.ne.s32.totalorder %s93, %s94
      %p106 = scmp.eq.s32.totalorder %s16, 1
      %p107 = por %p105, %p106
      %p109 = scmp.ne.s32.totalorder %s94, %s108
      %p110 = scmp.eq.s32.totalorder %s16, 0
      %p111 = por %p109, %p110
      %s113 = sadd.s32 %s112, 1
      %p116 = scmp.eq.s32.totalorder %s10, 1
      %p117 = scmp.ne.s32.totalorder %s112, %s114
      %p118 = scmp.eq.s32.totalorder %s10, 0
      %p119 = por %p117, %p118
      %p120 = scmp.ne.s32.totalorder %s112, %s114
      %p121 = scmp.eq.s32.totalorder %s15, 1
      %p122 = por %p120, %p121
      %p123 = scmp.ne.s32.totalorder %s114, %s115
      %p124 = scmp.eq.s32.totalorder %s15, 0
      %p125 = por %p123, %p124
      %p126 = scmp.ne.s32.totalorder %s114, %s115
      %p127 = scmp.eq.s32.totalorder %s16, 1
      %p128 = por %p126, %p127
      %p130 = scmp.ne.s32.totalorder %s115, %s129
      %p131 = scmp.eq.s32.totalorder %s16, 0
      %p132 = por %p130, %p131
      %p133 = scmp.le.s32.totalorder 1, %s10
      %p134 = scmp.lt.s32.totalorder %s10, 3
      %p135 = pnand %p133, %p134
      %p136 = pneg %p135
      // Predicated region
      $region9: #{discriminator_forward.8} parent=5 // pred_check
        _
      $region10: #{discriminator_forward.8} parent=5 // pred_check_branch
        %138 = sbr.rel (%p135) target = $region12
      $region11: #{discriminator_forward.8} parent=5 // pred_region
        %s139 = ssub.s32 %s10, 1
        // Predicated region
        $region13: #{discriminator_forward.8} parent=11 // pred_check
          %p140 = pneg %p83
        $region14: #{discriminator_forward.8} parent=11 // pred_check_branch
          %142 = sbr.rel (%p140) target = $region16
        $region15: #{discriminator_forward.8} parent=11 // pred_region
          _
        $region16: #{discriminator_forward.8} parent=11 // pred_fallthru
          _
        // Predicated region
        $region17: #{discriminator_forward.8} parent=11 // pred_check
          %p143 = pneg %p104
        $region18: #{discriminator_forward.8} parent=11 // pred_check_branch
          %145 = sbr.rel (%p143) target = $region20
        $region19: #{discriminator_forward.8} parent=11 // pred_region
          _
        $region20: #{discriminator_forward.8} parent=11 // pred_fallthru
          _
      $region12: #{discriminator_forward.8} parent=5 // pred_fallthru
        _
      %p146 = scmp.lt.s32.totalorder %s10, 2
      // Predicated region
      $region21: #{discriminator_forward.8} parent=5 // pred_check
        %p147 = pneg %p146
      $region22: #{discriminator_forward.8} parent=5 // pred_check_branch
        %149 = sbr.rel (%p147) target = $region24
      $region23: #{discriminator_forward.8} parent=5 // pred_region
        // Predicated region
        $region25: #{discriminator_forward.8} parent=23 // pred_check
          %p150 = pneg %p30
        $region26: #{discriminator_forward.8} parent=23 // pred_check_branch
          %152 = sbr.rel (%p150) target = $region28
        $region27: #{discriminator_forward.8} parent=23 // pred_region
          %s153 = sand.u32 %s20, 1
          %s154 = sand.u32 %s20, 1
          %s155 = smul.addr %s154, 64
          %s156 = scalar_lea.vmem [#allocation3], %s155
          %s157 = smul.u32 4, %s10
          %s158 = smul.addr %s157, 4
          %s159 = scalar_lea.vmem %s0, %s158
          // Predicated region
          $region29: #{discriminator_forward.8} parent=27 // pred_check
            _
          $region30: #{discriminator_forward.8} parent=27 // pred_check_branch
            %161 = sbr.rel (0) target = $region32
          $region31: #{discriminator_forward.8} parent=27 // pred_region
            // Predicated region
            $region33: #{discriminator_forward.8} parent=31 // pred_check
              _
            $region34: #{discriminator_forward.8} parent=31 // pred_check_branch
              %163 = sbr.rel (0) target = $region36
            $region35: #{discriminator_forward.8} parent=31 // pred_region
              loop: start=0, step=1, limit=1
              $region37: #{discriminator_forward.8} parent=35 // loop_pre_header
                _
              $region38: #{discriminator_forward.8} parent=35 // loop_header
                %s165 = sphi 0, %s169
                %p166 = scmp.ge.s32.totalorder %s165, 1
                %s170 = sphi %s159, %s159
                %s171 = sphi %s156, %s156
              $region39: #{discriminator_forward.8} parent=35 // loop_header_branch
                %168 = sbr.rel (%p166) target = $region43
              $region40: #{discriminator_forward.8} parent=35 // loop_body
                %v172 = vld [vmem:[%s170] sm:$0xff]
                %173 = vst [vmem:[%s171] sm:$0xff] %v172
                %v174 = vld [vmem:[%s170 + $0x8] sm:$0xff]
                %175 = vst [vmem:[%s171 + $0x8] sm:$0xff] %v174
                %v176 = vld [vmem:[%s170 + $0x20] sm:$0xff]
                %177 = vst [vmem:[%s171 + $0x10] sm:$0xff] %v176
                %v178 = vld [vmem:[%s170 + $0x28] sm:$0xff]
                %179 = vst [vmem:[%s171 + $0x18] sm:$0xff] %v178
                %v180 = vld [vmem:[%s170 + $0x40] sm:$0xff]
                %181 = vst [vmem:[%s171 + $0x20] sm:$0xff] %v180
                %v182 = vld [vmem:[%s170 + $0x48] sm:$0xff]
                %183 = vst [vmem:[%s171 + $0x28] sm:$0xff] %v182
                %v184 = vld [vmem:[%s170 + $0x60] sm:$0xff]
                %185 = vst [vmem:[%s171 + $0x30] sm:$0xff] %v184
                %v186 = vld [vmem:[%s170 + $0x68] sm:$0xff]
                %187 = vst [vmem:[%s171 + $0x38] sm:$0xff] %v186
              $region41: #{discriminator_forward.8} parent=35 // loop_footer
                %s169 = sadd.s32 1, %s165
              $region42: #{discriminator_forward.8} parent=35 // loop_footer_branch
                %164 = sbr.rel target = $region38
              $region43: #{discriminator_forward.8} parent=35 // loop_exit
                _
            $region36: #{discriminator_forward.8} parent=31 // pred_fallthru
              _
            // Predicated region
            $region44: #{discriminator_forward.8} parent=31 // pred_check
              _
            $region45: #{discriminator_forward.8} parent=31 // pred_check_branch
              %189 = sbr.rel target = $region47
            $region46: #{discriminator_forward.8} parent=31 // pred_region
              _
            $region47: #{discriminator_forward.8} parent=31 // pred_fallthru
              _
          $region32: #{discriminator_forward.8} parent=27 // pred_fallthru
            _
          %190 = vnop
        $region28: #{discriminator_forward.8} parent=23 // pred_fallthru
          _
        // Predicated region
        $region48: #{discriminator_forward.8} parent=23 // pred_check
          %p191 = pneg %p56
        $region49: #{discriminator_forward.8} parent=23 // pred_check_branch
          %193 = sbr.rel (%p191) target = $region51
        $region50: #{discriminator_forward.8} parent=23 // pred_region
          %s194 = smul.u32 64, %s10
          %p195 = scmp.lt.s32.totalorder %s194, 127
          %s196 = scalar_select %p195, %s194, 127
          %s197 = smul.addr %s196, 4
          %s198 = scalar_lea.vmem %s1, %s197
          %s199 = smul.u32 64, %s10
        $region51: #{discriminator_forward.8} parent=23 // pred_fallthru
          _
      $region24: #{discriminator_forward.8} parent=5 // pred_fallthru
        _
      %p200 = scmp.le.s32.totalorder 1, %s10
      %p201 = scmp.lt.s32.totalorder %s10, 3
      %p202 = pnand %p200, %p201
      %p203 = pneg %p202
      // Predicated region
      $region52: #{discriminator_forward.8} parent=5 // pred_check
        _
      $region53: #{discriminator_forward.8} parent=5 // pred_check_branch
        %205 = sbr.rel (%p202) target = $region55
      $region54: #{discriminator_forward.8} parent=5 // pred_region
        %s206 = ssub.s32 %s10, 1
        %s207 = sand.u32 %s23, 1
        %s208 = sand.u32 %s23, 1
        %s209 = smul.addr %s208, 64
        %s210 = scalar_lea.vmem [#allocation3], %s209
        // Predicated region
        $region56: #{discriminator_forward.8} parent=54 // pred_check
          %p211 = pneg %p36
        $region57: #{discriminator_forward.8} parent=54 // pred_check_branch
          %213 = sbr.rel (%p211) target = $region59
        $region58: #{discriminator_forward.8} parent=54 // pred_region
          _
        $region59: #{discriminator_forward.8} parent=54 // pred_fallthru
          _
        %s214 = sand.u32 %s23, 1
        %s215 = sand.u32 %s23, 1
        %s216 = smul.addr %s215, 64
        %s217 = scalar_lea.vmem [#allocation3], %s216
        %p218 = pneg %p36
        %p219 = pneg %p33
        %s220 = smul.u32 64, %s15
        %p221 = scmp.lt.s32.totalorder %s220, 127
        %s222 = scalar_select %p221, %s220, 127
        %s223 = smul.addr %s222, 4
        %s224 = scalar_lea.vmem %s1, %s223
        %p225 = pneg %p62
        %p226 = pneg %p59
        %p227 = pneg %p83
        %p228 = pneg %p80
        %p229 = pneg %p104
        %p230 = pneg %p101
        %p231 = pneg %p125
        %p232 = pneg %p122
        %s233 = smul.u32 4, %s15
        %s234 = smul.u32 64, %s15
        %p235 = scmp.lt.s32.totalorder %s234, 127
        %s236 = scalar_select %p235, %s234, 127
        %s237 = smul.addr %s236, 4
        %s238 = scalar_lea.vmem %s1, %s237
        %s239 = smul.u32 64, %s15
        %p240 = scmp.eq.s32.totalorder %s15, 0
        // Predicated region
        $region60: #{discriminator_forward.8} parent=54 // pred_check
          %p241 = pneg %p240
        $region61: #{discriminator_forward.8} parent=54 // pred_check_branch
          %243 = sbr.rel (%p241) target = $region63
        $region62: #{discriminator_forward.8} parent=54 // pred_region
          %244 = vst [vmem:[#allocation2] sm:$0xff] 0.0
          %245 = vst [vmem:[#allocation2 + $0x8] sm:$0xff] 0.0
          %246 = vst [vmem:[#allocation2 + $0x10] sm:$0xff] 0.0
          %247 = vst [vmem:[#allocation2 + $0x18] sm:$0xff] 0.0
        $region63: #{discriminator_forward.8} parent=54 // pred_fallthru
          _
        %v248 = vld [vmem:[#allocation2] sm:$0xff]
        %v249 = vld [vmem:[#allocation2 + $0x8] sm:$0xff]
        %v250 = vld [vmem:[#allocation2 + $0x10] sm:$0xff]
        %v251 = vld [vmem:[#allocation2 + $0x18] sm:$0xff]
        %v252 = vld [vmem:[%s210] sm:$0xff]
        %v253 = vld [vmem:[%s210 + $0x8] sm:$0xff]
        %v254 = vld [vmem:[%s210 + $0x10] sm:$0xff]
        %v255 = vld [vmem:[%s210 + $0x18] sm:$0xff]
        %v256 = vld [vmem:[%s210 + $0x20] sm:$0xff]
        %v257 = vld [vmem:[%s210 + $0x28] sm:$0xff]
        %v258 = vld [vmem:[%s210 + $0x30] sm:$0xff]
        %v259 = vld [vmem:[%s210 + $0x38] sm:$0xff]
        %v260 = vld [vmem:[%s238] sm:$0xf]
        %v261 = vld [vmem:[%s238 + $0x4] sm:$0xf]
        %v262 = vld [vmem:[%s238 + $0x8] sm:$0xf]
        %v263 = vld [vmem:[%s238 + $0xc] sm:$0xf]
        %v264 = vld [vmem:[%s238 + $0x10] sm:$0xf]
        %v265 = vld [vmem:[%s238 + $0x14] sm:$0xf]
        %v266 = vld [vmem:[%s238 + $0x18] sm:$0xf]
        %v267 = vld [vmem:[%s238 + $0x1c] sm:$0xf]
        %v268 = vld [vmem:[%s238 + $0x20] sm:$0xf]
        %v269 = vld [vmem:[%s238 + $0x24] sm:$0xf]
        %v270 = vld [vmem:[%s238 + $0x28] sm:$0xf]
        %v271 = vld [vmem:[%s238 + $0x2c] sm:$0xf]
        %v272 = vld [vmem:[%s238 + $0x30] sm:$0xf]
        %v273 = vld [vmem:[%s238 + $0x34] sm:$0xf]
        %v274 = vld [vmem:[%s238 + $0x38] sm:$0xf]
        %v275 = vld [vmem:[%s238 + $0x3c] sm:$0xf]
        %v276 = vld [vmem:[%s238 + $0x40] sm:$0xf]
        %v277 = vld [vmem:[%s238 + $0x44] sm:$0xf]
        %v278 = vld [vmem:[%s238 + $0x48] sm:$0xf]
        %v279 = vld [vmem:[%s238 + $0x4c] sm:$0xf]
        %v280 = vld [vmem:[%s238 + $0x50] sm:$0xf]
        %v281 = vld [vmem:[%s238 + $0x54] sm:$0xf]
        %v282 = vld [vmem:[%s238 + $0x58] sm:$0xf]
        %v283 = vld [vmem:[%s238 + $0x5c] sm:$0xf]
        %v284 = vld [vmem:[%s238 + $0x60] sm:$0xf]
        %v285 = vld [vmem:[%s238 + $0x64] sm:$0xf]
        %v286 = vld [vmem:[%s238 + $0x68] sm:$0xf]
        %v287 = vld [vmem:[%s238 + $0x6c] sm:$0xf]
        %v288 = vld [vmem:[%s238 + $0x70] sm:$0xf]
        %v289 = vld [vmem:[%s238 + $0x74] sm:$0xf]
        %v290 = vld [vmem:[%s238 + $0x78] sm:$0xf]
        %v291 = vld [vmem:[%s238 + $0x7c] sm:$0xf]
        %v292 = vld [vmem:[%s238 + $0x80] sm:$0xf]
        %v293 = vld [vmem:[%s238 + $0x84] sm:$0xf]
        %v294 = vld [vmem:[%s238 + $0x88] sm:$0xf]
        %v295 = vld [vmem:[%s238 + $0x8c] sm:$0xf]
        %v296 = vld [vmem:[%s238 + $0x90] sm:$0xf]
        %v297 = vld [vmem:[%s238 + $0x94] sm:$0xf]
        %v298 = vld [vmem:[%s238 + $0x98] sm:$0xf]
        %v299 = vld [vmem:[%s238 + $0x9c] sm:$0xf]
        %v300 = vld [vmem:[%s238 + $0xa0] sm:$0xf]
        %v301 = vld [vmem:[%s238 + $0xa4] sm:$0xf]
        %v302 = vld [vmem:[%s238 + $0xa8] sm:$0xf]
        %v303 = vld [vmem:[%s238 + $0xac] sm:$0xf]
        %v304 = vld [vmem:[%s238 + $0xb0] sm:$0xf]
        %v305 = vld [vmem:[%s238 + $0xb4] sm:$0xf]
        %v306 = vld [vmem:[%s238 + $0xb8] sm:$0xf]
        %v307 = vld [vmem:[%s238 + $0xbc] sm:$0xf]
        %v308 = vld [vmem:[%s238 + $0xc0] sm:$0xf]
        %v309 = vld [vmem:[%s238 + $0xc4] sm:$0xf]
        %v310 = vld [vmem:[%s238 + $0xc8] sm:$0xf]
        %v311 = vld [vmem:[%s238 + $0xcc] sm:$0xf]
        %v312 = vld [vmem:[%s238 + $0xd0] sm:$0xf]
        %v313 = vld [vmem:[%s238 + $0xd4] sm:$0xf]
        %v314 = vld [vmem:[%s238 + $0xd8] sm:$0xf]
        %v315 = vld [vmem:[%s238 + $0xdc] sm:$0xf]
        %v316 = vld [vmem:[%s238 + $0xe0] sm:$0xf]
        %v317 = vld [vmem:[%s238 + $0xe4] sm:$0xf]
        %v318 = vld [vmem:[%s238 + $0xe8] sm:$0xf]
        %v319 = vld [vmem:[%s238 + $0xec] sm:$0xf]
        %v320 = vld [vmem:[%s238 + $0xf0] sm:$0xf]
        %v321 = vld [vmem:[%s238 + $0xf4] sm:$0xf]
        %v322 = vld [vmem:[%s238 + $0xf8] sm:$0xf]
        %v323 = vld [vmem:[%s238 + $0xfc] sm:$0xf]
        %v332 = vunpack.c.l.b16 %v252
        %v333 = vunpack.c.h.b16 %v252
        %v334 = vunpack.c.l.b16 %v253
        %v335 = vunpack.c.h.b16 %v253
        %v336 = vunpack.c.l.b16 %v254
        %v337 = vunpack.c.h.b16 %v254
        %v338 = vunpack.c.l.b16 %v255
        %v339 = vunpack.c.h.b16 %v255
        %v340 = vunpack.c.l.b16 %v256
        %v341 = vunpack.c.h.b16 %v256
        %v342 = vunpack.c.l.b16 %v257
        %v343 = vunpack.c.h.b16 %v257
        %v344 = vunpack.c.l.b16 %v258
        %v345 = vunpack.c.h.b16 %v258
        %v346 = vunpack.c.l.b16 %v259
        %v347 = vunpack.c.h.b16 %v259
        %v348 = vpack.c.b16 %v336, %v332
        %v349 = vpack.c.b16 %v337, %v333
        %v350 = vpack.c.b16 %v338, %v334
        %v351 = vpack.c.b16 %v339, %v335
        %v352 = vpack.c.b16 %v344, %v340
        %v353 = vpack.c.b16 %v345, %v341
        %v354 = vpack.c.b16 %v346, %v342
        %v355 = vpack.c.b16 %v347, %v343
        %v428 = vunpack.c.l.b16 %v260
        %v429 = vunpack.c.l.b16 %v261
        %v430 = vunpack.c.l.b16 %v262
        %v431 = vunpack.c.l.b16 %v263
        %v432 = vunpack.c.l.b16 %v264
        %v433 = vunpack.c.l.b16 %v265
        %v434 = vunpack.c.l.b16 %v266
        %v435 = vunpack.c.l.b16 %v267
        %v436 = vunpack.c.l.b16 %v268
        %v437 = vunpack.c.l.b16 %v269
        %v438 = vunpack.c.l.b16 %v270
        %v439 = vunpack.c.l.b16 %v271
        %v440 = vunpack.c.l.b16 %v272
        %v441 = vunpack.c.l.b16 %v273
        %v442 = vunpack.c.l.b16 %v274
        %v443 = vunpack.c.l.b16 %v275
        %v444 = vunpack.c.l.b16 %v276
        %v445 = vunpack.c.l.b16 %v277
        %v446 = vunpack.c.l.b16 %v278
        %v447 = vunpack.c.l.b16 %v279
        %v448 = vunpack.c.l.b16 %v280
        %v449 = vunpack.c.l.b16 %v281
        %v450 = vunpack.c.l.b16 %v282
        %v451 = vunpack.c.l.b16 %v283
        %v452 = vunpack.c.l.b16 %v284
        %v453 = vunpack.c.l.b16 %v285
        %v454 = vunpack.c.l.b16 %v286
        %v455 = vunpack.c.l.b16 %v287
        %v456 = vunpack.c.l.b16 %v288
        %v457 = vunpack.c.l.b16 %v289
        %v458 = vunpack.c.l.b16 %v290
        %v459 = vunpack.c.l.b16 %v291
        %v460 = vunpack.c.l.b16 %v292
        %v461 = vunpack.c.l.b16 %v293
        %v462 = vunpack.c.l.b16 %v294
        %v463 = vunpack.c.l.b16 %v295
        %v464 = vunpack.c.l.b16 %v296
        %v465 = vunpack.c.l.b16 %v297
        %v466 = vunpack.c.l.b16 %v298
        %v467 = vunpack.c.l.b16 %v299
        %v468 = vunpack.c.l.b16 %v300
        %v469 = vunpack.c.l.b16 %v301
        %v470 = vunpack.c.l.b16 %v302
        %v471 = vunpack.c.l.b16 %v303
        %v472 = vunpack.c.l.b16 %v304
        %v473 = vunpack.c.l.b16 %v305
        %v474 = vunpack.c.l.b16 %v306
        %v475 = vunpack.c.l.b16 %v307
        %v476 = vunpack.c.l.b16 %v308
        %v477 = vunpack.c.l.b16 %v309
        %v478 = vunpack.c.l.b16 %v310
        %v479 = vunpack.c.l.b16 %v311
        %v480 = vunpack.c.l.b16 %v312
        %v481 = vunpack.c.l.b16 %v313
        %v482 = vunpack.c.l.b16 %v314
        %v483 = vunpack.c.l.b16 %v315
        %v484 = vunpack.c.l.b16 %v316
        %v485 = vunpack.c.l.b16 %v317
        %v486 = vunpack.c.l.b16 %v318
        %v487 = vunpack.c.l.b16 %v319
        %v488 = vunpack.c.l.b16 %v320
        %v489 = vunpack.c.l.b16 %v321
        %v490 = vunpack.c.l.b16 %v322
        %v491 = vunpack.c.l.b16 %v323
        %v492 = vpack.c.b16 %v429, %v428
        %v493 = vpack.c.b16 %v431, %v430
        %v494 = vpack.c.b16 %v433, %v432
        %v495 = vpack.c.b16 %v435, %v434
        %v496 = vpack.c.b16 %v437, %v436
        %v497 = vpack.c.b16 %v439, %v438
        %v498 = vpack.c.b16 %v441, %v440
        %v499 = vpack.c.b16 %v443, %v442
        %v500 = vpack.c.b16 %v445, %v444
        %v501 = vpack.c.b16 %v447, %v446
        %v502 = vpack.c.b16 %v449, %v448
        %v503 = vpack.c.b16 %v451, %v450
        %v504 = vpack.c.b16 %v453, %v452
        %v505 = vpack.c.b16 %v455, %v454
        %v506 = vpack.c.b16 %v457, %v456
        %v507 = vpack.c.b16 %v459, %v458
        %v508 = vpack.c.b16 %v461, %v460
        %v509 = vpack.c.b16 %v463, %v462
        %v510 = vpack.c.b16 %v465, %v464
        %v511 = vpack.c.b16 %v467, %v466
        %v512 = vpack.c.b16 %v469, %v468
        %v513 = vpack.c.b16 %v471, %v470
        %v514 = vpack.c.b16 %v473, %v472
        %v515 = vpack.c.b16 %v475, %v474
        %v516 = vpack.c.b16 %v477, %v476
        %v517 = vpack.c.b16 %v479, %v478
        %v518 = vpack.c.b16 %v481, %v480
        %v519 = vpack.c.b16 %v483, %v482
        %v520 = vpack.c.b16 %v485, %v484
        %v521 = vpack.c.b16 %v487, %v486
        %v522 = vpack.c.b16 %v489, %v488
        %v523 = vpack.c.b16 %v491, %v490
        %556 = vmatpush.bf16.msra.mxu0 %v499
        %557 = vmatpush.bf16.msra.mxu0 %v498
        %558 = vmatpush.bf16.msra.mxu0 %v497
        %559 = vmatpush.bf16.msra.mxu0 %v496
        %560 = vmatpush.bf16.msra.mxu0 %v495
        %561 = vmatpush.bf16.msra.mxu0 %v494
        %562 = vmatpush.bf16.msra.mxu0 %v493
        %563 = vmatpush.bf16.msra.mxu0 %v492
        %564 = vmatmul.bf16.gmra.mxu0 %v348
        %v565 = vpop.f32.mrf.mxu0
        %v566 = vadd.f32 0.0, %v565
        %v567 = vpop.f32.mrf.mxu0
        %v568 = vadd.f32 0.0, %v567
        %569 = vmatmul.bf16.gmra.mxu0 %v352
        %v570 = vpop.f32.mrf.mxu0
        %v571 = vadd.f32 0.0, %v570
        %v572 = vpop.f32.mrf.mxu0
        %v573 = vadd.f32 0.0, %v572
        %574 = vdwg.mxu0
        %575 = vmatpush.bf16.msra.mxu0 %v507
        %576 = vmatpush.bf16.msra.mxu0 %v506
        %577 = vmatpush.bf16.msra.mxu0 %v505
        %578 = vmatpush.bf16.msra.mxu0 %v504
        %579 = vmatpush.bf16.msra.mxu0 %v503
        %580 = vmatpush.bf16.msra.mxu0 %v502
        %581 = vmatpush.bf16.msra.mxu0 %v501
        %582 = vmatpush.bf16.msra.mxu0 %v500
        %583 = vmatmul.bf16.gmra.mxu0 %v349
        %v584 = vpop.f32.mrf.mxu0
        %v585 = vadd.f32 %v566, %v584
        %v586 = vpop.f32.mrf.mxu0
        %v587 = vadd.f32 %v568, %v586
        %588 = vmatmul.bf16.gmra.mxu0 %v353
        %v589 = vpop.f32.mrf.mxu0
        %v590 = vadd.f32 %v571, %v589
        %v591 = vpop.f32.mrf.mxu0
        %v592 = vadd.f32 %v573, %v591
        %593 = vdwg.mxu0
        %594 = vmatpush.bf16.msra.mxu0 %v515
        %595 = vmatpush.bf16.msra.mxu0 %v514
        %596 = vmatpush.bf16.msra.mxu0 %v513
        %597 = vmatpush.bf16.msra.mxu0 %v512
        %598 = vmatpush.bf16.msra.mxu0 %v511
        %599 = vmatpush.bf16.msra.mxu0 %v510
        %600 = vmatpush.bf16.msra.mxu0 %v509
        %601 = vmatpush.bf16.msra.mxu0 %v508
        %602 = vmatmul.bf16.gmra.mxu0 %v350
        %v603 = vpop.f32.mrf.mxu0
        %v604 = vadd.f32 %v585, %v603
        %v605 = vpop.f32.mrf.mxu0
        %v606 = vadd.f32 %v587, %v605
        %607 = vmatmul.bf16.gmra.mxu0 %v354
        %v608 = vpop.f32.mrf.mxu0
        %v609 = vadd.f32 %v590, %v608
        %v610 = vpop.f32.mrf.mxu0
        %v611 = vadd.f32 %v592, %v610
        %612 = vdwg.mxu0
        %613 = vmatpush.bf16.msra.mxu0 %v523
        %614 = vmatpush.bf16.msra.mxu0 %v522
        %615 = vmatpush.bf16.msra.mxu0 %v521
        %616 = vmatpush.bf16.msra.mxu0 %v520
        %617 = vmatpush.bf16.msra.mxu0 %v519
        %618 = vmatpush.bf16.msra.mxu0 %v518
        %619 = vmatpush.bf16.msra.mxu0 %v517
        %620 = vmatpush.bf16.msra.mxu0 %v516
        %621 = vmatmul.bf16.gmra.mxu0 %v351
        %v622 = vpop.f32.mrf.mxu0
        %v623 = vadd.f32 %v604, %v622
        %v624 = vpop.f32.mrf.mxu0
        %v625 = vadd.f32 %v606, %v624
        %626 = vmatmul.bf16.gmra.mxu0 %v355
        %v627 = vpop.f32.mrf.mxu0
        %v628 = vadd.f32 %v609, %v627
        %v629 = vpop.f32.mrf.mxu0
        %v630 = vadd.f32 %v611, %v629
        %631 = vdwg.mxu0
        %v632 = vadd.f32 %v248, %v623
        %v633 = vadd.f32 %v249, %v625
        %v634 = vadd.f32 %v250, %v628
        %v635 = vadd.f32 %v251, %v630
        %636 = vst [vmem:[#allocation2] sm:$0xff] %v632
        %637 = vst [vmem:[#allocation2 + $0x8] sm:$0xff] %v633
        %638 = vst [vmem:[#allocation2 + $0x10] sm:$0xff] %v634
        %639 = vst [vmem:[#allocation2 + $0x18] sm:$0xff] %v635
        %p640 = scmp.eq.s32.totalorder %s15, 1
        // Predicated region
        $region64: #{discriminator_forward.8} parent=54 // pred_check
          %p641 = pneg %p640
        $region65: #{discriminator_forward.8} parent=54 // pred_check_branch
          %643 = sbr.rel (%p641) target = $region67
        $region66: #{discriminator_forward.8} parent=54 // pred_region
          %v644 = vld [vmem:[#allocation2] sm:$0xff]
          %v645 = vld [vmem:[#allocation2 + $0x8] sm:$0xff]
          %v646 = vld [vmem:[#allocation2 + $0x10] sm:$0xff]
          %v647 = vld [vmem:[#allocation2 + $0x18] sm:$0xff]
          %v648 = vadd.f32 %v644, %v645
          %v649 = vadd.f32 %v648, %v646
          %v650 = vadd.f32 %v649, %v647
          %v651 = vrot.slane %v650, 4
          %v652 = vadd.f32 %v650, %v651
          %v653 = vrot.slane %v652, 2
          %v654 = vadd.f32 %v652, %v653
          %v655 = vrot.slane %v654, 1
          %v656 = vadd.f32 %v654, %v655
          %v657 = vrcp.pop 32.0
          %v658 = vmul.f32 32.0, %v657
          %v659 = vsub.f32 1.0, %v658
          %v660 = vmul.f32 %v657, %v659
          %v661 = vadd.f32 %v657, %v660
          %vm662 = vweird.f32 %v657
          %v663 = vsel %vm662, %v657, %v661
          %v664 = vmul.f32 %v656, %v663
          %v665 = vsub.f32 %v644, %v664
          %v666 = vsub.f32 %v645, %v664
          %v667 = vsub.f32 %v646, %v664
          %v668 = vsub.f32 %v647, %v664
          %v669 = vmul.f32 %v665, %v665
          %v670 = vmul.f32 %v666, %v666
          %v671 = vmul.f32 %v667, %v667
          %v672 = vmul.f32 %v668, %v668
          %v673 = vadd.f32 %v669, %v670
          %v674 = vadd.f32 %v673, %v671
          %v675 = vadd.f32 %v674, %v672
          %v676 = vrot.slane %v675, 4
          %v677 = vadd.f32 %v675, %v676
          %v678 = vrot.slane %v677, 2
          %v679 = vadd.f32 %v677, %v678
          %v680 = vrot.slane %v679, 1
          %v681 = vadd.f32 %v679, %v680
          %v682 = vmul.f32 %v681, %v663
          %v683 = vadd.f32 %v682, 1e-05
          %v684 = vrsqrt.pop %v683
          %v685 = vmul.f32 %v684, %v683
          %v686 = vmul.f32 %v685, %v684
          %v687 = vmul.f32 0.5, %v686
          %v688 = vsub.f32 1.5, %v687
          %v689 = vmul.f32 %v684, %v688
          %vm690 = vweird.f32 %v683
          %vm691 = vweird.f32 %v684
          %vm692 = vmor %vm690, %vm691
          %v693 = vsel %vm692, %v684, %v689
          %v694 = vmul.f32 %v665, %v693
          %v695 = vmul.f32 %v666, %v693
          %v696 = vmul.f32 %v667, %v693
          %v697 = vmul.f32 %v668, %v693
          %v698 = vld [vmem:[%s2] sm:$0x1]
          %v700 = vperm.slane %v698, 0
          %v702 = vmul.f32 %v694, %v700
          %v703 = vmul.f32 %v695, %v700
          %v704 = vmul.f32 %v696, %v700
          %v705 = vmul.f32 %v697, %v700
          %v706 = vld [vmem:[%s3] sm:$0x1]
          %v708 = vperm.slane %v706, 0
          %v710 = vadd.f32 %v702, %v708
          %v711 = vadd.f32 %v703, %v708
          %v712 = vadd.f32 %v704, %v708
          %v713 = vadd.f32 %v705, %v708
          %vm714 = vcmp.gt.f32.partialorder %v710, 0.0
          %vm715 = vcmp.gt.f32.partialorder %v711, 0.0
          %vm716 = vcmp.gt.f32.partialorder %v712, 0.0
          %vm717 = vcmp.gt.f32.partialorder %v713, 0.0
          %v718 = vmul.f32 %v710, 0.2
          %v719 = vmul.f32 %v711, 0.2
          %v720 = vmul.f32 %v712, 0.2
          %v721 = vmul.f32 %v713, 0.2
          %v722 = vsel %vm714, %v710, %v718
          %v723 = vsel %vm715, %v711, %v719
          %v724 = vsel %vm716, %v712, %v720
          %v725 = vsel %vm717, %v713, %v721
          %v726 = vpack.c.bf16 %v722, %v722
          %v727 = vpack.c.bf16 %v723, %v723
          %v728 = vpack.c.bf16 %v724, %v724
          %v729 = vpack.c.bf16 %v725, %v725
          %730 = vst [vmem:[%s4] sm:$0xf] %v726
          %731 = vst [vmem:[%s4 + $0x4] sm:$0xf] %v727
          %732 = vst [vmem:[%s4 + $0x8] sm:$0xf] %v728
          %733 = vst [vmem:[%s4 + $0xc] sm:$0xf] %v729
        $region67: #{discriminator_forward.8} parent=54 // pred_fallthru
          _
        // Predicated region
        $region68: #{discriminator_forward.8} parent=54 // pred_check
          %p734 = pneg %p122
        $region69: #{discriminator_forward.8} parent=54 // pred_check_branch
          %736 = sbr.rel (%p734) target = $region71
        $region70: #{discriminator_forward.8} parent=54 // pred_region
          _
        $region71: #{discriminator_forward.8} parent=54 // pred_fallthru
          _
        // Predicated region
        $region72: #{discriminator_forward.8} parent=54 // pred_check
          %p737 = pneg %p122
        $region73: #{discriminator_forward.8} parent=54 // pred_check_branch
          %739 = sbr.rel (%p737) target = $region75
        $region74: #{discriminator_forward.8} parent=54 // pred_region
          _
        $region75: #{discriminator_forward.8} parent=54 // pred_fallthru
          _
      $region55: #{discriminator_forward.8} parent=5 // pred_fallthru
        _
      %p740 = scmp.le.s32.totalorder 2, %s10
      // Predicated region
      $region76: #{discriminator_forward.8} parent=5 // pred_check
        %p741 = pneg %p740
      $region77: #{discriminator_forward.8} parent=5 // pred_check_branch
        %743 = sbr.rel (%p741) target = $region79
      $region78: #{discriminator_forward.8} parent=5 // pred_region
        %s744 = ssub.s32 %s10, 2
      $region79: #{discriminator_forward.8} parent=5 // pred_fallthru
        _
    $region6: #{discriminator_forward.8} parent=1 // loop_footer
      %s14 = sadd.s32 1, %s10
    $region7: #{discriminator_forward.8} parent=1 // loop_footer_branch
      %9 = sbr.rel target = $region3
    $region8: #{discriminator_forward.8} parent=1 // loop_exit
      _

// kernel: discriminator_forward.9
$region0: #{discriminator_forward.9}
  #allocation0 [shape = 'u32[]', space=smem, size = 0x4, offset = 0x4, fixed_abs, tag = 'smem constant byte address 0x4 - core index']
  #allocation1 [shape = 'u32[72,128]{1,0:T(1,128)}', space=vmem, size = 0x9000, scoped, tag = 'internal scratch']
  %s0 = inlined_call_operand.vmem [shape: bf16[2,2048], index: 0, kind: input, shape index: {}]
  %s1 = inlined_call_operand.vmem [shape: bf16[2048,128], index: 1, kind: input, shape index: {}]
  %s2 = inlined_call_operand.vmem [shape: bf16[2,128], index: 2, kind: output, shape index: {}]
  %s3 = sld [smem:[#allocation0]]
  $region18: #{discriminator_forward.9} parent=0
    _
  %s5 = ssub.s32 1, %s3
  %s6 = scalar_select 0, %s5, %s3
  // Predicated region
  $region2: #{discriminator_forward.9} parent=0 // pred_check
    _
  $region3: #{discriminator_forward.9} parent=0 // pred_check_branch
    %8 = sbr.rel (0) target = $region5
  $region4: #{discriminator_forward.9} parent=0 // pred_region
    _
  $region5: #{discriminator_forward.9} parent=0 // pred_fallthru
    _
  // Predicated region
  $region6: #{discriminator_forward.9} parent=0 // pred_check
    _
  $region7: #{discriminator_forward.9} parent=0 // pred_check_branch
    %10 = sbr.rel (0) target = $region9
  $region8: #{discriminator_forward.9} parent=0 // pred_region
    _
  $region9: #{discriminator_forward.9} parent=0 // pred_fallthru
    _
  %v11 = vld [vmem:[%s0] sm:$0xff]
  %v12 = vld [vmem:[%s0 + $0x8] sm:$0xff]
  %v13 = vld [vmem:[%s1] sm:$0xf]
  %v14 = vld [vmem:[%s1 + $0x4] sm:$0xf]
  %v15 = vld [vmem:[%s1 + $0x8] sm:$0xf]
  %v16 = vld [vmem:[%s1 + $0xc] sm:$0xf]
  %v17 = vld [vmem:[%s1 + $0x10] sm:$0xf]
  %v18 = vld [vmem:[%s1 + $0x14] sm:$0xf]
  %v19 = vld [vmem:[%s1 + $0x18] sm:$0xf]
  %v20 = vld [vmem:[%s1 + $0x1c] sm:$0xf]
  %v21 = vld [vmem:[%s1 + $0x20] sm:$0xf]
  %v22 = vld [vmem:[%s1 + $0x24] sm:$0xf]
  %v23 = vld [vmem:[%s1 + $0x28] sm:$0xf]
  %v24 = vld [vmem:[%s1 + $0x2c] sm:$0xf]
  %v25 = vld [vmem:[%s1 + $0x30] sm:$0xf]
  %v26 = vld [vmem:[%s1 + $0x34] sm:$0xf]
  %v27 = vld [vmem:[%s1 + $0x38] sm:$0xf]
  %v28 = vld [vmem:[%s1 + $0x3c] sm:$0xf]
  %v29 = vld [vmem:[%s1 + $0x40] sm:$0xf]
  %v30 = vld [vmem:[%s1 + $0x44] sm:$0xf]
  %v31 = vld [vmem:[%s1 + $0x48] sm:$0xf]
  %v32 = vld [vmem:[%s1 + $0x4c] sm:$0xf]
  %v33 = vld [vmem:[%s1 + $0x50] sm:$0xf]
  %v34 = vld [vmem:[%s1 + $0x54] sm:$0xf]
  %v35 = vld [vmem:[%s1 + $0x58] sm:$0xf]
  %v36 = vld [vmem:[%s1 + $0x5c] sm:$0xf]
  %v37 = vld [vmem:[%s1 + $0x60] sm:$0xf]
  %v38 = vld [vmem:[%s1 + $0x64] sm:$0xf]
  %v39 = vld [vmem:[%s1 + $0x68] sm:$0xf]
  %v40 = vld [vmem:[%s1 + $0x6c] sm:$0xf]
  %v41 = vld [vmem:[%s1 + $0x70] sm:$0xf]
  %v42 = vld [vmem:[%s1 + $0x74] sm:$0xf]
  %v43 = vld [vmem:[%s1 + $0x78] sm:$0xf]
  %v44 = vld [vmem:[%s1 + $0x7c] sm:$0xf]
  %v45 = vld [vmem:[%s1 + $0x80] sm:$0xf]
  %v46 = vld [vmem:[%s1 + $0x84] sm:$0xf]
  %v47 = vld [vmem:[%s1 + $0x88] sm:$0xf]
  %v48 = vld [vmem:[%s1 + $0x8c] sm:$0xf]
  %v49 = vld [vmem:[%s1 + $0x90] sm:$0xf]
  %v50 = vld [vmem:[%s1 + $0x94] sm:$0xf]
  %v51 = vld [vmem:[%s1 + $0x98] sm:$0xf]
  %v52 = vld [vmem:[%s1 + $0x9c] sm:$0xf]
  %v53 = vld [vmem:[%s1 + $0xa0] sm:$0xf]
  %v54 = vld [vmem:[%s1 + $0xa4] sm:$0xf]
  %v55 = vld [vmem:[%s1 + $0xa8] sm:$0xf]
  %v56 = vld [vmem:[%s1 + $0xac] sm:$0xf]
  %v57 = vld [vmem:[%s1 + $0xb0] sm:$0xf]
  %v58 = vld [vmem:[%s1 + $0xb4] sm:$0xf]
  %v59 = vld [vmem:[%s1 + $0xb8] sm:$0xf]
  %v60 = vld [vmem:[%s1 + $0xbc] sm:$0xf]
  %v61 = vld [vmem:[%s1 + $0xc0] sm:$0xf]
  %v62 = vld [vmem:[%s1 + $0xc4] sm:$0xf]
  %v63 = vld [vmem:[%s1 + $0xc8] sm:$0xf]
  %v64 = vld [vmem:[%s1 + $0xcc] sm:$0xf]
  %v65 = vld [vmem:[%s1 + $0xd0] sm:$0xf]
  %v66 = vld [vmem:[%s1 + $0xd4] sm:$0xf]
  %v67 = vld [vmem:[%s1 + $0xd8] sm:$0xf]
  %v68 = vld [vmem:[%s1 + $0xdc] sm:$0xf]
  %v69 = vld [vmem:[%s1 + $0xe0] sm:$0xf]
  %v70 = vld [vmem:[%s1 + $0xe4] sm:$0xf]
  %v71 = vld [vmem:[%s1 + $0xe8] sm:$0xf]
  %v72 = vld [vmem:[%s1 + $0xec] sm:$0xf]
  %v73 = vld [vmem:[%s1 + $0xf0] sm:$0xf]
  %v74 = vld [vmem:[%s1 + $0xf4] sm:$0xf]
  %v75 = vld [vmem:[%s1 + $0xf8] sm:$0xf]
  %v76 = vld [vmem:[%s1 + $0xfc] sm:$0xf]
  %v77 = vld [vmem:[%s1 + $0x100] sm:$0xf]
  %v78 = vld [vmem:[%s1 + $0x104] sm:$0xf]
  %v79 = vld [vmem:[%s1 + $0x108] sm:$0xf]
  %v80 = vld [vmem:[%s1 + $0x10c] sm:$0xf]
  %v81 = vld [vmem:[%s1 + $0x110] sm:$0xf]
  %v82 = vld [vmem:[%s1 + $0x114] sm:$0xf]
  %v83 = vld [vmem:[%s1 + $0x118] sm:$0xf]
  %v84 = vld [vmem:[%s1 + $0x11c] sm:$0xf]
  %v85 = vld [vmem:[%s1 + $0x120] sm:$0xf]
  %v86 = vld [vmem:[%s1 + $0x124] sm:$0xf]
  %v87 = vld [vmem:[%s1 + $0x128] sm:$0xf]
  %v88 = vld [vmem:[%s1 + $0x12c] sm:$0xf]
  %v89 = vld [vmem:[%s1 + $0x130] sm:$0xf]
  %v90 = vld [vmem:[%s1 + $0x134] sm:$0xf]
  %v91 = vld [vmem:[%s1 + $0x138] sm:$0xf]
  %v92 = vld [vmem:[%s1 + $0x13c] sm:$0xf]
  %v93 = vld [vmem:[%s1 + $0x140] sm:$0xf]
  %v94 = vld [vmem:[%s1 + $0x144] sm:$0xf]
  %v95 = vld [vmem:[%s1 + $0x148] sm:$0xf]
  %v96 = vld [vmem:[%s1 + $0x14c] sm:$0xf]
  %v97 = vld [vmem:[%s1 + $0x150] sm:$0xf]
  %v98 = vld [vmem:[%s1 + $0x154] sm:$0xf]
  %v99 = vld [vmem:[%s1 + $0x158] sm:$0xf]
  %v100 = vld [vmem:[%s1 + $0x15c] sm:$0xf]
  %v101 = vld [vmem:[%s1 + $0x160] sm:$0xf]
  %v102 = vld [vmem:[%s1 + $0x164] sm:$0xf]
  %v103 = vld [vmem:[%s1 + $0x168] sm:$0xf]
  %v104 = vld [vmem:[%s1 + $0x16c] sm:$0xf]
  %v105 = vld [vmem:[%s1 + $0x170] sm:$0xf]
  %v106 = vld [vmem:[%s1 + $0x174] sm:$0xf]
  %v107 = vld [vmem:[%s1 + $0x178] sm:$0xf]
  %v108 = vld [vmem:[%s1 + $0x17c] sm:$0xf]
  %v109 = vld [vmem:[%s1 + $0x180] sm:$0xf]
  %v110 = vld [vmem:[%s1 + $0x184] sm:$0xf]
  %v111 = vld [vmem:[%s1 + $0x188] sm:$0xf]
  %v112 = vld [vmem:[%s1 + $0x18c] sm:$0xf]
  %v113 = vld [vmem:[%s1 + $0x190] sm:$0xf]
  %v114 = vld [vmem:[%s1 + $0x194] sm:$0xf]
  %v115 = vld [vmem:[%s1 + $0x198] sm:$0xf]
  %v116 = vld [vmem:[%s1 + $0x19c] sm:$0xf]
  %v117 = vld [vmem:[%s1 + $0x1a0] sm:$0xf]
  %v118 = vld [vmem:[%s1 + $0x1a4] sm:$0xf]
  %v119 = vld [vmem:[%s1 + $0x1a8] sm:$0xf]
  %v120 = vld [vmem:[%s1 + $0x1ac] sm:$0xf]
  %v121 = vld [vmem:[%s1 + $0x1b0] sm:$0xf]
  %v122 = vld [vmem:[%s1 + $0x1b4] sm:$0xf]
  %v123 = vld [vmem:[%s1 + $0x1b8] sm:$0xf]
  %v124 = vld [vmem:[%s1 + $0x1bc] sm:$0xf]
  %v125 = vld [vmem:[%s1 + $0x1c0] sm:$0xf]
  %v126 = vld [vmem:[%s1 + $0x1c4] sm:$0xf]
  %v127 = vld [vmem:[%s1 + $0x1c8] sm:$0xf]
  %v128 = vld [vmem:[%s1 + $0x1cc] sm:$0xf]
  %v129 = vld [vmem:[%s1 + $0x1d0] sm:$0xf]
  %v130 = vld [vmem:[%s1 + $0x1d4] sm:$0xf]
  %v131 = vld [vmem:[%s1 + $0x1d8] sm:$0xf]
  %v132 = vld [vmem:[%s1 + $0x1dc] sm:$0xf]
  %v133 = vld [vmem:[%s1 + $0x1e0] sm:$0xf]
  %v134 = vld [vmem:[%s1 + $0x1e4] sm:$0xf]
  %v135 = vld [vmem:[%s1 + $0x1e8] sm:$0xf]
  %v136 = vld [vmem:[%s1 + $0x1ec] sm:$0xf]
  %v137 = vld [vmem:[%s1 + $0x1f0] sm:$0xf]
  %v138 = vld [vmem:[%s1 + $0x1f4] sm:$0xf]
  %v139 = vld [vmem:[%s1 + $0x1f8] sm:$0xf]
  %v140 = vld [vmem:[%s1 + $0x1fc] sm:$0xf]
  %v141 = vld [vmem:[%s1 + $0x200] sm:$0xf]
  %v142 = vld [vmem:[%s1 + $0x204] sm:$0xf]
  %v143 = vld [vmem:[%s1 + $0x208] sm:$0xf]
  %v144 = vld [vmem:[%s1 + $0x20c] sm:$0xf]
  %v145 = vld [vmem:[%s1 + $0x210] sm:$0xf]
  %v146 = vld [vmem:[%s1 + $0x214] sm:$0xf]
  %v147 = vld [vmem:[%s1 + $0x218] sm:$0xf]
  %v148 = vld [vmem:[%s1 + $0x21c] sm:$0xf]
  %v149 = vld [vmem:[%s1 + $0x220] sm:$0xf]
  %v150 = vld [vmem:[%s1 + $0x224] sm:$0xf]
  %v151 = vld [vmem:[%s1 + $0x228] sm:$0xf]
  %v152 = vld [vmem:[%s1 + $0x22c] sm:$0xf]
  %v153 = vld [vmem:[%s1 + $0x230] sm:$0xf]
  %v154 = vld [vmem:[%s1 + $0x234] sm:$0xf]
  %v155 = vld [vmem:[%s1 + $0x238] sm:$0xf]
  %v156 = vld [vmem:[%s1 + $0x23c] sm:$0xf]
  %v157 = vld [vmem:[%s1 + $0x240] sm:$0xf]
  %v158 = vld [vmem:[%s1 + $0x244] sm:$0xf]
  %v159 = vld [vmem:[%s1 + $0x248] sm:$0xf]
  %v160 = vld [vmem:[%s1 + $0x24c] sm:$0xf]
  %v161 = vld [vmem:[%s1 + $0x250] sm:$0xf]
  %v162 = vld [vmem:[%s1 + $0x254] sm:$0xf]
  %v163 = vld [vmem:[%s1 + $0x258] sm:$0xf]
  %v164 = vld [vmem:[%s1 + $0x25c] sm:$0xf]
  %v165 = vld [vmem:[%s1 + $0x260] sm:$0xf]
  %v166 = vld [vmem:[%s1 + $0x264] sm:$0xf]
  %v167 = vld [vmem:[%s1 + $0x268] sm:$0xf]
  %v168 = vld [vmem:[%s1 + $0x26c] sm:$0xf]
  %v169 = vld [vmem:[%s1 + $0x270] sm:$0xf]
  %v170 = vld [vmem:[%s1 + $0x274] sm:$0xf]
  %v171 = vld [vmem:[%s1 + $0x278] sm:$0xf]
  %v172 = vld [vmem:[%s1 + $0x27c] sm:$0xf]
  %v173 = vld [vmem:[%s1 + $0x280] sm:$0xf]
  %v174 = vld [vmem:[%s1 + $0x284] sm:$0xf]
  %v175 = vld [vmem:[%s1 + $0x288] sm:$0xf]
  %v176 = vld [vmem:[%s1 + $0x28c] sm:$0xf]
  %v177 = vld [vmem:[%s1 + $0x290] sm:$0xf]
  %v178 = vld [vmem:[%s1 + $0x294] sm:$0xf]
  %v179 = vld [vmem:[%s1 + $0x298] sm:$0xf]
  %v180 = vld [vmem:[%s1 + $0x29c] sm:$0xf]
  %v181 = vld [vmem:[%s1 + $0x2a0] sm:$0xf]
  %v182 = vld [vmem:[%s1 + $0x2a4] sm:$0xf]
  %v183 = vld [vmem:[%s1 + $0x2a8] sm:$0xf]
  %v184 = vld [vmem:[%s1 + $0x2ac] sm:$0xf]
  %v185 = vld [vmem:[%s1 + $0x2b0] sm:$0xf]
  %v186 = vld [vmem:[%s1 + $0x2b4] sm:$0xf]
  %v187 = vld [vmem:[%s1 + $0x2b8] sm:$0xf]
  %v188 = vld [vmem:[%s1 + $0x2bc] sm:$0xf]
  %v189 = vld [vmem:[%s1 + $0x2c0] sm:$0xf]
  %v190 = vld [vmem:[%s1 + $0x2c4] sm:$0xf]
  %v191 = vld [vmem:[%s1 + $0x2c8] sm:$0xf]
  %v192 = vld [vmem:[%s1 + $0x2cc] sm:$0xf]
  %v193 = vld [vmem:[%s1 + $0x2d0] sm:$0xf]
  %v194 = vld [vmem:[%s1 + $0x2d4] sm:$0xf]
  %v195 = vld [vmem:[%s1 + $0x2d8] sm:$0xf]
  %v196 = vld [vmem:[%s1 + $0x2dc] sm:$0xf]
  %v197 = vld [vmem:[%s1 + $0x2e0] sm:$0xf]
  %v198 = vld [vmem:[%s1 + $0x2e4] sm:$0xf]
  %v199 = vld [vmem:[%s1 + $0x2e8] sm:$0xf]
  %v200 = vld [vmem:[%s1 + $0x2ec] sm:$0xf]
  %v201 = vld [vmem:[%s1 + $0x2f0] sm:$0xf]
  %v202 = vld [vmem:[%s1 + $0x2f4] sm:$0xf]
  %v203 = vld [vmem:[%s1 + $0x2f8] sm:$0xf]
  %v204 = vld [vmem:[%s1 + $0x2fc] sm:$0xf]
  %v205 = vld [vmem:[%s1 + $0x300] sm:$0xf]
  %v206 = vld [vmem:[%s1 + $0x304] sm:$0xf]
  %v207 = vld [vmem:[%s1 + $0x308] sm:$0xf]
  %v208 = vld [vmem:[%s1 + $0x30c] sm:$0xf]
  %v209 = vld [vmem:[%s1 + $0x310] sm:$0xf]
  %v210 = vld [vmem:[%s1 + $0x314] sm:$0xf]
  %v211 = vld [vmem:[%s1 + $0x318] sm:$0xf]
  %v212 = vld [vmem:[%s1 + $0x31c] sm:$0xf]
  %v213 = vld [vmem:[%s1 + $0x320] sm:$0xf]
  %v214 = vld [vmem:[%s1 + $0x324] sm:$0xf]
  %v215 = vld [vmem:[%s1 + $0x328] sm:$0xf]
  %v216 = vld [vmem:[%s1 + $0x32c] sm:$0xf]
  %v217 = vld [vmem:[%s1 + $0x330] sm:$0xf]
  %v218 = vld [vmem:[%s1 + $0x334] sm:$0xf]
  %v219 = vld [vmem:[%s1 + $0x338] sm:$0xf]
  %v220 = vld [vmem:[%s1 + $0x33c] sm:$0xf]
  %v221 = vld [vmem:[%s1 + $0x340] sm:$0xf]
  %v222 = vld [vmem:[%s1 + $0x344] sm:$0xf]
  %v223 = vld [vmem:[%s1 + $0x348] sm:$0xf]
  %v224 = vld [vmem:[%s1 + $0x34c] sm:$0xf]
  %v225 = vld [vmem:[%s1 + $0x350] sm:$0xf]
  %v226 = vld [vmem:[%s1 + $0x354] sm:$0xf]
  %v227 = vld [vmem:[%s1 + $0x358] sm:$0xf]
  %v228 = vld [vmem:[%s1 + $0x35c] sm:$0xf]
  %v229 = vld [vmem:[%s1 + $0x360] sm:$0xf]
  %v230 = vld [vmem:[%s1 + $0x364] sm:$0xf]
  %v231 = vld [vmem:[%s1 + $0x368] sm:$0xf]
  %v232 = vld [vmem:[%s1 + $0x36c] sm:$0xf]
  %v233 = vld [vmem:[%s1 + $0x370] sm:$0xf]
  %v234 = vld [vmem:[%s1 + $0x374] sm:$0xf]
  %v235 = vld [vmem:[%s1 + $0x378] sm:$0xf]
  %v236 = vld [vmem:[%s1 + $0x37c] sm:$0xf]
  %v237 = vld [vmem:[%s1 + $0x380] sm:$0xf]
  %v238 = vld [vmem:[%s1 + $0x384] sm:$0xf]
  %v239 = vld [vmem:[%s1 + $0x388] sm:$0xf]
  %v240 = vld [vmem:[%s1 + $0x38c] sm:$0xf]
  %v241 = vld [vmem:[%s1 + $0x390] sm:$0xf]
  %v242 = vld [vmem:[%s1 + $0x394] sm:$0xf]
  %v243 = vld [vmem:[%s1 + $0x398] sm:$0xf]
  %v244 = vld [vmem:[%s1 + $0x39c] sm:$0xf]
  %v245 = vld [vmem:[%s1 + $0x3a0] sm:$0xf]
  %v246 = vld [vmem:[%s1 + $0x3a4] sm:$0xf]
  %v247 = vld [vmem:[%s1 + $0x3a8] sm:$0xf]
  %v248 = vld [vmem:[%s1 + $0x3ac] sm:$0xf]
  %v249 = vld [vmem:[%s1 + $0x3b0] sm:$0xf]
  %v250 = vld [vmem:[%s1 + $0x3b4] sm:$0xf]
  %v251 = vld [vmem:[%s1 + $0x3b8] sm:$0xf]
  %v252 = vld [vmem:[%s1 + $0x3bc] sm:$0xf]
  %v253 = vld [vmem:[%s1 + $0x3c0] sm:$0xf]
  %v254 = vld [vmem:[%s1 + $0x3c4] sm:$0xf]
  %v255 = vld [vmem:[%s1 + $0x3c8] sm:$0xf]
  %v256 = vld [vmem:[%s1 + $0x3cc] sm:$0xf]
  %v257 = vld [vmem:[%s1 + $0x3d0] sm:$0xf]
  %v258 = vld [vmem:[%s1 + $0x3d4] sm:$0xf]
  %v259 = vld [vmem:[%s1 + $0x3d8] sm:$0xf]
  %v260 = vld [vmem:[%s1 + $0x3dc] sm:$0xf]
  %v261 = vld [vmem:[%s1 + $0x3e0] sm:$0xf]
  %v262 = vld [vmem:[%s1 + $0x3e4] sm:$0xf]
  %v263 = vld [vmem:[%s1 + $0x3e8] sm:$0xf]
  %v264 = vld [vmem:[%s1 + $0x3ec] sm:$0xf]
  %v265 = vld [vmem:[%s1 + $0x3f0] sm:$0xf]
  %v266 = vld [vmem:[%s1 + $0x3f4] sm:$0xf]
  %v267 = vld [vmem:[%s1 + $0x3f8] sm:$0xf]
  %v268 = vld [vmem:[%s1 + $0x3fc] sm:$0xf]
  %270 = vst [vmem:[#allocation1] ss:$9 sm:$0xff] %v11
  %v271 = vld [vmem:[#allocation1] sm:$0xff]
  %v272 = vld [vmem:[#allocation1 + $0x9] sm:$0xff]
  %v273 = vld [vmem:[#allocation1 + $0x12] sm:$0xff]
  %v274 = vld [vmem:[#allocation1 + $0x1b] sm:$0xff]
  %v275 = vld [vmem:[#allocation1 + $0x24] sm:$0xff]
  %v276 = vld [vmem:[#allocation1 + $0x2d] sm:$0xff]
  %v277 = vld [vmem:[#allocation1 + $0x36] sm:$0xff]
  %v278 = vld [vmem:[#allocation1 + $0x3f] sm:$0xff]
  %280 = vst [vmem:[#allocation1] ss:$9 sm:$0xff] %v12
  %v281 = vld [vmem:[#allocation1] sm:$0xff]
  %v282 = vld [vmem:[#allocation1 + $0x9] sm:$0xff]
  %v283 = vld [vmem:[#allocation1 + $0x12] sm:$0xff]
  %v284 = vld [vmem:[#allocation1 + $0x1b] sm:$0xff]
  %v285 = vld [vmem:[#allocation1 + $0x24] sm:$0xff]
  %v286 = vld [vmem:[#allocation1 + $0x2d] sm:$0xff]
  %v287 = vld [vmem:[#allocation1 + $0x36] sm:$0xff]
  %v288 = vld [vmem:[#allocation1 + $0x3f] sm:$0xff]
  %v561 = vunpack.c.l.b16 %v13
  %v562 = vunpack.c.l.b16 %v14
  %v563 = vunpack.c.l.b16 %v15
  %v564 = vunpack.c.l.b16 %v16
  %v565 = vunpack.c.l.b16 %v17
  %v566 = vunpack.c.l.b16 %v18
  %v567 = vunpack.c.l.b16 %v19
  %v568 = vunpack.c.l.b16 %v20
  %v569 = vunpack.c.l.b16 %v21
  %v570 = vunpack.c.l.b16 %v22
  %v571 = vunpack.c.l.b16 %v23
  %v572 = vunpack.c.l.b16 %v24
  %v573 = vunpack.c.l.b16 %v25
  %v574 = vunpack.c.l.b16 %v26
  %v575 = vunpack.c.l.b16 %v27
  %v576 = vunpack.c.l.b16 %v28
  %v577 = vunpack.c.l.b16 %v29
  %v578 = vunpack.c.l.b16 %v30
  %v579 = vunpack.c.l.b16 %v31
  %v580 = vunpack.c.l.b16 %v32
  %v581 = vunpack.c.l.b16 %v33
  %v582 = vunpack.c.l.b16 %v34
  %v583 = vunpack.c.l.b16 %v35
  %v584 = vunpack.c.l.b16 %v36
  %v585 = vunpack.c.l.b16 %v37
  %v586 = vunpack.c.l.b16 %v38
  %v587 = vunpack.c.l.b16 %v39
  %v588 = vunpack.c.l.b16 %v40
  %v589 = vunpack.c.l.b16 %v41
  %v590 = vunpack.c.l.b16 %v42
  %v591 = vunpack.c.l.b16 %v43
  %v592 = vunpack.c.l.b16 %v44
  %v593 = vunpack.c.l.b16 %v45
  %v594 = vunpack.c.l.b16 %v46
  %v595 = vunpack.c.l.b16 %v47
  %v596 = vunpack.c.l.b16 %v48
  %v597 = vunpack.c.l.b16 %v49
  %v598 = vunpack.c.l.b16 %v50
  %v599 = vunpack.c.l.b16 %v51
  %v600 = vunpack.c.l.b16 %v52
  %v601 = vunpack.c.l.b16 %v53
  %v602 = vunpack.c.l.b16 %v54
  %v603 = vunpack.c.l.b16 %v55
  %v604 = vunpack.c.l.b16 %v56
  %v605 = vunpack.c.l.b16 %v57
  %v606 = vunpack.c.l.b16 %v58
  %v607 = vunpack.c.l.b16 %v59
  %v608 = vunpack.c.l.b16 %v60
  %v609 = vunpack.c.l.b16 %v61
  %v610 = vunpack.c.l.b16 %v62
  %v611 = vunpack.c.l.b16 %v63
  %v612 = vunpack.c.l.b16 %v64
  %v613 = vunpack.c.l.b16 %v65
  %v614 = vunpack.c.l.b16 %v66
  %v615 = vunpack.c.l.b16 %v67
  %v616 = vunpack.c.l.b16 %v68
  %v617 = vunpack.c.l.b16 %v69
  %v618 = vunpack.c.l.b16 %v70
  %v619 = vunpack.c.l.b16 %v71
  %v620 = vunpack.c.l.b16 %v72
  %v621 = vunpack.c.l.b16 %v73
  %v622 = vunpack.c.l.b16 %v74
  %v623 = vunpack.c.l.b16 %v75
  %v624 = vunpack.c.l.b16 %v76
  %v625 = vunpack.c.l.b16 %v77
  %v626 = vunpack.c.l.b16 %v78
  %v627 = vunpack.c.l.b16 %v79
  %v628 = vunpack.c.l.b16 %v80
  %v629 = vunpack.c.l.b16 %v81
  %v630 = vunpack.c.l.b16 %v82
  %v631 = vunpack.c.l.b16 %v83
  %v632 = vunpack.c.l.b16 %v84
  %v633 = vunpack.c.l.b16 %v85
  %v634 = vunpack.c.l.b16 %v86
  %v635 = vunpack.c.l.b16 %v87
  %v636 = vunpack.c.l.b16 %v88
  %v637 = vunpack.c.l.b16 %v89
  %v638 = vunpack.c.l.b16 %v90
  %v639 = vunpack.c.l.b16 %v91
  %v640 = vunpack.c.l.b16 %v92
  %v641 = vunpack.c.l.b16 %v93
  %v642 = vunpack.c.l.b16 %v94
  %v643 = vunpack.c.l.b16 %v95
  %v644 = vunpack.c.l.b16 %v96
  %v645 = vunpack.c.l.b16 %v97
  %v646 = vunpack.c.l.b16 %v98
  %v647 = vunpack.c.l.b16 %v99
  %v648 = vunpack.c.l.b16 %v100
  %v649 = vunpack.c.l.b16 %v101
  %v650 = vunpack.c.l.b16 %v102
  %v651 = vunpack.c.l.b16 %v103
  %v652 = vunpack.c.l.b16 %v104
  %v653 = vunpack.c.l.b16 %v105
  %v654 = vunpack.c.l.b16 %v106
  %v655 = vunpack.c.l.b16 %v107
  %v656 = vunpack.c.l.b16 %v108
  %v657 = vunpack.c.l.b16 %v109
  %v658 = vunpack.c.l.b16 %v110
  %v659 = vunpack.c.l.b16 %v111
  %v660 = vunpack.c.l.b16 %v112
  %v661 = vunpack.c.l.b16 %v113
  %v662 = vunpack.c.l.b16 %v114
  %v663 = vunpack.c.l.b16 %v115
  %v664 = vunpack.c.l.b16 %v116
  %v665 = vunpack.c.l.b16 %v117
  %v666 = vunpack.c.l.b16 %v118
  %v667 = vunpack.c.l.b16 %v119
  %v668 = vunpack.c.l.b16 %v120
  %v669 = vunpack.c.l.b16 %v121
  %v670 = vunpack.c.l.b16 %v122
  %v671 = vunpack.c.l.b16 %v123
  %v672 = vunpack.c.l.b16 %v124
  %v673 = vunpack.c.l.b16 %v125
  %v674 = vunpack.c.l.b16 %v126
  %v675 = vunpack.c.l.b16 %v127
  %v676 = vunpack.c.l.b16 %v128
  %v677 = vunpack.c.l.b16 %v129
  %v678 = vunpack.c.l.b16 %v130
  %v679 = vunpack.c.l.b16 %v131
  %v680 = vunpack.c.l.b16 %v132
  %v681 = vunpack.c.l.b16 %v133
  %v682 = vunpack.c.l.b16 %v134
  %v683 = vunpack.c.l.b16 %v135
  %v684 = vunpack.c.l.b16 %v136
  %v685 = vunpack.c.l.b16 %v137
  %v686 = vunpack.c.l.b16 %v138
  %v687 = vunpack.c.l.b16 %v139
  %v688 = vunpack.c.l.b16 %v140
  %v689 = vunpack.c.l.b16 %v141
  %v690 = vunpack.c.l.b16 %v142
  %v691 = vunpack.c.l.b16 %v143
  %v692 = vunpack.c.l.b16 %v144
  %v693 = vunpack.c.l.b16 %v145
  %v694 = vunpack.c.l.b16 %v146
  %v695 = vunpack.c.l.b16 %v147
  %v696 = vunpack.c.l.b16 %v148
  %v697 = vunpack.c.l.b16 %v149
  %v698 = vunpack.c.l.b16 %v150
  %v699 = vunpack.c.l.b16 %v151
  %v700 = vunpack.c.l.b16 %v152
  %v701 = vunpack.c.l.b16 %v153
  %v702 = vunpack.c.l.b16 %v154
  %v703 = vunpack.c.l.b16 %v155
  %v704 = vunpack.c.l.b16 %v156
  %v705 = vunpack.c.l.b16 %v157
  %v706 = vunpack.c.l.b16 %v158
  %v707 = vunpack.c.l.b16 %v159
  %v708 = vunpack.c.l.b16 %v160
  %v709 = vunpack.c.l.b16 %v161
  %v710 = vunpack.c.l.b16 %v162
  %v711 = vunpack.c.l.b16 %v163
  %v712 = vunpack.c.l.b16 %v164
  %v713 = vunpack.c.l.b16 %v165
  %v714 = vunpack.c.l.b16 %v166
  %v715 = vunpack.c.l.b16 %v167
  %v716 = vunpack.c.l.b16 %v168
  %v717 = vunpack.c.l.b16 %v169
  %v718 = vunpack.c.l.b16 %v170
  %v719 = vunpack.c.l.b16 %v171
  %v720 = vunpack.c.l.b16 %v172
  %v721 = vunpack.c.l.b16 %v173
  %v722 = vunpack.c.l.b16 %v174
  %v723 = vunpack.c.l.b16 %v175
  %v724 = vunpack.c.l.b16 %v176
  %v725 = vunpack.c.l.b16 %v177
  %v726 = vunpack.c.l.b16 %v178
  %v727 = vunpack.c.l.b16 %v179
  %v728 = vunpack.c.l.b16 %v180
  %v729 = vunpack.c.l.b16 %v181
  %v730 = vunpack.c.l.b16 %v182
  %v731 = vunpack.c.l.b16 %v183
  %v732 = vunpack.c.l.b16 %v184
  %v733 = vunpack.c.l.b16 %v185
  %v734 = vunpack.c.l.b16 %v186
  %v735 = vunpack.c.l.b16 %v187
  %v736 = vunpack.c.l.b16 %v188
  %v737 = vunpack.c.l.b16 %v189
  %v738 = vunpack.c.l.b16 %v190
  %v739 = vunpack.c.l.b16 %v191
  %v740 = vunpack.c.l.b16 %v192
  %v741 = vunpack.c.l.b16 %v193
  %v742 = vunpack.c.l.b16 %v194
  %v743 = vunpack.c.l.b16 %v195
  %v744 = vunpack.c.l.b16 %v196
  %v745 = vunpack.c.l.b16 %v197
  %v746 = vunpack.c.l.b16 %v198
  %v747 = vunpack.c.l.b16 %v199
  %v748 = vunpack.c.l.b16 %v200
  %v749 = vunpack.c.l.b16 %v201
  %v750 = vunpack.c.l.b16 %v202
  %v751 = vunpack.c.l.b16 %v203
  %v752 = vunpack.c.l.b16 %v204
  %v753 = vunpack.c.l.b16 %v205
  %v754 = vunpack.c.l.b16 %v206
  %v755 = vunpack.c.l.b16 %v207
  %v756 = vunpack.c.l.b16 %v208
  %v757 = vunpack.c.l.b16 %v209
  %v758 = vunpack.c.l.b16 %v210
  %v759 = vunpack.c.l.b16 %v211
  %v760 = vunpack.c.l.b16 %v212
  %v761 = vunpack.c.l.b16 %v213
  %v762 = vunpack.c.l.b16 %v214
  %v763 = vunpack.c.l.b16 %v215
  %v764 = vunpack.c.l.b16 %v216
  %v765 = vunpack.c.l.b16 %v217
  %v766 = vunpack.c.l.b16 %v218
  %v767 = vunpack.c.l.b16 %v219
  %v768 = vunpack.c.l.b16 %v220
  %v769 = vunpack.c.l.b16 %v221
  %v770 = vunpack.c.l.b16 %v222
  %v771 = vunpack.c.l.b16 %v223
  %v772 = vunpack.c.l.b16 %v224
  %v773 = vunpack.c.l.b16 %v225
  %v774 = vunpack.c.l.b16 %v226
  %v775 = vunpack.c.l.b16 %v227
  %v776 = vunpack.c.l.b16 %v228
  %v777 = vunpack.c.l.b16 %v229
  %v778 = vunpack.c.l.b16 %v230
  %v779 = vunpack.c.l.b16 %v231
  %v780 = vunpack.c.l.b16 %v232
  %v781 = vunpack.c.l.b16 %v233
  %v782 = vunpack.c.l.b16 %v234
  %v783 = vunpack.c.l.b16 %v235
  %v784 = vunpack.c.l.b16 %v236
  %v785 = vunpack.c.l.b16 %v237
  %v786 = vunpack.c.l.b16 %v238
  %v787 = vunpack.c.l.b16 %v239
  %v788 = vunpack.c.l.b16 %v240
  %v789 = vunpack.c.l.b16 %v241
  %v790 = vunpack.c.l.b16 %v242
  %v791 = vunpack.c.l.b16 %v243
  %v792 = vunpack.c.l.b16 %v244
  %v793 = vunpack.c.l.b16 %v245
  %v794 = vunpack.c.l.b16 %v246
  %v795 = vunpack.c.l.b16 %v247
  %v796 = vunpack.c.l.b16 %v248
  %v797 = vunpack.c.l.b16 %v249
  %v798 = vunpack.c.l.b16 %v250
  %v799 = vunpack.c.l.b16 %v251
  %v800 = vunpack.c.l.b16 %v252
  %v801 = vunpack.c.l.b16 %v253
  %v802 = vunpack.c.l.b16 %v254
  %v803 = vunpack.c.l.b16 %v255
  %v804 = vunpack.c.l.b16 %v256
  %v805 = vunpack.c.l.b16 %v257
  %v806 = vunpack.c.l.b16 %v258
  %v807 = vunpack.c.l.b16 %v259
  %v808 = vunpack.c.l.b16 %v260
  %v809 = vunpack.c.l.b16 %v261
  %v810 = vunpack.c.l.b16 %v262
  %v811 = vunpack.c.l.b16 %v263
  %v812 = vunpack.c.l.b16 %v264
  %v813 = vunpack.c.l.b16 %v265
  %v814 = vunpack.c.l.b16 %v266
  %v815 = vunpack.c.l.b16 %v267
  %v816 = vunpack.c.l.b16 %v268
  %v817 = vpack.c.b16 %v562, %v561
  %v818 = vpack.c.b16 %v564, %v563
  %v819 = vpack.c.b16 %v566, %v565
  %v820 = vpack.c.b16 %v568, %v567
  %v821 = vpack.c.b16 %v570, %v569
  %v822 = vpack.c.b16 %v572, %v571
  %v823 = vpack.c.b16 %v574, %v573
  %v824 = vpack.c.b16 %v576, %v575
  %v825 = vpack.c.b16 %v578, %v577
  %v826 = vpack.c.b16 %v580, %v579
  %v827 = vpack.c.b16 %v582, %v581
  %v828 = vpack.c.b16 %v584, %v583
  %v829 = vpack.c.b16 %v586, %v585
  %v830 = vpack.c.b16 %v588, %v587
  %v831 = vpack.c.b16 %v590, %v589
  %v832 = vpack.c.b16 %v592, %v591
  %v833 = vpack.c.b16 %v594, %v593
  %v834 = vpack.c.b16 %v596, %v595
  %v835 = vpack.c.b16 %v598, %v597
  %v836 = vpack.c.b16 %v600, %v599
  %v837 = vpack.c.b16 %v602, %v601
  %v838 = vpack.c.b16 %v604, %v603
  %v839 = vpack.c.b16 %v606, %v605
  %v840 = vpack.c.b16 %v608, %v607
  %v841 = vpack.c.b16 %v610, %v609
  %v842 = vpack.c.b16 %v612, %v611
  %v843 = vpack.c.b16 %v614, %v613
  %v844 = vpack.c.b16 %v616, %v615
  %v845 = vpack.c.b16 %v618, %v617
  %v846 = vpack.c.b16 %v620, %v619
  %v847 = vpack.c.b16 %v622, %v621
  %v848 = vpack.c.b16 %v624, %v623
  %v849 = vpack.c.b16 %v626, %v625
  %v850 = vpack.c.b16 %v628, %v627
  %v851 = vpack.c.b16 %v630, %v629
  %v852 = vpack.c.b16 %v632, %v631
  %v853 = vpack.c.b16 %v634, %v633
  %v854 = vpack.c.b16 %v636, %v635
  %v855 = vpack.c.b16 %v638, %v637
  %v856 = vpack.c.b16 %v640, %v639
  %v857 = vpack.c.b16 %v642, %v641
  %v858 = vpack.c.b16 %v644, %v643
  %v859 = vpack.c.b16 %v646, %v645
  %v860 = vpack.c.b16 %v648, %v647
  %v861 = vpack.c.b16 %v650, %v649
  %v862 = vpack.c.b16 %v652, %v651
  %v863 = vpack.c.b16 %v654, %v653
  %v864 = vpack.c.b16 %v656, %v655
  %v865 = vpack.c.b16 %v658, %v657
  %v866 = vpack.c.b16 %v660, %v659
  %v867 = vpack.c.b16 %v662, %v661
  %v868 = vpack.c.b16 %v664, %v663
  %v869 = vpack.c.b16 %v666, %v665
  %v870 = vpack.c.b16 %v668, %v667
  %v871 = vpack.c.b16 %v670, %v669
  %v872 = vpack.c.b16 %v672, %v671
  %v873 = vpack.c.b16 %v674, %v673
  %v874 = vpack.c.b16 %v676, %v675
  %v875 = vpack.c.b16 %v678, %v677
  %v876 = vpack.c.b16 %v680, %v679
  %v877 = vpack.c.b16 %v682, %v681
  %v878 = vpack.c.b16 %v684, %v683
  %v879 = vpack.c.b16 %v686, %v685
  %v880 = vpack.c.b16 %v688, %v687
  %v881 = vpack.c.b16 %v690, %v689
  %v882 = vpack.c.b16 %v692, %v691
  %v883 = vpack.c.b16 %v694, %v693
  %v884 = vpack.c.b16 %v696, %v695
  %v885 = vpack.c.b16 %v698, %v697
  %v886 = vpack.c.b16 %v700, %v699
  %v887 = vpack.c.b16 %v702, %v701
  %v888 = vpack.c.b16 %v704, %v703
  %v889 = vpack.c.b16 %v706, %v705
  %v890 = vpack.c.b16 %v708, %v707
  %v891 = vpack.c.b16 %v710, %v709
  %v892 = vpack.c.b16 %v712, %v711
  %v893 = vpack.c.b16 %v714, %v713
  %v894 = vpack.c.b16 %v716, %v715
  %v895 = vpack.c.b16 %v718, %v717
  %v896 = vpack.c.b16 %v720, %v719
  %v897 = vpack.c.b16 %v722, %v721
  %v898 = vpack.c.b16 %v724, %v723
  %v899 = vpack.c.b16 %v726, %v725
  %v900 = vpack.c.b16 %v728, %v727
  %v901 = vpack.c.b16 %v730, %v729
  %v902 = vpack.c.b16 %v732, %v731
  %v903 = vpack.c.b16 %v734, %v733
  %v904 = vpack.c.b16 %v736, %v735
  %v905 = vpack.c.b16 %v738, %v737
  %v906 = vpack.c.b16 %v740, %v739
  %v907 = vpack.c.b16 %v742, %v741
  %v908 = vpack.c.b16 %v744, %v743
  %v909 = vpack.c.b16 %v746, %v745
  %v910 = vpack.c.b16 %v748, %v747
  %v911 = vpack.c.b16 %v750, %v749
  %v912 = vpack.c.b16 %v752, %v751
  %v913 = vpack.c.b16 %v754, %v753
  %v914 = vpack.c.b16 %v756, %v755
  %v915 = vpack.c.b16 %v758, %v757
  %v916 = vpack.c.b16 %v760, %v759
  %v917 = vpack.c.b16 %v762, %v761
  %v918 = vpack.c.b16 %v764, %v763
  %v919 = vpack.c.b16 %v766, %v765
  %v920 = vpack.c.b16 %v768, %v767
  %v921 = vpack.c.b16 %v770, %v769
  %v922 = vpack.c.b16 %v772, %v771
  %v923 = vpack.c.b16 %v774, %v773
  %v924 = vpack.c.b16 %v776, %v775
  %v925 = vpack.c.b16 %v778, %v777
  %v926 = vpack.c.b16 %v780, %v779
  %v927 = vpack.c.b16 %v782, %v781
  %v928 = vpack.c.b16 %v784, %v783
  %v929 = vpack.c.b16 %v786, %v785
  %v930 = vpack.c.b16 %v788, %v787
  %v931 = vpack.c.b16 %v790, %v789
  %v932 = vpack.c.b16 %v792, %v791
  %v933 = vpack.c.b16 %v794, %v793
  %v934 = vpack.c.b16 %v796, %v795
  %v935 = vpack.c.b16 %v798, %v797
  %v936 = vpack.c.b16 %v800, %v799
  %v937 = vpack.c.b16 %v802, %v801
  %v938 = vpack.c.b16 %v804, %v803
  %v939 = vpack.c.b16 %v806, %v805
  %v940 = vpack.c.b16 %v808, %v807
  %v941 = vpack.c.b16 %v810, %v809
  %v942 = vpack.c.b16 %v812, %v811
  %v943 = vpack.c.b16 %v814, %v813
  %v944 = vpack.c.b16 %v816, %v815
  %1073 = vmatpush.bf16.msra.mxu0 %v824
  %1074 = vmatpush.bf16.msra.mxu0 %v823
  %1075 = vmatpush.bf16.msra.mxu0 %v822
  %1076 = vmatpush.bf16.msra.mxu0 %v821
  %1077 = vmatpush.bf16.msra.mxu0 %v820
  %1078 = vmatpush.bf16.msra.mxu0 %v819
  %1079 = vmatpush.bf16.msra.mxu0 %v818
  %1080 = vmatpush.bf16.msra.mxu0 %v817
  %1081 = vmatmul.bf16.gmra.mxu0 %v271
  %v1082 = vpop.f32.mrf.mxu0
  %v1083 = vadd.f32 0.0, %v1082
  %v1084 = vpop.f32.mrf.mxu0
  %1085 = vdwg.mxu0
  %1086 = vmatpush.bf16.msra.mxu0 %v832
  %1087 = vmatpush.bf16.msra.mxu0 %v831
  %1088 = vmatpush.bf16.msra.mxu0 %v830
  %1089 = vmatpush.bf16.msra.mxu0 %v829
  %1090 = vmatpush.bf16.msra.mxu0 %v828
  %1091 = vmatpush.bf16.msra.mxu0 %v827
  %1092 = vmatpush.bf16.msra.mxu0 %v826
  %1093 = vmatpush.bf16.msra.mxu0 %v825
  %1094 = vmatmul.bf16.gmra.mxu0 %v272
  %v1095 = vpop.f32.mrf.mxu0
  %v1096 = vadd.f32 %v1083, %v1095
  %v1097 = vpop.f32.mrf.mxu0
  %1098 = vdwg.mxu0
  %1099 = vmatpush.bf16.msra.mxu0 %v840
  %1100 = vmatpush.bf16.msra.mxu0 %v839
  %1101 = vmatpush.bf16.msra.mxu0 %v838
  %1102 = vmatpush.bf16.msra.mxu0 %v837
  %1103 = vmatpush.bf16.msra.mxu0 %v836
  %1104 = vmatpush.bf16.msra.mxu0 %v835
  %1105 = vmatpush.bf16.msra.mxu0 %v834
  %1106 = vmatpush.bf16.msra.mxu0 %v833
  %1107 = vmatmul.bf16.gmra.mxu0 %v273
  %v1108 = vpop.f32.mrf.mxu0
  %v1109 = vadd.f32 %v1096, %v1108
  %v1110 = vpop.f32.mrf.mxu0
  %1111 = vdwg.mxu0
  %1112 = vmatpush.bf16.msra.mxu0 %v848
  %1113 = vmatpush.bf16.msra.mxu0 %v847
  %1114 = vmatpush.bf16.msra.mxu0 %v846
  %1115 = vmatpush.bf16.msra.mxu0 %v845
  %1116 = vmatpush.bf16.msra.mxu0 %v844
  %1117 = vmatpush.bf16.msra.mxu0 %v843
  %1118 = vmatpush.bf16.msra.mxu0 %v842
  %1119 = vmatpush.bf16.msra.mxu0 %v841
  %1120 = vmatmul.bf16.gmra.mxu0 %v274
  %v1121 = vpop.f32.mrf.mxu0
  %v1122 = vadd.f32 %v1109, %v1121
  %v1123 = vpop.f32.mrf.mxu0
  %1124 = vdwg.mxu0
  %1125 = vmatpush.bf16.msra.mxu0 %v856
  %1126 = vmatpush.bf16.msra.mxu0 %v855
  %1127 = vmatpush.bf16.msra.mxu0 %v854
  %1128 = vmatpush.bf16.msra.mxu0 %v853
  %1129 = vmatpush.bf16.msra.mxu0 %v852
  %1130 = vmatpush.bf16.msra.mxu0 %v851
  %1131 = vmatpush.bf16.msra.mxu0 %v850
  %1132 = vmatpush.bf16.msra.mxu0 %v849
  %1133 = vmatmul.bf16.gmra.mxu0 %v275
  %v1134 = vpop.f32.mrf.mxu0
  %v1135 = vadd.f32 %v1122, %v1134
  %v1136 = vpop.f32.mrf.mxu0
  %1137 = vdwg.mxu0
  %1138 = vmatpush.bf16.msra.mxu0 %v864
  %1139 = vmatpush.bf16.msra.mxu0 %v863
  %1140 = vmatpush.bf16.msra.mxu0 %v862
  %1141 = vmatpush.bf16.msra.mxu0 %v861
  %1142 = vmatpush.bf16.msra.mxu0 %v860
  %1143 = vmatpush.bf16.msra.mxu0 %v859
  %1144 = vmatpush.bf16.msra.mxu0 %v858
  %1145 = vmatpush.bf16.msra.mxu0 %v857
  %1146 = vmatmul.bf16.gmra.mxu0 %v276
  %v1147 = vpop.f32.mrf.mxu0
  %v1148 = vadd.f32 %v1135, %v1147
  %v1149 = vpop.f32.mrf.mxu0
  %1150 = vdwg.mxu0
  %1151 = vmatpush.bf16.msra.mxu0 %v872
  %1152 = vmatpush.bf16.msra.mxu0 %v871
  %1153 = vmatpush.bf16.msra.mxu0 %v870
  %1154 = vmatpush.bf16.msra.mxu0 %v869
  %1155 = vmatpush.bf16.msra.mxu0 %v868
  %1156 = vmatpush.bf16.msra.mxu0 %v867
  %1157 = vmatpush.bf16.msra.mxu0 %v866
  %1158 = vmatpush.bf16.msra.mxu0 %v865
  %1159 = vmatmul.bf16.gmra.mxu0 %v277
  %v1160 = vpop.f32.mrf.mxu0
  %v1161 = vadd.f32 %v1148, %v1160
  %v1162 = vpop.f32.mrf.mxu0
  %1163 = vdwg.mxu0
  %1164 = vmatpush.bf16.msra.mxu0 %v880
  %1165 = vmatpush.bf16.msra.mxu0 %v879
  %1166 = vmatpush.bf16.msra.mxu0 %v878
  %1167 = vmatpush.bf16.msra.mxu0 %v877
  %1168 = vmatpush.bf16.msra.mxu0 %v876
  %1169 = vmatpush.bf16.msra.mxu0 %v875
  %1170 = vmatpush.bf16.msra.mxu0 %v874
  %1171 = vmatpush.bf16.msra.mxu0 %v873
  %1172 = vmatmul.bf16.gmra.mxu0 %v278
  %v1173 = vpop.f32.mrf.mxu0
  %v1174 = vadd.f32 %v1161, %v1173
  %v1175 = vpop.f32.mrf.mxu0
  %1176 = vdwg.mxu0
  %1177 = vmatpush.bf16.msra.mxu0 %v888
  %1178 = vmatpush.bf16.msra.mxu0 %v887
  %1179 = vmatpush.bf16.msra.mxu0 %v886
  %1180 = vmatpush.bf16.msra.mxu0 %v885
  %1181 = vmatpush.bf16.msra.mxu0 %v884
  %1182 = vmatpush.bf16.msra.mxu0 %v883
  %1183 = vmatpush.bf16.msra.mxu0 %v882
  %1184 = vmatpush.bf16.msra.mxu0 %v881
  %1185 = vmatmul.bf16.gmra.mxu0 %v281
  %v1186 = vpop.f32.mrf.mxu0
  %v1187 = vadd.f32 %v1174, %v1186
  %v1188 = vpop.f32.mrf.mxu0
  %1189 = vdwg.mxu0
  %1190 = vmatpush.bf16.msra.mxu0 %v896
  %1191 = vmatpush.bf16.msra.mxu0 %v895
  %1192 = vmatpush.bf16.msra.mxu0 %v894
  %1193 = vmatpush.bf16.msra.mxu0 %v893
  %1194 = vmatpush.bf16.msra.mxu0 %v892
  %1195 = vmatpush.bf16.msra.mxu0 %v891
  %1196 = vmatpush.bf16.msra.mxu0 %v890
  %1197 = vmatpush.bf16.msra.mxu0 %v889
  %1198 = vmatmul.bf16.gmra.mxu0 %v282
  %v1199 = vpop.f32.mrf.mxu0
  %v1200 = vadd.f32 %v1187, %v1199
  %v1201 = vpop.f32.mrf.mxu0
  %1202 = vdwg.mxu0
  %1203 = vmatpush.bf16.msra.mxu0 %v904
  %1204 = vmatpush.bf16.msra.mxu0 %v903
  %1205 = vmatpush.bf16.msra.mxu0 %v902
  %1206 = vmatpush.bf16.msra.mxu0 %v901
  %1207 = vmatpush.bf16.msra.mxu0 %v900
  %1208 = vmatpush.bf16.msra.mxu0 %v899
  %1209 = vmatpush.bf16.msra.mxu0 %v898
  %1210 = vmatpush.bf16.msra.mxu0 %v897
  %1211 = vmatmul.bf16.gmra.mxu0 %v283
  %v1212 = vpop.f32.mrf.mxu0
  %v1213 = vadd.f32 %v1200, %v1212
  %v1214 = vpop.f32.mrf.mxu0
  %1215 = vdwg.mxu0
  %1216 = vmatpush.bf16.msra.mxu0 %v912
  %1217 = vmatpush.bf16.msra.mxu0 %v911
  %1218 = vmatpush.bf16.msra.mxu0 %v910
  %1219 = vmatpush.bf16.msra.mxu0 %v909
  %1220 = vmatpush.bf16.msra.mxu0 %v908
  %1221 = vmatpush.bf16.msra.mxu0 %v907
  %1222 = vmatpush.bf16.msra.mxu0 %v906
  %1223 = vmatpush.bf16.msra.mxu0 %v905
  %1224 = vmatmul.bf16.gmra.mxu0 %v284
  %v1225 = vpop.f32.mrf.mxu0
  %v1226 = vadd.f32 %v1213, %v1225
  %v1227 = vpop.f32.mrf.mxu0
  %1228 = vdwg.mxu0
  %1229 = vmatpush.bf16.msra.mxu0 %v920
  %1230 = vmatpush.bf16.msra.mxu0 %v919
  %1231 = vmatpush.bf16.msra.mxu0 %v918
  %1232 = vmatpush.bf16.msra.mxu0 %v917
  %1233 = vmatpush.bf16.msra.mxu0 %v916
  %1234 = vmatpush.bf16.msra.mxu0 %v915
  %1235 = vmatpush.bf16.msra.mxu0 %v914
  %1236 = vmatpush.bf16.msra.mxu0 %v913
  %1237 = vmatmul.bf16.gmra.mxu0 %v285
  %v1238 = vpop.f32.mrf.mxu0
  %v1239 = vadd.f32 %v1226, %v1238
  %v1240 = vpop.f32.mrf.mxu0
  %1241 = vdwg.mxu0
  %1242 = vmatpush.bf16.msra.mxu0 %v928
  %1243 = vmatpush.bf16.msra.mxu0 %v927
  %1244 = vmatpush.bf16.msra.mxu0 %v926
  %1245 = vmatpush.bf16.msra.mxu0 %v925
  %1246 = vmatpush.bf16.msra.mxu0 %v924
  %1247 = vmatpush.bf16.msra.mxu0 %v923
  %1248 = vmatpush.bf16.msra.mxu0 %v922
  %1249 = vmatpush.bf16.msra.mxu0 %v921
  %1250 = vmatmul.bf16.gmra.mxu0 %v286
  %v1251 = vpop.f32.mrf.mxu0
  %v1252 = vadd.f32 %v1239, %v1251
  %v1253 = vpop.f32.mrf.mxu0
  %1254 = vdwg.mxu0
  %1255 = vmatpush.bf16.msra.mxu0 %v936
  %1256 = vmatpush.bf16.msra.mxu0 %v935
  %1257 = vmatpush.bf16.msra.mxu0 %v934
  %1258 = vmatpush.bf16.msra.mxu0 %v933
  %1259 = vmatpush.bf16.msra.mxu0 %v932
  %1260 = vmatpush.bf16.msra.mxu0 %v931
  %1261 = vmatpush.bf16.msra.mxu0 %v930
  %1262 = vmatpush.bf16.msra.mxu0 %v929
  %1263 = vmatmul.bf16.gmra.mxu0 %v287
  %v1264 = vpop.f32.mrf.mxu0
  %v1265 = vadd.f32 %v1252, %v1264
  %v1266 = vpop.f32.mrf.mxu0
  %1267 = vdwg.mxu0
  %1268 = vmatpush.bf16.msra.mxu0 %v944
  %1269 = vmatpush.bf16.msra.mxu0 %v943
  %1270 = vmatpush.bf16.msra.mxu0 %v942
  %1271 = vmatpush.bf16.msra.mxu0 %v941
  %1272 = vmatpush.bf16.msra.mxu0 %v940
  %1273 = vmatpush.bf16.msra.mxu0 %v939
  %1274 = vmatpush.bf16.msra.mxu0 %v938
  %1275 = vmatpush.bf16.msra.mxu0 %v937
  %1276 = vmatmul.bf16.gmra.mxu0 %v288
  %v1277 = vpop.f32.mrf.mxu0
  %v1278 = vadd.f32 %v1265, %v1277
  %v1279 = vpop.f32.mrf.mxu0
  %1280 = vdwg.mxu0
  %v1281 = vsub.f32 0.0, %v1278
  %v1282 = vmul.f32 %v1281, 1.442695
  %v1283 = vpow.pop %v1282
  %v1284 = vadd.f32 %v1283, 1.0
  %v1285 = vrcp.pop %v1284
  %v1286 = vmax.f32 %v1285, 0.0
  %v1287 = vmin.f32 %v1286, 1.0
  %v1288 = vpack.c.bf16 %v1287, %v1287
  %1289 = vst [vmem:[%s2] sm:$0x1] %v1288
  // Predicated region
  $region10: #{discriminator_forward.9} parent=0 // pred_check
    _
  $region11: #{discriminator_forward.9} parent=0 // pred_check_branch
    %1291 = sbr.rel (0) target = $region13
  $region12: #{discriminator_forward.9} parent=0 // pred_region
    _
  $region13: #{discriminator_forward.9} parent=0 // pred_fallthru
    _
  // Predicated region
  $region14: #{discriminator_forward.9} parent=0 // pred_check
    _
  $region15: #{discriminator_forward.9} parent=0 // pred_check_branch
    %1293 = sbr.rel (0) target = $region17
  $region16: #{discriminator_forward.9} parent=0 // pred_region
    _
  $region17: #{discriminator_forward.9} parent=0 // pred_fallthru
    _

</llo_original>
